<compile_context>
chip_gen: v7x
topology: tpu7x:2x2x1
jax: 0.10.0
libtpu: 0.0.40
codegen_flags: <defaults>
</compile_context>

<pallas_src>
import jax
import jax.numpy as jnp
from jax.experimental import pallas as pl
from jax.experimental.pallas import tpu as pltpu


# ----------------------------------------------------------------------------
# Single fused kernel: initial_network -> encoder CDE -> fc -> forecast ODE+CDE
#                      -> final linear readout.
# ----------------------------------------------------------------------------
def make_fused_kernel(L, T, H, HH, CIN, output_time):
    Lm1 = L - 1

    def kernel(times_ref, tt_ref, a_ref, b_ref, c_ref, d_ref,
               wi_ref, bi_ref, wfc_ref, bfc_ref,
               w1_ref, b1_ref, w2_ref, b2_ref,
               wf1_ref, bf1_ref, wf2_ref, bf2_ref,
               wg1_ref, bg1_ref, wg2_ref, bg2_ref,
               wlin_ref, blin_ref, pred_ref):
        Bp = a_ref.shape[0]
        f32 = jnp.float32

        # ---- loop-invariant operands, hoisted once --------------------------
        wi = wi_ref[...]
        bi = jnp.broadcast_to(bi_ref[...], (Bp, H))
        wfc = wfc_ref[...]
        bfc = jnp.broadcast_to(bfc_ref[...], (Bp, H))
        w1 = w1_ref[...]
        b1 = jnp.broadcast_to(b1_ref[...], (Bp, HH))
        wf1 = wf1_ref[...]
        bf1 = jnp.broadcast_to(bf1_ref[...], (Bp, HH))
        wf2 = wf2_ref[...]
        bf2 = jnp.broadcast_to(bf2_ref[...], (Bp, H))
        wg1 = wg1_ref[...]
        bg1 = jnp.broadcast_to(bg1_ref[...], (Bp, HH))
        wlin = wlin_ref[...]
        blin = jnp.broadcast_to(blin_ref[...], (Bp, CIN))
        # Per-input-channel weight blocks: static leading-dim slices of resident refs.
        w2 = [w2_ref[c] for c in range(CIN)]
        b2 = [jnp.broadcast_to(b2_ref[c], (Bp, H)) for c in range(CIN)]
        wg2 = [wg2_ref[c] for c in range(CIN)]
        bg2 = [jnp.broadcast_to(bg2_ref[c], (Bp, H)) for c in range(CIN)]

        def cde_field(z, dx, wl1, bl1, wl2, bl2):
            # func(z): H -> HH -> (H x CIN) matrix (tanh), contracted against dX/dt.
            # Contraction unrolled over CIN with the weight (not the activation) sliced.
            h1 = jnp.tanh(jnp.dot(z, wl1, preferred_element_type=f32) + bl1)
            dz = None
            for c in range(CIN):
                fc = jnp.tanh(jnp.dot(h1, wl2[c], preferred_element_type=f32) + bl2[c])
                contrib = fc * dx[:, c:c + 1]
                dz = contrib if dz is None else dz + contrib
            return dz

        def f_ode(h):
            h1 = jnp.tanh(jnp.dot(h, wf1, preferred_element_type=f32) + bf1)
            return jnp.dot(h1, wf2, preferred_element_type=f32) + bf2

        # ---- z0 = initial_network(spline.evaluate(times[0])) ----------------
        x0 = a_ref[:, 0, :]                      # spline value at t = times[0]
        z0 = jnp.dot(x0, wi, preferred_element_type=f32) + bi

        # ---- Encoder CDE: explicit midpoint over the observation time grid --
        z = z0
        for s in range(Lm1):
            dt = times_ref[s + 1] - times_ref[s]
            b_s = b_ref[:, s, :]
            c_s = c_ref[:, s, :]
            d_s = d_ref[:, s, :]
            # dX/dt at the interval start is exactly b_s (frac = 0).
            k1 = cde_field(z, b_s, w1, b1, w2, b2)
            frac = 0.5 * dt
            dx_mid = b_s + (c_s + d_s * frac) * frac
            k2 = cde_field(z + (0.5 * dt) * k1, dx_mid, w1, b1, w2, b2)
            z = z + dt * k2
        z_T = z                                   # Encoder = z(times[-1])

        # ---- h0 = fc(Encoder) ------------------------------------------------
        h = jnp.dot(z_T, wfc, preferred_element_type=f32) + bfc

        # ---- Forecast: coupled ODE (h, func_f) + CDE (z, func_g) -------------
        t_base = times_ref[Lm1 - 1]               # base time of the last spline interval
        b_l = b_ref[:, Lm1 - 1, :]
        c_l = c_ref[:, Lm1 - 1, :]
        d_l = d_ref[:, Lm1 - 1, :]

        def dxdt(t):
            frac = t - t_base                     # extrapolated with the last cubic
            return b_l + (c_l + d_l * frac) * frac

        z = z0                                    # forecast CDE starts from z0 (reference passes z0)
        first_out = T - output_time
        for s in range(T):
            if s > 0:
                t_prev = tt_ref[s - 1]
                t_cur = tt_ref[s]
                dt = t_cur - t_prev
                k1h = f_ode(h)
                k1z = cde_field(z, dxdt(t_prev), wg1, bg1, wg2, bg2)
                h_mid = h + (0.5 * dt) * k1h
                z_mid = z + (0.5 * dt) * k1z
                k2h = f_ode(h_mid)
                k2z = cde_field(z_mid, dxdt(t_prev + 0.5 * dt), wg1, bg1, wg2, bg2)
                h = h + dt * k2h
                z = z + dt * k2z
            j = s - first_out
            if j >= 0:                            # apply the final linear only to the kept steps
                pred_ref[:, j * CIN:(j + 1) * CIN] = (
                    jnp.dot(z, wlin, preferred_element_type=f32) + blin)

    return kernel


# ----------------------------------------------------------------------------
# Full forward pass: host-side glue is only layout prep (pad / weight reshape).
# ----------------------------------------------------------------------------
def neural_cde_idea4_forecasting(times, terminal_time, coeffs, final_index, params,
                                 output_time):
    a, b, two_c, three_d = coeffs
    B, Lm1, CIN = a.shape
    L = Lm1 + 1
    T = int(terminal_time.shape[0])
    H = params["w_fc"].shape[0]
    HH = params["w_func1"].shape[1]

    # TODO(synk): general per-batch final_index unique()/gather over intermediate solver
    # outputs; here final_index == len(times)-1 for all batch elements, so Encoder = z(t_N).

    # Pad batch to a multiple of 8 sublanes (f32 min tile) for full-tile vreg/MXU occupancy.
    Bp = ((B + 7) // 8) * 8
    if Bp != B:
        padcfg = ((0, Bp - B), (0, 0), (0, 0))
        a = jnp.pad(a, padcfg)
        b = jnp.pad(b, padcfg)
        two_c = jnp.pad(two_c, padcfg)
        three_d = jnp.pad(three_d, padcfg)

    # Pre-split the (HH, CIN*H) CDE-field weights into per-channel (HH, H) blocks so the
    # in-kernel CIN contraction slices resident weights, not live activation vregs.
    w_func2_r = jnp.transpose(params["w_func2"].reshape(HH, CIN, H), (1, 0, 2))
    b_func2_r = jnp.transpose(params["b_func2"].reshape(1, CIN, H), (1, 0, 2))
    w_g2_r = jnp.transpose(params["w_g2"].reshape(HH, CIN, H), (1, 0, 2))
    b_g2_r = jnp.transpose(params["b_g2"].reshape(1, CIN, H), (1, 0, 2))

    operands = (
        times, terminal_time, a, b, two_c, three_d,
        params["w_init"], params["b_init"], params["w_fc"], params["b_fc"],
        params["w_func1"], params["b_func1"], w_func2_r, b_func2_r,
        params["w_f1"], params["b_f1"], params["w_f2"], params["b_f2"],
        params["w_g1"], params["b_g1"], w_g2_r, b_g2_r,
        params["w_lin"], params["b_lin"],
    )

    smem_spec = pl.BlockSpec(memory_space=pltpu.MemorySpace.SMEM)

    def vmem_spec(x):
        nd = x.ndim
        return pl.BlockSpec(x.shape, lambda i, nd=nd: (0,) * nd)

    in_specs = [smem_spec, smem_spec] + [vmem_spec(x) for x in operands[2:]]

    kernel = make_fused_kernel(L, T, H, HH, CIN, output_time)
    pred_flat = pl.pallas_call(
        kernel,
        out_shape=jax.ShapeDtypeStruct((Bp, output_time * CIN), jnp.float32),
        grid=(1,),
        in_specs=in_specs,
        out_specs=pl.BlockSpec((Bp, output_time * CIN), lambda i: (0, 0)),
        compiler_params=pltpu.CompilerParams(dimension_semantics=("arbitrary",)),
    )(*operands)

    pred_y = pred_flat.reshape(Bp, output_time, CIN)[:B]     # drop batch padding
    reg = jnp.zeros((), jnp.float32)  # kinetic_energy_coef = jacobian_norm2_coef = 0
    return pred_y, reg


# ----------------------------------------------------------------------------
# Deterministic parameter initialisation (nn.Linear-style uniform bounds).
# ----------------------------------------------------------------------------
def init_params(key, cin, h, hh):
    def linear_init(k, fan_in, fan_out):
        k1, k2 = jax.random.split(k)
        lim = 1.0 / float(fan_in) ** 0.5
        w = jax.random.uniform(k1, (fan_in, fan_out), jnp.float32, -lim, lim)
        bb = jax.random.uniform(k2, (1, fan_out), jnp.float32, -lim, lim)
        return w, bb

    keys = jax.random.split(key, 7)
    w_init, b_init = linear_init(keys[0], cin, h)          # initial_network
    w_fc, b_fc = linear_init(keys[1], h, h)                # fc
    w_lin, b_lin = linear_init(keys[2], h, cin)            # linear (hidden -> input)
    w_func1, b_func1 = linear_init(keys[3], h, hh)         # func (CDE field) layer 1
    w_func2, b_func2 = linear_init(keys[4], hh, cin * h)   # func layer 2 (H x CIN matrix)
    kf = jax.random.split(keys[5], 2)
    w_f1, b_f1 = linear_init(kf[0], h, hh)                 # func_f (ODE) layer 1
    w_f2, b_f2 = linear_init(kf[1], hh, h)                 # func_f layer 2
    kg = jax.random.split(keys[6], 2)
    w_g1, b_g1 = linear_init(kg[0], h, hh)                 # func_g (CDE) layer 1
    w_g2, b_g2 = linear_init(kg[1], hh, cin * h)           # func_g layer 2
    return dict(w_init=w_init, b_init=b_init, w_fc=w_fc, b_fc=b_fc,
                w_lin=w_lin, b_lin=b_lin,
                w_func1=w_func1, b_func1=b_func1, w_func2=w_func2, b_func2=b_func2,
                w_f1=w_f1, b_f1=b_f1, w_f2=w_f2, b_f2=b_f2,
                w_g1=w_g1, b_g1=b_g1, w_g2=w_g2, b_g2=b_g2)


if __name__ == "__main__":
    B, CIN, H, HH = 4, 4, 32, 32
    L = 8            # number of observation times
    T_TERM = 6       # number of forecast (terminal) times
    OUTPUT_TIME = 4  # self.output_time

    key = jax.random.PRNGKey(0)
    k_par, k_a, k_b, k_c, k_d = jax.random.split(key, 5)
    params = init_params(k_par, CIN, H, HH)

    times = jnp.linspace(0.0, 1.0, L, dtype=jnp.float32)
    terminal_time = jnp.linspace(1.0, 1.5, T_TERM, dtype=jnp.float32)

    a = 0.1 * jax.random.normal(k_a, (B, L - 1, CIN), jnp.float32)
    b = 0.1 * jax.random.normal(k_b, (B, L - 1, CIN), jnp.float32)
    two_c = 0.1 * jax.random.normal(k_c, (B, L - 1, CIN), jnp.float32)
    three_d = 0.1 * jax.random.normal(k_d, (B, L - 1, CIN), jnp.float32)
    coeffs = (a, b, two_c, three_d)

    final_index = jnp.full((B,), L - 1, dtype=jnp.int32)
    assert bool(jnp.all(final_index == L - 1))  # simplification documented above

    # jit the whole forward so the tiny host-side layout ops (pad / weight reshape /
    # output reshape) fuse into a single dispatch around the one fused Pallas kernel.
    forward = jax.jit(neural_cde_idea4_forecasting, static_argnums=(5,))
    pred_y, reg = forward(times, terminal_time, coeffs, final_index, params, OUTPUT_TIME)
    jax.block_until_ready((pred_y, reg))

    assert pred_y.shape == (B, OUTPUT_TIME, CIN)
    assert bool(jnp.all(jnp.isfinite(pred_y)))
    print("KERNEL_OK")
</pallas_src>

<mosaic_0001>
module attributes {stable_mosaic.version = 11 : i64} {
  func.func @kernel(%arg0: i32, %arg1: memref<8xf32, #tpu.memory_space<smem>>, %arg2: memref<6xf32, #tpu.memory_space<smem>>, %arg3: memref<8x7x4xf32, #tpu.memory_space<vmem>>, %arg4: memref<8x7x4xf32, #tpu.memory_space<vmem>>, %arg5: memref<8x7x4xf32, #tpu.memory_space<vmem>>, %arg6: memref<8x7x4xf32, #tpu.memory_space<vmem>>, %arg7: memref<4x32xf32, #tpu.memory_space<vmem>>, %arg8: memref<1x32xf32, #tpu.memory_space<vmem>>, %arg9: memref<32x32xf32, #tpu.memory_space<vmem>>, %arg10: memref<1x32xf32, #tpu.memory_space<vmem>>, %arg11: memref<32x32xf32, #tpu.memory_space<vmem>>, %arg12: memref<1x32xf32, #tpu.memory_space<vmem>>, %arg13: memref<4x32x32xf32, #tpu.memory_space<vmem>>, %arg14: memref<4x1x32xf32, #tpu.memory_space<vmem>>, %arg15: memref<32x32xf32, #tpu.memory_space<vmem>>, %arg16: memref<1x32xf32, #tpu.memory_space<vmem>>, %arg17: memref<32x32xf32, #tpu.memory_space<vmem>>, %arg18: memref<1x32xf32, #tpu.memory_space<vmem>>, %arg19: memref<32x32xf32, #tpu.memory_space<vmem>>, %arg20: memref<1x32xf32, #tpu.memory_space<vmem>>, %arg21: memref<4x32x32xf32, #tpu.memory_space<vmem>>, %arg22: memref<4x1x32xf32, #tpu.memory_space<vmem>>, %arg23: memref<32x4xf32, #tpu.memory_space<vmem>>, %arg24: memref<1x4xf32, #tpu.memory_space<vmem>>, %arg25: memref<8x16xf32, #tpu.memory_space<vmem>>) attributes {dimension_semantics = [#tpu.dimension_semantics<arbitrary>], iteration_bounds = array<i64: 1>, scalar_prefetch = 0 : i64, scratch_operands = 0 : i64, tpu.core_type = #tpu.core_type<tc>, window_params = [{transform_indices = @transform_0, window_bounds = array<i64: 8>}, {transform_indices = @transform_1, window_bounds = array<i64: 6>}, {pipeline_mode = #tpu.pipeline_mode<synchronous>, transform_indices = @transform_2, window_bounds = array<i64: 8, 7, 4>}, {pipeline_mode = #tpu.pipeline_mode<synchronous>, transform_indices = @transform_3, window_bounds = array<i64: 8, 7, 4>}, {pipeline_mode = #tpu.pipeline_mode<synchronous>, transform_indices = @transform_4, window_bounds = array<i64: 8, 7, 4>}, {pipeline_mode = #tpu.pipeline_mode<synchronous>, transform_indices = @transform_5, window_bounds = array<i64: 8, 7, 4>}, {pipeline_mode = #tpu.pipeline_mode<synchronous>, transform_indices = @transform_6, window_bounds = array<i64: 4, 32>}, {pipeline_mode = #tpu.pipeline_mode<synchronous>, transform_indices = @transform_7, window_bounds = array<i64: 1, 32>}, {pipeline_mode = #tpu.pipeline_mode<synchronous>, transform_indices = @transform_8, window_bounds = array<i64: 32, 32>}, {pipeline_mode = #tpu.pipeline_mode<synchronous>, transform_indices = @transform_9, window_bounds = array<i64: 1, 32>}, {pipeline_mode = #tpu.pipeline_mode<synchronous>, transform_indices = @transform_10, window_bounds = array<i64: 32, 32>}, {pipeline_mode = #tpu.pipeline_mode<synchronous>, transform_indices = @transform_11, window_bounds = array<i64: 1, 32>}, {pipeline_mode = #tpu.pipeline_mode<synchronous>, transform_indices = @transform_12, window_bounds = array<i64: 4, 32, 32>}, {pipeline_mode = #tpu.pipeline_mode<synchronous>, transform_indices = @transform_13, window_bounds = array<i64: 4, 1, 32>}, {pipeline_mode = #tpu.pipeline_mode<synchronous>, transform_indices = @transform_14, window_bounds = array<i64: 32, 32>}, {pipeline_mode = #tpu.pipeline_mode<synchronous>, transform_indices = @transform_15, window_bounds = array<i64: 1, 32>}, {pipeline_mode = #tpu.pipeline_mode<synchronous>, transform_indices = @transform_16, window_bounds = array<i64: 32, 32>}, {pipeline_mode = #tpu.pipeline_mode<synchronous>, transform_indices = @transform_17, window_bounds = array<i64: 1, 32>}, {pipeline_mode = #tpu.pipeline_mode<synchronous>, transform_indices = @transform_18, window_bounds = array<i64: 32, 32>}, {pipeline_mode = #tpu.pipeline_mode<synchronous>, transform_indices = @transform_19, window_bounds = array<i64: 1, 32>}, {pipeline_mode = #tpu.pipeline_mode<synchronous>, transform_indices = @transform_20, window_bounds = array<i64: 4, 32, 32>}, {pipeline_mode = #tpu.pipeline_mode<synchronous>, transform_indices = @transform_21, window_bounds = array<i64: 4, 1, 32>}, {pipeline_mode = #tpu.pipeline_mode<synchronous>, transform_indices = @transform_22, window_bounds = array<i64: 32, 4>}, {pipeline_mode = #tpu.pipeline_mode<synchronous>, transform_indices = @transform_23, window_bounds = array<i64: 1, 4>}, {pipeline_mode = #tpu.pipeline_mode<synchronous>, transform_indices = @transform_24, window_bounds = array<i64: 8, 16>}]} {
    %c0 = arith.constant 0 : index
    %c0_0 = arith.constant 0 : index
    %0 = vector.load %arg7[%c0, %c0_0] : memref<4x32xf32, #tpu.memory_space<vmem>>, vector<4x32xf32>
    %c0_1 = arith.constant 0 : index
    %c0_2 = arith.constant 0 : index
    %1 = vector.load %arg8[%c0_1, %c0_2] : memref<1x32xf32, #tpu.memory_space<vmem>>, vector<1x32xf32>
    %2 = vector.shape_cast %1 : vector<1x32xf32> to vector<1x32xf32>
    %3 = vector.broadcast %2 : vector<1x32xf32> to vector<8x32xf32>
    %c0_3 = arith.constant 0 : index
    %c0_4 = arith.constant 0 : index
    %4 = vector.load %arg19[%c0_3, %c0_4] : memref<32x32xf32, #tpu.memory_space<vmem>>, vector<32x32xf32>
    %c0_5 = arith.constant 0 : index
    %c0_6 = arith.constant 0 : index
    %5 = vector.load %arg20[%c0_5, %c0_6] : memref<1x32xf32, #tpu.memory_space<vmem>>, vector<1x32xf32>
    %6 = vector.shape_cast %5 : vector<1x32xf32> to vector<1x32xf32>
    %7 = vector.broadcast %6 : vector<1x32xf32> to vector<8x32xf32>
    %c0_7 = arith.constant 0 : index
    %c0_8 = arith.constant 0 : index
    %8 = vector.load %arg23[%c0_7, %c0_8] : memref<32x4xf32, #tpu.memory_space<vmem>>, vector<32x4xf32>
    %c0_9 = arith.constant 0 : index
    %c0_10 = arith.constant 0 : index
    %9 = vector.load %arg24[%c0_9, %c0_10] : memref<1x4xf32, #tpu.memory_space<vmem>>, vector<1x4xf32>
    %10 = vector.shape_cast %9 : vector<1x4xf32> to vector<1x4xf32>
    %11 = vector.broadcast %10 : vector<1x4xf32> to vector<8x4xf32>
    %c0_11 = arith.constant 0 : index
    %c0_12 = arith.constant 0 : index
    %c0_13 = arith.constant 0 : index
    %12 = vector.load %arg21[%c0_11, %c0_12, %c0_13] : memref<4x32x32xf32, #tpu.memory_space<vmem>>, vector<1x32x32xf32>
    %13 = vector.shape_cast %12 : vector<1x32x32xf32> to vector<32x32xf32>
    %c1 = arith.constant 1 : index
    %c0_14 = arith.constant 0 : index
    %c0_15 = arith.constant 0 : index
    %14 = vector.load %arg21[%c1, %c0_14, %c0_15] : memref<4x32x32xf32, #tpu.memory_space<vmem>>, vector<1x32x32xf32>
    %15 = vector.shape_cast %14 : vector<1x32x32xf32> to vector<32x32xf32>
    %c2 = arith.constant 2 : index
    %c0_16 = arith.constant 0 : index
    %c0_17 = arith.constant 0 : index
    %16 = vector.load %arg21[%c2, %c0_16, %c0_17] : memref<4x32x32xf32, #tpu.memory_space<vmem>>, vector<1x32x32xf32>
    %17 = vector.shape_cast %16 : vector<1x32x32xf32> to vector<32x32xf32>
    %c3 = arith.constant 3 : index
    %c0_18 = arith.constant 0 : index
    %c0_19 = arith.constant 0 : index
    %18 = vector.load %arg21[%c3, %c0_18, %c0_19] : memref<4x32x32xf32, #tpu.memory_space<vmem>>, vector<1x32x32xf32>
    %19 = vector.shape_cast %18 : vector<1x32x32xf32> to vector<32x32xf32>
    %c0_20 = arith.constant 0 : index
    %c0_21 = arith.constant 0 : index
    %c0_22 = arith.constant 0 : index
    %20 = vector.load %arg22[%c0_20, %c0_21, %c0_22] : memref<4x1x32xf32, #tpu.memory_space<vmem>>, vector<1x1x32xf32>
    %21 = vector.shape_cast %20 : vector<1x1x32xf32> to vector<1x32xf32>
    %22 = vector.shape_cast %21 : vector<1x32xf32> to vector<1x32xf32>
    %23 = vector.broadcast %22 : vector<1x32xf32> to vector<8x32xf32>
    %c1_23 = arith.constant 1 : index
    %c0_24 = arith.constant 0 : index
    %c0_25 = arith.constant 0 : index
    %24 = vector.load %arg22[%c1_23, %c0_24, %c0_25] : memref<4x1x32xf32, #tpu.memory_space<vmem>>, vector<1x1x32xf32>
    %25 = vector.shape_cast %24 : vector<1x1x32xf32> to vector<1x32xf32>
    %26 = vector.shape_cast %25 : vector<1x32xf32> to vector<1x32xf32>
    %27 = vector.broadcast %26 : vector<1x32xf32> to vector<8x32xf32>
    %c2_26 = arith.constant 2 : index
    %c0_27 = arith.constant 0 : index
    %c0_28 = arith.constant 0 : index
    %28 = vector.load %arg22[%c2_26, %c0_27, %c0_28] : memref<4x1x32xf32, #tpu.memory_space<vmem>>, vector<1x1x32xf32>
    %29 = vector.shape_cast %28 : vector<1x1x32xf32> to vector<1x32xf32>
    %30 = vector.shape_cast %29 : vector<1x32xf32> to vector<1x32xf32>
    %31 = vector.broadcast %30 : vector<1x32xf32> to vector<8x32xf32>
    %c3_29 = arith.constant 3 : index
    %c0_30 = arith.constant 0 : index
    %c0_31 = arith.constant 0 : index
    %32 = vector.load %arg22[%c3_29, %c0_30, %c0_31] : memref<4x1x32xf32, #tpu.memory_space<vmem>>, vector<1x1x32xf32>
    %33 = vector.shape_cast %32 : vector<1x1x32xf32> to vector<1x32xf32>
    %34 = vector.shape_cast %33 : vector<1x32xf32> to vector<1x32xf32>
    %35 = vector.broadcast %34 : vector<1x32xf32> to vector<8x32xf32>
    %c0_32 = arith.constant 0 : index
    %c0_33 = arith.constant 0 : index
    %c0_34 = arith.constant 0 : index
    %36 = vector.load %arg3[%c0_32, %c0_33, %c0_34] : memref<8x7x4xf32, #tpu.memory_space<vmem>>, vector<8x1x4xf32>
    %37 = vector.shape_cast %36 : vector<8x1x4xf32> to vector<8x4xf32>
    %cst = arith.constant dense<0.000000e+00> : vector<8x32xf32>
    %38 = tpu.matmul %37, %0, %cst {dimension_numbers = #tpu.dot_dimension_numbers<[1], [0], [0], [1], [0, 0, 1, 1], [], []>} : vector<8x4xf32>, vector<4x32xf32>, vector<8x32xf32> -> vector<8x32xf32>
    %39 = arith.addf %38, %3 : vector<8x32xf32>
    %c6 = arith.constant 6 : index
    %40 = memref.load %arg1[%c6] : memref<8xf32, #tpu.memory_space<smem>>
    %c0_35 = arith.constant 0 : index
    %c6_36 = arith.constant 6 : index
    %c0_37 = arith.constant 0 : index
    %41 = vector.load %arg4[%c0_35, %c6_36, %c0_37] : memref<8x7x4xf32, #tpu.memory_space<vmem>>, vector<8x1x4xf32>
    %42 = vector.shape_cast %41 : vector<8x1x4xf32> to vector<8x4xf32>
    %c0_38 = arith.constant 0 : index
    %c6_39 = arith.constant 6 : index
    %c0_40 = arith.constant 0 : index
    %43 = vector.load %arg5[%c0_38, %c6_39, %c0_40] : memref<8x7x4xf32, #tpu.memory_space<vmem>>, vector<8x1x4xf32>
    %44 = vector.shape_cast %43 : vector<8x1x4xf32> to vector<8x4xf32>
    %c0_41 = arith.constant 0 : index
    %c6_42 = arith.constant 6 : index
    %c0_43 = arith.constant 0 : index
    %45 = vector.load %arg6[%c0_41, %c6_42, %c0_43] : memref<8x7x4xf32, #tpu.memory_space<vmem>>, vector<8x1x4xf32>
    %46 = vector.shape_cast %45 : vector<8x1x4xf32> to vector<8x4xf32>
    %c0_44 = arith.constant 0 : index
    %47 = memref.load %arg2[%c0_44] : memref<6xf32, #tpu.memory_space<smem>>
    %c1_45 = arith.constant 1 : index
    %48 = memref.load %arg2[%c1_45] : memref<6xf32, #tpu.memory_space<smem>>
    %49 = arith.subf %48, %47 : f32
    %50 = arith.subf %47, %40 : f32
    %51 = vector.broadcast %50 : f32 to vector<8x4xf32>
    %52 = arith.mulf %46, %51 : vector<8x4xf32>
    %53 = arith.addf %44, %52 : vector<8x4xf32>
    %54 = vector.broadcast %50 : f32 to vector<8x4xf32>
    %55 = arith.mulf %53, %54 : vector<8x4xf32>
    %56 = arith.addf %42, %55 : vector<8x4xf32>
    %cst_46 = arith.constant dense<0.000000e+00> : vector<8x32xf32>
    %57 = tpu.matmul %39, %4, %cst_46 {dimension_numbers = #tpu.dot_dimension_numbers<[1], [0], [0], [1], [0, 0, 1, 1], [], []>} : vector<8x32xf32>, vector<32x32xf32>, vector<8x32xf32> -> vector<8x32xf32>
    %58 = arith.addf %57, %7 : vector<8x32xf32>
    %59 = math.tanh %58 : vector<8x32xf32>
    %cst_47 = arith.constant dense<0.000000e+00> : vector<8x32xf32>
    %60 = tpu.matmul %59, %13, %cst_47 {dimension_numbers = #tpu.dot_dimension_numbers<[1], [0], [0], [1], [0, 0, 1, 1], [], []>} : vector<8x32xf32>, vector<32x32xf32>, vector<8x32xf32> -> vector<8x32xf32>
    %61 = arith.addf %60, %23 : vector<8x32xf32>
    %62 = math.tanh %61 : vector<8x32xf32>
    %63 = vector.extract_strided_slice %56 {offsets = [0, 0], sizes = [8, 1], strides = [1, 1]} : vector<8x4xf32> to vector<8x1xf32>
    %64 = vector.broadcast %63 : vector<8x1xf32> to vector<8x32xf32>
    %65 = arith.mulf %62, %64 : vector<8x32xf32>
    %cst_48 = arith.constant dense<0.000000e+00> : vector<8x32xf32>
    %66 = tpu.matmul %59, %15, %cst_48 {dimension_numbers = #tpu.dot_dimension_numbers<[1], [0], [0], [1], [0, 0, 1, 1], [], []>} : vector<8x32xf32>, vector<32x32xf32>, vector<8x32xf32> -> vector<8x32xf32>
    %67 = arith.addf %66, %27 : vector<8x32xf32>
    %68 = math.tanh %67 : vector<8x32xf32>
    %69 = vector.extract_strided_slice %56 {offsets = [0, 1], sizes = [8, 1], strides = [1, 1]} : vector<8x4xf32> to vector<8x1xf32>
    %70 = vector.broadcast %69 : vector<8x1xf32> to vector<8x32xf32>
    %71 = arith.mulf %68, %70 : vector<8x32xf32>
    %72 = arith.addf %65, %71 : vector<8x32xf32>
    %cst_49 = arith.constant dense<0.000000e+00> : vector<8x32xf32>
    %73 = tpu.matmul %59, %17, %cst_49 {dimension_numbers = #tpu.dot_dimension_numbers<[1], [0], [0], [1], [0, 0, 1, 1], [], []>} : vector<8x32xf32>, vector<32x32xf32>, vector<8x32xf32> -> vector<8x32xf32>
    %74 = arith.addf %73, %31 : vector<8x32xf32>
    %75 = math.tanh %74 : vector<8x32xf32>
    %76 = vector.extract_strided_slice %56 {offsets = [0, 2], sizes = [8, 1], strides = [1, 1]} : vector<8x4xf32> to vector<8x1xf32>
    %77 = vector.broadcast %76 : vector<8x1xf32> to vector<8x32xf32>
    %78 = arith.mulf %75, %77 : vector<8x32xf32>
    %79 = arith.addf %72, %78 : vector<8x32xf32>
    %cst_50 = arith.constant dense<0.000000e+00> : vector<8x32xf32>
    %80 = tpu.matmul %59, %19, %cst_50 {dimension_numbers = #tpu.dot_dimension_numbers<[1], [0], [0], [1], [0, 0, 1, 1], [], []>} : vector<8x32xf32>, vector<32x32xf32>, vector<8x32xf32> -> vector<8x32xf32>
    %81 = arith.addf %80, %35 : vector<8x32xf32>
    %82 = math.tanh %81 : vector<8x32xf32>
    %83 = vector.extract_strided_slice %56 {offsets = [0, 3], sizes = [8, 1], strides = [1, 1]} : vector<8x4xf32> to vector<8x1xf32>
    %84 = vector.broadcast %83 : vector<8x1xf32> to vector<8x32xf32>
    %85 = arith.mulf %82, %84 : vector<8x32xf32>
    %86 = arith.addf %79, %85 : vector<8x32xf32>
    %cst_51 = arith.constant 5.000000e-01 : f32
    %87 = arith.mulf %cst_51, %49 : f32
    %88 = vector.broadcast %87 : f32 to vector<8x32xf32>
    %89 = arith.mulf %88, %86 : vector<8x32xf32>
    %90 = arith.addf %39, %89 : vector<8x32xf32>
    %cst_52 = arith.constant 5.000000e-01 : f32
    %91 = arith.mulf %cst_52, %49 : f32
    %92 = arith.addf %47, %91 : f32
    %93 = arith.subf %92, %40 : f32
    %94 = vector.broadcast %93 : f32 to vector<8x4xf32>
    %95 = arith.mulf %46, %94 : vector<8x4xf32>
    %96 = arith.addf %44, %95 : vector<8x4xf32>
    %97 = vector.broadcast %93 : f32 to vector<8x4xf32>
    %98 = arith.mulf %96, %97 : vector<8x4xf32>
    %99 = arith.addf %42, %98 : vector<8x4xf32>
    %cst_53 = arith.constant dense<0.000000e+00> : vector<8x32xf32>
    %100 = tpu.matmul %90, %4, %cst_53 {dimension_numbers = #tpu.dot_dimension_numbers<[1], [0], [0], [1], [0, 0, 1, 1], [], []>} : vector<8x32xf32>, vector<32x32xf32>, vector<8x32xf32> -> vector<8x32xf32>
    %101 = arith.addf %100, %7 : vector<8x32xf32>
    %102 = math.tanh %101 : vector<8x32xf32>
    %cst_54 = arith.constant dense<0.000000e+00> : vector<8x32xf32>
    %103 = tpu.matmul %102, %13, %cst_54 {dimension_numbers = #tpu.dot_dimension_numbers<[1], [0], [0], [1], [0, 0, 1, 1], [], []>} : vector<8x32xf32>, vector<32x32xf32>, vector<8x32xf32> -> vector<8x32xf32>
    %104 = arith.addf %103, %23 : vector<8x32xf32>
    %105 = math.tanh %104 : vector<8x32xf32>
    %106 = vector.extract_strided_slice %99 {offsets = [0, 0], sizes = [8, 1], strides = [1, 1]} : vector<8x4xf32> to vector<8x1xf32>
    %107 = vector.broadcast %106 : vector<8x1xf32> to vector<8x32xf32>
    %108 = arith.mulf %105, %107 : vector<8x32xf32>
    %cst_55 = arith.constant dense<0.000000e+00> : vector<8x32xf32>
    %109 = tpu.matmul %102, %15, %cst_55 {dimension_numbers = #tpu.dot_dimension_numbers<[1], [0], [0], [1], [0, 0, 1, 1], [], []>} : vector<8x32xf32>, vector<32x32xf32>, vector<8x32xf32> -> vector<8x32xf32>
    %110 = arith.addf %109, %27 : vector<8x32xf32>
    %111 = math.tanh %110 : vector<8x32xf32>
    %112 = vector.extract_strided_slice %99 {offsets = [0, 1], sizes = [8, 1], strides = [1, 1]} : vector<8x4xf32> to vector<8x1xf32>
    %113 = vector.broadcast %112 : vector<8x1xf32> to vector<8x32xf32>
    %114 = arith.mulf %111, %113 : vector<8x32xf32>
    %115 = arith.addf %108, %114 : vector<8x32xf32>
    %cst_56 = arith.constant dense<0.000000e+00> : vector<8x32xf32>
    %116 = tpu.matmul %102, %17, %cst_56 {dimension_numbers = #tpu.dot_dimension_numbers<[1], [0], [0], [1], [0, 0, 1, 1], [], []>} : vector<8x32xf32>, vector<32x32xf32>, vector<8x32xf32> -> vector<8x32xf32>
    %117 = arith.addf %116, %31 : vector<8x32xf32>
    %118 = math.tanh %117 : vector<8x32xf32>
    %119 = vector.extract_strided_slice %99 {offsets = [0, 2], sizes = [8, 1], strides = [1, 1]} : vector<8x4xf32> to vector<8x1xf32>
    %120 = vector.broadcast %119 : vector<8x1xf32> to vector<8x32xf32>
    %121 = arith.mulf %118, %120 : vector<8x32xf32>
    %122 = arith.addf %115, %121 : vector<8x32xf32>
    %cst_57 = arith.constant dense<0.000000e+00> : vector<8x32xf32>
    %123 = tpu.matmul %102, %19, %cst_57 {dimension_numbers = #tpu.dot_dimension_numbers<[1], [0], [0], [1], [0, 0, 1, 1], [], []>} : vector<8x32xf32>, vector<32x32xf32>, vector<8x32xf32> -> vector<8x32xf32>
    %124 = arith.addf %123, %35 : vector<8x32xf32>
    %125 = math.tanh %124 : vector<8x32xf32>
    %126 = vector.extract_strided_slice %99 {offsets = [0, 3], sizes = [8, 1], strides = [1, 1]} : vector<8x4xf32> to vector<8x1xf32>
    %127 = vector.broadcast %126 : vector<8x1xf32> to vector<8x32xf32>
    %128 = arith.mulf %125, %127 : vector<8x32xf32>
    %129 = arith.addf %122, %128 : vector<8x32xf32>
    %130 = vector.broadcast %49 : f32 to vector<8x32xf32>
    %131 = arith.mulf %130, %129 : vector<8x32xf32>
    %132 = arith.addf %39, %131 : vector<8x32xf32>
    %c1_58 = arith.constant 1 : index
    %133 = memref.load %arg2[%c1_58] : memref<6xf32, #tpu.memory_space<smem>>
    %c2_59 = arith.constant 2 : index
    %134 = memref.load %arg2[%c2_59] : memref<6xf32, #tpu.memory_space<smem>>
    %135 = arith.subf %134, %133 : f32
    %136 = arith.subf %133, %40 : f32
    %137 = vector.broadcast %136 : f32 to vector<8x4xf32>
    %138 = arith.mulf %46, %137 : vector<8x4xf32>
    %139 = arith.addf %44, %138 : vector<8x4xf32>
    %140 = vector.broadcast %136 : f32 to vector<8x4xf32>
    %141 = arith.mulf %139, %140 : vector<8x4xf32>
    %142 = arith.addf %42, %141 : vector<8x4xf32>
    %cst_60 = arith.constant dense<0.000000e+00> : vector<8x32xf32>
    %143 = tpu.matmul %132, %4, %cst_60 {dimension_numbers = #tpu.dot_dimension_numbers<[1], [0], [0], [1], [0, 0, 1, 1], [], []>} : vector<8x32xf32>, vector<32x32xf32>, vector<8x32xf32> -> vector<8x32xf32>
    %144 = arith.addf %143, %7 : vector<8x32xf32>
    %145 = math.tanh %144 : vector<8x32xf32>
    %cst_61 = arith.constant dense<0.000000e+00> : vector<8x32xf32>
    %146 = tpu.matmul %145, %13, %cst_61 {dimension_numbers = #tpu.dot_dimension_numbers<[1], [0], [0], [1], [0, 0, 1, 1], [], []>} : vector<8x32xf32>, vector<32x32xf32>, vector<8x32xf32> -> vector<8x32xf32>
    %147 = arith.addf %146, %23 : vector<8x32xf32>
    %148 = math.tanh %147 : vector<8x32xf32>
    %149 = vector.extract_strided_slice %142 {offsets = [0, 0], sizes = [8, 1], strides = [1, 1]} : vector<8x4xf32> to vector<8x1xf32>
    %150 = vector.broadcast %149 : vector<8x1xf32> to vector<8x32xf32>
    %151 = arith.mulf %148, %150 : vector<8x32xf32>
    %cst_62 = arith.constant dense<0.000000e+00> : vector<8x32xf32>
    %152 = tpu.matmul %145, %15, %cst_62 {dimension_numbers = #tpu.dot_dimension_numbers<[1], [0], [0], [1], [0, 0, 1, 1], [], []>} : vector<8x32xf32>, vector<32x32xf32>, vector<8x32xf32> -> vector<8x32xf32>
    %153 = arith.addf %152, %27 : vector<8x32xf32>
    %154 = math.tanh %153 : vector<8x32xf32>
    %155 = vector.extract_strided_slice %142 {offsets = [0, 1], sizes = [8, 1], strides = [1, 1]} : vector<8x4xf32> to vector<8x1xf32>
    %156 = vector.broadcast %155 : vector<8x1xf32> to vector<8x32xf32>
    %157 = arith.mulf %154, %156 : vector<8x32xf32>
    %158 = arith.addf %151, %157 : vector<8x32xf32>
    %cst_63 = arith.constant dense<0.000000e+00> : vector<8x32xf32>
    %159 = tpu.matmul %145, %17, %cst_63 {dimension_numbers = #tpu.dot_dimension_numbers<[1], [0], [0], [1], [0, 0, 1, 1], [], []>} : vector<8x32xf32>, vector<32x32xf32>, vector<8x32xf32> -> vector<8x32xf32>
    %160 = arith.addf %159, %31 : vector<8x32xf32>
    %161 = math.tanh %160 : vector<8x32xf32>
    %162 = vector.extract_strided_slice %142 {offsets = [0, 2], sizes = [8, 1], strides = [1, 1]} : vector<8x4xf32> to vector<8x1xf32>
    %163 = vector.broadcast %162 : vector<8x1xf32> to vector<8x32xf32>
    %164 = arith.mulf %161, %163 : vector<8x32xf32>
    %165 = arith.addf %158, %164 : vector<8x32xf32>
    %cst_64 = arith.constant dense<0.000000e+00> : vector<8x32xf32>
    %166 = tpu.matmul %145, %19, %cst_64 {dimension_numbers = #tpu.dot_dimension_numbers<[1], [0], [0], [1], [0, 0, 1, 1], [], []>} : vector<8x32xf32>, vector<32x32xf32>, vector<8x32xf32> -> vector<8x32xf32>
    %167 = arith.addf %166, %35 : vector<8x32xf32>
    %168 = math.tanh %167 : vector<8x32xf32>
    %169 = vector.extract_strided_slice %142 {offsets = [0, 3], sizes = [8, 1], strides = [1, 1]} : vector<8x4xf32> to vector<8x1xf32>
    %170 = vector.broadcast %169 : vector<8x1xf32> to vector<8x32xf32>
    %171 = arith.mulf %168, %170 : vector<8x32xf32>
    %172 = arith.addf %165, %171 : vector<8x32xf32>
    %cst_65 = arith.constant 5.000000e-01 : f32
    %173 = arith.mulf %cst_65, %135 : f32
    %174 = vector.broadcast %173 : f32 to vector<8x32xf32>
    %175 = arith.mulf %174, %172 : vector<8x32xf32>
    %176 = arith.addf %132, %175 : vector<8x32xf32>
    %cst_66 = arith.constant 5.000000e-01 : f32
    %177 = arith.mulf %cst_66, %135 : f32
    %178 = arith.addf %133, %177 : f32
    %179 = arith.subf %178, %40 : f32
    %180 = vector.broadcast %179 : f32 to vector<8x4xf32>
    %181 = arith.mulf %46, %180 : vector<8x4xf32>
    %182 = arith.addf %44, %181 : vector<8x4xf32>
    %183 = vector.broadcast %179 : f32 to vector<8x4xf32>
    %184 = arith.mulf %182, %183 : vector<8x4xf32>
    %185 = arith.addf %42, %184 : vector<8x4xf32>
    %cst_67 = arith.constant dense<0.000000e+00> : vector<8x32xf32>
    %186 = tpu.matmul %176, %4, %cst_67 {dimension_numbers = #tpu.dot_dimension_numbers<[1], [0], [0], [1], [0, 0, 1, 1], [], []>} : vector<8x32xf32>, vector<32x32xf32>, vector<8x32xf32> -> vector<8x32xf32>
    %187 = arith.addf %186, %7 : vector<8x32xf32>
    %188 = math.tanh %187 : vector<8x32xf32>
    %cst_68 = arith.constant dense<0.000000e+00> : vector<8x32xf32>
    %189 = tpu.matmul %188, %13, %cst_68 {dimension_numbers = #tpu.dot_dimension_numbers<[1], [0], [0], [1], [0, 0, 1, 1], [], []>} : vector<8x32xf32>, vector<32x32xf32>, vector<8x32xf32> -> vector<8x32xf32>
    %190 = arith.addf %189, %23 : vector<8x32xf32>
    %191 = math.tanh %190 : vector<8x32xf32>
    %192 = vector.extract_strided_slice %185 {offsets = [0, 0], sizes = [8, 1], strides = [1, 1]} : vector<8x4xf32> to vector<8x1xf32>
    %193 = vector.broadcast %192 : vector<8x1xf32> to vector<8x32xf32>
    %194 = arith.mulf %191, %193 : vector<8x32xf32>
    %cst_69 = arith.constant dense<0.000000e+00> : vector<8x32xf32>
    %195 = tpu.matmul %188, %15, %cst_69 {dimension_numbers = #tpu.dot_dimension_numbers<[1], [0], [0], [1], [0, 0, 1, 1], [], []>} : vector<8x32xf32>, vector<32x32xf32>, vector<8x32xf32> -> vector<8x32xf32>
    %196 = arith.addf %195, %27 : vector<8x32xf32>
    %197 = math.tanh %196 : vector<8x32xf32>
    %198 = vector.extract_strided_slice %185 {offsets = [0, 1], sizes = [8, 1], strides = [1, 1]} : vector<8x4xf32> to vector<8x1xf32>
    %199 = vector.broadcast %198 : vector<8x1xf32> to vector<8x32xf32>
    %200 = arith.mulf %197, %199 : vector<8x32xf32>
    %201 = arith.addf %194, %200 : vector<8x32xf32>
    %cst_70 = arith.constant dense<0.000000e+00> : vector<8x32xf32>
    %202 = tpu.matmul %188, %17, %cst_70 {dimension_numbers = #tpu.dot_dimension_numbers<[1], [0], [0], [1], [0, 0, 1, 1], [], []>} : vector<8x32xf32>, vector<32x32xf32>, vector<8x32xf32> -> vector<8x32xf32>
    %203 = arith.addf %202, %31 : vector<8x32xf32>
    %204 = math.tanh %203 : vector<8x32xf32>
    %205 = vector.extract_strided_slice %185 {offsets = [0, 2], sizes = [8, 1], strides = [1, 1]} : vector<8x4xf32> to vector<8x1xf32>
    %206 = vector.broadcast %205 : vector<8x1xf32> to vector<8x32xf32>
    %207 = arith.mulf %204, %206 : vector<8x32xf32>
    %208 = arith.addf %201, %207 : vector<8x32xf32>
    %cst_71 = arith.constant dense<0.000000e+00> : vector<8x32xf32>
    %209 = tpu.matmul %188, %19, %cst_71 {dimension_numbers = #tpu.dot_dimension_numbers<[1], [0], [0], [1], [0, 0, 1, 1], [], []>} : vector<8x32xf32>, vector<32x32xf32>, vector<8x32xf32> -> vector<8x32xf32>
    %210 = arith.addf %209, %35 : vector<8x32xf32>
    %211 = math.tanh %210 : vector<8x32xf32>
    %212 = vector.extract_strided_slice %185 {offsets = [0, 3], sizes = [8, 1], strides = [1, 1]} : vector<8x4xf32> to vector<8x1xf32>
    %213 = vector.broadcast %212 : vector<8x1xf32> to vector<8x32xf32>
    %214 = arith.mulf %211, %213 : vector<8x32xf32>
    %215 = arith.addf %208, %214 : vector<8x32xf32>
    %216 = vector.broadcast %135 : f32 to vector<8x32xf32>
    %217 = arith.mulf %216, %215 : vector<8x32xf32>
    %218 = arith.addf %132, %217 : vector<8x32xf32>
    %cst_72 = arith.constant dense<0.000000e+00> : vector<8x4xf32>
    %219 = tpu.matmul %218, %8, %cst_72 {dimension_numbers = #tpu.dot_dimension_numbers<[1], [0], [0], [1], [0, 0, 1, 1], [], []>} : vector<8x32xf32>, vector<32x4xf32>, vector<8x4xf32> -> vector<8x4xf32>
    %220 = arith.addf %219, %11 : vector<8x4xf32>
    %c0_73 = arith.constant 0 : index
    %c0_74 = arith.constant 0 : index
    %221 = vector.load %arg25[%c0_73, %c0_74] : memref<8x16xf32, #tpu.memory_space<vmem>>, vector<8x4xf32>
    tpu.vector_store %arg25[%c0_73, %c0_74], %220 {strides = array<i32>} : memref<8x16xf32, #tpu.memory_space<vmem>>, vector<8x4xf32>,
    %c2_75 = arith.constant 2 : index
    %222 = memref.load %arg2[%c2_75] : memref<6xf32, #tpu.memory_space<smem>>
    %c3_76 = arith.constant 3 : index
    %223 = memref.load %arg2[%c3_76] : memref<6xf32, #tpu.memory_space<smem>>
    %224 = arith.subf %223, %222 : f32
    %225 = arith.subf %222, %40 : f32
    %226 = vector.broadcast %225 : f32 to vector<8x4xf32>
    %227 = arith.mulf %46, %226 : vector<8x4xf32>
    %228 = arith.addf %44, %227 : vector<8x4xf32>
    %229 = vector.broadcast %225 : f32 to vector<8x4xf32>
    %230 = arith.mulf %228, %229 : vector<8x4xf32>
    %231 = arith.addf %42, %230 : vector<8x4xf32>
    %cst_77 = arith.constant dense<0.000000e+00> : vector<8x32xf32>
    %232 = tpu.matmul %218, %4, %cst_77 {dimension_numbers = #tpu.dot_dimension_numbers<[1], [0], [0], [1], [0, 0, 1, 1], [], []>} : vector<8x32xf32>, vector<32x32xf32>, vector<8x32xf32> -> vector<8x32xf32>
    %233 = arith.addf %232, %7 : vector<8x32xf32>
    %234 = math.tanh %233 : vector<8x32xf32>
    %cst_78 = arith.constant dense<0.000000e+00> : vector<8x32xf32>
    %235 = tpu.matmul %234, %13, %cst_78 {dimension_numbers = #tpu.dot_dimension_numbers<[1], [0], [0], [1], [0, 0, 1, 1], [], []>} : vector<8x32xf32>, vector<32x32xf32>, vector<8x32xf32> -> vector<8x32xf32>
    %236 = arith.addf %235, %23 : vector<8x32xf32>
    %237 = math.tanh %236 : vector<8x32xf32>
    %238 = vector.extract_strided_slice %231 {offsets = [0, 0], sizes = [8, 1], strides = [1, 1]} : vector<8x4xf32> to vector<8x1xf32>
    %239 = vector.broadcast %238 : vector<8x1xf32> to vector<8x32xf32>
    %240 = arith.mulf %237, %239 : vector<8x32xf32>
    %cst_79 = arith.constant dense<0.000000e+00> : vector<8x32xf32>
    %241 = tpu.matmul %234, %15, %cst_79 {dimension_numbers = #tpu.dot_dimension_numbers<[1], [0], [0], [1], [0, 0, 1, 1], [], []>} : vector<8x32xf32>, vector<32x32xf32>, vector<8x32xf32> -> vector<8x32xf32>
    %242 = arith.addf %241, %27 : vector<8x32xf32>
    %243 = math.tanh %242 : vector<8x32xf32>
    %244 = vector.extract_strided_slice %231 {offsets = [0, 1], sizes = [8, 1], strides = [1, 1]} : vector<8x4xf32> to vector<8x1xf32>
    %245 = vector.broadcast %244 : vector<8x1xf32> to vector<8x32xf32>
    %246 = arith.mulf %243, %245 : vector<8x32xf32>
    %247 = arith.addf %240, %246 : vector<8x32xf32>
    %cst_80 = arith.constant dense<0.000000e+00> : vector<8x32xf32>
    %248 = tpu.matmul %234, %17, %cst_80 {dimension_numbers = #tpu.dot_dimension_numbers<[1], [0], [0], [1], [0, 0, 1, 1], [], []>} : vector<8x32xf32>, vector<32x32xf32>, vector<8x32xf32> -> vector<8x32xf32>
    %249 = arith.addf %248, %31 : vector<8x32xf32>
    %250 = math.tanh %249 : vector<8x32xf32>
    %251 = vector.extract_strided_slice %231 {offsets = [0, 2], sizes = [8, 1], strides = [1, 1]} : vector<8x4xf32> to vector<8x1xf32>
    %252 = vector.broadcast %251 : vector<8x1xf32> to vector<8x32xf32>
    %253 = arith.mulf %250, %252 : vector<8x32xf32>
    %254 = arith.addf %247, %253 : vector<8x32xf32>
    %cst_81 = arith.constant dense<0.000000e+00> : vector<8x32xf32>
    %255 = tpu.matmul %234, %19, %cst_81 {dimension_numbers = #tpu.dot_dimension_numbers<[1], [0], [0], [1], [0, 0, 1, 1], [], []>} : vector<8x32xf32>, vector<32x32xf32>, vector<8x32xf32> -> vector<8x32xf32>
    %256 = arith.addf %255, %35 : vector<8x32xf32>
    %257 = math.tanh %256 : vector<8x32xf32>
    %258 = vector.extract_strided_slice %231 {offsets = [0, 3], sizes = [8, 1], strides = [1, 1]} : vector<8x4xf32> to vector<8x1xf32>
    %259 = vector.broadcast %258 : vector<8x1xf32> to vector<8x32xf32>
    %260 = arith.mulf %257, %259 : vector<8x32xf32>
    %261 = arith.addf %254, %260 : vector<8x32xf32>
    %cst_82 = arith.constant 5.000000e-01 : f32
    %262 = arith.mulf %cst_82, %224 : f32
    %263 = vector.broadcast %262 : f32 to vector<8x32xf32>
    %264 = arith.mulf %263, %261 : vector<8x32xf32>
    %265 = arith.addf %218, %264 : vector<8x32xf32>
    %cst_83 = arith.constant 5.000000e-01 : f32
    %266 = arith.mulf %cst_83, %224 : f32
    %267 = arith.addf %222, %266 : f32
    %268 = arith.subf %267, %40 : f32
    %269 = vector.broadcast %268 : f32 to vector<8x4xf32>
    %270 = arith.mulf %46, %269 : vector<8x4xf32>
    %271 = arith.addf %44, %270 : vector<8x4xf32>
    %272 = vector.broadcast %268 : f32 to vector<8x4xf32>
    %273 = arith.mulf %271, %272 : vector<8x4xf32>
    %274 = arith.addf %42, %273 : vector<8x4xf32>
    %cst_84 = arith.constant dense<0.000000e+00> : vector<8x32xf32>
    %275 = tpu.matmul %265, %4, %cst_84 {dimension_numbers = #tpu.dot_dimension_numbers<[1], [0], [0], [1], [0, 0, 1, 1], [], []>} : vector<8x32xf32>, vector<32x32xf32>, vector<8x32xf32> -> vector<8x32xf32>
    %276 = arith.addf %275, %7 : vector<8x32xf32>
    %277 = math.tanh %276 : vector<8x32xf32>
    %cst_85 = arith.constant dense<0.000000e+00> : vector<8x32xf32>
    %278 = tpu.matmul %277, %13, %cst_85 {dimension_numbers = #tpu.dot_dimension_numbers<[1], [0], [0], [1], [0, 0, 1, 1], [], []>} : vector<8x32xf32>, vector<32x32xf32>, vector<8x32xf32> -> vector<8x32xf32>
    %279 = arith.addf %278, %23 : vector<8x32xf32>
    %280 = math.tanh %279 : vector<8x32xf32>
    %281 = vector.extract_strided_slice %274 {offsets = [0, 0], sizes = [8, 1], strides = [1, 1]} : vector<8x4xf32> to vector<8x1xf32>
    %282 = vector.broadcast %281 : vector<8x1xf32> to vector<8x32xf32>
    %283 = arith.mulf %280, %282 : vector<8x32xf32>
    %cst_86 = arith.constant dense<0.000000e+00> : vector<8x32xf32>
    %284 = tpu.matmul %277, %15, %cst_86 {dimension_numbers = #tpu.dot_dimension_numbers<[1], [0], [0], [1], [0, 0, 1, 1], [], []>} : vector<8x32xf32>, vector<32x32xf32>, vector<8x32xf32> -> vector<8x32xf32>
    %285 = arith.addf %284, %27 : vector<8x32xf32>
    %286 = math.tanh %285 : vector<8x32xf32>
    %287 = vector.extract_strided_slice %274 {offsets = [0, 1], sizes = [8, 1], strides = [1, 1]} : vector<8x4xf32> to vector<8x1xf32>
    %288 = vector.broadcast %287 : vector<8x1xf32> to vector<8x32xf32>
    %289 = arith.mulf %286, %288 : vector<8x32xf32>
    %290 = arith.addf %283, %289 : vector<8x32xf32>
    %cst_87 = arith.constant dense<0.000000e+00> : vector<8x32xf32>
    %291 = tpu.matmul %277, %17, %cst_87 {dimension_numbers = #tpu.dot_dimension_numbers<[1], [0], [0], [1], [0, 0, 1, 1], [], []>} : vector<8x32xf32>, vector<32x32xf32>, vector<8x32xf32> -> vector<8x32xf32>
    %292 = arith.addf %291, %31 : vector<8x32xf32>
    %293 = math.tanh %292 : vector<8x32xf32>
    %294 = vector.extract_strided_slice %274 {offsets = [0, 2], sizes = [8, 1], strides = [1, 1]} : vector<8x4xf32> to vector<8x1xf32>
    %295 = vector.broadcast %294 : vector<8x1xf32> to vector<8x32xf32>
    %296 = arith.mulf %293, %295 : vector<8x32xf32>
    %297 = arith.addf %290, %296 : vector<8x32xf32>
    %cst_88 = arith.constant dense<0.000000e+00> : vector<8x32xf32>
    %298 = tpu.matmul %277, %19, %cst_88 {dimension_numbers = #tpu.dot_dimension_numbers<[1], [0], [0], [1], [0, 0, 1, 1], [], []>} : vector<8x32xf32>, vector<32x32xf32>, vector<8x32xf32> -> vector<8x32xf32>
    %299 = arith.addf %298, %35 : vector<8x32xf32>
    %300 = math.tanh %299 : vector<8x32xf32>
    %301 = vector.extract_strided_slice %274 {offsets = [0, 3], sizes = [8, 1], strides = [1, 1]} : vector<8x4xf32> to vector<8x1xf32>
    %302 = vector.broadcast %301 : vector<8x1xf32> to vector<8x32xf32>
    %303 = arith.mulf %300, %302 : vector<8x32xf32>
    %304 = arith.addf %297, %303 : vector<8x32xf32>
    %305 = vector.broadcast %224 : f32 to vector<8x32xf32>
    %306 = arith.mulf %305, %304 : vector<8x32xf32>
    %307 = arith.addf %218, %306 : vector<8x32xf32>
    %cst_89 = arith.constant dense<0.000000e+00> : vector<8x4xf32>
    %308 = tpu.matmul %307, %8, %cst_89 {dimension_numbers = #tpu.dot_dimension_numbers<[1], [0], [0], [1], [0, 0, 1, 1], [], []>} : vector<8x32xf32>, vector<32x4xf32>, vector<8x4xf32> -> vector<8x4xf32>
    %309 = arith.addf %308, %11 : vector<8x4xf32>
    %c0_90 = arith.constant 0 : index
    %c4 = arith.constant 4 : index
    %310 = vector.load %arg25[%c0_90, %c4] : memref<8x16xf32, #tpu.memory_space<vmem>>, vector<8x4xf32>
    tpu.vector_store %arg25[%c0_90, %c4], %309 {strides = array<i32>} : memref<8x16xf32, #tpu.memory_space<vmem>>, vector<8x4xf32>,
    %c3_91 = arith.constant 3 : index
    %311 = memref.load %arg2[%c3_91] : memref<6xf32, #tpu.memory_space<smem>>
    %c4_92 = arith.constant 4 : index
    %312 = memref.load %arg2[%c4_92] : memref<6xf32, #tpu.memory_space<smem>>
    %313 = arith.subf %312, %311 : f32
    %314 = arith.subf %311, %40 : f32
    %315 = vector.broadcast %314 : f32 to vector<8x4xf32>
    %316 = arith.mulf %46, %315 : vector<8x4xf32>
    %317 = arith.addf %44, %316 : vector<8x4xf32>
    %318 = vector.broadcast %314 : f32 to vector<8x4xf32>
    %319 = arith.mulf %317, %318 : vector<8x4xf32>
    %320 = arith.addf %42, %319 : vector<8x4xf32>
    %cst_93 = arith.constant dense<0.000000e+00> : vector<8x32xf32>
    %321 = tpu.matmul %307, %4, %cst_93 {dimension_numbers = #tpu.dot_dimension_numbers<[1], [0], [0], [1], [0, 0, 1, 1], [], []>} : vector<8x32xf32>, vector<32x32xf32>, vector<8x32xf32> -> vector<8x32xf32>
    %322 = arith.addf %321, %7 : vector<8x32xf32>
    %323 = math.tanh %322 : vector<8x32xf32>
    %cst_94 = arith.constant dense<0.000000e+00> : vector<8x32xf32>
    %324 = tpu.matmul %323, %13, %cst_94 {dimension_numbers = #tpu.dot_dimension_numbers<[1], [0], [0], [1], [0, 0, 1, 1], [], []>} : vector<8x32xf32>, vector<32x32xf32>, vector<8x32xf32> -> vector<8x32xf32>
    %325 = arith.addf %324, %23 : vector<8x32xf32>
    %326 = math.tanh %325 : vector<8x32xf32>
    %327 = vector.extract_strided_slice %320 {offsets = [0, 0], sizes = [8, 1], strides = [1, 1]} : vector<8x4xf32> to vector<8x1xf32>
    %328 = vector.broadcast %327 : vector<8x1xf32> to vector<8x32xf32>
    %329 = arith.mulf %326, %328 : vector<8x32xf32>
    %cst_95 = arith.constant dense<0.000000e+00> : vector<8x32xf32>
    %330 = tpu.matmul %323, %15, %cst_95 {dimension_numbers = #tpu.dot_dimension_numbers<[1], [0], [0], [1], [0, 0, 1, 1], [], []>} : vector<8x32xf32>, vector<32x32xf32>, vector<8x32xf32> -> vector<8x32xf32>
    %331 = arith.addf %330, %27 : vector<8x32xf32>
    %332 = math.tanh %331 : vector<8x32xf32>
    %333 = vector.extract_strided_slice %320 {offsets = [0, 1], sizes = [8, 1], strides = [1, 1]} : vector<8x4xf32> to vector<8x1xf32>
    %334 = vector.broadcast %333 : vector<8x1xf32> to vector<8x32xf32>
    %335 = arith.mulf %332, %334 : vector<8x32xf32>
    %336 = arith.addf %329, %335 : vector<8x32xf32>
    %cst_96 = arith.constant dense<0.000000e+00> : vector<8x32xf32>
    %337 = tpu.matmul %323, %17, %cst_96 {dimension_numbers = #tpu.dot_dimension_numbers<[1], [0], [0], [1], [0, 0, 1, 1], [], []>} : vector<8x32xf32>, vector<32x32xf32>, vector<8x32xf32> -> vector<8x32xf32>
    %338 = arith.addf %337, %31 : vector<8x32xf32>
    %339 = math.tanh %338 : vector<8x32xf32>
    %340 = vector.extract_strided_slice %320 {offsets = [0, 2], sizes = [8, 1], strides = [1, 1]} : vector<8x4xf32> to vector<8x1xf32>
    %341 = vector.broadcast %340 : vector<8x1xf32> to vector<8x32xf32>
    %342 = arith.mulf %339, %341 : vector<8x32xf32>
    %343 = arith.addf %336, %342 : vector<8x32xf32>
    %cst_97 = arith.constant dense<0.000000e+00> : vector<8x32xf32>
    %344 = tpu.matmul %323, %19, %cst_97 {dimension_numbers = #tpu.dot_dimension_numbers<[1], [0], [0], [1], [0, 0, 1, 1], [], []>} : vector<8x32xf32>, vector<32x32xf32>, vector<8x32xf32> -> vector<8x32xf32>
    %345 = arith.addf %344, %35 : vector<8x32xf32>
    %346 = math.tanh %345 : vector<8x32xf32>
    %347 = vector.extract_strided_slice %320 {offsets = [0, 3], sizes = [8, 1], strides = [1, 1]} : vector<8x4xf32> to vector<8x1xf32>
    %348 = vector.broadcast %347 : vector<8x1xf32> to vector<8x32xf32>
    %349 = arith.mulf %346, %348 : vector<8x32xf32>
    %350 = arith.addf %343, %349 : vector<8x32xf32>
    %cst_98 = arith.constant 5.000000e-01 : f32
    %351 = arith.mulf %cst_98, %313 : f32
    %352 = vector.broadcast %351 : f32 to vector<8x32xf32>
    %353 = arith.mulf %352, %350 : vector<8x32xf32>
    %354 = arith.addf %307, %353 : vector<8x32xf32>
    %cst_99 = arith.constant 5.000000e-01 : f32
    %355 = arith.mulf %cst_99, %313 : f32
    %356 = arith.addf %311, %355 : f32
    %357 = arith.subf %356, %40 : f32
    %358 = vector.broadcast %357 : f32 to vector<8x4xf32>
    %359 = arith.mulf %46, %358 : vector<8x4xf32>
    %360 = arith.addf %44, %359 : vector<8x4xf32>
    %361 = vector.broadcast %357 : f32 to vector<8x4xf32>
    %362 = arith.mulf %360, %361 : vector<8x4xf32>
    %363 = arith.addf %42, %362 : vector<8x4xf32>
    %cst_100 = arith.constant dense<0.000000e+00> : vector<8x32xf32>
    %364 = tpu.matmul %354, %4, %cst_100 {dimension_numbers = #tpu.dot_dimension_numbers<[1], [0], [0], [1], [0, 0, 1, 1], [], []>} : vector<8x32xf32>, vector<32x32xf32>, vector<8x32xf32> -> vector<8x32xf32>
    %365 = arith.addf %364, %7 : vector<8x32xf32>
    %366 = math.tanh %365 : vector<8x32xf32>
    %cst_101 = arith.constant dense<0.000000e+00> : vector<8x32xf32>
    %367 = tpu.matmul %366, %13, %cst_101 {dimension_numbers = #tpu.dot_dimension_numbers<[1], [0], [0], [1], [0, 0, 1, 1], [], []>} : vector<8x32xf32>, vector<32x32xf32>, vector<8x32xf32> -> vector<8x32xf32>
    %368 = arith.addf %367, %23 : vector<8x32xf32>
    %369 = math.tanh %368 : vector<8x32xf32>
    %370 = vector.extract_strided_slice %363 {offsets = [0, 0], sizes = [8, 1], strides = [1, 1]} : vector<8x4xf32> to vector<8x1xf32>
    %371 = vector.broadcast %370 : vector<8x1xf32> to vector<8x32xf32>
    %372 = arith.mulf %369, %371 : vector<8x32xf32>
    %cst_102 = arith.constant dense<0.000000e+00> : vector<8x32xf32>
    %373 = tpu.matmul %366, %15, %cst_102 {dimension_numbers = #tpu.dot_dimension_numbers<[1], [0], [0], [1], [0, 0, 1, 1], [], []>} : vector<8x32xf32>, vector<32x32xf32>, vector<8x32xf32> -> vector<8x32xf32>
    %374 = arith.addf %373, %27 : vector<8x32xf32>
    %375 = math.tanh %374 : vector<8x32xf32>
    %376 = vector.extract_strided_slice %363 {offsets = [0, 1], sizes = [8, 1], strides = [1, 1]} : vector<8x4xf32> to vector<8x1xf32>
    %377 = vector.broadcast %376 : vector<8x1xf32> to vector<8x32xf32>
    %378 = arith.mulf %375, %377 : vector<8x32xf32>
    %379 = arith.addf %372, %378 : vector<8x32xf32>
    %cst_103 = arith.constant dense<0.000000e+00> : vector<8x32xf32>
    %380 = tpu.matmul %366, %17, %cst_103 {dimension_numbers = #tpu.dot_dimension_numbers<[1], [0], [0], [1], [0, 0, 1, 1], [], []>} : vector<8x32xf32>, vector<32x32xf32>, vector<8x32xf32> -> vector<8x32xf32>
    %381 = arith.addf %380, %31 : vector<8x32xf32>
    %382 = math.tanh %381 : vector<8x32xf32>
    %383 = vector.extract_strided_slice %363 {offsets = [0, 2], sizes = [8, 1], strides = [1, 1]} : vector<8x4xf32> to vector<8x1xf32>
    %384 = vector.broadcast %383 : vector<8x1xf32> to vector<8x32xf32>
    %385 = arith.mulf %382, %384 : vector<8x32xf32>
    %386 = arith.addf %379, %385 : vector<8x32xf32>
    %cst_104 = arith.constant dense<0.000000e+00> : vector<8x32xf32>
    %387 = tpu.matmul %366, %19, %cst_104 {dimension_numbers = #tpu.dot_dimension_numbers<[1], [0], [0], [1], [0, 0, 1, 1], [], []>} : vector<8x32xf32>, vector<32x32xf32>, vector<8x32xf32> -> vector<8x32xf32>
    %388 = arith.addf %387, %35 : vector<8x32xf32>
    %389 = math.tanh %388 : vector<8x32xf32>
    %390 = vector.extract_strided_slice %363 {offsets = [0, 3], sizes = [8, 1], strides = [1, 1]} : vector<8x4xf32> to vector<8x1xf32>
    %391 = vector.broadcast %390 : vector<8x1xf32> to vector<8x32xf32>
    %392 = arith.mulf %389, %391 : vector<8x32xf32>
    %393 = arith.addf %386, %392 : vector<8x32xf32>
    %394 = vector.broadcast %313 : f32 to vector<8x32xf32>
    %395 = arith.mulf %394, %393 : vector<8x32xf32>
    %396 = arith.addf %307, %395 : vector<8x32xf32>
    %cst_105 = arith.constant dense<0.000000e+00> : vector<8x4xf32>
    %397 = tpu.matmul %396, %8, %cst_105 {dimension_numbers = #tpu.dot_dimension_numbers<[1], [0], [0], [1], [0, 0, 1, 1], [], []>} : vector<8x32xf32>, vector<32x4xf32>, vector<8x4xf32> -> vector<8x4xf32>
    %398 = arith.addf %397, %11 : vector<8x4xf32>
    %c0_106 = arith.constant 0 : index
    %c8 = arith.constant 8 : index
    %399 = vector.load %arg25[%c0_106, %c8] : memref<8x16xf32, #tpu.memory_space<vmem>>, vector<8x4xf32>
    tpu.vector_store %arg25[%c0_106, %c8], %398 {strides = array<i32>} : memref<8x16xf32, #tpu.memory_space<vmem>>, vector<8x4xf32>,
    %c4_107 = arith.constant 4 : index
    %400 = memref.load %arg2[%c4_107] : memref<6xf32, #tpu.memory_space<smem>>
    %c5 = arith.constant 5 : index
    %401 = memref.load %arg2[%c5] : memref<6xf32, #tpu.memory_space<smem>>
    %402 = arith.subf %401, %400 : f32
    %403 = arith.subf %400, %40 : f32
    %404 = vector.broadcast %403 : f32 to vector<8x4xf32>
    %405 = arith.mulf %46, %404 : vector<8x4xf32>
    %406 = arith.addf %44, %405 : vector<8x4xf32>
    %407 = vector.broadcast %403 : f32 to vector<8x4xf32>
    %408 = arith.mulf %406, %407 : vector<8x4xf32>
    %409 = arith.addf %42, %408 : vector<8x4xf32>
    %cst_108 = arith.constant dense<0.000000e+00> : vector<8x32xf32>
    %410 = tpu.matmul %396, %4, %cst_108 {dimension_numbers = #tpu.dot_dimension_numbers<[1], [0], [0], [1], [0, 0, 1, 1], [], []>} : vector<8x32xf32>, vector<32x32xf32>, vector<8x32xf32> -> vector<8x32xf32>
    %411 = arith.addf %410, %7 : vector<8x32xf32>
    %412 = math.tanh %411 : vector<8x32xf32>
    %cst_109 = arith.constant dense<0.000000e+00> : vector<8x32xf32>
    %413 = tpu.matmul %412, %13, %cst_109 {dimension_numbers = #tpu.dot_dimension_numbers<[1], [0], [0], [1], [0, 0, 1, 1], [], []>} : vector<8x32xf32>, vector<32x32xf32>, vector<8x32xf32> -> vector<8x32xf32>
    %414 = arith.addf %413, %23 : vector<8x32xf32>
    %415 = math.tanh %414 : vector<8x32xf32>
    %416 = vector.extract_strided_slice %409 {offsets = [0, 0], sizes = [8, 1], strides = [1, 1]} : vector<8x4xf32> to vector<8x1xf32>
    %417 = vector.broadcast %416 : vector<8x1xf32> to vector<8x32xf32>
    %418 = arith.mulf %415, %417 : vector<8x32xf32>
    %cst_110 = arith.constant dense<0.000000e+00> : vector<8x32xf32>
    %419 = tpu.matmul %412, %15, %cst_110 {dimension_numbers = #tpu.dot_dimension_numbers<[1], [0], [0], [1], [0, 0, 1, 1], [], []>} : vector<8x32xf32>, vector<32x32xf32>, vector<8x32xf32> -> vector<8x32xf32>
    %420 = arith.addf %419, %27 : vector<8x32xf32>
    %421 = math.tanh %420 : vector<8x32xf32>
    %422 = vector.extract_strided_slice %409 {offsets = [0, 1], sizes = [8, 1], strides = [1, 1]} : vector<8x4xf32> to vector<8x1xf32>
    %423 = vector.broadcast %422 : vector<8x1xf32> to vector<8x32xf32>
    %424 = arith.mulf %421, %423 : vector<8x32xf32>
    %425 = arith.addf %418, %424 : vector<8x32xf32>
    %cst_111 = arith.constant dense<0.000000e+00> : vector<8x32xf32>
    %426 = tpu.matmul %412, %17, %cst_111 {dimension_numbers = #tpu.dot_dimension_numbers<[1], [0], [0], [1], [0, 0, 1, 1], [], []>} : vector<8x32xf32>, vector<32x32xf32>, vector<8x32xf32> -> vector<8x32xf32>
    %427 = arith.addf %426, %31 : vector<8x32xf32>
    %428 = math.tanh %427 : vector<8x32xf32>
    %429 = vector.extract_strided_slice %409 {offsets = [0, 2], sizes = [8, 1], strides = [1, 1]} : vector<8x4xf32> to vector<8x1xf32>
    %430 = vector.broadcast %429 : vector<8x1xf32> to vector<8x32xf32>
    %431 = arith.mulf %428, %430 : vector<8x32xf32>
    %432 = arith.addf %425, %431 : vector<8x32xf32>
    %cst_112 = arith.constant dense<0.000000e+00> : vector<8x32xf32>
    %433 = tpu.matmul %412, %19, %cst_112 {dimension_numbers = #tpu.dot_dimension_numbers<[1], [0], [0], [1], [0, 0, 1, 1], [], []>} : vector<8x32xf32>, vector<32x32xf32>, vector<8x32xf32> -> vector<8x32xf32>
    %434 = arith.addf %433, %35 : vector<8x32xf32>
    %435 = math.tanh %434 : vector<8x32xf32>
    %436 = vector.extract_strided_slice %409 {offsets = [0, 3], sizes = [8, 1], strides = [1, 1]} : vector<8x4xf32> to vector<8x1xf32>
    %437 = vector.broadcast %436 : vector<8x1xf32> to vector<8x32xf32>
    %438 = arith.mulf %435, %437 : vector<8x32xf32>
    %439 = arith.addf %432, %438 : vector<8x32xf32>
    %cst_113 = arith.constant 5.000000e-01 : f32
    %440 = arith.mulf %cst_113, %402 : f32
    %441 = vector.broadcast %440 : f32 to vector<8x32xf32>
    %442 = arith.mulf %441, %439 : vector<8x32xf32>
    %443 = arith.addf %396, %442 : vector<8x32xf32>
    %cst_114 = arith.constant 5.000000e-01 : f32
    %444 = arith.mulf %cst_114, %402 : f32
    %445 = arith.addf %400, %444 : f32
    %446 = arith.subf %445, %40 : f32
    %447 = vector.broadcast %446 : f32 to vector<8x4xf32>
    %448 = arith.mulf %46, %447 : vector<8x4xf32>
    %449 = arith.addf %44, %448 : vector<8x4xf32>
    %450 = vector.broadcast %446 : f32 to vector<8x4xf32>
    %451 = arith.mulf %449, %450 : vector<8x4xf32>
    %452 = arith.addf %42, %451 : vector<8x4xf32>
    %cst_115 = arith.constant dense<0.000000e+00> : vector<8x32xf32>
    %453 = tpu.matmul %443, %4, %cst_115 {dimension_numbers = #tpu.dot_dimension_numbers<[1], [0], [0], [1], [0, 0, 1, 1], [], []>} : vector<8x32xf32>, vector<32x32xf32>, vector<8x32xf32> -> vector<8x32xf32>
    %454 = arith.addf %453, %7 : vector<8x32xf32>
    %455 = math.tanh %454 : vector<8x32xf32>
    %cst_116 = arith.constant dense<0.000000e+00> : vector<8x32xf32>
    %456 = tpu.matmul %455, %13, %cst_116 {dimension_numbers = #tpu.dot_dimension_numbers<[1], [0], [0], [1], [0, 0, 1, 1], [], []>} : vector<8x32xf32>, vector<32x32xf32>, vector<8x32xf32> -> vector<8x32xf32>
    %457 = arith.addf %456, %23 : vector<8x32xf32>
    %458 = math.tanh %457 : vector<8x32xf32>
    %459 = vector.extract_strided_slice %452 {offsets = [0, 0], sizes = [8, 1], strides = [1, 1]} : vector<8x4xf32> to vector<8x1xf32>
    %460 = vector.broadcast %459 : vector<8x1xf32> to vector<8x32xf32>
    %461 = arith.mulf %458, %460 : vector<8x32xf32>
    %cst_117 = arith.constant dense<0.000000e+00> : vector<8x32xf32>
    %462 = tpu.matmul %455, %15, %cst_117 {dimension_numbers = #tpu.dot_dimension_numbers<[1], [0], [0], [1], [0, 0, 1, 1], [], []>} : vector<8x32xf32>, vector<32x32xf32>, vector<8x32xf32> -> vector<8x32xf32>
    %463 = arith.addf %462, %27 : vector<8x32xf32>
    %464 = math.tanh %463 : vector<8x32xf32>
    %465 = vector.extract_strided_slice %452 {offsets = [0, 1], sizes = [8, 1], strides = [1, 1]} : vector<8x4xf32> to vector<8x1xf32>
    %466 = vector.broadcast %465 : vector<8x1xf32> to vector<8x32xf32>
    %467 = arith.mulf %464, %466 : vector<8x32xf32>
    %468 = arith.addf %461, %467 : vector<8x32xf32>
    %cst_118 = arith.constant dense<0.000000e+00> : vector<8x32xf32>
    %469 = tpu.matmul %455, %17, %cst_118 {dimension_numbers = #tpu.dot_dimension_numbers<[1], [0], [0], [1], [0, 0, 1, 1], [], []>} : vector<8x32xf32>, vector<32x32xf32>, vector<8x32xf32> -> vector<8x32xf32>
    %470 = arith.addf %469, %31 : vector<8x32xf32>
    %471 = math.tanh %470 : vector<8x32xf32>
    %472 = vector.extract_strided_slice %452 {offsets = [0, 2], sizes = [8, 1], strides = [1, 1]} : vector<8x4xf32> to vector<8x1xf32>
    %473 = vector.broadcast %472 : vector<8x1xf32> to vector<8x32xf32>
    %474 = arith.mulf %471, %473 : vector<8x32xf32>
    %475 = arith.addf %468, %474 : vector<8x32xf32>
    %cst_119 = arith.constant dense<0.000000e+00> : vector<8x32xf32>
    %476 = tpu.matmul %455, %19, %cst_119 {dimension_numbers = #tpu.dot_dimension_numbers<[1], [0], [0], [1], [0, 0, 1, 1], [], []>} : vector<8x32xf32>, vector<32x32xf32>, vector<8x32xf32> -> vector<8x32xf32>
    %477 = arith.addf %476, %35 : vector<8x32xf32>
    %478 = math.tanh %477 : vector<8x32xf32>
    %479 = vector.extract_strided_slice %452 {offsets = [0, 3], sizes = [8, 1], strides = [1, 1]} : vector<8x4xf32> to vector<8x1xf32>
    %480 = vector.broadcast %479 : vector<8x1xf32> to vector<8x32xf32>
    %481 = arith.mulf %478, %480 : vector<8x32xf32>
    %482 = arith.addf %475, %481 : vector<8x32xf32>
    %483 = vector.broadcast %402 : f32 to vector<8x32xf32>
    %484 = arith.mulf %483, %482 : vector<8x32xf32>
    %485 = arith.addf %396, %484 : vector<8x32xf32>
    %cst_120 = arith.constant dense<0.000000e+00> : vector<8x4xf32>
    %486 = tpu.matmul %485, %8, %cst_120 {dimension_numbers = #tpu.dot_dimension_numbers<[1], [0], [0], [1], [0, 0, 1, 1], [], []>} : vector<8x32xf32>, vector<32x4xf32>, vector<8x4xf32> -> vector<8x4xf32>
    %487 = arith.addf %486, %11 : vector<8x4xf32>
    %c0_121 = arith.constant 0 : index
    %c12 = arith.constant 12 : index
    %488 = vector.load %arg25[%c0_121, %c12] : memref<8x16xf32, #tpu.memory_space<vmem>>, vector<8x4xf32>
    tpu.vector_store %arg25[%c0_121, %c12], %487 {strides = array<i32>} : memref<8x16xf32, #tpu.memory_space<vmem>>, vector<8x4xf32>,
    return
  }
  func.func @transform_0(%arg0: i32) -> i32 {
    %c0_i32 = arith.constant 0 : i32
    %c0_i32_0 = arith.constant 0 : i32
    return %c0_i32 : i32
  }
  func.func @transform_1(%arg0: i32) -> i32 {
    %c0_i32 = arith.constant 0 : i32
    %c0_i32_0 = arith.constant 0 : i32
    return %c0_i32 : i32
  }
  func.func @transform_2(%arg0: i32) -> (i32, i32, i32) {
    %c0_i32 = arith.constant 0 : i32
    %c0_i32_0 = arith.constant 0 : i32
    %c0_i32_1 = arith.constant 0 : i32
    %c0_i32_2 = arith.constant 0 : i32
    return %c0_i32, %c0_i32_0, %c0_i32_1 : i32, i32, i32
  }
  func.func @transform_3(%arg0: i32) -> (i32, i32, i32) {
    %c0_i32 = arith.constant 0 : i32
    %c0_i32_0 = arith.constant 0 : i32
    %c0_i32_1 = arith.constant 0 : i32
    %c0_i32_2 = arith.constant 0 : i32
    return %c0_i32, %c0_i32_0, %c0_i32_1 : i32, i32, i32
  }
  func.func @transform_4(%arg0: i32) -> (i32, i32, i32) {
    %c0_i32 = arith.constant 0 : i32
    %c0_i32_0 = arith.constant 0 : i32
    %c0_i32_1 = arith.constant 0 : i32
    %c0_i32_2 = arith.constant 0 : i32
    return %c0_i32, %c0_i32_0, %c0_i32_1 : i32, i32, i32
  }
  func.func @transform_5(%arg0: i32) -> (i32, i32, i32) {
    %c0_i32 = arith.constant 0 : i32
    %c0_i32_0 = arith.constant 0 : i32
    %c0_i32_1 = arith.constant 0 : i32
    %c0_i32_2 = arith.constant 0 : i32
    return %c0_i32, %c0_i32_0, %c0_i32_1 : i32, i32, i32
  }
  func.func @transform_6(%arg0: i32) -> (i32, i32) {
    %c0_i32 = arith.constant 0 : i32
    %c0_i32_0 = arith.constant 0 : i32
    %c0_i32_1 = arith.constant 0 : i32
    return %c0_i32, %c0_i32_0 : i32, i32
  }
  func.func @transform_7(%arg0: i32) -> (i32, i32) {
    %c0_i32 = arith.constant 0 : i32
    %c0_i32_0 = arith.constant 0 : i32
    %c0_i32_1 = arith.constant 0 : i32
    return %c0_i32, %c0_i32_0 : i32, i32
  }
  func.func @transform_8(%arg0: i32) -> (i32, i32) {
    %c0_i32 = arith.constant 0 : i32
    %c0_i32_0 = arith.constant 0 : i32
    %c0_i32_1 = arith.constant 0 : i32
    return %c0_i32, %c0_i32_0 : i32, i32
  }
  func.func @transform_9(%arg0: i32) -> (i32, i32) {
    %c0_i32 = arith.constant 0 : i32
    %c0_i32_0 = arith.constant 0 : i32
    %c0_i32_1 = arith.constant 0 : i32
    return %c0_i32, %c0_i32_0 : i32, i32
  }
  func.func @transform_10(%arg0: i32) -> (i32, i32) {
    %c0_i32 = arith.constant 0 : i32
    %c0_i32_0 = arith.constant 0 : i32
    %c0_i32_1 = arith.constant 0 : i32
    return %c0_i32, %c0_i32_0 : i32, i32
  }
  func.func @transform_11(%arg0: i32) -> (i32, i32) {
    %c0_i32 = arith.constant 0 : i32
    %c0_i32_0 = arith.constant 0 : i32
    %c0_i32_1 = arith.constant 0 : i32
    return %c0_i32, %c0_i32_0 : i32, i32
  }
  func.func @transform_12(%arg0: i32) -> (i32, i32, i32) {
    %c0_i32 = arith.constant 0 : i32
    %c0_i32_0 = arith.constant 0 : i32
    %c0_i32_1 = arith.constant 0 : i32
    %c0_i32_2 = arith.constant 0 : i32
    return %c0_i32, %c0_i32_0, %c0_i32_1 : i32, i32, i32
  }
  func.func @transform_13(%arg0: i32) -> (i32, i32, i32) {
    %c0_i32 = arith.constant 0 : i32
    %c0_i32_0 = arith.constant 0 : i32
    %c0_i32_1 = arith.constant 0 : i32
    %c0_i32_2 = arith.constant 0 : i32
    return %c0_i32, %c0_i32_0, %c0_i32_1 : i32, i32, i32
  }
  func.func @transform_14(%arg0: i32) -> (i32, i32) {
    %c0_i32 = arith.constant 0 : i32
    %c0_i32_0 = arith.constant 0 : i32
    %c0_i32_1 = arith.constant 0 : i32
    return %c0_i32, %c0_i32_0 : i32, i32
  }
  func.func @transform_15(%arg0: i32) -> (i32, i32) {
    %c0_i32 = arith.constant 0 : i32
    %c0_i32_0 = arith.constant 0 : i32
    %c0_i32_1 = arith.constant 0 : i32
    return %c0_i32, %c0_i32_0 : i32, i32
  }
  func.func @transform_16(%arg0: i32) -> (i32, i32) {
    %c0_i32 = arith.constant 0 : i32
    %c0_i32_0 = arith.constant 0 : i32
    %c0_i32_1 = arith.constant 0 : i32
    return %c0_i32, %c0_i32_0 : i32, i32
  }
  func.func @transform_17(%arg0: i32) -> (i32, i32) {
    %c0_i32 = arith.constant 0 : i32
    %c0_i32_0 = arith.constant 0 : i32
    %c0_i32_1 = arith.constant 0 : i32
    return %c0_i32, %c0_i32_0 : i32, i32
  }
  func.func @transform_18(%arg0: i32) -> (i32, i32) {
    %c0_i32 = arith.constant 0 : i32
    %c0_i32_0 = arith.constant 0 : i32
    %c0_i32_1 = arith.constant 0 : i32
    return %c0_i32, %c0_i32_0 : i32, i32
  }
  func.func @transform_19(%arg0: i32) -> (i32, i32) {
    %c0_i32 = arith.constant 0 : i32
    %c0_i32_0 = arith.constant 0 : i32
    %c0_i32_1 = arith.constant 0 : i32
    return %c0_i32, %c0_i32_0 : i32, i32
  }
  func.func @transform_20(%arg0: i32) -> (i32, i32, i32) {
    %c0_i32 = arith.constant 0 : i32
    %c0_i32_0 = arith.constant 0 : i32
    %c0_i32_1 = arith.constant 0 : i32
    %c0_i32_2 = arith.constant 0 : i32
    return %c0_i32, %c0_i32_0, %c0_i32_1 : i32, i32, i32
  }
  func.func @transform_21(%arg0: i32) -> (i32, i32, i32) {
    %c0_i32 = arith.constant 0 : i32
    %c0_i32_0 = arith.constant 0 : i32
    %c0_i32_1 = arith.constant 0 : i32
    %c0_i32_2 = arith.constant 0 : i32
    return %c0_i32, %c0_i32_0, %c0_i32_1 : i32, i32, i32
  }
  func.func @transform_22(%arg0: i32) -> (i32, i32) {
    %c0_i32 = arith.constant 0 : i32
    %c0_i32_0 = arith.constant 0 : i32
    %c0_i32_1 = arith.constant 0 : i32
    return %c0_i32, %c0_i32_0 : i32, i32
  }
  func.func @transform_23(%arg0: i32) -> (i32, i32) {
    %c0_i32 = arith.constant 0 : i32
    %c0_i32_0 = arith.constant 0 : i32
    %c0_i32_1 = arith.constant 0 : i32
    return %c0_i32, %c0_i32_0 : i32, i32
  }
  func.func @transform_24(%arg0: i32) -> (i32, i32) {
    %c0_i32 = arith.constant 0 : i32
    %c0_i32_0 = arith.constant 0 : i32
    %c0_i32_1 = arith.constant 0 : i32
    return %c0_i32, %c0_i32_0 : i32, i32
  }
}

</mosaic_0001>

<llo_original>
// kernel: neural_cde_idea4_forecasting.1
$region0: #{neural_cde_idea4_forecasting.1}
  #allocation0 [shape = 'u32[]', space=smem, size = 0x4, offset = 0x4, fixed_abs, tag = 'smem constant byte address 0x4 - core index']
  #allocation1 [shape = 'u32[144,128]{1,0:T(1,128)}', space=vmem, size = 0x12000, scoped, tag = 'internal scratch']
  %s0 = inlined_call_operand.vmem [shape: f32[8], index: 0, kind: input, shape index: {}]
  %s1 = inlined_call_operand.vmem [shape: f32[6], index: 1, kind: input, shape index: {}]
  %s2 = inlined_call_operand.vmem [shape: f32[8,7,4], index: 2, kind: input, shape index: {}]
  %s3 = inlined_call_operand.vmem [shape: f32[8,7,4], index: 3, kind: input, shape index: {}]
  %s4 = inlined_call_operand.vmem [shape: f32[8,7,4], index: 4, kind: input, shape index: {}]
  %s5 = inlined_call_operand.vmem [shape: f32[8,7,4], index: 5, kind: input, shape index: {}]
  %s6 = inlined_call_operand.vmem [shape: f32[4,32], index: 6, kind: input, shape index: {}]
  %s7 = inlined_call_operand.vmem [shape: f32[1,32], index: 7, kind: input, shape index: {}]
  %s8 = inlined_call_operand.vmem [shape: f32[32,32], index: 8, kind: input, shape index: {}]
  %s9 = inlined_call_operand.vmem [shape: f32[1,32], index: 9, kind: input, shape index: {}]
  %s10 = inlined_call_operand.vmem [shape: f32[32,32], index: 10, kind: input, shape index: {}]
  %s11 = inlined_call_operand.vmem [shape: f32[1,32], index: 11, kind: input, shape index: {}]
  %s12 = inlined_call_operand.vmem [shape: f32[4,32,32], index: 12, kind: input, shape index: {}]
  %s13 = inlined_call_operand.vmem [shape: f32[4,1,32], index: 13, kind: input, shape index: {}]
  %s14 = inlined_call_operand.vmem [shape: f32[32,32], index: 14, kind: input, shape index: {}]
  %s15 = inlined_call_operand.vmem [shape: f32[1,32], index: 15, kind: input, shape index: {}]
  %s16 = inlined_call_operand.vmem [shape: f32[32,32], index: 16, kind: input, shape index: {}]
  %s17 = inlined_call_operand.vmem [shape: f32[1,32], index: 17, kind: input, shape index: {}]
  %s18 = inlined_call_operand.vmem [shape: f32[32,32], index: 18, kind: input, shape index: {}]
  %s19 = inlined_call_operand.vmem [shape: f32[1,32], index: 19, kind: input, shape index: {}]
  %s20 = inlined_call_operand.vmem [shape: f32[4,32,32], index: 20, kind: input, shape index: {}]
  %s21 = inlined_call_operand.vmem [shape: f32[4,1,32], index: 21, kind: input, shape index: {}]
  %s22 = inlined_call_operand.vmem [shape: f32[32,4], index: 22, kind: input, shape index: {}]
  %s23 = inlined_call_operand.vmem [shape: f32[1,4], index: 23, kind: input, shape index: {}]
  %s24 = inlined_call_operand.vmem [shape: f32[8,16], index: 24, kind: output, shape index: {}]
  %s25 = sld [smem:[#allocation0]]
  $region114: #{neural_cde_idea4_forecasting.1} parent=0
    _
  %s27 = ssub.s32 1, %s25
  %s28 = scalar_select 0, %s27, %s25
  $region1: #{neural_cde_idea4_forecasting.1} parent=0
    #allocation2 [shape = 'u8[512]{0}', space=smem, size = 0x200, scoped, tag = 'input window, operand 0, single buffered']
    #allocation3 [shape = 's32[1]{0}', space=sflag, size = 0x4, scoped, tag = 'scoped memory for neural_cde_idea4_forecasting.1']
    #allocation4 [shape = 'u8[512]{0}', space=smem, size = 0x200, scoped, tag = 'input window, operand 1, single buffered']
    #allocation5 [shape = 's32[1]{0}', space=sflag, size = 0x4, scoped, tag = 'scoped memory for neural_cde_idea4_forecasting.1']
    %29 = vsyncpa [#allocation3], 0
    %30 = vsyncpa [#allocation5], 0
    // Predicated region
    $region2: #{neural_cde_idea4_forecasting.1} parent=1 // pred_check
      _
    $region3: #{neural_cde_idea4_forecasting.1} parent=1 // pred_check_branch
      %32 = sbr.rel (0) target = $region5
    $region4: #{neural_cde_idea4_forecasting.1} parent=1 // pred_region
      %s34 = ssub.s32 16, 16
      %35 = vsyncadd [#allocation3], %s34
      %s37 = sshll.u32 %s0, 4
      %s38 = int_to_ptr.vmem [resolvable:$true] %s37
      %40 = dma.vmem_to_smem %s38, 16, [#allocation2], [#allocation3]
    $region5: #{neural_cde_idea4_forecasting.1} parent=1 // pred_fallthru
      _
    // Predicated region
    $region6: #{neural_cde_idea4_forecasting.1} parent=1 // pred_check
      _
    $region7: #{neural_cde_idea4_forecasting.1} parent=1 // pred_check_branch
      %42 = sbr.rel (0) target = $region9
    $region8: #{neural_cde_idea4_forecasting.1} parent=1 // pred_region
      %s44 = ssub.s32 16, 16
      %45 = vsyncadd [#allocation5], %s44
      %s47 = sshll.u32 %s1, 4
      %s48 = int_to_ptr.vmem [resolvable:$true] %s47
      %50 = dma.vmem_to_smem %s48, 16, [#allocation4], [#allocation5]
    $region9: #{neural_cde_idea4_forecasting.1} parent=1 // pred_fallthru
      _
    // Predicated region
    $region10: #{neural_cde_idea4_forecasting.1} parent=1 // pred_check
      _
    $region11: #{neural_cde_idea4_forecasting.1} parent=1 // pred_check_branch
      %52 = sbr.rel (0) target = $region13
    $region12: #{neural_cde_idea4_forecasting.1} parent=1 // pred_region
      _
    $region13: #{neural_cde_idea4_forecasting.1} parent=1 // pred_fallthru
      _
    // Predicated region
    $region14: #{neural_cde_idea4_forecasting.1} parent=1 // pred_check
      _
    $region15: #{neural_cde_idea4_forecasting.1} parent=1 // pred_check_branch
      %54 = sbr.rel (0) target = $region17
    $region16: #{neural_cde_idea4_forecasting.1} parent=1 // pred_region
      _
    $region17: #{neural_cde_idea4_forecasting.1} parent=1 // pred_fallthru
      _
    // Predicated region
    $region18: #{neural_cde_idea4_forecasting.1} parent=1 // pred_check
      _
    $region19: #{neural_cde_idea4_forecasting.1} parent=1 // pred_check_branch
      %56 = sbr.rel (0) target = $region21
    $region20: #{neural_cde_idea4_forecasting.1} parent=1 // pred_region
      _
    $region21: #{neural_cde_idea4_forecasting.1} parent=1 // pred_fallthru
      _
    // Predicated region
    $region22: #{neural_cde_idea4_forecasting.1} parent=1 // pred_check
      _
    $region23: #{neural_cde_idea4_forecasting.1} parent=1 // pred_check_branch
      %58 = sbr.rel (0) target = $region25
    $region24: #{neural_cde_idea4_forecasting.1} parent=1 // pred_region
      _
    $region25: #{neural_cde_idea4_forecasting.1} parent=1 // pred_fallthru
      _
    // Predicated region
    $region26: #{neural_cde_idea4_forecasting.1} parent=1 // pred_check
      _
    $region27: #{neural_cde_idea4_forecasting.1} parent=1 // pred_check_branch
      %60 = sbr.rel (0) target = $region29
    $region28: #{neural_cde_idea4_forecasting.1} parent=1 // pred_region
      _
    $region29: #{neural_cde_idea4_forecasting.1} parent=1 // pred_fallthru
      _
    // Predicated region
    $region30: #{neural_cde_idea4_forecasting.1} parent=1 // pred_check
      _
    $region31: #{neural_cde_idea4_forecasting.1} parent=1 // pred_check_branch
      %62 = sbr.rel (0) target = $region33
    $region32: #{neural_cde_idea4_forecasting.1} parent=1 // pred_region
      _
    $region33: #{neural_cde_idea4_forecasting.1} parent=1 // pred_fallthru
      _
    // Predicated region
    $region34: #{neural_cde_idea4_forecasting.1} parent=1 // pred_check
      _
    $region35: #{neural_cde_idea4_forecasting.1} parent=1 // pred_check_branch
      %64 = sbr.rel (0) target = $region37
    $region36: #{neural_cde_idea4_forecasting.1} parent=1 // pred_region
      _
    $region37: #{neural_cde_idea4_forecasting.1} parent=1 // pred_fallthru
      _
    // Predicated region
    $region38: #{neural_cde_idea4_forecasting.1} parent=1 // pred_check
      _
    $region39: #{neural_cde_idea4_forecasting.1} parent=1 // pred_check_branch
      %66 = sbr.rel (0) target = $region41
    $region40: #{neural_cde_idea4_forecasting.1} parent=1 // pred_region
      _
    $region41: #{neural_cde_idea4_forecasting.1} parent=1 // pred_fallthru
      _
    // Predicated region
    $region42: #{neural_cde_idea4_forecasting.1} parent=1 // pred_check
      _
    $region43: #{neural_cde_idea4_forecasting.1} parent=1 // pred_check_branch
      %68 = sbr.rel (0) target = $region45
    $region44: #{neural_cde_idea4_forecasting.1} parent=1 // pred_region
      _
    $region45: #{neural_cde_idea4_forecasting.1} parent=1 // pred_fallthru
      _
    // Predicated region
    $region46: #{neural_cde_idea4_forecasting.1} parent=1 // pred_check
      _
    $region47: #{neural_cde_idea4_forecasting.1} parent=1 // pred_check_branch
      %70 = sbr.rel (0) target = $region49
    $region48: #{neural_cde_idea4_forecasting.1} parent=1 // pred_region
      _
    $region49: #{neural_cde_idea4_forecasting.1} parent=1 // pred_fallthru
      _
    // Predicated region
    $region50: #{neural_cde_idea4_forecasting.1} parent=1 // pred_check
      _
    $region51: #{neural_cde_idea4_forecasting.1} parent=1 // pred_check_branch
      %72 = sbr.rel (0) target = $region53
    $region52: #{neural_cde_idea4_forecasting.1} parent=1 // pred_region
      _
    $region53: #{neural_cde_idea4_forecasting.1} parent=1 // pred_fallthru
      _
    // Predicated region
    $region54: #{neural_cde_idea4_forecasting.1} parent=1 // pred_check
      _
    $region55: #{neural_cde_idea4_forecasting.1} parent=1 // pred_check_branch
      %74 = sbr.rel (0) target = $region57
    $region56: #{neural_cde_idea4_forecasting.1} parent=1 // pred_region
      _
    $region57: #{neural_cde_idea4_forecasting.1} parent=1 // pred_fallthru
      _
    // Predicated region
    $region58: #{neural_cde_idea4_forecasting.1} parent=1 // pred_check
      _
    $region59: #{neural_cde_idea4_forecasting.1} parent=1 // pred_check_branch
      %76 = sbr.rel (0) target = $region61
    $region60: #{neural_cde_idea4_forecasting.1} parent=1 // pred_region
      _
    $region61: #{neural_cde_idea4_forecasting.1} parent=1 // pred_fallthru
      _
    // Predicated region
    $region62: #{neural_cde_idea4_forecasting.1} parent=1 // pred_check
      _
    $region63: #{neural_cde_idea4_forecasting.1} parent=1 // pred_check_branch
      %78 = sbr.rel (0) target = $region65
    $region64: #{neural_cde_idea4_forecasting.1} parent=1 // pred_region
      _
    $region65: #{neural_cde_idea4_forecasting.1} parent=1 // pred_fallthru
      _
    // Predicated region
    $region66: #{neural_cde_idea4_forecasting.1} parent=1 // pred_check
      _
    $region67: #{neural_cde_idea4_forecasting.1} parent=1 // pred_check_branch
      %80 = sbr.rel (0) target = $region69
    $region68: #{neural_cde_idea4_forecasting.1} parent=1 // pred_region
      _
    $region69: #{neural_cde_idea4_forecasting.1} parent=1 // pred_fallthru
      _
    // Predicated region
    $region70: #{neural_cde_idea4_forecasting.1} parent=1 // pred_check
      _
    $region71: #{neural_cde_idea4_forecasting.1} parent=1 // pred_check_branch
      %82 = sbr.rel (0) target = $region73
    $region72: #{neural_cde_idea4_forecasting.1} parent=1 // pred_region
      _
    $region73: #{neural_cde_idea4_forecasting.1} parent=1 // pred_fallthru
      _
    // Predicated region
    $region74: #{neural_cde_idea4_forecasting.1} parent=1 // pred_check
      _
    $region75: #{neural_cde_idea4_forecasting.1} parent=1 // pred_check_branch
      %84 = sbr.rel (0) target = $region77
    $region76: #{neural_cde_idea4_forecasting.1} parent=1 // pred_region
      _
    $region77: #{neural_cde_idea4_forecasting.1} parent=1 // pred_fallthru
      _
    // Predicated region
    $region78: #{neural_cde_idea4_forecasting.1} parent=1 // pred_check
      _
    $region79: #{neural_cde_idea4_forecasting.1} parent=1 // pred_check_branch
      %86 = sbr.rel (0) target = $region81
    $region80: #{neural_cde_idea4_forecasting.1} parent=1 // pred_region
      _
    $region81: #{neural_cde_idea4_forecasting.1} parent=1 // pred_fallthru
      _
    // Predicated region
    $region82: #{neural_cde_idea4_forecasting.1} parent=1 // pred_check
      _
    $region83: #{neural_cde_idea4_forecasting.1} parent=1 // pred_check_branch
      %88 = sbr.rel (0) target = $region85
    $region84: #{neural_cde_idea4_forecasting.1} parent=1 // pred_region
      _
    $region85: #{neural_cde_idea4_forecasting.1} parent=1 // pred_fallthru
      _
    // Predicated region
    $region86: #{neural_cde_idea4_forecasting.1} parent=1 // pred_check
      _
    $region87: #{neural_cde_idea4_forecasting.1} parent=1 // pred_check_branch
      %90 = sbr.rel (0) target = $region89
    $region88: #{neural_cde_idea4_forecasting.1} parent=1 // pred_region
      _
    $region89: #{neural_cde_idea4_forecasting.1} parent=1 // pred_fallthru
      _
    // Predicated region
    $region90: #{neural_cde_idea4_forecasting.1} parent=1 // pred_check
      _
    $region91: #{neural_cde_idea4_forecasting.1} parent=1 // pred_check_branch
      %92 = sbr.rel (0) target = $region93
    $region92: #{neural_cde_idea4_forecasting.1} parent=1 // pred_region
      _
    $region93: #{neural_cde_idea4_forecasting.1} parent=1 // pred_fallthru
      _
    // Predicated region
    $region94: #{neural_cde_idea4_forecasting.1} parent=1 // pred_check
      _
    $region95: #{neural_cde_idea4_forecasting.1} parent=1 // pred_check_branch
      %94 = sbr.rel (0) target = $region97
    $region96: #{neural_cde_idea4_forecasting.1} parent=1 // pred_region
      _
    $region97: #{neural_cde_idea4_forecasting.1} parent=1 // pred_fallthru
      _
    // Predicated region
    $region98: #{neural_cde_idea4_forecasting.1} parent=1 // pred_check
      _
    $region99: #{neural_cde_idea4_forecasting.1} parent=1 // pred_check_branch
      %96 = sbr.rel (0) target = $region101
    $region100: #{neural_cde_idea4_forecasting.1} parent=1 // pred_region
      %97 = dma.done [#allocation3], 16
    $region101: #{neural_cde_idea4_forecasting.1} parent=1 // pred_fallthru
      _
    // Predicated region
    $region102: #{neural_cde_idea4_forecasting.1} parent=1 // pred_check
      _
    $region103: #{neural_cde_idea4_forecasting.1} parent=1 // pred_check_branch
      %99 = sbr.rel (0) target = $region105
    $region104: #{neural_cde_idea4_forecasting.1} parent=1 // pred_region
      %100 = dma.done [#allocation5], 16
    $region105: #{neural_cde_idea4_forecasting.1} parent=1 // pred_fallthru
      _
    %101 = sfence
    %v102 = vld [vmem:[%s6] sm:$0xf]
    %v103 = vld [vmem:[%s7] sm:$0x1]
    %v105 = vlaneseq
    %v106 = vshrl.u32 %v105, 7
    %v107 = vsub.s32 0, %v106
    %v108 = vrot.slane %v103, %v107
    %v110 = vld [vmem:[%s18] sm:$0xff]
    %v111 = vld [vmem:[%s18 + $0x8] sm:$0xff]
    %v112 = vld [vmem:[%s18 + $0x10] sm:$0xff]
    %v113 = vld [vmem:[%s18 + $0x18] sm:$0xff]
    %v114 = vld [vmem:[%s19] sm:$0x1]
    %v116 = vlaneseq
    %v117 = vshrl.u32 %v116, 7
    %v118 = vsub.s32 0, %v117
    %v119 = vrot.slane %v114, %v118
    %v121 = vld [vmem:[%s22] sm:$0xff]
    %v122 = vld [vmem:[%s22 + $0x8] sm:$0xff]
    %v123 = vld [vmem:[%s22 + $0x10] sm:$0xff]
    %v124 = vld [vmem:[%s22 + $0x18] sm:$0xff]
    %v125 = vld [vmem:[%s23] sm:$0x1]
    %v127 = vlaneseq
    %v128 = vshrl.u32 %v127, 7
    %v129 = vsub.s32 0, %v128
    %v130 = vrot.slane %v125, %v129
    %v132 = vld [vmem:[%s20] sm:$0xff]
    %v133 = vld [vmem:[%s20 + $0x8] sm:$0xff]
    %v134 = vld [vmem:[%s20 + $0x10] sm:$0xff]
    %v135 = vld [vmem:[%s20 + $0x18] sm:$0xff]
    %s136 = scalar_lea.vmem %s20, 32
    %v137 = vld [vmem:[%s136] sm:$0xff]
    %v138 = vld [vmem:[%s136 + $0x8] sm:$0xff]
    %v139 = vld [vmem:[%s136 + $0x10] sm:$0xff]
    %v140 = vld [vmem:[%s136 + $0x18] sm:$0xff]
    %s141 = scalar_lea.vmem %s20, 64
    %v142 = vld [vmem:[%s141] sm:$0xff]
    %v143 = vld [vmem:[%s141 + $0x8] sm:$0xff]
    %v144 = vld [vmem:[%s141 + $0x10] sm:$0xff]
    %v145 = vld [vmem:[%s141 + $0x18] sm:$0xff]
    %s146 = scalar_lea.vmem %s20, 96
    %v147 = vld [vmem:[%s146] sm:$0xff]
    %v148 = vld [vmem:[%s146 + $0x8] sm:$0xff]
    %v149 = vld [vmem:[%s146 + $0x10] sm:$0xff]
    %v150 = vld [vmem:[%s146 + $0x18] sm:$0xff]
    %v151 = vld [vmem:[%s21] sm:$0x1]
    %v153 = vlaneseq
    %v154 = vshrl.u32 %v153, 7
    %v155 = vsub.s32 0, %v154
    %v156 = vrot.slane %v151, %v155
    %s158 = scalar_lea.vmem %s21, 1
    %v159 = vld [vmem:[%s158] sm:$0x1]
    %v161 = vlaneseq
    %v162 = vshrl.u32 %v161, 7
    %v163 = vsub.s32 0, %v162
    %v164 = vrot.slane %v159, %v163
    %s166 = scalar_lea.vmem %s21, 2
    %v167 = vld [vmem:[%s166] sm:$0x1]
    %v169 = vlaneseq
    %v170 = vshrl.u32 %v169, 7
    %v171 = vsub.s32 0, %v170
    %v172 = vrot.slane %v167, %v171
    %s174 = scalar_lea.vmem %s21, 3
    %v175 = vld [vmem:[%s174] sm:$0x1]
    %v177 = vlaneseq
    %v178 = vshrl.u32 %v177, 7
    %v179 = vsub.s32 0, %v178
    %v180 = vrot.slane %v175, %v179
    %v182 = vld [vmem:[%s2] sm:$0x1]
    %v183 = vld [vmem:[%s2 + $0x8] sm:$0x1]
    %v184 = vld [vmem:[%s2 + $0x10] sm:$0x1]
    %v185 = vld [vmem:[%s2 + $0x18] sm:$0x1]
    %v186 = vld [vmem:[%s2 + $0x20] sm:$0x1]
    %v187 = vld [vmem:[%s2 + $0x28] sm:$0x1]
    %v188 = vld [vmem:[%s2 + $0x30] sm:$0x1]
    %v189 = vld [vmem:[%s2 + $0x38] sm:$0x1]
    %v198 = vrot.slane %v183, 7
    %vm199 = vcmask 1041409
    %v200 = vsel %vm199, %v198, %v182
    %v201 = vrot.slane %v184, 6
    %vm202 = vcmask 1042434
    %v203 = vsel %vm202, %v201, %v200
    %v204 = vrot.slane %v185, 5
    %vm205 = vcmask 1043459
    %v206 = vsel %vm205, %v204, %v203
    %v207 = vrot.slane %v186, 4
    %vm208 = vcmask 1044484
    %v209 = vsel %vm208, %v207, %v206
    %v210 = vrot.slane %v187, 3
    %vm211 = vcmask 1045509
    %v212 = vsel %vm211, %v210, %v209
    %v213 = vrot.slane %v188, 2
    %vm214 = vcmask 1046534
    %v215 = vsel %vm214, %v213, %v212
    %v216 = vrot.slane %v189, 1
    %vm217 = vcmask 1047559
    %v218 = vsel %vm217, %v216, %v215
    %vm219 = vcmask 31744
    %v220 = vsel %vm219, %v218, 0
    %vm222 = vcmask 1043456
    %v224 = vsel %vm222, %v102, 0
    %226 = vmatprep.subr.mxu0 0.0
    %227 = vmatpush1.msra.mxu0 %v224
    %228 = vmatprep.subr.mxu0 0.0
    %229 = vmatpush1.msra.mxu0 0.0
    %230 = vmatprep.subr.mxu0 0.0
    %231 = vmatpush1.msra.mxu0 0.0
    %232 = vmatprep.subr.mxu0 0.0
    %233 = vmatpush1.msra.mxu0 0.0
    %234 = vmatprep.subr.mxu0 0.0
    %235 = vmatpush1.msra.mxu0 0.0
    %236 = vmatprep.subr.mxu0 0.0
    %237 = vmatpush1.msra.mxu0 0.0
    %238 = vmatprep.subr.mxu0 0.0
    %239 = vmatpush1.msra.mxu0 0.0
    %240 = vmatprep.subr.mxu0 0.0
    %241 = vmatpush1.msra.mxu0 0.0
    %242 = vmatprep.subr.mxu0 0.0
    %243 = vmatpush1.msra.mxu0 0.0
    %244 = vmatprep.subr.mxu0 0.0
    %245 = vmatpush1.msra.mxu0 0.0
    %246 = vmatprep.subr.mxu0 0.0
    %247 = vmatpush1.msra.mxu0 0.0
    %248 = vmatprep.subr.mxu0 0.0
    %249 = vmatpush1.msra.mxu0 0.0
    %250 = vmatprep.subr.mxu0 0.0
    %251 = vmatpush1.msra.mxu0 0.0
    %252 = vmatprep.subr.mxu0 0.0
    %253 = vmatpush1.msra.mxu0 0.0
    %254 = vmatprep.subr.mxu0 0.0
    %255 = vmatpush1.msra.mxu0 0.0
    %256 = vmatprep.subr.mxu0 0.0
    %257 = vmatpush1.msra.mxu0 0.0
    %258 = vmatprep.subr.mxu0 0.0
    %259 = vmatpush1.msra.mxu0 0.0
    %260 = vmatprep.subr.mxu0 0.0
    %261 = vmatpush1.msra.mxu0 0.0
    %262 = vmatprep.subr.mxu0 0.0
    %263 = vmatpush1.msra.mxu0 0.0
    %264 = vmatprep.subr.mxu0 0.0
    %265 = vmatpush1.msra.mxu0 0.0
    %266 = vmatprep.subr.mxu0 0.0
    %267 = vmatpush1.msra.mxu0 0.0
    %268 = vmatprep.subr.mxu0 0.0
    %269 = vmatpush1.msra.mxu0 0.0
    %270 = vmatprep.subr.mxu0 0.0
    %271 = vmatpush1.msra.mxu0 0.0
    %272 = vmatprep.subr.mxu0 0.0
    %273 = vmatpush1.msra.mxu0 0.0
    %274 = vmatprep.subr.mxu0 0.0
    %275 = vmatpush1.msra.mxu0 0.0
    %276 = vmatprep.subr.mxu0 0.0
    %277 = vmatpush1.msra.mxu0 0.0
    %278 = vmatprep.subr.mxu0 0.0
    %279 = vmatpush1.msra.mxu0 0.0
    %280 = vmatprep.subr.mxu0 0.0
    %281 = vmatpush1.msra.mxu0 0.0
    %282 = vmatprep.subr.mxu0 0.0
    %283 = vmatpush1.msra.mxu0 0.0
    %284 = vmatprep.subr.mxu0 0.0
    %285 = vmatpush1.msra.mxu0 0.0
    %286 = vmatprep.subr.mxu0 0.0
    %287 = vmatpush1.msra.mxu0 0.0
    %288 = vmatprep.subr.mxu0 0.0
    %289 = vmatpush1.msra.mxu0 0.0
    %290 = vmatprep.mubr.f32.mxu0 0.0
    %291 = vmatmul.mubr.f32.gmra.mrb[0].mxu0 %v220
    %v292 = vpop.f32.mrb[0].mxu0
    %v293 = vadd.f32 %v108, %v292
    %v294 = vpop.f32.mrb[0].mxu0
    %295 = vdwg.mxu0
    %s296 = sld [smem:[#allocation2 + $0x6]]
    %v297 = vld [vmem:[%s3 + $0x6] sm:$0x1]
    %v298 = vld [vmem:[%s3 + $0xe] sm:$0x1]
    %v299 = vld [vmem:[%s3 + $0x16] sm:$0x1]
    %v300 = vld [vmem:[%s3 + $0x1e] sm:$0x1]
    %v301 = vld [vmem:[%s3 + $0x26] sm:$0x1]
    %v302 = vld [vmem:[%s3 + $0x2e] sm:$0x1]
    %v303 = vld [vmem:[%s3 + $0x36] sm:$0x1]
    %v304 = vld [vmem:[%s3 + $0x3e] sm:$0x1]
    %v305 = vld [vmem:[%s4 + $0x6] sm:$0x1]
    %v306 = vld [vmem:[%s4 + $0xe] sm:$0x1]
    %v307 = vld [vmem:[%s4 + $0x16] sm:$0x1]
    %v308 = vld [vmem:[%s4 + $0x1e] sm:$0x1]
    %v309 = vld [vmem:[%s4 + $0x26] sm:$0x1]
    %v310 = vld [vmem:[%s4 + $0x2e] sm:$0x1]
    %v311 = vld [vmem:[%s4 + $0x36] sm:$0x1]
    %v312 = vld [vmem:[%s4 + $0x3e] sm:$0x1]
    %v313 = vld [vmem:[%s5 + $0x6] sm:$0x1]
    %v314 = vld [vmem:[%s5 + $0xe] sm:$0x1]
    %v315 = vld [vmem:[%s5 + $0x16] sm:$0x1]
    %v316 = vld [vmem:[%s5 + $0x1e] sm:$0x1]
    %v317 = vld [vmem:[%s5 + $0x26] sm:$0x1]
    %v318 = vld [vmem:[%s5 + $0x2e] sm:$0x1]
    %v319 = vld [vmem:[%s5 + $0x36] sm:$0x1]
    %v320 = vld [vmem:[%s5 + $0x3e] sm:$0x1]
    %s321 = sld [smem:[#allocation4]]
    %s322 = sld [smem:[#allocation4 + $0x1]]
    %s323 = ssub.f32 %s322, %s321
    %s324 = ssub.f32 %s321, %s296
    %v325 = vstv %s324
    %v326 = vmul.f32 %v313, %v325
    %v327 = vmul.f32 %v314, %v325
    %v328 = vmul.f32 %v315, %v325
    %v329 = vmul.f32 %v316, %v325
    %v330 = vmul.f32 %v317, %v325
    %v331 = vmul.f32 %v318, %v325
    %v332 = vmul.f32 %v319, %v325
    %v333 = vmul.f32 %v320, %v325
    %v334 = vadd.f32 %v305, %v326
    %v335 = vadd.f32 %v306, %v327
    %v336 = vadd.f32 %v307, %v328
    %v337 = vadd.f32 %v308, %v329
    %v338 = vadd.f32 %v309, %v330
    %v339 = vadd.f32 %v310, %v331
    %v340 = vadd.f32 %v311, %v332
    %v341 = vadd.f32 %v312, %v333
    %v342 = vmul.f32 %v334, %v325
    %v343 = vmul.f32 %v335, %v325
    %v344 = vmul.f32 %v336, %v325
    %v345 = vmul.f32 %v337, %v325
    %v346 = vmul.f32 %v338, %v325
    %v347 = vmul.f32 %v339, %v325
    %v348 = vmul.f32 %v340, %v325
    %v349 = vmul.f32 %v341, %v325
    %v350 = vadd.f32 %v297, %v342
    %v351 = vadd.f32 %v298, %v343
    %v352 = vadd.f32 %v299, %v344
    %v353 = vadd.f32 %v300, %v345
    %v354 = vadd.f32 %v301, %v346
    %v355 = vadd.f32 %v302, %v347
    %v356 = vadd.f32 %v303, %v348
    %v357 = vadd.f32 %v304, %v349
    %vm358 = vcmask 261120
    %v360 = vsel %vm358, %v293, 0
    %362 = vmatprep.subr.mxu0 0.0
    %363 = vmatpush1.msra.mxu0 %v110
    %364 = vmatprep.subr.mxu0 0.0
    %365 = vmatpush1.msra.mxu0 %v111
    %366 = vmatprep.subr.mxu0 0.0
    %367 = vmatpush1.msra.mxu0 %v112
    %368 = vmatprep.subr.mxu0 0.0
    %369 = vmatpush1.msra.mxu0 %v113
    %370 = vmatprep.subr.mxu0 0.0
    %371 = vmatpush1.msra.mxu0 0.0
    %372 = vmatprep.subr.mxu0 0.0
    %373 = vmatpush1.msra.mxu0 0.0
    %374 = vmatprep.subr.mxu0 0.0
    %375 = vmatpush1.msra.mxu0 0.0
    %376 = vmatprep.subr.mxu0 0.0
    %377 = vmatpush1.msra.mxu0 0.0
    %378 = vmatprep.subr.mxu0 0.0
    %379 = vmatpush1.msra.mxu0 0.0
    %380 = vmatprep.subr.mxu0 0.0
    %381 = vmatpush1.msra.mxu0 0.0
    %382 = vmatprep.subr.mxu0 0.0
    %383 = vmatpush1.msra.mxu0 0.0
    %384 = vmatprep.subr.mxu0 0.0
    %385 = vmatpush1.msra.mxu0 0.0
    %386 = vmatprep.subr.mxu0 0.0
    %387 = vmatpush1.msra.mxu0 0.0
    %388 = vmatprep.subr.mxu0 0.0
    %389 = vmatpush1.msra.mxu0 0.0
    %390 = vmatprep.subr.mxu0 0.0
    %391 = vmatpush1.msra.mxu0 0.0
    %392 = vmatprep.subr.mxu0 0.0
    %393 = vmatpush1.msra.mxu0 0.0
    %394 = vmatprep.subr.mxu0 0.0
    %395 = vmatpush1.msra.mxu0 0.0
    %396 = vmatprep.subr.mxu0 0.0
    %397 = vmatpush1.msra.mxu0 0.0
    %398 = vmatprep.subr.mxu0 0.0
    %399 = vmatpush1.msra.mxu0 0.0
    %400 = vmatprep.subr.mxu0 0.0
    %401 = vmatpush1.msra.mxu0 0.0
    %402 = vmatprep.subr.mxu0 0.0
    %403 = vmatpush1.msra.mxu0 0.0
    %404 = vmatprep.subr.mxu0 0.0
    %405 = vmatpush1.msra.mxu0 0.0
    %406 = vmatprep.subr.mxu0 0.0
    %407 = vmatpush1.msra.mxu0 0.0
    %408 = vmatprep.subr.mxu0 0.0
    %409 = vmatpush1.msra.mxu0 0.0
    %410 = vmatprep.subr.mxu0 0.0
    %411 = vmatpush1.msra.mxu0 0.0
    %412 = vmatprep.subr.mxu0 0.0
    %413 = vmatpush1.msra.mxu0 0.0
    %414 = vmatprep.subr.mxu0 0.0
    %415 = vmatpush1.msra.mxu0 0.0
    %416 = vmatprep.subr.mxu0 0.0
    %417 = vmatpush1.msra.mxu0 0.0
    %418 = vmatprep.subr.mxu0 0.0
    %419 = vmatpush1.msra.mxu0 0.0
    %420 = vmatprep.subr.mxu0 0.0
    %421 = vmatpush1.msra.mxu0 0.0
    %422 = vmatprep.subr.mxu0 0.0
    %423 = vmatpush1.msra.mxu0 0.0
    %424 = vmatprep.subr.mxu0 0.0
    %425 = vmatpush1.msra.mxu0 0.0
    %426 = vmatprep.mubr.f32.mxu0 0.0
    %427 = vmatmul.mubr.f32.gmra.mrb[0].mxu0 %v360
    %v428 = vpop.f32.mrb[0].mxu0
    %v429 = vadd.f32 %v119, %v428
    %v430 = vpop.f32.mrb[0].mxu0
    %431 = vdwg.mxu0
    %v432 = vtanh.pop %v429
    %v434 = vsel %vm358, %v432, 0
    %436 = vmatprep.subr.mxu0 0.0
    %437 = vmatpush1.msra.mxu0 %v132
    %438 = vmatprep.subr.mxu0 0.0
    %439 = vmatpush1.msra.mxu0 %v133
    %440 = vmatprep.subr.mxu0 0.0
    %441 = vmatpush1.msra.mxu0 %v134
    %442 = vmatprep.subr.mxu0 0.0
    %443 = vmatpush1.msra.mxu0 %v135
    %444 = vmatprep.subr.mxu0 0.0
    %445 = vmatpush1.msra.mxu0 0.0
    %446 = vmatprep.subr.mxu0 0.0
    %447 = vmatpush1.msra.mxu0 0.0
    %448 = vmatprep.subr.mxu0 0.0
    %449 = vmatpush1.msra.mxu0 0.0
    %450 = vmatprep.subr.mxu0 0.0
    %451 = vmatpush1.msra.mxu0 0.0
    %452 = vmatprep.subr.mxu0 0.0
    %453 = vmatpush1.msra.mxu0 0.0
    %454 = vmatprep.subr.mxu0 0.0
    %455 = vmatpush1.msra.mxu0 0.0
    %456 = vmatprep.subr.mxu0 0.0
    %457 = vmatpush1.msra.mxu0 0.0
    %458 = vmatprep.subr.mxu0 0.0
    %459 = vmatpush1.msra.mxu0 0.0
    %460 = vmatprep.subr.mxu0 0.0
    %461 = vmatpush1.msra.mxu0 0.0
    %462 = vmatprep.subr.mxu0 0.0
    %463 = vmatpush1.msra.mxu0 0.0
    %464 = vmatprep.subr.mxu0 0.0
    %465 = vmatpush1.msra.mxu0 0.0
    %466 = vmatprep.subr.mxu0 0.0
    %467 = vmatpush1.msra.mxu0 0.0
    %468 = vmatprep.subr.mxu0 0.0
    %469 = vmatpush1.msra.mxu0 0.0
    %470 = vmatprep.subr.mxu0 0.0
    %471 = vmatpush1.msra.mxu0 0.0
    %472 = vmatprep.subr.mxu0 0.0
    %473 = vmatpush1.msra.mxu0 0.0
    %474 = vmatprep.subr.mxu0 0.0
    %475 = vmatpush1.msra.mxu0 0.0
    %476 = vmatprep.subr.mxu0 0.0
    %477 = vmatpush1.msra.mxu0 0.0
    %478 = vmatprep.subr.mxu0 0.0
    %479 = vmatpush1.msra.mxu0 0.0
    %480 = vmatprep.subr.mxu0 0.0
    %481 = vmatpush1.msra.mxu0 0.0
    %482 = vmatprep.subr.mxu0 0.0
    %483 = vmatpush1.msra.mxu0 0.0
    %484 = vmatprep.subr.mxu0 0.0
    %485 = vmatpush1.msra.mxu0 0.0
    %486 = vmatprep.subr.mxu0 0.0
    %487 = vmatpush1.msra.mxu0 0.0
    %488 = vmatprep.subr.mxu0 0.0
    %489 = vmatpush1.msra.mxu0 0.0
    %490 = vmatprep.subr.mxu0 0.0
    %491 = vmatpush1.msra.mxu0 0.0
    %492 = vmatprep.subr.mxu0 0.0
    %493 = vmatpush1.msra.mxu0 0.0
    %494 = vmatprep.subr.mxu0 0.0
    %495 = vmatpush1.msra.mxu0 0.0
    %496 = vmatprep.subr.mxu0 0.0
    %497 = vmatpush1.msra.mxu0 0.0
    %498 = vmatprep.subr.mxu0 0.0
    %499 = vmatpush1.msra.mxu0 0.0
    %500 = vmatprep.mubr.f32.mxu0 0.0
    %501 = vmatmul.mubr.f32.gmra.mrb[0].mxu0 %v434
    %v502 = vpop.f32.mrb[0].mxu0
    %v503 = vadd.f32 %v156, %v502
    %v504 = vpop.f32.mrb[0].mxu0
    %505 = vdwg.mxu0
    %v506 = vtanh.pop %v503
    %508 = vset.pattern.permute.xlu0 0
    %509 = vperm.xlu0 %508, %v350
    %v510 = vpop.permute.xlu0 %509
    %512 = vset.pattern.permute.xlu0 0
    %513 = vperm.xlu0 %512, %v351
    %v514 = vpop.permute.xlu0 %513
    %516 = vset.pattern.permute.xlu0 0
    %517 = vperm.xlu0 %516, %v352
    %v518 = vpop.permute.xlu0 %517
    %520 = vset.pattern.permute.xlu0 0
    %521 = vperm.xlu0 %520, %v353
    %v522 = vpop.permute.xlu0 %521
    %524 = vset.pattern.permute.xlu0 0
    %525 = vperm.xlu0 %524, %v354
    %v526 = vpop.permute.xlu0 %525
    %528 = vset.pattern.permute.xlu0 0
    %529 = vperm.xlu0 %528, %v355
    %v530 = vpop.permute.xlu0 %529
    %532 = vset.pattern.permute.xlu0 0
    %533 = vperm.xlu0 %532, %v356
    %v534 = vpop.permute.xlu0 %533
    %536 = vset.pattern.permute.xlu0 0
    %537 = vperm.xlu0 %536, %v357
    %v538 = vpop.permute.xlu0 %537
    %v539 = vrot.slane %v514, 7
    %v540 = vsel %vm199, %v539, %v510
    %v541 = vrot.slane %v518, 6
    %v542 = vsel %vm202, %v541, %v540
    %v543 = vrot.slane %v522, 5
    %v544 = vsel %vm205, %v543, %v542
    %v545 = vrot.slane %v526, 4
    %v546 = vsel %vm208, %v545, %v544
    %v547 = vrot.slane %v530, 3
    %v548 = vsel %vm211, %v547, %v546
    %v549 = vrot.slane %v534, 2
    %v550 = vsel %vm214, %v549, %v548
    %v551 = vrot.slane %v538, 1
    %v552 = vsel %vm217, %v551, %v550
    %v554 = vmul.f32 %v506, %v552
    %555 = vmatprep.subr.mxu0 0.0
    %556 = vmatpush1.msra.mxu0 %v137
    %557 = vmatprep.subr.mxu0 0.0
    %558 = vmatpush1.msra.mxu0 %v138
    %559 = vmatprep.subr.mxu0 0.0
    %560 = vmatpush1.msra.mxu0 %v139
    %561 = vmatprep.subr.mxu0 0.0
    %562 = vmatpush1.msra.mxu0 %v140
    %563 = vmatprep.subr.mxu0 0.0
    %564 = vmatpush1.msra.mxu0 0.0
    %565 = vmatprep.subr.mxu0 0.0
    %566 = vmatpush1.msra.mxu0 0.0
    %567 = vmatprep.subr.mxu0 0.0
    %568 = vmatpush1.msra.mxu0 0.0
    %569 = vmatprep.subr.mxu0 0.0
    %570 = vmatpush1.msra.mxu0 0.0
    %571 = vmatprep.subr.mxu0 0.0
    %572 = vmatpush1.msra.mxu0 0.0
    %573 = vmatprep.subr.mxu0 0.0
    %574 = vmatpush1.msra.mxu0 0.0
    %575 = vmatprep.subr.mxu0 0.0
    %576 = vmatpush1.msra.mxu0 0.0
    %577 = vmatprep.subr.mxu0 0.0
    %578 = vmatpush1.msra.mxu0 0.0
    %579 = vmatprep.subr.mxu0 0.0
    %580 = vmatpush1.msra.mxu0 0.0
    %581 = vmatprep.subr.mxu0 0.0
    %582 = vmatpush1.msra.mxu0 0.0
    %583 = vmatprep.subr.mxu0 0.0
    %584 = vmatpush1.msra.mxu0 0.0
    %585 = vmatprep.subr.mxu0 0.0
    %586 = vmatpush1.msra.mxu0 0.0
    %587 = vmatprep.subr.mxu0 0.0
    %588 = vmatpush1.msra.mxu0 0.0
    %589 = vmatprep.subr.mxu0 0.0
    %590 = vmatpush1.msra.mxu0 0.0
    %591 = vmatprep.subr.mxu0 0.0
    %592 = vmatpush1.msra.mxu0 0.0
    %593 = vmatprep.subr.mxu0 0.0
    %594 = vmatpush1.msra.mxu0 0.0
    %595 = vmatprep.subr.mxu0 0.0
    %596 = vmatpush1.msra.mxu0 0.0
    %597 = vmatprep.subr.mxu0 0.0
    %598 = vmatpush1.msra.mxu0 0.0
    %599 = vmatprep.subr.mxu0 0.0
    %600 = vmatpush1.msra.mxu0 0.0
    %601 = vmatprep.subr.mxu0 0.0
    %602 = vmatpush1.msra.mxu0 0.0
    %603 = vmatprep.subr.mxu0 0.0
    %604 = vmatpush1.msra.mxu0 0.0
    %605 = vmatprep.subr.mxu0 0.0
    %606 = vmatpush1.msra.mxu0 0.0
    %607 = vmatprep.subr.mxu0 0.0
    %608 = vmatpush1.msra.mxu0 0.0
    %609 = vmatprep.subr.mxu0 0.0
    %610 = vmatpush1.msra.mxu0 0.0
    %611 = vmatprep.subr.mxu0 0.0
    %612 = vmatpush1.msra.mxu0 0.0
    %613 = vmatprep.subr.mxu0 0.0
    %614 = vmatpush1.msra.mxu0 0.0
    %615 = vmatprep.subr.mxu0 0.0
    %616 = vmatpush1.msra.mxu0 0.0
    %617 = vmatprep.subr.mxu0 0.0
    %618 = vmatpush1.msra.mxu0 0.0
    %619 = vmatprep.mubr.f32.mxu0 0.0
    %620 = vmatmul.mubr.f32.gmra.mrb[0].mxu0 %v434
    %v621 = vpop.f32.mrb[0].mxu0
    %v622 = vadd.f32 %v164, %v621
    %v623 = vpop.f32.mrb[0].mxu0
    %624 = vdwg.mxu0
    %v625 = vtanh.pop %v622
    %626 = vset.pattern.permute.xlu0 1
    %627 = vperm.xlu0 %626, %v350
    %v628 = vpop.permute.xlu0 %627
    %629 = vset.pattern.permute.xlu0 1
    %630 = vperm.xlu0 %629, %v351
    %v631 = vpop.permute.xlu0 %630
    %632 = vset.pattern.permute.xlu0 1
    %633 = vperm.xlu0 %632, %v352
    %v634 = vpop.permute.xlu0 %633
    %635 = vset.pattern.permute.xlu0 1
    %636 = vperm.xlu0 %635, %v353
    %v637 = vpop.permute.xlu0 %636
    %638 = vset.pattern.permute.xlu0 1
    %639 = vperm.xlu0 %638, %v354
    %v640 = vpop.permute.xlu0 %639
    %641 = vset.pattern.permute.xlu0 1
    %642 = vperm.xlu0 %641, %v355
    %v643 = vpop.permute.xlu0 %642
    %644 = vset.pattern.permute.xlu0 1
    %645 = vperm.xlu0 %644, %v356
    %v646 = vpop.permute.xlu0 %645
    %647 = vset.pattern.permute.xlu0 1
    %648 = vperm.xlu0 %647, %v357
    %v649 = vpop.permute.xlu0 %648
    %v650 = vrot.slane %v631, 7
    %v651 = vsel %vm199, %v650, %v628
    %v652 = vrot.slane %v634, 6
    %v653 = vsel %vm202, %v652, %v651
    %v654 = vrot.slane %v637, 5
    %v655 = vsel %vm205, %v654, %v653
    %v656 = vrot.slane %v640, 4
    %v657 = vsel %vm208, %v656, %v655
    %v658 = vrot.slane %v643, 3
    %v659 = vsel %vm211, %v658, %v657
    %v660 = vrot.slane %v646, 2
    %v661 = vsel %vm214, %v660, %v659
    %v662 = vrot.slane %v649, 1
    %v663 = vsel %vm217, %v662, %v661
    %v665 = vmul.f32 %v625, %v663
    %v666 = vadd.f32 %v554, %v665
    %667 = vmatprep.subr.mxu0 0.0
    %668 = vmatpush1.msra.mxu0 %v142
    %669 = vmatprep.subr.mxu0 0.0
    %670 = vmatpush1.msra.mxu0 %v143
    %671 = vmatprep.subr.mxu0 0.0
    %672 = vmatpush1.msra.mxu0 %v144
    %673 = vmatprep.subr.mxu0 0.0
    %674 = vmatpush1.msra.mxu0 %v145
    %675 = vmatprep.subr.mxu0 0.0
    %676 = vmatpush1.msra.mxu0 0.0
    %677 = vmatprep.subr.mxu0 0.0
    %678 = vmatpush1.msra.mxu0 0.0
    %679 = vmatprep.subr.mxu0 0.0
    %680 = vmatpush1.msra.mxu0 0.0
    %681 = vmatprep.subr.mxu0 0.0
    %682 = vmatpush1.msra.mxu0 0.0
    %683 = vmatprep.subr.mxu0 0.0
    %684 = vmatpush1.msra.mxu0 0.0
    %685 = vmatprep.subr.mxu0 0.0
    %686 = vmatpush1.msra.mxu0 0.0
    %687 = vmatprep.subr.mxu0 0.0
    %688 = vmatpush1.msra.mxu0 0.0
    %689 = vmatprep.subr.mxu0 0.0
    %690 = vmatpush1.msra.mxu0 0.0
    %691 = vmatprep.subr.mxu0 0.0
    %692 = vmatpush1.msra.mxu0 0.0
    %693 = vmatprep.subr.mxu0 0.0
    %694 = vmatpush1.msra.mxu0 0.0
    %695 = vmatprep.subr.mxu0 0.0
    %696 = vmatpush1.msra.mxu0 0.0
    %697 = vmatprep.subr.mxu0 0.0
    %698 = vmatpush1.msra.mxu0 0.0
    %699 = vmatprep.subr.mxu0 0.0
    %700 = vmatpush1.msra.mxu0 0.0
    %701 = vmatprep.subr.mxu0 0.0
    %702 = vmatpush1.msra.mxu0 0.0
    %703 = vmatprep.subr.mxu0 0.0
    %704 = vmatpush1.msra.mxu0 0.0
    %705 = vmatprep.subr.mxu0 0.0
    %706 = vmatpush1.msra.mxu0 0.0
    %707 = vmatprep.subr.mxu0 0.0
    %708 = vmatpush1.msra.mxu0 0.0
    %709 = vmatprep.subr.mxu0 0.0
    %710 = vmatpush1.msra.mxu0 0.0
    %711 = vmatprep.subr.mxu0 0.0
    %712 = vmatpush1.msra.mxu0 0.0
    %713 = vmatprep.subr.mxu0 0.0
    %714 = vmatpush1.msra.mxu0 0.0
    %715 = vmatprep.subr.mxu0 0.0
    %716 = vmatpush1.msra.mxu0 0.0
    %717 = vmatprep.subr.mxu0 0.0
    %718 = vmatpush1.msra.mxu0 0.0
    %719 = vmatprep.subr.mxu0 0.0
    %720 = vmatpush1.msra.mxu0 0.0
    %721 = vmatprep.subr.mxu0 0.0
    %722 = vmatpush1.msra.mxu0 0.0
    %723 = vmatprep.subr.mxu0 0.0
    %724 = vmatpush1.msra.mxu0 0.0
    %725 = vmatprep.subr.mxu0 0.0
    %726 = vmatpush1.msra.mxu0 0.0
    %727 = vmatprep.subr.mxu0 0.0
    %728 = vmatpush1.msra.mxu0 0.0
    %729 = vmatprep.subr.mxu0 0.0
    %730 = vmatpush1.msra.mxu0 0.0
    %731 = vmatprep.mubr.f32.mxu0 0.0
    %732 = vmatmul.mubr.f32.gmra.mrb[0].mxu0 %v434
    %v733 = vpop.f32.mrb[0].mxu0
    %v734 = vadd.f32 %v172, %v733
    %v735 = vpop.f32.mrb[0].mxu0
    %736 = vdwg.mxu0
    %v737 = vtanh.pop %v734
    %738 = vset.pattern.permute.xlu0 2
    %739 = vperm.xlu0 %738, %v350
    %v740 = vpop.permute.xlu0 %739
    %741 = vset.pattern.permute.xlu0 2
    %742 = vperm.xlu0 %741, %v351
    %v743 = vpop.permute.xlu0 %742
    %744 = vset.pattern.permute.xlu0 2
    %745 = vperm.xlu0 %744, %v352
    %v746 = vpop.permute.xlu0 %745
    %747 = vset.pattern.permute.xlu0 2
    %748 = vperm.xlu0 %747, %v353
    %v749 = vpop.permute.xlu0 %748
    %750 = vset.pattern.permute.xlu0 2
    %751 = vperm.xlu0 %750, %v354
    %v752 = vpop.permute.xlu0 %751
    %753 = vset.pattern.permute.xlu0 2
    %754 = vperm.xlu0 %753, %v355
    %v755 = vpop.permute.xlu0 %754
    %756 = vset.pattern.permute.xlu0 2
    %757 = vperm.xlu0 %756, %v356
    %v758 = vpop.permute.xlu0 %757
    %759 = vset.pattern.permute.xlu0 2
    %760 = vperm.xlu0 %759, %v357
    %v761 = vpop.permute.xlu0 %760
    %v762 = vrot.slane %v743, 7
    %v763 = vsel %vm199, %v762, %v740
    %v764 = vrot.slane %v746, 6
    %v765 = vsel %vm202, %v764, %v763
    %v766 = vrot.slane %v749, 5
    %v767 = vsel %vm205, %v766, %v765
    %v768 = vrot.slane %v752, 4
    %v769 = vsel %vm208, %v768, %v767
    %v770 = vrot.slane %v755, 3
    %v771 = vsel %vm211, %v770, %v769
    %v772 = vrot.slane %v758, 2
    %v773 = vsel %vm214, %v772, %v771
    %v774 = vrot.slane %v761, 1
    %v775 = vsel %vm217, %v774, %v773
    %v777 = vmul.f32 %v737, %v775
    %v778 = vadd.f32 %v666, %v777
    %779 = vmatprep.subr.mxu0 0.0
    %780 = vmatpush1.msra.mxu0 %v147
    %781 = vmatprep.subr.mxu0 0.0
    %782 = vmatpush1.msra.mxu0 %v148
    %783 = vmatprep.subr.mxu0 0.0
    %784 = vmatpush1.msra.mxu0 %v149
    %785 = vmatprep.subr.mxu0 0.0
    %786 = vmatpush1.msra.mxu0 %v150
    %787 = vmatprep.subr.mxu0 0.0
    %788 = vmatpush1.msra.mxu0 0.0
    %789 = vmatprep.subr.mxu0 0.0
    %790 = vmatpush1.msra.mxu0 0.0
    %791 = vmatprep.subr.mxu0 0.0
    %792 = vmatpush1.msra.mxu0 0.0
    %793 = vmatprep.subr.mxu0 0.0
    %794 = vmatpush1.msra.mxu0 0.0
    %795 = vmatprep.subr.mxu0 0.0
    %796 = vmatpush1.msra.mxu0 0.0
    %797 = vmatprep.subr.mxu0 0.0
    %798 = vmatpush1.msra.mxu0 0.0
    %799 = vmatprep.subr.mxu0 0.0
    %800 = vmatpush1.msra.mxu0 0.0
    %801 = vmatprep.subr.mxu0 0.0
    %802 = vmatpush1.msra.mxu0 0.0
    %803 = vmatprep.subr.mxu0 0.0
    %804 = vmatpush1.msra.mxu0 0.0
    %805 = vmatprep.subr.mxu0 0.0
    %806 = vmatpush1.msra.mxu0 0.0
    %807 = vmatprep.subr.mxu0 0.0
    %808 = vmatpush1.msra.mxu0 0.0
    %809 = vmatprep.subr.mxu0 0.0
    %810 = vmatpush1.msra.mxu0 0.0
    %811 = vmatprep.subr.mxu0 0.0
    %812 = vmatpush1.msra.mxu0 0.0
    %813 = vmatprep.subr.mxu0 0.0
    %814 = vmatpush1.msra.mxu0 0.0
    %815 = vmatprep.subr.mxu0 0.0
    %816 = vmatpush1.msra.mxu0 0.0
    %817 = vmatprep.subr.mxu0 0.0
    %818 = vmatpush1.msra.mxu0 0.0
    %819 = vmatprep.subr.mxu0 0.0
    %820 = vmatpush1.msra.mxu0 0.0
    %821 = vmatprep.subr.mxu0 0.0
    %822 = vmatpush1.msra.mxu0 0.0
    %823 = vmatprep.subr.mxu0 0.0
    %824 = vmatpush1.msra.mxu0 0.0
    %825 = vmatprep.subr.mxu0 0.0
    %826 = vmatpush1.msra.mxu0 0.0
    %827 = vmatprep.subr.mxu0 0.0
    %828 = vmatpush1.msra.mxu0 0.0
    %829 = vmatprep.subr.mxu0 0.0
    %830 = vmatpush1.msra.mxu0 0.0
    %831 = vmatprep.subr.mxu0 0.0
    %832 = vmatpush1.msra.mxu0 0.0
    %833 = vmatprep.subr.mxu0 0.0
    %834 = vmatpush1.msra.mxu0 0.0
    %835 = vmatprep.subr.mxu0 0.0
    %836 = vmatpush1.msra.mxu0 0.0
    %837 = vmatprep.subr.mxu0 0.0
    %838 = vmatpush1.msra.mxu0 0.0
    %839 = vmatprep.subr.mxu0 0.0
    %840 = vmatpush1.msra.mxu0 0.0
    %841 = vmatprep.subr.mxu0 0.0
    %842 = vmatpush1.msra.mxu0 0.0
    %843 = vmatprep.mubr.f32.mxu0 0.0
    %844 = vmatmul.mubr.f32.gmra.mrb[0].mxu0 %v434
    %v845 = vpop.f32.mrb[0].mxu0
    %v846 = vadd.f32 %v180, %v845
    %v847 = vpop.f32.mrb[0].mxu0
    %848 = vdwg.mxu0
    %v849 = vtanh.pop %v846
    %850 = vset.pattern.permute.xlu0 3
    %851 = vperm.xlu0 %850, %v350
    %v852 = vpop.permute.xlu0 %851
    %853 = vset.pattern.permute.xlu0 3
    %854 = vperm.xlu0 %853, %v351
    %v855 = vpop.permute.xlu0 %854
    %856 = vset.pattern.permute.xlu0 3
    %857 = vperm.xlu0 %856, %v352
    %v858 = vpop.permute.xlu0 %857
    %859 = vset.pattern.permute.xlu0 3
    %860 = vperm.xlu0 %859, %v353
    %v861 = vpop.permute.xlu0 %860
    %862 = vset.pattern.permute.xlu0 3
    %863 = vperm.xlu0 %862, %v354
    %v864 = vpop.permute.xlu0 %863
    %865 = vset.pattern.permute.xlu0 3
    %866 = vperm.xlu0 %865, %v355
    %v867 = vpop.permute.xlu0 %866
    %868 = vset.pattern.permute.xlu0 3
    %869 = vperm.xlu0 %868, %v356
    %v870 = vpop.permute.xlu0 %869
    %871 = vset.pattern.permute.xlu0 3
    %872 = vperm.xlu0 %871, %v357
    %v873 = vpop.permute.xlu0 %872
    %v874 = vrot.slane %v855, 7
    %v875 = vsel %vm199, %v874, %v852
    %v876 = vrot.slane %v858, 6
    %v877 = vsel %vm202, %v876, %v875
    %v878 = vrot.slane %v861, 5
    %v879 = vsel %vm205, %v878, %v877
    %v880 = vrot.slane %v864, 4
    %v881 = vsel %vm208, %v880, %v879
    %v882 = vrot.slane %v867, 3
    %v883 = vsel %vm211, %v882, %v881
    %v884 = vrot.slane %v870, 2
    %v885 = vsel %vm214, %v884, %v883
    %v886 = vrot.slane %v873, 1
    %v887 = vsel %vm217, %v886, %v885
    %v889 = vmul.f32 %v849, %v887
    %v890 = vadd.f32 %v778, %v889
    %s891 = smul.f32 %s323, 0.5
    %v892 = vstv %s891
    %v893 = vmul.f32 %v892, %v890
    %v894 = vadd.f32 %v293, %v893
    %s895 = sadd.f32 %s321, %s891
    %s896 = ssub.f32 %s895, %s296
    %v897 = vstv %s896
    %v898 = vmul.f32 %v313, %v897
    %v899 = vmul.f32 %v314, %v897
    %v900 = vmul.f32 %v315, %v897
    %v901 = vmul.f32 %v316, %v897
    %v902 = vmul.f32 %v317, %v897
    %v903 = vmul.f32 %v318, %v897
    %v904 = vmul.f32 %v319, %v897
    %v905 = vmul.f32 %v320, %v897
    %v906 = vadd.f32 %v305, %v898
    %v907 = vadd.f32 %v306, %v899
    %v908 = vadd.f32 %v307, %v900
    %v909 = vadd.f32 %v308, %v901
    %v910 = vadd.f32 %v309, %v902
    %v911 = vadd.f32 %v310, %v903
    %v912 = vadd.f32 %v311, %v904
    %v913 = vadd.f32 %v312, %v905
    %v914 = vmul.f32 %v906, %v897
    %v915 = vmul.f32 %v907, %v897
    %v916 = vmul.f32 %v908, %v897
    %v917 = vmul.f32 %v909, %v897
    %v918 = vmul.f32 %v910, %v897
    %v919 = vmul.f32 %v911, %v897
    %v920 = vmul.f32 %v912, %v897
    %v921 = vmul.f32 %v913, %v897
    %v922 = vadd.f32 %v297, %v914
    %v923 = vadd.f32 %v298, %v915
    %v924 = vadd.f32 %v299, %v916
    %v925 = vadd.f32 %v300, %v917
    %v926 = vadd.f32 %v301, %v918
    %v927 = vadd.f32 %v302, %v919
    %v928 = vadd.f32 %v303, %v920
    %v929 = vadd.f32 %v304, %v921
    %v931 = vsel %vm358, %v894, 0
    %933 = vmatprep.subr.mxu0 0.0
    %934 = vmatpush1.msra.mxu0 %v110
    %935 = vmatprep.subr.mxu0 0.0
    %936 = vmatpush1.msra.mxu0 %v111
    %937 = vmatprep.subr.mxu0 0.0
    %938 = vmatpush1.msra.mxu0 %v112
    %939 = vmatprep.subr.mxu0 0.0
    %940 = vmatpush1.msra.mxu0 %v113
    %941 = vmatprep.subr.mxu0 0.0
    %942 = vmatpush1.msra.mxu0 0.0
    %943 = vmatprep.subr.mxu0 0.0
    %944 = vmatpush1.msra.mxu0 0.0
    %945 = vmatprep.subr.mxu0 0.0
    %946 = vmatpush1.msra.mxu0 0.0
    %947 = vmatprep.subr.mxu0 0.0
    %948 = vmatpush1.msra.mxu0 0.0
    %949 = vmatprep.subr.mxu0 0.0
    %950 = vmatpush1.msra.mxu0 0.0
    %951 = vmatprep.subr.mxu0 0.0
    %952 = vmatpush1.msra.mxu0 0.0
    %953 = vmatprep.subr.mxu0 0.0
    %954 = vmatpush1.msra.mxu0 0.0
    %955 = vmatprep.subr.mxu0 0.0
    %956 = vmatpush1.msra.mxu0 0.0
    %957 = vmatprep.subr.mxu0 0.0
    %958 = vmatpush1.msra.mxu0 0.0
    %959 = vmatprep.subr.mxu0 0.0
    %960 = vmatpush1.msra.mxu0 0.0
    %961 = vmatprep.subr.mxu0 0.0
    %962 = vmatpush1.msra.mxu0 0.0
    %963 = vmatprep.subr.mxu0 0.0
    %964 = vmatpush1.msra.mxu0 0.0
    %965 = vmatprep.subr.mxu0 0.0
    %966 = vmatpush1.msra.mxu0 0.0
    %967 = vmatprep.subr.mxu0 0.0
    %968 = vmatpush1.msra.mxu0 0.0
    %969 = vmatprep.subr.mxu0 0.0
    %970 = vmatpush1.msra.mxu0 0.0
    %971 = vmatprep.subr.mxu0 0.0
    %972 = vmatpush1.msra.mxu0 0.0
    %973 = vmatprep.subr.mxu0 0.0
    %974 = vmatpush1.msra.mxu0 0.0
    %975 = vmatprep.subr.mxu0 0.0
    %976 = vmatpush1.msra.mxu0 0.0
    %977 = vmatprep.subr.mxu0 0.0
    %978 = vmatpush1.msra.mxu0 0.0
    %979 = vmatprep.subr.mxu0 0.0
    %980 = vmatpush1.msra.mxu0 0.0
    %981 = vmatprep.subr.mxu0 0.0
    %982 = vmatpush1.msra.mxu0 0.0
    %983 = vmatprep.subr.mxu0 0.0
    %984 = vmatpush1.msra.mxu0 0.0
    %985 = vmatprep.subr.mxu0 0.0
    %986 = vmatpush1.msra.mxu0 0.0
    %987 = vmatprep.subr.mxu0 0.0
    %988 = vmatpush1.msra.mxu0 0.0
    %989 = vmatprep.subr.mxu0 0.0
    %990 = vmatpush1.msra.mxu0 0.0
    %991 = vmatprep.subr.mxu0 0.0
    %992 = vmatpush1.msra.mxu0 0.0
    %993 = vmatprep.subr.mxu0 0.0
    %994 = vmatpush1.msra.mxu0 0.0
    %995 = vmatprep.subr.mxu0 0.0
    %996 = vmatpush1.msra.mxu0 0.0
    %997 = vmatprep.mubr.f32.mxu0 0.0
    %998 = vmatmul.mubr.f32.gmra.mrb[0].mxu0 %v931
    %v999 = vpop.f32.mrb[0].mxu0
    %v1000 = vadd.f32 %v119, %v999
    %v1001 = vpop.f32.mrb[0].mxu0
    %1002 = vdwg.mxu0
    %v1003 = vtanh.pop %v1000
    %v1005 = vsel %vm358, %v1003, 0
    %1007 = vmatprep.subr.mxu0 0.0
    %1008 = vmatpush1.msra.mxu0 %v132
    %1009 = vmatprep.subr.mxu0 0.0
    %1010 = vmatpush1.msra.mxu0 %v133
    %1011 = vmatprep.subr.mxu0 0.0
    %1012 = vmatpush1.msra.mxu0 %v134
    %1013 = vmatprep.subr.mxu0 0.0
    %1014 = vmatpush1.msra.mxu0 %v135
    %1015 = vmatprep.subr.mxu0 0.0
    %1016 = vmatpush1.msra.mxu0 0.0
    %1017 = vmatprep.subr.mxu0 0.0
    %1018 = vmatpush1.msra.mxu0 0.0
    %1019 = vmatprep.subr.mxu0 0.0
    %1020 = vmatpush1.msra.mxu0 0.0
    %1021 = vmatprep.subr.mxu0 0.0
    %1022 = vmatpush1.msra.mxu0 0.0
    %1023 = vmatprep.subr.mxu0 0.0
    %1024 = vmatpush1.msra.mxu0 0.0
    %1025 = vmatprep.subr.mxu0 0.0
    %1026 = vmatpush1.msra.mxu0 0.0
    %1027 = vmatprep.subr.mxu0 0.0
    %1028 = vmatpush1.msra.mxu0 0.0
    %1029 = vmatprep.subr.mxu0 0.0
    %1030 = vmatpush1.msra.mxu0 0.0
    %1031 = vmatprep.subr.mxu0 0.0
    %1032 = vmatpush1.msra.mxu0 0.0
    %1033 = vmatprep.subr.mxu0 0.0
    %1034 = vmatpush1.msra.mxu0 0.0
    %1035 = vmatprep.subr.mxu0 0.0
    %1036 = vmatpush1.msra.mxu0 0.0
    %1037 = vmatprep.subr.mxu0 0.0
    %1038 = vmatpush1.msra.mxu0 0.0
    %1039 = vmatprep.subr.mxu0 0.0
    %1040 = vmatpush1.msra.mxu0 0.0
    %1041 = vmatprep.subr.mxu0 0.0
    %1042 = vmatpush1.msra.mxu0 0.0
    %1043 = vmatprep.subr.mxu0 0.0
    %1044 = vmatpush1.msra.mxu0 0.0
    %1045 = vmatprep.subr.mxu0 0.0
    %1046 = vmatpush1.msra.mxu0 0.0
    %1047 = vmatprep.subr.mxu0 0.0
    %1048 = vmatpush1.msra.mxu0 0.0
    %1049 = vmatprep.subr.mxu0 0.0
    %1050 = vmatpush1.msra.mxu0 0.0
    %1051 = vmatprep.subr.mxu0 0.0
    %1052 = vmatpush1.msra.mxu0 0.0
    %1053 = vmatprep.subr.mxu0 0.0
    %1054 = vmatpush1.msra.mxu0 0.0
    %1055 = vmatprep.subr.mxu0 0.0
    %1056 = vmatpush1.msra.mxu0 0.0
    %1057 = vmatprep.subr.mxu0 0.0
    %1058 = vmatpush1.msra.mxu0 0.0
    %1059 = vmatprep.subr.mxu0 0.0
    %1060 = vmatpush1.msra.mxu0 0.0
    %1061 = vmatprep.subr.mxu0 0.0
    %1062 = vmatpush1.msra.mxu0 0.0
    %1063 = vmatprep.subr.mxu0 0.0
    %1064 = vmatpush1.msra.mxu0 0.0
    %1065 = vmatprep.subr.mxu0 0.0
    %1066 = vmatpush1.msra.mxu0 0.0
    %1067 = vmatprep.subr.mxu0 0.0
    %1068 = vmatpush1.msra.mxu0 0.0
    %1069 = vmatprep.subr.mxu0 0.0
    %1070 = vmatpush1.msra.mxu0 0.0
    %1071 = vmatprep.mubr.f32.mxu0 0.0
    %1072 = vmatmul.mubr.f32.gmra.mrb[0].mxu0 %v1005
    %v1073 = vpop.f32.mrb[0].mxu0
    %v1074 = vadd.f32 %v156, %v1073
    %v1075 = vpop.f32.mrb[0].mxu0
    %1076 = vdwg.mxu0
    %v1077 = vtanh.pop %v1074
    %1079 = vset.pattern.permute.xlu0 0
    %1080 = vperm.xlu0 %1079, %v922
    %v1081 = vpop.permute.xlu0 %1080
    %1083 = vset.pattern.permute.xlu0 0
    %1084 = vperm.xlu0 %1083, %v923
    %v1085 = vpop.permute.xlu0 %1084
    %1087 = vset.pattern.permute.xlu0 0
    %1088 = vperm.xlu0 %1087, %v924
    %v1089 = vpop.permute.xlu0 %1088
    %1091 = vset.pattern.permute.xlu0 0
    %1092 = vperm.xlu0 %1091, %v925
    %v1093 = vpop.permute.xlu0 %1092
    %1095 = vset.pattern.permute.xlu0 0
    %1096 = vperm.xlu0 %1095, %v926
    %v1097 = vpop.permute.xlu0 %1096
    %1099 = vset.pattern.permute.xlu0 0
    %1100 = vperm.xlu0 %1099, %v927
    %v1101 = vpop.permute.xlu0 %1100
    %1103 = vset.pattern.permute.xlu0 0
    %1104 = vperm.xlu0 %1103, %v928
    %v1105 = vpop.permute.xlu0 %1104
    %1107 = vset.pattern.permute.xlu0 0
    %1108 = vperm.xlu0 %1107, %v929
    %v1109 = vpop.permute.xlu0 %1108
    %v1110 = vrot.slane %v1085, 7
    %v1111 = vsel %vm199, %v1110, %v1081
    %v1112 = vrot.slane %v1089, 6
    %v1113 = vsel %vm202, %v1112, %v1111
    %v1114 = vrot.slane %v1093, 5
    %v1115 = vsel %vm205, %v1114, %v1113
    %v1116 = vrot.slane %v1097, 4
    %v1117 = vsel %vm208, %v1116, %v1115
    %v1118 = vrot.slane %v1101, 3
    %v1119 = vsel %vm211, %v1118, %v1117
    %v1120 = vrot.slane %v1105, 2
    %v1121 = vsel %vm214, %v1120, %v1119
    %v1122 = vrot.slane %v1109, 1
    %v1123 = vsel %vm217, %v1122, %v1121
    %v1125 = vmul.f32 %v1077, %v1123
    %1126 = vmatprep.subr.mxu0 0.0
    %1127 = vmatpush1.msra.mxu0 %v137
    %1128 = vmatprep.subr.mxu0 0.0
    %1129 = vmatpush1.msra.mxu0 %v138
    %1130 = vmatprep.subr.mxu0 0.0
    %1131 = vmatpush1.msra.mxu0 %v139
    %1132 = vmatprep.subr.mxu0 0.0
    %1133 = vmatpush1.msra.mxu0 %v140
    %1134 = vmatprep.subr.mxu0 0.0
    %1135 = vmatpush1.msra.mxu0 0.0
    %1136 = vmatprep.subr.mxu0 0.0
    %1137 = vmatpush1.msra.mxu0 0.0
    %1138 = vmatprep.subr.mxu0 0.0
    %1139 = vmatpush1.msra.mxu0 0.0
    %1140 = vmatprep.subr.mxu0 0.0
    %1141 = vmatpush1.msra.mxu0 0.0
    %1142 = vmatprep.subr.mxu0 0.0
    %1143 = vmatpush1.msra.mxu0 0.0
    %1144 = vmatprep.subr.mxu0 0.0
    %1145 = vmatpush1.msra.mxu0 0.0
    %1146 = vmatprep.subr.mxu0 0.0
    %1147 = vmatpush1.msra.mxu0 0.0
    %1148 = vmatprep.subr.mxu0 0.0
    %1149 = vmatpush1.msra.mxu0 0.0
    %1150 = vmatprep.subr.mxu0 0.0
    %1151 = vmatpush1.msra.mxu0 0.0
    %1152 = vmatprep.subr.mxu0 0.0
    %1153 = vmatpush1.msra.mxu0 0.0
    %1154 = vmatprep.subr.mxu0 0.0
    %1155 = vmatpush1.msra.mxu0 0.0
    %1156 = vmatprep.subr.mxu0 0.0
    %1157 = vmatpush1.msra.mxu0 0.0
    %1158 = vmatprep.subr.mxu0 0.0
    %1159 = vmatpush1.msra.mxu0 0.0
    %1160 = vmatprep.subr.mxu0 0.0
    %1161 = vmatpush1.msra.mxu0 0.0
    %1162 = vmatprep.subr.mxu0 0.0
    %1163 = vmatpush1.msra.mxu0 0.0
    %1164 = vmatprep.subr.mxu0 0.0
    %1165 = vmatpush1.msra.mxu0 0.0
    %1166 = vmatprep.subr.mxu0 0.0
    %1167 = vmatpush1.msra.mxu0 0.0
    %1168 = vmatprep.subr.mxu0 0.0
    %1169 = vmatpush1.msra.mxu0 0.0
    %1170 = vmatprep.subr.mxu0 0.0
    %1171 = vmatpush1.msra.mxu0 0.0
    %1172 = vmatprep.subr.mxu0 0.0
    %1173 = vmatpush1.msra.mxu0 0.0
    %1174 = vmatprep.subr.mxu0 0.0
    %1175 = vmatpush1.msra.mxu0 0.0
    %1176 = vmatprep.subr.mxu0 0.0
    %1177 = vmatpush1.msra.mxu0 0.0
    %1178 = vmatprep.subr.mxu0 0.0
    %1179 = vmatpush1.msra.mxu0 0.0
    %1180 = vmatprep.subr.mxu0 0.0
    %1181 = vmatpush1.msra.mxu0 0.0
    %1182 = vmatprep.subr.mxu0 0.0
    %1183 = vmatpush1.msra.mxu0 0.0
    %1184 = vmatprep.subr.mxu0 0.0
    %1185 = vmatpush1.msra.mxu0 0.0
    %1186 = vmatprep.subr.mxu0 0.0
    %1187 = vmatpush1.msra.mxu0 0.0
    %1188 = vmatprep.subr.mxu0 0.0
    %1189 = vmatpush1.msra.mxu0 0.0
    %1190 = vmatprep.mubr.f32.mxu0 0.0
    %1191 = vmatmul.mubr.f32.gmra.mrb[0].mxu0 %v1005
    %v1192 = vpop.f32.mrb[0].mxu0
    %v1193 = vadd.f32 %v164, %v1192
    %v1194 = vpop.f32.mrb[0].mxu0
    %1195 = vdwg.mxu0
    %v1196 = vtanh.pop %v1193
    %1197 = vset.pattern.permute.xlu0 1
    %1198 = vperm.xlu0 %1197, %v922
    %v1199 = vpop.permute.xlu0 %1198
    %1200 = vset.pattern.permute.xlu0 1
    %1201 = vperm.xlu0 %1200, %v923
    %v1202 = vpop.permute.xlu0 %1201
    %1203 = vset.pattern.permute.xlu0 1
    %1204 = vperm.xlu0 %1203, %v924
    %v1205 = vpop.permute.xlu0 %1204
    %1206 = vset.pattern.permute.xlu0 1
    %1207 = vperm.xlu0 %1206, %v925
    %v1208 = vpop.permute.xlu0 %1207
    %1209 = vset.pattern.permute.xlu0 1
    %1210 = vperm.xlu0 %1209, %v926
    %v1211 = vpop.permute.xlu0 %1210
    %1212 = vset.pattern.permute.xlu0 1
    %1213 = vperm.xlu0 %1212, %v927
    %v1214 = vpop.permute.xlu0 %1213
    %1215 = vset.pattern.permute.xlu0 1
    %1216 = vperm.xlu0 %1215, %v928
    %v1217 = vpop.permute.xlu0 %1216
    %1218 = vset.pattern.permute.xlu0 1
    %1219 = vperm.xlu0 %1218, %v929
    %v1220 = vpop.permute.xlu0 %1219
    %v1221 = vrot.slane %v1202, 7
    %v1222 = vsel %vm199, %v1221, %v1199
    %v1223 = vrot.slane %v1205, 6
    %v1224 = vsel %vm202, %v1223, %v1222
    %v1225 = vrot.slane %v1208, 5
    %v1226 = vsel %vm205, %v1225, %v1224
    %v1227 = vrot.slane %v1211, 4
    %v1228 = vsel %vm208, %v1227, %v1226
    %v1229 = vrot.slane %v1214, 3
    %v1230 = vsel %vm211, %v1229, %v1228
    %v1231 = vrot.slane %v1217, 2
    %v1232 = vsel %vm214, %v1231, %v1230
    %v1233 = vrot.slane %v1220, 1
    %v1234 = vsel %vm217, %v1233, %v1232
    %v1236 = vmul.f32 %v1196, %v1234
    %v1237 = vadd.f32 %v1125, %v1236
    %1238 = vmatprep.subr.mxu0 0.0
    %1239 = vmatpush1.msra.mxu0 %v142
    %1240 = vmatprep.subr.mxu0 0.0
    %1241 = vmatpush1.msra.mxu0 %v143
    %1242 = vmatprep.subr.mxu0 0.0
    %1243 = vmatpush1.msra.mxu0 %v144
    %1244 = vmatprep.subr.mxu0 0.0
    %1245 = vmatpush1.msra.mxu0 %v145
    %1246 = vmatprep.subr.mxu0 0.0
    %1247 = vmatpush1.msra.mxu0 0.0
    %1248 = vmatprep.subr.mxu0 0.0
    %1249 = vmatpush1.msra.mxu0 0.0
    %1250 = vmatprep.subr.mxu0 0.0
    %1251 = vmatpush1.msra.mxu0 0.0
    %1252 = vmatprep.subr.mxu0 0.0
    %1253 = vmatpush1.msra.mxu0 0.0
    %1254 = vmatprep.subr.mxu0 0.0
    %1255 = vmatpush1.msra.mxu0 0.0
    %1256 = vmatprep.subr.mxu0 0.0
    %1257 = vmatpush1.msra.mxu0 0.0
    %1258 = vmatprep.subr.mxu0 0.0
    %1259 = vmatpush1.msra.mxu0 0.0
    %1260 = vmatprep.subr.mxu0 0.0
    %1261 = vmatpush1.msra.mxu0 0.0
    %1262 = vmatprep.subr.mxu0 0.0
    %1263 = vmatpush1.msra.mxu0 0.0
    %1264 = vmatprep.subr.mxu0 0.0
    %1265 = vmatpush1.msra.mxu0 0.0
    %1266 = vmatprep.subr.mxu0 0.0
    %1267 = vmatpush1.msra.mxu0 0.0
    %1268 = vmatprep.subr.mxu0 0.0
    %1269 = vmatpush1.msra.mxu0 0.0
    %1270 = vmatprep.subr.mxu0 0.0
    %1271 = vmatpush1.msra.mxu0 0.0
    %1272 = vmatprep.subr.mxu0 0.0
    %1273 = vmatpush1.msra.mxu0 0.0
    %1274 = vmatprep.subr.mxu0 0.0
    %1275 = vmatpush1.msra.mxu0 0.0
    %1276 = vmatprep.subr.mxu0 0.0
    %1277 = vmatpush1.msra.mxu0 0.0
    %1278 = vmatprep.subr.mxu0 0.0
    %1279 = vmatpush1.msra.mxu0 0.0
    %1280 = vmatprep.subr.mxu0 0.0
    %1281 = vmatpush1.msra.mxu0 0.0
    %1282 = vmatprep.subr.mxu0 0.0
    %1283 = vmatpush1.msra.mxu0 0.0
    %1284 = vmatprep.subr.mxu0 0.0
    %1285 = vmatpush1.msra.mxu0 0.0
    %1286 = vmatprep.subr.mxu0 0.0
    %1287 = vmatpush1.msra.mxu0 0.0
    %1288 = vmatprep.subr.mxu0 0.0
    %1289 = vmatpush1.msra.mxu0 0.0
    %1290 = vmatprep.subr.mxu0 0.0
    %1291 = vmatpush1.msra.mxu0 0.0
    %1292 = vmatprep.subr.mxu0 0.0
    %1293 = vmatpush1.msra.mxu0 0.0
    %1294 = vmatprep.subr.mxu0 0.0
    %1295 = vmatpush1.msra.mxu0 0.0
    %1296 = vmatprep.subr.mxu0 0.0
    %1297 = vmatpush1.msra.mxu0 0.0
    %1298 = vmatprep.subr.mxu0 0.0
    %1299 = vmatpush1.msra.mxu0 0.0
    %1300 = vmatprep.subr.mxu0 0.0
    %1301 = vmatpush1.msra.mxu0 0.0
    %1302 = vmatprep.mubr.f32.mxu0 0.0
    %1303 = vmatmul.mubr.f32.gmra.mrb[0].mxu0 %v1005
    %v1304 = vpop.f32.mrb[0].mxu0
    %v1305 = vadd.f32 %v172, %v1304
    %v1306 = vpop.f32.mrb[0].mxu0
    %1307 = vdwg.mxu0
    %v1308 = vtanh.pop %v1305
    %1309 = vset.pattern.permute.xlu0 2
    %1310 = vperm.xlu0 %1309, %v922
    %v1311 = vpop.permute.xlu0 %1310
    %1312 = vset.pattern.permute.xlu0 2
    %1313 = vperm.xlu0 %1312, %v923
    %v1314 = vpop.permute.xlu0 %1313
    %1315 = vset.pattern.permute.xlu0 2
    %1316 = vperm.xlu0 %1315, %v924
    %v1317 = vpop.permute.xlu0 %1316
    %1318 = vset.pattern.permute.xlu0 2
    %1319 = vperm.xlu0 %1318, %v925
    %v1320 = vpop.permute.xlu0 %1319
    %1321 = vset.pattern.permute.xlu0 2
    %1322 = vperm.xlu0 %1321, %v926
    %v1323 = vpop.permute.xlu0 %1322
    %1324 = vset.pattern.permute.xlu0 2
    %1325 = vperm.xlu0 %1324, %v927
    %v1326 = vpop.permute.xlu0 %1325
    %1327 = vset.pattern.permute.xlu0 2
    %1328 = vperm.xlu0 %1327, %v928
    %v1329 = vpop.permute.xlu0 %1328
    %1330 = vset.pattern.permute.xlu0 2
    %1331 = vperm.xlu0 %1330, %v929
    %v1332 = vpop.permute.xlu0 %1331
    %v1333 = vrot.slane %v1314, 7
    %v1334 = vsel %vm199, %v1333, %v1311
    %v1335 = vrot.slane %v1317, 6
    %v1336 = vsel %vm202, %v1335, %v1334
    %v1337 = vrot.slane %v1320, 5
    %v1338 = vsel %vm205, %v1337, %v1336
    %v1339 = vrot.slane %v1323, 4
    %v1340 = vsel %vm208, %v1339, %v1338
    %v1341 = vrot.slane %v1326, 3
    %v1342 = vsel %vm211, %v1341, %v1340
    %v1343 = vrot.slane %v1329, 2
    %v1344 = vsel %vm214, %v1343, %v1342
    %v1345 = vrot.slane %v1332, 1
    %v1346 = vsel %vm217, %v1345, %v1344
    %v1348 = vmul.f32 %v1308, %v1346
    %v1349 = vadd.f32 %v1237, %v1348
    %1350 = vmatprep.subr.mxu0 0.0
    %1351 = vmatpush1.msra.mxu0 %v147
    %1352 = vmatprep.subr.mxu0 0.0
    %1353 = vmatpush1.msra.mxu0 %v148
    %1354 = vmatprep.subr.mxu0 0.0
    %1355 = vmatpush1.msra.mxu0 %v149
    %1356 = vmatprep.subr.mxu0 0.0
    %1357 = vmatpush1.msra.mxu0 %v150
    %1358 = vmatprep.subr.mxu0 0.0
    %1359 = vmatpush1.msra.mxu0 0.0
    %1360 = vmatprep.subr.mxu0 0.0
    %1361 = vmatpush1.msra.mxu0 0.0
    %1362 = vmatprep.subr.mxu0 0.0
    %1363 = vmatpush1.msra.mxu0 0.0
    %1364 = vmatprep.subr.mxu0 0.0
    %1365 = vmatpush1.msra.mxu0 0.0
    %1366 = vmatprep.subr.mxu0 0.0
    %1367 = vmatpush1.msra.mxu0 0.0
    %1368 = vmatprep.subr.mxu0 0.0
    %1369 = vmatpush1.msra.mxu0 0.0
    %1370 = vmatprep.subr.mxu0 0.0
    %1371 = vmatpush1.msra.mxu0 0.0
    %1372 = vmatprep.subr.mxu0 0.0
    %1373 = vmatpush1.msra.mxu0 0.0
    %1374 = vmatprep.subr.mxu0 0.0
    %1375 = vmatpush1.msra.mxu0 0.0
    %1376 = vmatprep.subr.mxu0 0.0
    %1377 = vmatpush1.msra.mxu0 0.0
    %1378 = vmatprep.subr.mxu0 0.0
    %1379 = vmatpush1.msra.mxu0 0.0
    %1380 = vmatprep.subr.mxu0 0.0
    %1381 = vmatpush1.msra.mxu0 0.0
    %1382 = vmatprep.subr.mxu0 0.0
    %1383 = vmatpush1.msra.mxu0 0.0
    %1384 = vmatprep.subr.mxu0 0.0
    %1385 = vmatpush1.msra.mxu0 0.0
    %1386 = vmatprep.subr.mxu0 0.0
    %1387 = vmatpush1.msra.mxu0 0.0
    %1388 = vmatprep.subr.mxu0 0.0
    %1389 = vmatpush1.msra.mxu0 0.0
    %1390 = vmatprep.subr.mxu0 0.0
    %1391 = vmatpush1.msra.mxu0 0.0
    %1392 = vmatprep.subr.mxu0 0.0
    %1393 = vmatpush1.msra.mxu0 0.0
    %1394 = vmatprep.subr.mxu0 0.0
    %1395 = vmatpush1.msra.mxu0 0.0
    %1396 = vmatprep.subr.mxu0 0.0
    %1397 = vmatpush1.msra.mxu0 0.0
    %1398 = vmatprep.subr.mxu0 0.0
    %1399 = vmatpush1.msra.mxu0 0.0
    %1400 = vmatprep.subr.mxu0 0.0
    %1401 = vmatpush1.msra.mxu0 0.0
    %1402 = vmatprep.subr.mxu0 0.0
    %1403 = vmatpush1.msra.mxu0 0.0
    %1404 = vmatprep.subr.mxu0 0.0
    %1405 = vmatpush1.msra.mxu0 0.0
    %1406 = vmatprep.subr.mxu0 0.0
    %1407 = vmatpush1.msra.mxu0 0.0
    %1408 = vmatprep.subr.mxu0 0.0
    %1409 = vmatpush1.msra.mxu0 0.0
    %1410 = vmatprep.subr.mxu0 0.0
    %1411 = vmatpush1.msra.mxu0 0.0
    %1412 = vmatprep.subr.mxu0 0.0
    %1413 = vmatpush1.msra.mxu0 0.0
    %1414 = vmatprep.mubr.f32.mxu0 0.0
    %1415 = vmatmul.mubr.f32.gmra.mrb[0].mxu0 %v1005
    %v1416 = vpop.f32.mrb[0].mxu0
    %v1417 = vadd.f32 %v180, %v1416
    %v1418 = vpop.f32.mrb[0].mxu0
    %1419 = vdwg.mxu0
    %v1420 = vtanh.pop %v1417
    %1421 = vset.pattern.permute.xlu0 3
    %1422 = vperm.xlu0 %1421, %v922
    %v1423 = vpop.permute.xlu0 %1422
    %1424 = vset.pattern.permute.xlu0 3
    %1425 = vperm.xlu0 %1424, %v923
    %v1426 = vpop.permute.xlu0 %1425
    %1427 = vset.pattern.permute.xlu0 3
    %1428 = vperm.xlu0 %1427, %v924
    %v1429 = vpop.permute.xlu0 %1428
    %1430 = vset.pattern.permute.xlu0 3
    %1431 = vperm.xlu0 %1430, %v925
    %v1432 = vpop.permute.xlu0 %1431
    %1433 = vset.pattern.permute.xlu0 3
    %1434 = vperm.xlu0 %1433, %v926
    %v1435 = vpop.permute.xlu0 %1434
    %1436 = vset.pattern.permute.xlu0 3
    %1437 = vperm.xlu0 %1436, %v927
    %v1438 = vpop.permute.xlu0 %1437
    %1439 = vset.pattern.permute.xlu0 3
    %1440 = vperm.xlu0 %1439, %v928
    %v1441 = vpop.permute.xlu0 %1440
    %1442 = vset.pattern.permute.xlu0 3
    %1443 = vperm.xlu0 %1442, %v929
    %v1444 = vpop.permute.xlu0 %1443
    %v1445 = vrot.slane %v1426, 7
    %v1446 = vsel %vm199, %v1445, %v1423
    %v1447 = vrot.slane %v1429, 6
    %v1448 = vsel %vm202, %v1447, %v1446
    %v1449 = vrot.slane %v1432, 5
    %v1450 = vsel %vm205, %v1449, %v1448
    %v1451 = vrot.slane %v1435, 4
    %v1452 = vsel %vm208, %v1451, %v1450
    %v1453 = vrot.slane %v1438, 3
    %v1454 = vsel %vm211, %v1453, %v1452
    %v1455 = vrot.slane %v1441, 2
    %v1456 = vsel %vm214, %v1455, %v1454
    %v1457 = vrot.slane %v1444, 1
    %v1458 = vsel %vm217, %v1457, %v1456
    %v1460 = vmul.f32 %v1420, %v1458
    %v1461 = vadd.f32 %v1349, %v1460
    %v1462 = vstv %s323
    %v1463 = vmul.f32 %v1462, %v1461
    %v1464 = vadd.f32 %v293, %v1463
    %s1465 = sld [smem:[#allocation4 + $0x2]]
    %s1466 = ssub.f32 %s1465, %s322
    %s1467 = ssub.f32 %s322, %s296
    %v1468 = vstv %s1467
    %v1469 = vmul.f32 %v313, %v1468
    %v1470 = vmul.f32 %v314, %v1468
    %v1471 = vmul.f32 %v315, %v1468
    %v1472 = vmul.f32 %v316, %v1468
    %v1473 = vmul.f32 %v317, %v1468
    %v1474 = vmul.f32 %v318, %v1468
    %v1475 = vmul.f32 %v319, %v1468
    %v1476 = vmul.f32 %v320, %v1468
    %v1477 = vadd.f32 %v305, %v1469
    %v1478 = vadd.f32 %v306, %v1470
    %v1479 = vadd.f32 %v307, %v1471
    %v1480 = vadd.f32 %v308, %v1472
    %v1481 = vadd.f32 %v309, %v1473
    %v1482 = vadd.f32 %v310, %v1474
    %v1483 = vadd.f32 %v311, %v1475
    %v1484 = vadd.f32 %v312, %v1476
    %v1485 = vmul.f32 %v1477, %v1468
    %v1486 = vmul.f32 %v1478, %v1468
    %v1487 = vmul.f32 %v1479, %v1468
    %v1488 = vmul.f32 %v1480, %v1468
    %v1489 = vmul.f32 %v1481, %v1468
    %v1490 = vmul.f32 %v1482, %v1468
    %v1491 = vmul.f32 %v1483, %v1468
    %v1492 = vmul.f32 %v1484, %v1468
    %v1493 = vadd.f32 %v297, %v1485
    %v1494 = vadd.f32 %v298, %v1486
    %v1495 = vadd.f32 %v299, %v1487
    %v1496 = vadd.f32 %v300, %v1488
    %v1497 = vadd.f32 %v301, %v1489
    %v1498 = vadd.f32 %v302, %v1490
    %v1499 = vadd.f32 %v303, %v1491
    %v1500 = vadd.f32 %v304, %v1492
    %v1502 = vsel %vm358, %v1464, 0
    %1504 = vmatprep.subr.mxu0 0.0
    %1505 = vmatpush1.msra.mxu0 %v110
    %1506 = vmatprep.subr.mxu0 0.0
    %1507 = vmatpush1.msra.mxu0 %v111
    %1508 = vmatprep.subr.mxu0 0.0
    %1509 = vmatpush1.msra.mxu0 %v112
    %1510 = vmatprep.subr.mxu0 0.0
    %1511 = vmatpush1.msra.mxu0 %v113
    %1512 = vmatprep.subr.mxu0 0.0
    %1513 = vmatpush1.msra.mxu0 0.0
    %1514 = vmatprep.subr.mxu0 0.0
    %1515 = vmatpush1.msra.mxu0 0.0
    %1516 = vmatprep.subr.mxu0 0.0
    %1517 = vmatpush1.msra.mxu0 0.0
    %1518 = vmatprep.subr.mxu0 0.0
    %1519 = vmatpush1.msra.mxu0 0.0
    %1520 = vmatprep.subr.mxu0 0.0
    %1521 = vmatpush1.msra.mxu0 0.0
    %1522 = vmatprep.subr.mxu0 0.0
    %1523 = vmatpush1.msra.mxu0 0.0
    %1524 = vmatprep.subr.mxu0 0.0
    %1525 = vmatpush1.msra.mxu0 0.0
    %1526 = vmatprep.subr.mxu0 0.0
    %1527 = vmatpush1.msra.mxu0 0.0
    %1528 = vmatprep.subr.mxu0 0.0
    %1529 = vmatpush1.msra.mxu0 0.0
    %1530 = vmatprep.subr.mxu0 0.0
    %1531 = vmatpush1.msra.mxu0 0.0
    %1532 = vmatprep.subr.mxu0 0.0
    %1533 = vmatpush1.msra.mxu0 0.0
    %1534 = vmatprep.subr.mxu0 0.0
    %1535 = vmatpush1.msra.mxu0 0.0
    %1536 = vmatprep.subr.mxu0 0.0
    %1537 = vmatpush1.msra.mxu0 0.0
    %1538 = vmatprep.subr.mxu0 0.0
    %1539 = vmatpush1.msra.mxu0 0.0
    %1540 = vmatprep.subr.mxu0 0.0
    %1541 = vmatpush1.msra.mxu0 0.0
    %1542 = vmatprep.subr.mxu0 0.0
    %1543 = vmatpush1.msra.mxu0 0.0
    %1544 = vmatprep.subr.mxu0 0.0
    %1545 = vmatpush1.msra.mxu0 0.0
    %1546 = vmatprep.subr.mxu0 0.0
    %1547 = vmatpush1.msra.mxu0 0.0
    %1548 = vmatprep.subr.mxu0 0.0
    %1549 = vmatpush1.msra.mxu0 0.0
    %1550 = vmatprep.subr.mxu0 0.0
    %1551 = vmatpush1.msra.mxu0 0.0
    %1552 = vmatprep.subr.mxu0 0.0
    %1553 = vmatpush1.msra.mxu0 0.0
    %1554 = vmatprep.subr.mxu0 0.0
    %1555 = vmatpush1.msra.mxu0 0.0
    %1556 = vmatprep.subr.mxu0 0.0
    %1557 = vmatpush1.msra.mxu0 0.0
    %1558 = vmatprep.subr.mxu0 0.0
    %1559 = vmatpush1.msra.mxu0 0.0
    %1560 = vmatprep.subr.mxu0 0.0
    %1561 = vmatpush1.msra.mxu0 0.0
    %1562 = vmatprep.subr.mxu0 0.0
    %1563 = vmatpush1.msra.mxu0 0.0
    %1564 = vmatprep.subr.mxu0 0.0
    %1565 = vmatpush1.msra.mxu0 0.0
    %1566 = vmatprep.subr.mxu0 0.0
    %1567 = vmatpush1.msra.mxu0 0.0
    %1568 = vmatprep.mubr.f32.mxu0 0.0
    %1569 = vmatmul.mubr.f32.gmra.mrb[0].mxu0 %v1502
    %v1570 = vpop.f32.mrb[0].mxu0
    %v1571 = vadd.f32 %v119, %v1570
    %v1572 = vpop.f32.mrb[0].mxu0
    %1573 = vdwg.mxu0
    %v1574 = vtanh.pop %v1571
    %v1576 = vsel %vm358, %v1574, 0
    %1578 = vmatprep.subr.mxu0 0.0
    %1579 = vmatpush1.msra.mxu0 %v132
    %1580 = vmatprep.subr.mxu0 0.0
    %1581 = vmatpush1.msra.mxu0 %v133
    %1582 = vmatprep.subr.mxu0 0.0
    %1583 = vmatpush1.msra.mxu0 %v134
    %1584 = vmatprep.subr.mxu0 0.0
    %1585 = vmatpush1.msra.mxu0 %v135
    %1586 = vmatprep.subr.mxu0 0.0
    %1587 = vmatpush1.msra.mxu0 0.0
    %1588 = vmatprep.subr.mxu0 0.0
    %1589 = vmatpush1.msra.mxu0 0.0
    %1590 = vmatprep.subr.mxu0 0.0
    %1591 = vmatpush1.msra.mxu0 0.0
    %1592 = vmatprep.subr.mxu0 0.0
    %1593 = vmatpush1.msra.mxu0 0.0
    %1594 = vmatprep.subr.mxu0 0.0
    %1595 = vmatpush1.msra.mxu0 0.0
    %1596 = vmatprep.subr.mxu0 0.0
    %1597 = vmatpush1.msra.mxu0 0.0
    %1598 = vmatprep.subr.mxu0 0.0
    %1599 = vmatpush1.msra.mxu0 0.0
    %1600 = vmatprep.subr.mxu0 0.0
    %1601 = vmatpush1.msra.mxu0 0.0
    %1602 = vmatprep.subr.mxu0 0.0
    %1603 = vmatpush1.msra.mxu0 0.0
    %1604 = vmatprep.subr.mxu0 0.0
    %1605 = vmatpush1.msra.mxu0 0.0
    %1606 = vmatprep.subr.mxu0 0.0
    %1607 = vmatpush1.msra.mxu0 0.0
    %1608 = vmatprep.subr.mxu0 0.0
    %1609 = vmatpush1.msra.mxu0 0.0
    %1610 = vmatprep.subr.mxu0 0.0
    %1611 = vmatpush1.msra.mxu0 0.0
    %1612 = vmatprep.subr.mxu0 0.0
    %1613 = vmatpush1.msra.mxu0 0.0
    %1614 = vmatprep.subr.mxu0 0.0
    %1615 = vmatpush1.msra.mxu0 0.0
    %1616 = vmatprep.subr.mxu0 0.0
    %1617 = vmatpush1.msra.mxu0 0.0
    %1618 = vmatprep.subr.mxu0 0.0
    %1619 = vmatpush1.msra.mxu0 0.0
    %1620 = vmatprep.subr.mxu0 0.0
    %1621 = vmatpush1.msra.mxu0 0.0
    %1622 = vmatprep.subr.mxu0 0.0
    %1623 = vmatpush1.msra.mxu0 0.0
    %1624 = vmatprep.subr.mxu0 0.0
    %1625 = vmatpush1.msra.mxu0 0.0
    %1626 = vmatprep.subr.mxu0 0.0
    %1627 = vmatpush1.msra.mxu0 0.0
    %1628 = vmatprep.subr.mxu0 0.0
    %1629 = vmatpush1.msra.mxu0 0.0
    %1630 = vmatprep.subr.mxu0 0.0
    %1631 = vmatpush1.msra.mxu0 0.0
    %1632 = vmatprep.subr.mxu0 0.0
    %1633 = vmatpush1.msra.mxu0 0.0
    %1634 = vmatprep.subr.mxu0 0.0
    %1635 = vmatpush1.msra.mxu0 0.0
    %1636 = vmatprep.subr.mxu0 0.0
    %1637 = vmatpush1.msra.mxu0 0.0
    %1638 = vmatprep.subr.mxu0 0.0
    %1639 = vmatpush1.msra.mxu0 0.0
    %1640 = vmatprep.subr.mxu0 0.0
    %1641 = vmatpush1.msra.mxu0 0.0
    %1642 = vmatprep.mubr.f32.mxu0 0.0
    %1643 = vmatmul.mubr.f32.gmra.mrb[0].mxu0 %v1576
    %v1644 = vpop.f32.mrb[0].mxu0
    %v1645 = vadd.f32 %v156, %v1644
    %v1646 = vpop.f32.mrb[0].mxu0
    %1647 = vdwg.mxu0
    %v1648 = vtanh.pop %v1645
    %1650 = vset.pattern.permute.xlu0 0
    %1651 = vperm.xlu0 %1650, %v1493
    %v1652 = vpop.permute.xlu0 %1651
    %1654 = vset.pattern.permute.xlu0 0
    %1655 = vperm.xlu0 %1654, %v1494
    %v1656 = vpop.permute.xlu0 %1655
    %1658 = vset.pattern.permute.xlu0 0
    %1659 = vperm.xlu0 %1658, %v1495
    %v1660 = vpop.permute.xlu0 %1659
    %1662 = vset.pattern.permute.xlu0 0
    %1663 = vperm.xlu0 %1662, %v1496
    %v1664 = vpop.permute.xlu0 %1663
    %1666 = vset.pattern.permute.xlu0 0
    %1667 = vperm.xlu0 %1666, %v1497
    %v1668 = vpop.permute.xlu0 %1667
    %1670 = vset.pattern.permute.xlu0 0
    %1671 = vperm.xlu0 %1670, %v1498
    %v1672 = vpop.permute.xlu0 %1671
    %1674 = vset.pattern.permute.xlu0 0
    %1675 = vperm.xlu0 %1674, %v1499
    %v1676 = vpop.permute.xlu0 %1675
    %1678 = vset.pattern.permute.xlu0 0
    %1679 = vperm.xlu0 %1678, %v1500
    %v1680 = vpop.permute.xlu0 %1679
    %v1681 = vrot.slane %v1656, 7
    %v1682 = vsel %vm199, %v1681, %v1652
    %v1683 = vrot.slane %v1660, 6
    %v1684 = vsel %vm202, %v1683, %v1682
    %v1685 = vrot.slane %v1664, 5
    %v1686 = vsel %vm205, %v1685, %v1684
    %v1687 = vrot.slane %v1668, 4
    %v1688 = vsel %vm208, %v1687, %v1686
    %v1689 = vrot.slane %v1672, 3
    %v1690 = vsel %vm211, %v1689, %v1688
    %v1691 = vrot.slane %v1676, 2
    %v1692 = vsel %vm214, %v1691, %v1690
    %v1693 = vrot.slane %v1680, 1
    %v1694 = vsel %vm217, %v1693, %v1692
    %v1696 = vmul.f32 %v1648, %v1694
    %1697 = vmatprep.subr.mxu0 0.0
    %1698 = vmatpush1.msra.mxu0 %v137
    %1699 = vmatprep.subr.mxu0 0.0
    %1700 = vmatpush1.msra.mxu0 %v138
    %1701 = vmatprep.subr.mxu0 0.0
    %1702 = vmatpush1.msra.mxu0 %v139
    %1703 = vmatprep.subr.mxu0 0.0
    %1704 = vmatpush1.msra.mxu0 %v140
    %1705 = vmatprep.subr.mxu0 0.0
    %1706 = vmatpush1.msra.mxu0 0.0
    %1707 = vmatprep.subr.mxu0 0.0
    %1708 = vmatpush1.msra.mxu0 0.0
    %1709 = vmatprep.subr.mxu0 0.0
    %1710 = vmatpush1.msra.mxu0 0.0
    %1711 = vmatprep.subr.mxu0 0.0
    %1712 = vmatpush1.msra.mxu0 0.0
    %1713 = vmatprep.subr.mxu0 0.0
    %1714 = vmatpush1.msra.mxu0 0.0
    %1715 = vmatprep.subr.mxu0 0.0
    %1716 = vmatpush1.msra.mxu0 0.0
    %1717 = vmatprep.subr.mxu0 0.0
    %1718 = vmatpush1.msra.mxu0 0.0
    %1719 = vmatprep.subr.mxu0 0.0
    %1720 = vmatpush1.msra.mxu0 0.0
    %1721 = vmatprep.subr.mxu0 0.0
    %1722 = vmatpush1.msra.mxu0 0.0
    %1723 = vmatprep.subr.mxu0 0.0
    %1724 = vmatpush1.msra.mxu0 0.0
    %1725 = vmatprep.subr.mxu0 0.0
    %1726 = vmatpush1.msra.mxu0 0.0
    %1727 = vmatprep.subr.mxu0 0.0
    %1728 = vmatpush1.msra.mxu0 0.0
    %1729 = vmatprep.subr.mxu0 0.0
    %1730 = vmatpush1.msra.mxu0 0.0
    %1731 = vmatprep.subr.mxu0 0.0
    %1732 = vmatpush1.msra.mxu0 0.0
    %1733 = vmatprep.subr.mxu0 0.0
    %1734 = vmatpush1.msra.mxu0 0.0
    %1735 = vmatprep.subr.mxu0 0.0
    %1736 = vmatpush1.msra.mxu0 0.0
    %1737 = vmatprep.subr.mxu0 0.0
    %1738 = vmatpush1.msra.mxu0 0.0
    %1739 = vmatprep.subr.mxu0 0.0
    %1740 = vmatpush1.msra.mxu0 0.0
    %1741 = vmatprep.subr.mxu0 0.0
    %1742 = vmatpush1.msra.mxu0 0.0
    %1743 = vmatprep.subr.mxu0 0.0
    %1744 = vmatpush1.msra.mxu0 0.0
    %1745 = vmatprep.subr.mxu0 0.0
    %1746 = vmatpush1.msra.mxu0 0.0
    %1747 = vmatprep.subr.mxu0 0.0
    %1748 = vmatpush1.msra.mxu0 0.0
    %1749 = vmatprep.subr.mxu0 0.0
    %1750 = vmatpush1.msra.mxu0 0.0
    %1751 = vmatprep.subr.mxu0 0.0
    %1752 = vmatpush1.msra.mxu0 0.0
    %1753 = vmatprep.subr.mxu0 0.0
    %1754 = vmatpush1.msra.mxu0 0.0
    %1755 = vmatprep.subr.mxu0 0.0
    %1756 = vmatpush1.msra.mxu0 0.0
    %1757 = vmatprep.subr.mxu0 0.0
    %1758 = vmatpush1.msra.mxu0 0.0
    %1759 = vmatprep.subr.mxu0 0.0
    %1760 = vmatpush1.msra.mxu0 0.0
    %1761 = vmatprep.mubr.f32.mxu0 0.0
    %1762 = vmatmul.mubr.f32.gmra.mrb[0].mxu0 %v1576
    %v1763 = vpop.f32.mrb[0].mxu0
    %v1764 = vadd.f32 %v164, %v1763
    %v1765 = vpop.f32.mrb[0].mxu0
    %1766 = vdwg.mxu0
    %v1767 = vtanh.pop %v1764
    %1768 = vset.pattern.permute.xlu0 1
    %1769 = vperm.xlu0 %1768, %v1493
    %v1770 = vpop.permute.xlu0 %1769
    %1771 = vset.pattern.permute.xlu0 1
    %1772 = vperm.xlu0 %1771, %v1494
    %v1773 = vpop.permute.xlu0 %1772
    %1774 = vset.pattern.permute.xlu0 1
    %1775 = vperm.xlu0 %1774, %v1495
    %v1776 = vpop.permute.xlu0 %1775
    %1777 = vset.pattern.permute.xlu0 1
    %1778 = vperm.xlu0 %1777, %v1496
    %v1779 = vpop.permute.xlu0 %1778
    %1780 = vset.pattern.permute.xlu0 1
    %1781 = vperm.xlu0 %1780, %v1497
    %v1782 = vpop.permute.xlu0 %1781
    %1783 = vset.pattern.permute.xlu0 1
    %1784 = vperm.xlu0 %1783, %v1498
    %v1785 = vpop.permute.xlu0 %1784
    %1786 = vset.pattern.permute.xlu0 1
    %1787 = vperm.xlu0 %1786, %v1499
    %v1788 = vpop.permute.xlu0 %1787
    %1789 = vset.pattern.permute.xlu0 1
    %1790 = vperm.xlu0 %1789, %v1500
    %v1791 = vpop.permute.xlu0 %1790
    %v1792 = vrot.slane %v1773, 7
    %v1793 = vsel %vm199, %v1792, %v1770
    %v1794 = vrot.slane %v1776, 6
    %v1795 = vsel %vm202, %v1794, %v1793
    %v1796 = vrot.slane %v1779, 5
    %v1797 = vsel %vm205, %v1796, %v1795
    %v1798 = vrot.slane %v1782, 4
    %v1799 = vsel %vm208, %v1798, %v1797
    %v1800 = vrot.slane %v1785, 3
    %v1801 = vsel %vm211, %v1800, %v1799
    %v1802 = vrot.slane %v1788, 2
    %v1803 = vsel %vm214, %v1802, %v1801
    %v1804 = vrot.slane %v1791, 1
    %v1805 = vsel %vm217, %v1804, %v1803
    %v1807 = vmul.f32 %v1767, %v1805
    %v1808 = vadd.f32 %v1696, %v1807
    %1809 = vmatprep.subr.mxu0 0.0
    %1810 = vmatpush1.msra.mxu0 %v142
    %1811 = vmatprep.subr.mxu0 0.0
    %1812 = vmatpush1.msra.mxu0 %v143
    %1813 = vmatprep.subr.mxu0 0.0
    %1814 = vmatpush1.msra.mxu0 %v144
    %1815 = vmatprep.subr.mxu0 0.0
    %1816 = vmatpush1.msra.mxu0 %v145
    %1817 = vmatprep.subr.mxu0 0.0
    %1818 = vmatpush1.msra.mxu0 0.0
    %1819 = vmatprep.subr.mxu0 0.0
    %1820 = vmatpush1.msra.mxu0 0.0
    %1821 = vmatprep.subr.mxu0 0.0
    %1822 = vmatpush1.msra.mxu0 0.0
    %1823 = vmatprep.subr.mxu0 0.0
    %1824 = vmatpush1.msra.mxu0 0.0
    %1825 = vmatprep.subr.mxu0 0.0
    %1826 = vmatpush1.msra.mxu0 0.0
    %1827 = vmatprep.subr.mxu0 0.0
    %1828 = vmatpush1.msra.mxu0 0.0
    %1829 = vmatprep.subr.mxu0 0.0
    %1830 = vmatpush1.msra.mxu0 0.0
    %1831 = vmatprep.subr.mxu0 0.0
    %1832 = vmatpush1.msra.mxu0 0.0
    %1833 = vmatprep.subr.mxu0 0.0
    %1834 = vmatpush1.msra.mxu0 0.0
    %1835 = vmatprep.subr.mxu0 0.0
    %1836 = vmatpush1.msra.mxu0 0.0
    %1837 = vmatprep.subr.mxu0 0.0
    %1838 = vmatpush1.msra.mxu0 0.0
    %1839 = vmatprep.subr.mxu0 0.0
    %1840 = vmatpush1.msra.mxu0 0.0
    %1841 = vmatprep.subr.mxu0 0.0
    %1842 = vmatpush1.msra.mxu0 0.0
    %1843 = vmatprep.subr.mxu0 0.0
    %1844 = vmatpush1.msra.mxu0 0.0
    %1845 = vmatprep.subr.mxu0 0.0
    %1846 = vmatpush1.msra.mxu0 0.0
    %1847 = vmatprep.subr.mxu0 0.0
    %1848 = vmatpush1.msra.mxu0 0.0
    %1849 = vmatprep.subr.mxu0 0.0
    %1850 = vmatpush1.msra.mxu0 0.0
    %1851 = vmatprep.subr.mxu0 0.0
    %1852 = vmatpush1.msra.mxu0 0.0
    %1853 = vmatprep.subr.mxu0 0.0
    %1854 = vmatpush1.msra.mxu0 0.0
    %1855 = vmatprep.subr.mxu0 0.0
    %1856 = vmatpush1.msra.mxu0 0.0
    %1857 = vmatprep.subr.mxu0 0.0
    %1858 = vmatpush1.msra.mxu0 0.0
    %1859 = vmatprep.subr.mxu0 0.0
    %1860 = vmatpush1.msra.mxu0 0.0
    %1861 = vmatprep.subr.mxu0 0.0
    %1862 = vmatpush1.msra.mxu0 0.0
    %1863 = vmatprep.subr.mxu0 0.0
    %1864 = vmatpush1.msra.mxu0 0.0
    %1865 = vmatprep.subr.mxu0 0.0
    %1866 = vmatpush1.msra.mxu0 0.0
    %1867 = vmatprep.subr.mxu0 0.0
    %1868 = vmatpush1.msra.mxu0 0.0
    %1869 = vmatprep.subr.mxu0 0.0
    %1870 = vmatpush1.msra.mxu0 0.0
    %1871 = vmatprep.subr.mxu0 0.0
    %1872 = vmatpush1.msra.mxu0 0.0
    %1873 = vmatprep.mubr.f32.mxu0 0.0
    %1874 = vmatmul.mubr.f32.gmra.mrb[0].mxu0 %v1576
    %v1875 = vpop.f32.mrb[0].mxu0
    %v1876 = vadd.f32 %v172, %v1875
    %v1877 = vpop.f32.mrb[0].mxu0
    %1878 = vdwg.mxu0
    %v1879 = vtanh.pop %v1876
    %1880 = vset.pattern.permute.xlu0 2
    %1881 = vperm.xlu0 %1880, %v1493
    %v1882 = vpop.permute.xlu0 %1881
    %1883 = vset.pattern.permute.xlu0 2
    %1884 = vperm.xlu0 %1883, %v1494
    %v1885 = vpop.permute.xlu0 %1884
    %1886 = vset.pattern.permute.xlu0 2
    %1887 = vperm.xlu0 %1886, %v1495
    %v1888 = vpop.permute.xlu0 %1887
    %1889 = vset.pattern.permute.xlu0 2
    %1890 = vperm.xlu0 %1889, %v1496
    %v1891 = vpop.permute.xlu0 %1890
    %1892 = vset.pattern.permute.xlu0 2
    %1893 = vperm.xlu0 %1892, %v1497
    %v1894 = vpop.permute.xlu0 %1893
    %1895 = vset.pattern.permute.xlu0 2
    %1896 = vperm.xlu0 %1895, %v1498
    %v1897 = vpop.permute.xlu0 %1896
    %1898 = vset.pattern.permute.xlu0 2
    %1899 = vperm.xlu0 %1898, %v1499
    %v1900 = vpop.permute.xlu0 %1899
    %1901 = vset.pattern.permute.xlu0 2
    %1902 = vperm.xlu0 %1901, %v1500
    %v1903 = vpop.permute.xlu0 %1902
    %v1904 = vrot.slane %v1885, 7
    %v1905 = vsel %vm199, %v1904, %v1882
    %v1906 = vrot.slane %v1888, 6
    %v1907 = vsel %vm202, %v1906, %v1905
    %v1908 = vrot.slane %v1891, 5
    %v1909 = vsel %vm205, %v1908, %v1907
    %v1910 = vrot.slane %v1894, 4
    %v1911 = vsel %vm208, %v1910, %v1909
    %v1912 = vrot.slane %v1897, 3
    %v1913 = vsel %vm211, %v1912, %v1911
    %v1914 = vrot.slane %v1900, 2
    %v1915 = vsel %vm214, %v1914, %v1913
    %v1916 = vrot.slane %v1903, 1
    %v1917 = vsel %vm217, %v1916, %v1915
    %v1919 = vmul.f32 %v1879, %v1917
    %v1920 = vadd.f32 %v1808, %v1919
    %1921 = vmatprep.subr.mxu0 0.0
    %1922 = vmatpush1.msra.mxu0 %v147
    %1923 = vmatprep.subr.mxu0 0.0
    %1924 = vmatpush1.msra.mxu0 %v148
    %1925 = vmatprep.subr.mxu0 0.0
    %1926 = vmatpush1.msra.mxu0 %v149
    %1927 = vmatprep.subr.mxu0 0.0
    %1928 = vmatpush1.msra.mxu0 %v150
    %1929 = vmatprep.subr.mxu0 0.0
    %1930 = vmatpush1.msra.mxu0 0.0
    %1931 = vmatprep.subr.mxu0 0.0
    %1932 = vmatpush1.msra.mxu0 0.0
    %1933 = vmatprep.subr.mxu0 0.0
    %1934 = vmatpush1.msra.mxu0 0.0
    %1935 = vmatprep.subr.mxu0 0.0
    %1936 = vmatpush1.msra.mxu0 0.0
    %1937 = vmatprep.subr.mxu0 0.0
    %1938 = vmatpush1.msra.mxu0 0.0
    %1939 = vmatprep.subr.mxu0 0.0
    %1940 = vmatpush1.msra.mxu0 0.0
    %1941 = vmatprep.subr.mxu0 0.0
    %1942 = vmatpush1.msra.mxu0 0.0
    %1943 = vmatprep.subr.mxu0 0.0
    %1944 = vmatpush1.msra.mxu0 0.0
    %1945 = vmatprep.subr.mxu0 0.0
    %1946 = vmatpush1.msra.mxu0 0.0
    %1947 = vmatprep.subr.mxu0 0.0
    %1948 = vmatpush1.msra.mxu0 0.0
    %1949 = vmatprep.subr.mxu0 0.0
    %1950 = vmatpush1.msra.mxu0 0.0
    %1951 = vmatprep.subr.mxu0 0.0
    %1952 = vmatpush1.msra.mxu0 0.0
    %1953 = vmatprep.subr.mxu0 0.0
    %1954 = vmatpush1.msra.mxu0 0.0
    %1955 = vmatprep.subr.mxu0 0.0
    %1956 = vmatpush1.msra.mxu0 0.0
    %1957 = vmatprep.subr.mxu0 0.0
    %1958 = vmatpush1.msra.mxu0 0.0
    %1959 = vmatprep.subr.mxu0 0.0
    %1960 = vmatpush1.msra.mxu0 0.0
    %1961 = vmatprep.subr.mxu0 0.0
    %1962 = vmatpush1.msra.mxu0 0.0
    %1963 = vmatprep.subr.mxu0 0.0
    %1964 = vmatpush1.msra.mxu0 0.0
    %1965 = vmatprep.subr.mxu0 0.0
    %1966 = vmatpush1.msra.mxu0 0.0
    %1967 = vmatprep.subr.mxu0 0.0
    %1968 = vmatpush1.msra.mxu0 0.0
    %1969 = vmatprep.subr.mxu0 0.0
    %1970 = vmatpush1.msra.mxu0 0.0
    %1971 = vmatprep.subr.mxu0 0.0
    %1972 = vmatpush1.msra.mxu0 0.0
    %1973 = vmatprep.subr.mxu0 0.0
    %1974 = vmatpush1.msra.mxu0 0.0
    %1975 = vmatprep.subr.mxu0 0.0
    %1976 = vmatpush1.msra.mxu0 0.0
    %1977 = vmatprep.subr.mxu0 0.0
    %1978 = vmatpush1.msra.mxu0 0.0
    %1979 = vmatprep.subr.mxu0 0.0
    %1980 = vmatpush1.msra.mxu0 0.0
    %1981 = vmatprep.subr.mxu0 0.0
    %1982 = vmatpush1.msra.mxu0 0.0
    %1983 = vmatprep.subr.mxu0 0.0
    %1984 = vmatpush1.msra.mxu0 0.0
    %1985 = vmatprep.mubr.f32.mxu0 0.0
    %1986 = vmatmul.mubr.f32.gmra.mrb[0].mxu0 %v1576
    %v1987 = vpop.f32.mrb[0].mxu0
    %v1988 = vadd.f32 %v180, %v1987
    %v1989 = vpop.f32.mrb[0].mxu0
    %1990 = vdwg.mxu0
    %v1991 = vtanh.pop %v1988
    %1992 = vset.pattern.permute.xlu0 3
    %1993 = vperm.xlu0 %1992, %v1493
    %v1994 = vpop.permute.xlu0 %1993
    %1995 = vset.pattern.permute.xlu0 3
    %1996 = vperm.xlu0 %1995, %v1494
    %v1997 = vpop.permute.xlu0 %1996
    %1998 = vset.pattern.permute.xlu0 3
    %1999 = vperm.xlu0 %1998, %v1495
    %v2000 = vpop.permute.xlu0 %1999
    %2001 = vset.pattern.permute.xlu0 3
    %2002 = vperm.xlu0 %2001, %v1496
    %v2003 = vpop.permute.xlu0 %2002
    %2004 = vset.pattern.permute.xlu0 3
    %2005 = vperm.xlu0 %2004, %v1497
    %v2006 = vpop.permute.xlu0 %2005
    %2007 = vset.pattern.permute.xlu0 3
    %2008 = vperm.xlu0 %2007, %v1498
    %v2009 = vpop.permute.xlu0 %2008
    %2010 = vset.pattern.permute.xlu0 3
    %2011 = vperm.xlu0 %2010, %v1499
    %v2012 = vpop.permute.xlu0 %2011
    %2013 = vset.pattern.permute.xlu0 3
    %2014 = vperm.xlu0 %2013, %v1500
    %v2015 = vpop.permute.xlu0 %2014
    %v2016 = vrot.slane %v1997, 7
    %v2017 = vsel %vm199, %v2016, %v1994
    %v2018 = vrot.slane %v2000, 6
    %v2019 = vsel %vm202, %v2018, %v2017
    %v2020 = vrot.slane %v2003, 5
    %v2021 = vsel %vm205, %v2020, %v2019
    %v2022 = vrot.slane %v2006, 4
    %v2023 = vsel %vm208, %v2022, %v2021
    %v2024 = vrot.slane %v2009, 3
    %v2025 = vsel %vm211, %v2024, %v2023
    %v2026 = vrot.slane %v2012, 2
    %v2027 = vsel %vm214, %v2026, %v2025
    %v2028 = vrot.slane %v2015, 1
    %v2029 = vsel %vm217, %v2028, %v2027
    %v2031 = vmul.f32 %v1991, %v2029
    %v2032 = vadd.f32 %v1920, %v2031
    %s2033 = smul.f32 %s1466, 0.5
    %v2034 = vstv %s2033
    %v2035 = vmul.f32 %v2034, %v2032
    %v2036 = vadd.f32 %v1464, %v2035
    %s2037 = sadd.f32 %s322, %s2033
    %s2038 = ssub.f32 %s2037, %s296
    %v2039 = vstv %s2038
    %v2040 = vmul.f32 %v313, %v2039
    %v2041 = vmul.f32 %v314, %v2039
    %v2042 = vmul.f32 %v315, %v2039
    %v2043 = vmul.f32 %v316, %v2039
    %v2044 = vmul.f32 %v317, %v2039
    %v2045 = vmul.f32 %v318, %v2039
    %v2046 = vmul.f32 %v319, %v2039
    %v2047 = vmul.f32 %v320, %v2039
    %v2048 = vadd.f32 %v305, %v2040
    %v2049 = vadd.f32 %v306, %v2041
    %v2050 = vadd.f32 %v307, %v2042
    %v2051 = vadd.f32 %v308, %v2043
    %v2052 = vadd.f32 %v309, %v2044
    %v2053 = vadd.f32 %v310, %v2045
    %v2054 = vadd.f32 %v311, %v2046
    %v2055 = vadd.f32 %v312, %v2047
    %v2056 = vmul.f32 %v2048, %v2039
    %v2057 = vmul.f32 %v2049, %v2039
    %v2058 = vmul.f32 %v2050, %v2039
    %v2059 = vmul.f32 %v2051, %v2039
    %v2060 = vmul.f32 %v2052, %v2039
    %v2061 = vmul.f32 %v2053, %v2039
    %v2062 = vmul.f32 %v2054, %v2039
    %v2063 = vmul.f32 %v2055, %v2039
    %v2064 = vadd.f32 %v297, %v2056
    %v2065 = vadd.f32 %v298, %v2057
    %v2066 = vadd.f32 %v299, %v2058
    %v2067 = vadd.f32 %v300, %v2059
    %v2068 = vadd.f32 %v301, %v2060
    %v2069 = vadd.f32 %v302, %v2061
    %v2070 = vadd.f32 %v303, %v2062
    %v2071 = vadd.f32 %v304, %v2063
    %v2073 = vsel %vm358, %v2036, 0
    %2075 = vmatprep.subr.mxu0 0.0
    %2076 = vmatpush1.msra.mxu0 %v110
    %2077 = vmatprep.subr.mxu0 0.0
    %2078 = vmatpush1.msra.mxu0 %v111
    %2079 = vmatprep.subr.mxu0 0.0
    %2080 = vmatpush1.msra.mxu0 %v112
    %2081 = vmatprep.subr.mxu0 0.0
    %2082 = vmatpush1.msra.mxu0 %v113
    %2083 = vmatprep.subr.mxu0 0.0
    %2084 = vmatpush1.msra.mxu0 0.0
    %2085 = vmatprep.subr.mxu0 0.0
    %2086 = vmatpush1.msra.mxu0 0.0
    %2087 = vmatprep.subr.mxu0 0.0
    %2088 = vmatpush1.msra.mxu0 0.0
    %2089 = vmatprep.subr.mxu0 0.0
    %2090 = vmatpush1.msra.mxu0 0.0
    %2091 = vmatprep.subr.mxu0 0.0
    %2092 = vmatpush1.msra.mxu0 0.0
    %2093 = vmatprep.subr.mxu0 0.0
    %2094 = vmatpush1.msra.mxu0 0.0
    %2095 = vmatprep.subr.mxu0 0.0
    %2096 = vmatpush1.msra.mxu0 0.0
    %2097 = vmatprep.subr.mxu0 0.0
    %2098 = vmatpush1.msra.mxu0 0.0
    %2099 = vmatprep.subr.mxu0 0.0
    %2100 = vmatpush1.msra.mxu0 0.0
    %2101 = vmatprep.subr.mxu0 0.0
    %2102 = vmatpush1.msra.mxu0 0.0
    %2103 = vmatprep.subr.mxu0 0.0
    %2104 = vmatpush1.msra.mxu0 0.0
    %2105 = vmatprep.subr.mxu0 0.0
    %2106 = vmatpush1.msra.mxu0 0.0
    %2107 = vmatprep.subr.mxu0 0.0
    %2108 = vmatpush1.msra.mxu0 0.0
    %2109 = vmatprep.subr.mxu0 0.0
    %2110 = vmatpush1.msra.mxu0 0.0
    %2111 = vmatprep.subr.mxu0 0.0
    %2112 = vmatpush1.msra.mxu0 0.0
    %2113 = vmatprep.subr.mxu0 0.0
    %2114 = vmatpush1.msra.mxu0 0.0
    %2115 = vmatprep.subr.mxu0 0.0
    %2116 = vmatpush1.msra.mxu0 0.0
    %2117 = vmatprep.subr.mxu0 0.0
    %2118 = vmatpush1.msra.mxu0 0.0
    %2119 = vmatprep.subr.mxu0 0.0
    %2120 = vmatpush1.msra.mxu0 0.0
    %2121 = vmatprep.subr.mxu0 0.0
    %2122 = vmatpush1.msra.mxu0 0.0
    %2123 = vmatprep.subr.mxu0 0.0
    %2124 = vmatpush1.msra.mxu0 0.0
    %2125 = vmatprep.subr.mxu0 0.0
    %2126 = vmatpush1.msra.mxu0 0.0
    %2127 = vmatprep.subr.mxu0 0.0
    %2128 = vmatpush1.msra.mxu0 0.0
    %2129 = vmatprep.subr.mxu0 0.0
    %2130 = vmatpush1.msra.mxu0 0.0
    %2131 = vmatprep.subr.mxu0 0.0
    %2132 = vmatpush1.msra.mxu0 0.0
    %2133 = vmatprep.subr.mxu0 0.0
    %2134 = vmatpush1.msra.mxu0 0.0
    %2135 = vmatprep.subr.mxu0 0.0
    %2136 = vmatpush1.msra.mxu0 0.0
    %2137 = vmatprep.subr.mxu0 0.0
    %2138 = vmatpush1.msra.mxu0 0.0
    %2139 = vmatprep.mubr.f32.mxu0 0.0
    %2140 = vmatmul.mubr.f32.gmra.mrb[0].mxu0 %v2073
    %v2141 = vpop.f32.mrb[0].mxu0
    %v2142 = vadd.f32 %v119, %v2141
    %v2143 = vpop.f32.mrb[0].mxu0
    %2144 = vdwg.mxu0
    %v2145 = vtanh.pop %v2142
    %v2147 = vsel %vm358, %v2145, 0
    %2149 = vmatprep.subr.mxu0 0.0
    %2150 = vmatpush1.msra.mxu0 %v132
    %2151 = vmatprep.subr.mxu0 0.0
    %2152 = vmatpush1.msra.mxu0 %v133
    %2153 = vmatprep.subr.mxu0 0.0
    %2154 = vmatpush1.msra.mxu0 %v134
    %2155 = vmatprep.subr.mxu0 0.0
    %2156 = vmatpush1.msra.mxu0 %v135
    %2157 = vmatprep.subr.mxu0 0.0
    %2158 = vmatpush1.msra.mxu0 0.0
    %2159 = vmatprep.subr.mxu0 0.0
    %2160 = vmatpush1.msra.mxu0 0.0
    %2161 = vmatprep.subr.mxu0 0.0
    %2162 = vmatpush1.msra.mxu0 0.0
    %2163 = vmatprep.subr.mxu0 0.0
    %2164 = vmatpush1.msra.mxu0 0.0
    %2165 = vmatprep.subr.mxu0 0.0
    %2166 = vmatpush1.msra.mxu0 0.0
    %2167 = vmatprep.subr.mxu0 0.0
    %2168 = vmatpush1.msra.mxu0 0.0
    %2169 = vmatprep.subr.mxu0 0.0
    %2170 = vmatpush1.msra.mxu0 0.0
    %2171 = vmatprep.subr.mxu0 0.0
    %2172 = vmatpush1.msra.mxu0 0.0
    %2173 = vmatprep.subr.mxu0 0.0
    %2174 = vmatpush1.msra.mxu0 0.0
    %2175 = vmatprep.subr.mxu0 0.0
    %2176 = vmatpush1.msra.mxu0 0.0
    %2177 = vmatprep.subr.mxu0 0.0
    %2178 = vmatpush1.msra.mxu0 0.0
    %2179 = vmatprep.subr.mxu0 0.0
    %2180 = vmatpush1.msra.mxu0 0.0
    %2181 = vmatprep.subr.mxu0 0.0
    %2182 = vmatpush1.msra.mxu0 0.0
    %2183 = vmatprep.subr.mxu0 0.0
    %2184 = vmatpush1.msra.mxu0 0.0
    %2185 = vmatprep.subr.mxu0 0.0
    %2186 = vmatpush1.msra.mxu0 0.0
    %2187 = vmatprep.subr.mxu0 0.0
    %2188 = vmatpush1.msra.mxu0 0.0
    %2189 = vmatprep.subr.mxu0 0.0
    %2190 = vmatpush1.msra.mxu0 0.0
    %2191 = vmatprep.subr.mxu0 0.0
    %2192 = vmatpush1.msra.mxu0 0.0
    %2193 = vmatprep.subr.mxu0 0.0
    %2194 = vmatpush1.msra.mxu0 0.0
    %2195 = vmatprep.subr.mxu0 0.0
    %2196 = vmatpush1.msra.mxu0 0.0
    %2197 = vmatprep.subr.mxu0 0.0
    %2198 = vmatpush1.msra.mxu0 0.0
    %2199 = vmatprep.subr.mxu0 0.0
    %2200 = vmatpush1.msra.mxu0 0.0
    %2201 = vmatprep.subr.mxu0 0.0
    %2202 = vmatpush1.msra.mxu0 0.0
    %2203 = vmatprep.subr.mxu0 0.0
    %2204 = vmatpush1.msra.mxu0 0.0
    %2205 = vmatprep.subr.mxu0 0.0
    %2206 = vmatpush1.msra.mxu0 0.0
    %2207 = vmatprep.subr.mxu0 0.0
    %2208 = vmatpush1.msra.mxu0 0.0
    %2209 = vmatprep.subr.mxu0 0.0
    %2210 = vmatpush1.msra.mxu0 0.0
    %2211 = vmatprep.subr.mxu0 0.0
    %2212 = vmatpush1.msra.mxu0 0.0
    %2213 = vmatprep.mubr.f32.mxu0 0.0
    %2214 = vmatmul.mubr.f32.gmra.mrb[0].mxu0 %v2147
    %v2215 = vpop.f32.mrb[0].mxu0
    %v2216 = vadd.f32 %v156, %v2215
    %v2217 = vpop.f32.mrb[0].mxu0
    %2218 = vdwg.mxu0
    %v2219 = vtanh.pop %v2216
    %2221 = vset.pattern.permute.xlu0 0
    %2222 = vperm.xlu0 %2221, %v2064
    %v2223 = vpop.permute.xlu0 %2222
    %2225 = vset.pattern.permute.xlu0 0
    %2226 = vperm.xlu0 %2225, %v2065
    %v2227 = vpop.permute.xlu0 %2226
    %2229 = vset.pattern.permute.xlu0 0
    %2230 = vperm.xlu0 %2229, %v2066
    %v2231 = vpop.permute.xlu0 %2230
    %2233 = vset.pattern.permute.xlu0 0
    %2234 = vperm.xlu0 %2233, %v2067
    %v2235 = vpop.permute.xlu0 %2234
    %2237 = vset.pattern.permute.xlu0 0
    %2238 = vperm.xlu0 %2237, %v2068
    %v2239 = vpop.permute.xlu0 %2238
    %2241 = vset.pattern.permute.xlu0 0
    %2242 = vperm.xlu0 %2241, %v2069
    %v2243 = vpop.permute.xlu0 %2242
    %2245 = vset.pattern.permute.xlu0 0
    %2246 = vperm.xlu0 %2245, %v2070
    %v2247 = vpop.permute.xlu0 %2246
    %2249 = vset.pattern.permute.xlu0 0
    %2250 = vperm.xlu0 %2249, %v2071
    %v2251 = vpop.permute.xlu0 %2250
    %v2252 = vrot.slane %v2227, 7
    %v2253 = vsel %vm199, %v2252, %v2223
    %v2254 = vrot.slane %v2231, 6
    %v2255 = vsel %vm202, %v2254, %v2253
    %v2256 = vrot.slane %v2235, 5
    %v2257 = vsel %vm205, %v2256, %v2255
    %v2258 = vrot.slane %v2239, 4
    %v2259 = vsel %vm208, %v2258, %v2257
    %v2260 = vrot.slane %v2243, 3
    %v2261 = vsel %vm211, %v2260, %v2259
    %v2262 = vrot.slane %v2247, 2
    %v2263 = vsel %vm214, %v2262, %v2261
    %v2264 = vrot.slane %v2251, 1
    %v2265 = vsel %vm217, %v2264, %v2263
    %v2267 = vmul.f32 %v2219, %v2265
    %2268 = vmatprep.subr.mxu0 0.0
    %2269 = vmatpush1.msra.mxu0 %v137
    %2270 = vmatprep.subr.mxu0 0.0
    %2271 = vmatpush1.msra.mxu0 %v138
    %2272 = vmatprep.subr.mxu0 0.0
    %2273 = vmatpush1.msra.mxu0 %v139
    %2274 = vmatprep.subr.mxu0 0.0
    %2275 = vmatpush1.msra.mxu0 %v140
    %2276 = vmatprep.subr.mxu0 0.0
    %2277 = vmatpush1.msra.mxu0 0.0
    %2278 = vmatprep.subr.mxu0 0.0
    %2279 = vmatpush1.msra.mxu0 0.0
    %2280 = vmatprep.subr.mxu0 0.0
    %2281 = vmatpush1.msra.mxu0 0.0
    %2282 = vmatprep.subr.mxu0 0.0
    %2283 = vmatpush1.msra.mxu0 0.0
    %2284 = vmatprep.subr.mxu0 0.0
    %2285 = vmatpush1.msra.mxu0 0.0
    %2286 = vmatprep.subr.mxu0 0.0
    %2287 = vmatpush1.msra.mxu0 0.0
    %2288 = vmatprep.subr.mxu0 0.0
    %2289 = vmatpush1.msra.mxu0 0.0
    %2290 = vmatprep.subr.mxu0 0.0
    %2291 = vmatpush1.msra.mxu0 0.0
    %2292 = vmatprep.subr.mxu0 0.0
    %2293 = vmatpush1.msra.mxu0 0.0
    %2294 = vmatprep.subr.mxu0 0.0
    %2295 = vmatpush1.msra.mxu0 0.0
    %2296 = vmatprep.subr.mxu0 0.0
    %2297 = vmatpush1.msra.mxu0 0.0
    %2298 = vmatprep.subr.mxu0 0.0
    %2299 = vmatpush1.msra.mxu0 0.0
    %2300 = vmatprep.subr.mxu0 0.0
    %2301 = vmatpush1.msra.mxu0 0.0
    %2302 = vmatprep.subr.mxu0 0.0
    %2303 = vmatpush1.msra.mxu0 0.0
    %2304 = vmatprep.subr.mxu0 0.0
    %2305 = vmatpush1.msra.mxu0 0.0
    %2306 = vmatprep.subr.mxu0 0.0
    %2307 = vmatpush1.msra.mxu0 0.0
    %2308 = vmatprep.subr.mxu0 0.0
    %2309 = vmatpush1.msra.mxu0 0.0
    %2310 = vmatprep.subr.mxu0 0.0
    %2311 = vmatpush1.msra.mxu0 0.0
    %2312 = vmatprep.subr.mxu0 0.0
    %2313 = vmatpush1.msra.mxu0 0.0
    %2314 = vmatprep.subr.mxu0 0.0
    %2315 = vmatpush1.msra.mxu0 0.0
    %2316 = vmatprep.subr.mxu0 0.0
    %2317 = vmatpush1.msra.mxu0 0.0
    %2318 = vmatprep.subr.mxu0 0.0
    %2319 = vmatpush1.msra.mxu0 0.0
    %2320 = vmatprep.subr.mxu0 0.0
    %2321 = vmatpush1.msra.mxu0 0.0
    %2322 = vmatprep.subr.mxu0 0.0
    %2323 = vmatpush1.msra.mxu0 0.0
    %2324 = vmatprep.subr.mxu0 0.0
    %2325 = vmatpush1.msra.mxu0 0.0
    %2326 = vmatprep.subr.mxu0 0.0
    %2327 = vmatpush1.msra.mxu0 0.0
    %2328 = vmatprep.subr.mxu0 0.0
    %2329 = vmatpush1.msra.mxu0 0.0
    %2330 = vmatprep.subr.mxu0 0.0
    %2331 = vmatpush1.msra.mxu0 0.0
    %2332 = vmatprep.mubr.f32.mxu0 0.0
    %2333 = vmatmul.mubr.f32.gmra.mrb[0].mxu0 %v2147
    %v2334 = vpop.f32.mrb[0].mxu0
    %v2335 = vadd.f32 %v164, %v2334
    %v2336 = vpop.f32.mrb[0].mxu0
    %2337 = vdwg.mxu0
    %v2338 = vtanh.pop %v2335
    %2339 = vset.pattern.permute.xlu0 1
    %2340 = vperm.xlu0 %2339, %v2064
    %v2341 = vpop.permute.xlu0 %2340
    %2342 = vset.pattern.permute.xlu0 1
    %2343 = vperm.xlu0 %2342, %v2065
    %v2344 = vpop.permute.xlu0 %2343
    %2345 = vset.pattern.permute.xlu0 1
    %2346 = vperm.xlu0 %2345, %v2066
    %v2347 = vpop.permute.xlu0 %2346
    %2348 = vset.pattern.permute.xlu0 1
    %2349 = vperm.xlu0 %2348, %v2067
    %v2350 = vpop.permute.xlu0 %2349
    %2351 = vset.pattern.permute.xlu0 1
    %2352 = vperm.xlu0 %2351, %v2068
    %v2353 = vpop.permute.xlu0 %2352
    %2354 = vset.pattern.permute.xlu0 1
    %2355 = vperm.xlu0 %2354, %v2069
    %v2356 = vpop.permute.xlu0 %2355
    %2357 = vset.pattern.permute.xlu0 1
    %2358 = vperm.xlu0 %2357, %v2070
    %v2359 = vpop.permute.xlu0 %2358
    %2360 = vset.pattern.permute.xlu0 1
    %2361 = vperm.xlu0 %2360, %v2071
    %v2362 = vpop.permute.xlu0 %2361
    %v2363 = vrot.slane %v2344, 7
    %v2364 = vsel %vm199, %v2363, %v2341
    %v2365 = vrot.slane %v2347, 6
    %v2366 = vsel %vm202, %v2365, %v2364
    %v2367 = vrot.slane %v2350, 5
    %v2368 = vsel %vm205, %v2367, %v2366
    %v2369 = vrot.slane %v2353, 4
    %v2370 = vsel %vm208, %v2369, %v2368
    %v2371 = vrot.slane %v2356, 3
    %v2372 = vsel %vm211, %v2371, %v2370
    %v2373 = vrot.slane %v2359, 2
    %v2374 = vsel %vm214, %v2373, %v2372
    %v2375 = vrot.slane %v2362, 1
    %v2376 = vsel %vm217, %v2375, %v2374
    %v2378 = vmul.f32 %v2338, %v2376
    %v2379 = vadd.f32 %v2267, %v2378
    %2380 = vmatprep.subr.mxu0 0.0
    %2381 = vmatpush1.msra.mxu0 %v142
    %2382 = vmatprep.subr.mxu0 0.0
    %2383 = vmatpush1.msra.mxu0 %v143
    %2384 = vmatprep.subr.mxu0 0.0
    %2385 = vmatpush1.msra.mxu0 %v144
    %2386 = vmatprep.subr.mxu0 0.0
    %2387 = vmatpush1.msra.mxu0 %v145
    %2388 = vmatprep.subr.mxu0 0.0
    %2389 = vmatpush1.msra.mxu0 0.0
    %2390 = vmatprep.subr.mxu0 0.0
    %2391 = vmatpush1.msra.mxu0 0.0
    %2392 = vmatprep.subr.mxu0 0.0
    %2393 = vmatpush1.msra.mxu0 0.0
    %2394 = vmatprep.subr.mxu0 0.0
    %2395 = vmatpush1.msra.mxu0 0.0
    %2396 = vmatprep.subr.mxu0 0.0
    %2397 = vmatpush1.msra.mxu0 0.0
    %2398 = vmatprep.subr.mxu0 0.0
    %2399 = vmatpush1.msra.mxu0 0.0
    %2400 = vmatprep.subr.mxu0 0.0
    %2401 = vmatpush1.msra.mxu0 0.0
    %2402 = vmatprep.subr.mxu0 0.0
    %2403 = vmatpush1.msra.mxu0 0.0
    %2404 = vmatprep.subr.mxu0 0.0
    %2405 = vmatpush1.msra.mxu0 0.0
    %2406 = vmatprep.subr.mxu0 0.0
    %2407 = vmatpush1.msra.mxu0 0.0
    %2408 = vmatprep.subr.mxu0 0.0
    %2409 = vmatpush1.msra.mxu0 0.0
    %2410 = vmatprep.subr.mxu0 0.0
    %2411 = vmatpush1.msra.mxu0 0.0
    %2412 = vmatprep.subr.mxu0 0.0
    %2413 = vmatpush1.msra.mxu0 0.0
    %2414 = vmatprep.subr.mxu0 0.0
    %2415 = vmatpush1.msra.mxu0 0.0
    %2416 = vmatprep.subr.mxu0 0.0
    %2417 = vmatpush1.msra.mxu0 0.0
    %2418 = vmatprep.subr.mxu0 0.0
    %2419 = vmatpush1.msra.mxu0 0.0
    %2420 = vmatprep.subr.mxu0 0.0
    %2421 = vmatpush1.msra.mxu0 0.0
    %2422 = vmatprep.subr.mxu0 0.0
    %2423 = vmatpush1.msra.mxu0 0.0
    %2424 = vmatprep.subr.mxu0 0.0
    %2425 = vmatpush1.msra.mxu0 0.0
    %2426 = vmatprep.subr.mxu0 0.0
    %2427 = vmatpush1.msra.mxu0 0.0
    %2428 = vmatprep.subr.mxu0 0.0
    %2429 = vmatpush1.msra.mxu0 0.0
    %2430 = vmatprep.subr.mxu0 0.0
    %2431 = vmatpush1.msra.mxu0 0.0
    %2432 = vmatprep.subr.mxu0 0.0
    %2433 = vmatpush1.msra.mxu0 0.0
    %2434 = vmatprep.subr.mxu0 0.0
    %2435 = vmatpush1.msra.mxu0 0.0
    %2436 = vmatprep.subr.mxu0 0.0
    %2437 = vmatpush1.msra.mxu0 0.0
    %2438 = vmatprep.subr.mxu0 0.0
    %2439 = vmatpush1.msra.mxu0 0.0
    %2440 = vmatprep.subr.mxu0 0.0
    %2441 = vmatpush1.msra.mxu0 0.0
    %2442 = vmatprep.subr.mxu0 0.0
    %2443 = vmatpush1.msra.mxu0 0.0
    %2444 = vmatprep.mubr.f32.mxu0 0.0
    %2445 = vmatmul.mubr.f32.gmra.mrb[0].mxu0 %v2147
    %v2446 = vpop.f32.mrb[0].mxu0
    %v2447 = vadd.f32 %v172, %v2446
    %v2448 = vpop.f32.mrb[0].mxu0
    %2449 = vdwg.mxu0
    %v2450 = vtanh.pop %v2447
    %2451 = vset.pattern.permute.xlu0 2
    %2452 = vperm.xlu0 %2451, %v2064
    %v2453 = vpop.permute.xlu0 %2452
    %2454 = vset.pattern.permute.xlu0 2
    %2455 = vperm.xlu0 %2454, %v2065
    %v2456 = vpop.permute.xlu0 %2455
    %2457 = vset.pattern.permute.xlu0 2
    %2458 = vperm.xlu0 %2457, %v2066
    %v2459 = vpop.permute.xlu0 %2458
    %2460 = vset.pattern.permute.xlu0 2
    %2461 = vperm.xlu0 %2460, %v2067
    %v2462 = vpop.permute.xlu0 %2461
    %2463 = vset.pattern.permute.xlu0 2
    %2464 = vperm.xlu0 %2463, %v2068
    %v2465 = vpop.permute.xlu0 %2464
    %2466 = vset.pattern.permute.xlu0 2
    %2467 = vperm.xlu0 %2466, %v2069
    %v2468 = vpop.permute.xlu0 %2467
    %2469 = vset.pattern.permute.xlu0 2
    %2470 = vperm.xlu0 %2469, %v2070
    %v2471 = vpop.permute.xlu0 %2470
    %2472 = vset.pattern.permute.xlu0 2
    %2473 = vperm.xlu0 %2472, %v2071
    %v2474 = vpop.permute.xlu0 %2473
    %v2475 = vrot.slane %v2456, 7
    %v2476 = vsel %vm199, %v2475, %v2453
    %v2477 = vrot.slane %v2459, 6
    %v2478 = vsel %vm202, %v2477, %v2476
    %v2479 = vrot.slane %v2462, 5
    %v2480 = vsel %vm205, %v2479, %v2478
    %v2481 = vrot.slane %v2465, 4
    %v2482 = vsel %vm208, %v2481, %v2480
    %v2483 = vrot.slane %v2468, 3
    %v2484 = vsel %vm211, %v2483, %v2482
    %v2485 = vrot.slane %v2471, 2
    %v2486 = vsel %vm214, %v2485, %v2484
    %v2487 = vrot.slane %v2474, 1
    %v2488 = vsel %vm217, %v2487, %v2486
    %v2490 = vmul.f32 %v2450, %v2488
    %v2491 = vadd.f32 %v2379, %v2490
    %2492 = vmatprep.subr.mxu0 0.0
    %2493 = vmatpush1.msra.mxu0 %v147
    %2494 = vmatprep.subr.mxu0 0.0
    %2495 = vmatpush1.msra.mxu0 %v148
    %2496 = vmatprep.subr.mxu0 0.0
    %2497 = vmatpush1.msra.mxu0 %v149
    %2498 = vmatprep.subr.mxu0 0.0
    %2499 = vmatpush1.msra.mxu0 %v150
    %2500 = vmatprep.subr.mxu0 0.0
    %2501 = vmatpush1.msra.mxu0 0.0
    %2502 = vmatprep.subr.mxu0 0.0
    %2503 = vmatpush1.msra.mxu0 0.0
    %2504 = vmatprep.subr.mxu0 0.0
    %2505 = vmatpush1.msra.mxu0 0.0
    %2506 = vmatprep.subr.mxu0 0.0
    %2507 = vmatpush1.msra.mxu0 0.0
    %2508 = vmatprep.subr.mxu0 0.0
    %2509 = vmatpush1.msra.mxu0 0.0
    %2510 = vmatprep.subr.mxu0 0.0
    %2511 = vmatpush1.msra.mxu0 0.0
    %2512 = vmatprep.subr.mxu0 0.0
    %2513 = vmatpush1.msra.mxu0 0.0
    %2514 = vmatprep.subr.mxu0 0.0
    %2515 = vmatpush1.msra.mxu0 0.0
    %2516 = vmatprep.subr.mxu0 0.0
    %2517 = vmatpush1.msra.mxu0 0.0
    %2518 = vmatprep.subr.mxu0 0.0
    %2519 = vmatpush1.msra.mxu0 0.0
    %2520 = vmatprep.subr.mxu0 0.0
    %2521 = vmatpush1.msra.mxu0 0.0
    %2522 = vmatprep.subr.mxu0 0.0
    %2523 = vmatpush1.msra.mxu0 0.0
    %2524 = vmatprep.subr.mxu0 0.0
    %2525 = vmatpush1.msra.mxu0 0.0
    %2526 = vmatprep.subr.mxu0 0.0
    %2527 = vmatpush1.msra.mxu0 0.0
    %2528 = vmatprep.subr.mxu0 0.0
    %2529 = vmatpush1.msra.mxu0 0.0
    %2530 = vmatprep.subr.mxu0 0.0
    %2531 = vmatpush1.msra.mxu0 0.0
    %2532 = vmatprep.subr.mxu0 0.0
    %2533 = vmatpush1.msra.mxu0 0.0
    %2534 = vmatprep.subr.mxu0 0.0
    %2535 = vmatpush1.msra.mxu0 0.0
    %2536 = vmatprep.subr.mxu0 0.0
    %2537 = vmatpush1.msra.mxu0 0.0
    %2538 = vmatprep.subr.mxu0 0.0
    %2539 = vmatpush1.msra.mxu0 0.0
    %2540 = vmatprep.subr.mxu0 0.0
    %2541 = vmatpush1.msra.mxu0 0.0
    %2542 = vmatprep.subr.mxu0 0.0
    %2543 = vmatpush1.msra.mxu0 0.0
    %2544 = vmatprep.subr.mxu0 0.0
    %2545 = vmatpush1.msra.mxu0 0.0
    %2546 = vmatprep.subr.mxu0 0.0
    %2547 = vmatpush1.msra.mxu0 0.0
    %2548 = vmatprep.subr.mxu0 0.0
    %2549 = vmatpush1.msra.mxu0 0.0
    %2550 = vmatprep.subr.mxu0 0.0
    %2551 = vmatpush1.msra.mxu0 0.0
    %2552 = vmatprep.subr.mxu0 0.0
    %2553 = vmatpush1.msra.mxu0 0.0
    %2554 = vmatprep.subr.mxu0 0.0
    %2555 = vmatpush1.msra.mxu0 0.0
    %2556 = vmatprep.mubr.f32.mxu0 0.0
    %2557 = vmatmul.mubr.f32.gmra.mrb[0].mxu0 %v2147
    %v2558 = vpop.f32.mrb[0].mxu0
    %v2559 = vadd.f32 %v180, %v2558
    %v2560 = vpop.f32.mrb[0].mxu0
    %2561 = vdwg.mxu0
    %v2562 = vtanh.pop %v2559
    %2563 = vset.pattern.permute.xlu0 3
    %2564 = vperm.xlu0 %2563, %v2064
    %v2565 = vpop.permute.xlu0 %2564
    %2566 = vset.pattern.permute.xlu0 3
    %2567 = vperm.xlu0 %2566, %v2065
    %v2568 = vpop.permute.xlu0 %2567
    %2569 = vset.pattern.permute.xlu0 3
    %2570 = vperm.xlu0 %2569, %v2066
    %v2571 = vpop.permute.xlu0 %2570
    %2572 = vset.pattern.permute.xlu0 3
    %2573 = vperm.xlu0 %2572, %v2067
    %v2574 = vpop.permute.xlu0 %2573
    %2575 = vset.pattern.permute.xlu0 3
    %2576 = vperm.xlu0 %2575, %v2068
    %v2577 = vpop.permute.xlu0 %2576
    %2578 = vset.pattern.permute.xlu0 3
    %2579 = vperm.xlu0 %2578, %v2069
    %v2580 = vpop.permute.xlu0 %2579
    %2581 = vset.pattern.permute.xlu0 3
    %2582 = vperm.xlu0 %2581, %v2070
    %v2583 = vpop.permute.xlu0 %2582
    %2584 = vset.pattern.permute.xlu0 3
    %2585 = vperm.xlu0 %2584, %v2071
    %v2586 = vpop.permute.xlu0 %2585
    %v2587 = vrot.slane %v2568, 7
    %v2588 = vsel %vm199, %v2587, %v2565
    %v2589 = vrot.slane %v2571, 6
    %v2590 = vsel %vm202, %v2589, %v2588
    %v2591 = vrot.slane %v2574, 5
    %v2592 = vsel %vm205, %v2591, %v2590
    %v2593 = vrot.slane %v2577, 4
    %v2594 = vsel %vm208, %v2593, %v2592
    %v2595 = vrot.slane %v2580, 3
    %v2596 = vsel %vm211, %v2595, %v2594
    %v2597 = vrot.slane %v2583, 2
    %v2598 = vsel %vm214, %v2597, %v2596
    %v2599 = vrot.slane %v2586, 1
    %v2600 = vsel %vm217, %v2599, %v2598
    %v2602 = vmul.f32 %v2562, %v2600
    %v2603 = vadd.f32 %v2491, %v2602
    %v2604 = vstv %s1466
    %v2605 = vmul.f32 %v2604, %v2603
    %v2606 = vadd.f32 %v1464, %v2605
    %v2608 = vsel %vm358, %v2606, 0
    %2610 = vmatprep.subr.mxu0 0.0
    %2611 = vmatpush1.msra.mxu0 %v121
    %2612 = vmatprep.subr.mxu0 0.0
    %2613 = vmatpush1.msra.mxu0 %v122
    %2614 = vmatprep.subr.mxu0 0.0
    %2615 = vmatpush1.msra.mxu0 %v123
    %2616 = vmatprep.subr.mxu0 0.0
    %2617 = vmatpush1.msra.mxu0 %v124
    %2618 = vmatprep.subr.mxu0 0.0
    %2619 = vmatpush1.msra.mxu0 0.0
    %2620 = vmatprep.subr.mxu0 0.0
    %2621 = vmatpush1.msra.mxu0 0.0
    %2622 = vmatprep.subr.mxu0 0.0
    %2623 = vmatpush1.msra.mxu0 0.0
    %2624 = vmatprep.subr.mxu0 0.0
    %2625 = vmatpush1.msra.mxu0 0.0
    %2626 = vmatprep.subr.mxu0 0.0
    %2627 = vmatpush1.msra.mxu0 0.0
    %2628 = vmatprep.subr.mxu0 0.0
    %2629 = vmatpush1.msra.mxu0 0.0
    %2630 = vmatprep.subr.mxu0 0.0
    %2631 = vmatpush1.msra.mxu0 0.0
    %2632 = vmatprep.subr.mxu0 0.0
    %2633 = vmatpush1.msra.mxu0 0.0
    %2634 = vmatprep.subr.mxu0 0.0
    %2635 = vmatpush1.msra.mxu0 0.0
    %2636 = vmatprep.subr.mxu0 0.0
    %2637 = vmatpush1.msra.mxu0 0.0
    %2638 = vmatprep.subr.mxu0 0.0
    %2639 = vmatpush1.msra.mxu0 0.0
    %2640 = vmatprep.subr.mxu0 0.0
    %2641 = vmatpush1.msra.mxu0 0.0
    %2642 = vmatprep.subr.mxu0 0.0
    %2643 = vmatpush1.msra.mxu0 0.0
    %2644 = vmatprep.subr.mxu0 0.0
    %2645 = vmatpush1.msra.mxu0 0.0
    %2646 = vmatprep.subr.mxu0 0.0
    %2647 = vmatpush1.msra.mxu0 0.0
    %2648 = vmatprep.subr.mxu0 0.0
    %2649 = vmatpush1.msra.mxu0 0.0
    %2650 = vmatprep.subr.mxu0 0.0
    %2651 = vmatpush1.msra.mxu0 0.0
    %2652 = vmatprep.subr.mxu0 0.0
    %2653 = vmatpush1.msra.mxu0 0.0
    %2654 = vmatprep.subr.mxu0 0.0
    %2655 = vmatpush1.msra.mxu0 0.0
    %2656 = vmatprep.subr.mxu0 0.0
    %2657 = vmatpush1.msra.mxu0 0.0
    %2658 = vmatprep.subr.mxu0 0.0
    %2659 = vmatpush1.msra.mxu0 0.0
    %2660 = vmatprep.subr.mxu0 0.0
    %2661 = vmatpush1.msra.mxu0 0.0
    %2662 = vmatprep.subr.mxu0 0.0
    %2663 = vmatpush1.msra.mxu0 0.0
    %2664 = vmatprep.subr.mxu0 0.0
    %2665 = vmatpush1.msra.mxu0 0.0
    %2666 = vmatprep.subr.mxu0 0.0
    %2667 = vmatpush1.msra.mxu0 0.0
    %2668 = vmatprep.subr.mxu0 0.0
    %2669 = vmatpush1.msra.mxu0 0.0
    %2670 = vmatprep.subr.mxu0 0.0
    %2671 = vmatpush1.msra.mxu0 0.0
    %2672 = vmatprep.subr.mxu0 0.0
    %2673 = vmatpush1.msra.mxu0 0.0
    %2674 = vmatprep.mubr.f32.mxu0 0.0
    %2675 = vmatmul.mubr.f32.gmra.mrb[0].mxu0 %v2608
    %v2676 = vpop.f32.mrb[0].mxu0
    %v2677 = vadd.f32 %v130, %v2676
    %v2678 = vpop.f32.mrb[0].mxu0
    %2679 = vdwg.mxu0
    %2680 = vst.msk [vmem:[%s24] sm:$0xff] %vm219, %v2677
    %s2681 = sld [smem:[#allocation4 + $0x2]]
    %s2682 = sld [smem:[#allocation4 + $0x3]]
    %s2683 = ssub.f32 %s2682, %s2681
    %s2684 = ssub.f32 %s2681, %s296
    %v2685 = vstv %s2684
    %v2686 = vmul.f32 %v313, %v2685
    %v2687 = vmul.f32 %v314, %v2685
    %v2688 = vmul.f32 %v315, %v2685
    %v2689 = vmul.f32 %v316, %v2685
    %v2690 = vmul.f32 %v317, %v2685
    %v2691 = vmul.f32 %v318, %v2685
    %v2692 = vmul.f32 %v319, %v2685
    %v2693 = vmul.f32 %v320, %v2685
    %v2694 = vadd.f32 %v305, %v2686
    %v2695 = vadd.f32 %v306, %v2687
    %v2696 = vadd.f32 %v307, %v2688
    %v2697 = vadd.f32 %v308, %v2689
    %v2698 = vadd.f32 %v309, %v2690
    %v2699 = vadd.f32 %v310, %v2691
    %v2700 = vadd.f32 %v311, %v2692
    %v2701 = vadd.f32 %v312, %v2693
    %v2702 = vmul.f32 %v2694, %v2685
    %v2703 = vmul.f32 %v2695, %v2685
    %v2704 = vmul.f32 %v2696, %v2685
    %v2705 = vmul.f32 %v2697, %v2685
    %v2706 = vmul.f32 %v2698, %v2685
    %v2707 = vmul.f32 %v2699, %v2685
    %v2708 = vmul.f32 %v2700, %v2685
    %v2709 = vmul.f32 %v2701, %v2685
    %v2710 = vadd.f32 %v297, %v2702
    %v2711 = vadd.f32 %v298, %v2703
    %v2712 = vadd.f32 %v299, %v2704
    %v2713 = vadd.f32 %v300, %v2705
    %v2714 = vadd.f32 %v301, %v2706
    %v2715 = vadd.f32 %v302, %v2707
    %v2716 = vadd.f32 %v303, %v2708
    %v2717 = vadd.f32 %v304, %v2709
    %2718 = vmatprep.subr.mxu0 0.0
    %2719 = vmatpush1.msra.mxu0 %v110
    %2720 = vmatprep.subr.mxu0 0.0
    %2721 = vmatpush1.msra.mxu0 %v111
    %2722 = vmatprep.subr.mxu0 0.0
    %2723 = vmatpush1.msra.mxu0 %v112
    %2724 = vmatprep.subr.mxu0 0.0
    %2725 = vmatpush1.msra.mxu0 %v113
    %2726 = vmatprep.subr.mxu0 0.0
    %2727 = vmatpush1.msra.mxu0 0.0
    %2728 = vmatprep.subr.mxu0 0.0
    %2729 = vmatpush1.msra.mxu0 0.0
    %2730 = vmatprep.subr.mxu0 0.0
    %2731 = vmatpush1.msra.mxu0 0.0
    %2732 = vmatprep.subr.mxu0 0.0
    %2733 = vmatpush1.msra.mxu0 0.0
    %2734 = vmatprep.subr.mxu0 0.0
    %2735 = vmatpush1.msra.mxu0 0.0
    %2736 = vmatprep.subr.mxu0 0.0
    %2737 = vmatpush1.msra.mxu0 0.0
    %2738 = vmatprep.subr.mxu0 0.0
    %2739 = vmatpush1.msra.mxu0 0.0
    %2740 = vmatprep.subr.mxu0 0.0
    %2741 = vmatpush1.msra.mxu0 0.0
    %2742 = vmatprep.subr.mxu0 0.0
    %2743 = vmatpush1.msra.mxu0 0.0
    %2744 = vmatprep.subr.mxu0 0.0
    %2745 = vmatpush1.msra.mxu0 0.0
    %2746 = vmatprep.subr.mxu0 0.0
    %2747 = vmatpush1.msra.mxu0 0.0
    %2748 = vmatprep.subr.mxu0 0.0
    %2749 = vmatpush1.msra.mxu0 0.0
    %2750 = vmatprep.subr.mxu0 0.0
    %2751 = vmatpush1.msra.mxu0 0.0
    %2752 = vmatprep.subr.mxu0 0.0
    %2753 = vmatpush1.msra.mxu0 0.0
    %2754 = vmatprep.subr.mxu0 0.0
    %2755 = vmatpush1.msra.mxu0 0.0
    %2756 = vmatprep.subr.mxu0 0.0
    %2757 = vmatpush1.msra.mxu0 0.0
    %2758 = vmatprep.subr.mxu0 0.0
    %2759 = vmatpush1.msra.mxu0 0.0
    %2760 = vmatprep.subr.mxu0 0.0
    %2761 = vmatpush1.msra.mxu0 0.0
    %2762 = vmatprep.subr.mxu0 0.0
    %2763 = vmatpush1.msra.mxu0 0.0
    %2764 = vmatprep.subr.mxu0 0.0
    %2765 = vmatpush1.msra.mxu0 0.0
    %2766 = vmatprep.subr.mxu0 0.0
    %2767 = vmatpush1.msra.mxu0 0.0
    %2768 = vmatprep.subr.mxu0 0.0
    %2769 = vmatpush1.msra.mxu0 0.0
    %2770 = vmatprep.subr.mxu0 0.0
    %2771 = vmatpush1.msra.mxu0 0.0
    %2772 = vmatprep.subr.mxu0 0.0
    %2773 = vmatpush1.msra.mxu0 0.0
    %2774 = vmatprep.subr.mxu0 0.0
    %2775 = vmatpush1.msra.mxu0 0.0
    %2776 = vmatprep.subr.mxu0 0.0
    %2777 = vmatpush1.msra.mxu0 0.0
    %2778 = vmatprep.subr.mxu0 0.0
    %2779 = vmatpush1.msra.mxu0 0.0
    %2780 = vmatprep.subr.mxu0 0.0
    %2781 = vmatpush1.msra.mxu0 0.0
    %2782 = vmatprep.mubr.f32.mxu0 0.0
    %2783 = vmatmul.mubr.f32.gmra.mrb[0].mxu0 %v2608
    %v2784 = vpop.f32.mrb[0].mxu0
    %v2785 = vadd.f32 %v119, %v2784
    %v2786 = vpop.f32.mrb[0].mxu0
    %2787 = vdwg.mxu0
    %v2788 = vtanh.pop %v2785
    %v2790 = vsel %vm358, %v2788, 0
    %2792 = vmatprep.subr.mxu0 0.0
    %2793 = vmatpush1.msra.mxu0 %v132
    %2794 = vmatprep.subr.mxu0 0.0
    %2795 = vmatpush1.msra.mxu0 %v133
    %2796 = vmatprep.subr.mxu0 0.0
    %2797 = vmatpush1.msra.mxu0 %v134
    %2798 = vmatprep.subr.mxu0 0.0
    %2799 = vmatpush1.msra.mxu0 %v135
    %2800 = vmatprep.subr.mxu0 0.0
    %2801 = vmatpush1.msra.mxu0 0.0
    %2802 = vmatprep.subr.mxu0 0.0
    %2803 = vmatpush1.msra.mxu0 0.0
    %2804 = vmatprep.subr.mxu0 0.0
    %2805 = vmatpush1.msra.mxu0 0.0
    %2806 = vmatprep.subr.mxu0 0.0
    %2807 = vmatpush1.msra.mxu0 0.0
    %2808 = vmatprep.subr.mxu0 0.0
    %2809 = vmatpush1.msra.mxu0 0.0
    %2810 = vmatprep.subr.mxu0 0.0
    %2811 = vmatpush1.msra.mxu0 0.0
    %2812 = vmatprep.subr.mxu0 0.0
    %2813 = vmatpush1.msra.mxu0 0.0
    %2814 = vmatprep.subr.mxu0 0.0
    %2815 = vmatpush1.msra.mxu0 0.0
    %2816 = vmatprep.subr.mxu0 0.0
    %2817 = vmatpush1.msra.mxu0 0.0
    %2818 = vmatprep.subr.mxu0 0.0
    %2819 = vmatpush1.msra.mxu0 0.0
    %2820 = vmatprep.subr.mxu0 0.0
    %2821 = vmatpush1.msra.mxu0 0.0
    %2822 = vmatprep.subr.mxu0 0.0
    %2823 = vmatpush1.msra.mxu0 0.0
    %2824 = vmatprep.subr.mxu0 0.0
    %2825 = vmatpush1.msra.mxu0 0.0
    %2826 = vmatprep.subr.mxu0 0.0
    %2827 = vmatpush1.msra.mxu0 0.0
    %2828 = vmatprep.subr.mxu0 0.0
    %2829 = vmatpush1.msra.mxu0 0.0
    %2830 = vmatprep.subr.mxu0 0.0
    %2831 = vmatpush1.msra.mxu0 0.0
    %2832 = vmatprep.subr.mxu0 0.0
    %2833 = vmatpush1.msra.mxu0 0.0
    %2834 = vmatprep.subr.mxu0 0.0
    %2835 = vmatpush1.msra.mxu0 0.0
    %2836 = vmatprep.subr.mxu0 0.0
    %2837 = vmatpush1.msra.mxu0 0.0
    %2838 = vmatprep.subr.mxu0 0.0
    %2839 = vmatpush1.msra.mxu0 0.0
    %2840 = vmatprep.subr.mxu0 0.0
    %2841 = vmatpush1.msra.mxu0 0.0
    %2842 = vmatprep.subr.mxu0 0.0
    %2843 = vmatpush1.msra.mxu0 0.0
    %2844 = vmatprep.subr.mxu0 0.0
    %2845 = vmatpush1.msra.mxu0 0.0
    %2846 = vmatprep.subr.mxu0 0.0
    %2847 = vmatpush1.msra.mxu0 0.0
    %2848 = vmatprep.subr.mxu0 0.0
    %2849 = vmatpush1.msra.mxu0 0.0
    %2850 = vmatprep.subr.mxu0 0.0
    %2851 = vmatpush1.msra.mxu0 0.0
    %2852 = vmatprep.subr.mxu0 0.0
    %2853 = vmatpush1.msra.mxu0 0.0
    %2854 = vmatprep.subr.mxu0 0.0
    %2855 = vmatpush1.msra.mxu0 0.0
    %2856 = vmatprep.mubr.f32.mxu0 0.0
    %2857 = vmatmul.mubr.f32.gmra.mrb[0].mxu0 %v2790
    %v2858 = vpop.f32.mrb[0].mxu0
    %v2859 = vadd.f32 %v156, %v2858
    %v2860 = vpop.f32.mrb[0].mxu0
    %2861 = vdwg.mxu0
    %v2862 = vtanh.pop %v2859
    %2864 = vset.pattern.permute.xlu0 0
    %2865 = vperm.xlu0 %2864, %v2710
    %v2866 = vpop.permute.xlu0 %2865
    %2868 = vset.pattern.permute.xlu0 0
    %2869 = vperm.xlu0 %2868, %v2711
    %v2870 = vpop.permute.xlu0 %2869
    %2872 = vset.pattern.permute.xlu0 0
    %2873 = vperm.xlu0 %2872, %v2712
    %v2874 = vpop.permute.xlu0 %2873
    %2876 = vset.pattern.permute.xlu0 0
    %2877 = vperm.xlu0 %2876, %v2713
    %v2878 = vpop.permute.xlu0 %2877
    %2880 = vset.pattern.permute.xlu0 0
    %2881 = vperm.xlu0 %2880, %v2714
    %v2882 = vpop.permute.xlu0 %2881
    %2884 = vset.pattern.permute.xlu0 0
    %2885 = vperm.xlu0 %2884, %v2715
    %v2886 = vpop.permute.xlu0 %2885
    %2888 = vset.pattern.permute.xlu0 0
    %2889 = vperm.xlu0 %2888, %v2716
    %v2890 = vpop.permute.xlu0 %2889
    %2892 = vset.pattern.permute.xlu0 0
    %2893 = vperm.xlu0 %2892, %v2717
    %v2894 = vpop.permute.xlu0 %2893
    %v2895 = vrot.slane %v2870, 7
    %v2896 = vsel %vm199, %v2895, %v2866
    %v2897 = vrot.slane %v2874, 6
    %v2898 = vsel %vm202, %v2897, %v2896
    %v2899 = vrot.slane %v2878, 5
    %v2900 = vsel %vm205, %v2899, %v2898
    %v2901 = vrot.slane %v2882, 4
    %v2902 = vsel %vm208, %v2901, %v2900
    %v2903 = vrot.slane %v2886, 3
    %v2904 = vsel %vm211, %v2903, %v2902
    %v2905 = vrot.slane %v2890, 2
    %v2906 = vsel %vm214, %v2905, %v2904
    %v2907 = vrot.slane %v2894, 1
    %v2908 = vsel %vm217, %v2907, %v2906
    %v2910 = vmul.f32 %v2862, %v2908
    %2911 = vmatprep.subr.mxu0 0.0
    %2912 = vmatpush1.msra.mxu0 %v137
    %2913 = vmatprep.subr.mxu0 0.0
    %2914 = vmatpush1.msra.mxu0 %v138
    %2915 = vmatprep.subr.mxu0 0.0
    %2916 = vmatpush1.msra.mxu0 %v139
    %2917 = vmatprep.subr.mxu0 0.0
    %2918 = vmatpush1.msra.mxu0 %v140
    %2919 = vmatprep.subr.mxu0 0.0
    %2920 = vmatpush1.msra.mxu0 0.0
    %2921 = vmatprep.subr.mxu0 0.0
    %2922 = vmatpush1.msra.mxu0 0.0
    %2923 = vmatprep.subr.mxu0 0.0
    %2924 = vmatpush1.msra.mxu0 0.0
    %2925 = vmatprep.subr.mxu0 0.0
    %2926 = vmatpush1.msra.mxu0 0.0
    %2927 = vmatprep.subr.mxu0 0.0
    %2928 = vmatpush1.msra.mxu0 0.0
    %2929 = vmatprep.subr.mxu0 0.0
    %2930 = vmatpush1.msra.mxu0 0.0
    %2931 = vmatprep.subr.mxu0 0.0
    %2932 = vmatpush1.msra.mxu0 0.0
    %2933 = vmatprep.subr.mxu0 0.0
    %2934 = vmatpush1.msra.mxu0 0.0
    %2935 = vmatprep.subr.mxu0 0.0
    %2936 = vmatpush1.msra.mxu0 0.0
    %2937 = vmatprep.subr.mxu0 0.0
    %2938 = vmatpush1.msra.mxu0 0.0
    %2939 = vmatprep.subr.mxu0 0.0
    %2940 = vmatpush1.msra.mxu0 0.0
    %2941 = vmatprep.subr.mxu0 0.0
    %2942 = vmatpush1.msra.mxu0 0.0
    %2943 = vmatprep.subr.mxu0 0.0
    %2944 = vmatpush1.msra.mxu0 0.0
    %2945 = vmatprep.subr.mxu0 0.0
    %2946 = vmatpush1.msra.mxu0 0.0
    %2947 = vmatprep.subr.mxu0 0.0
    %2948 = vmatpush1.msra.mxu0 0.0
    %2949 = vmatprep.subr.mxu0 0.0
    %2950 = vmatpush1.msra.mxu0 0.0
    %2951 = vmatprep.subr.mxu0 0.0
    %2952 = vmatpush1.msra.mxu0 0.0
    %2953 = vmatprep.subr.mxu0 0.0
    %2954 = vmatpush1.msra.mxu0 0.0
    %2955 = vmatprep.subr.mxu0 0.0
    %2956 = vmatpush1.msra.mxu0 0.0
    %2957 = vmatprep.subr.mxu0 0.0
    %2958 = vmatpush1.msra.mxu0 0.0
    %2959 = vmatprep.subr.mxu0 0.0
    %2960 = vmatpush1.msra.mxu0 0.0
    %2961 = vmatprep.subr.mxu0 0.0
    %2962 = vmatpush1.msra.mxu0 0.0
    %2963 = vmatprep.subr.mxu0 0.0
    %2964 = vmatpush1.msra.mxu0 0.0
    %2965 = vmatprep.subr.mxu0 0.0
    %2966 = vmatpush1.msra.mxu0 0.0
    %2967 = vmatprep.subr.mxu0 0.0
    %2968 = vmatpush1.msra.mxu0 0.0
    %2969 = vmatprep.subr.mxu0 0.0
    %2970 = vmatpush1.msra.mxu0 0.0
    %2971 = vmatprep.subr.mxu0 0.0
    %2972 = vmatpush1.msra.mxu0 0.0
    %2973 = vmatprep.subr.mxu0 0.0
    %2974 = vmatpush1.msra.mxu0 0.0
    %2975 = vmatprep.mubr.f32.mxu0 0.0
    %2976 = vmatmul.mubr.f32.gmra.mrb[0].mxu0 %v2790
    %v2977 = vpop.f32.mrb[0].mxu0
    %v2978 = vadd.f32 %v164, %v2977
    %v2979 = vpop.f32.mrb[0].mxu0
    %2980 = vdwg.mxu0
    %v2981 = vtanh.pop %v2978
    %2982 = vset.pattern.permute.xlu0 1
    %2983 = vperm.xlu0 %2982, %v2710
    %v2984 = vpop.permute.xlu0 %2983
    %2985 = vset.pattern.permute.xlu0 1
    %2986 = vperm.xlu0 %2985, %v2711
    %v2987 = vpop.permute.xlu0 %2986
    %2988 = vset.pattern.permute.xlu0 1
    %2989 = vperm.xlu0 %2988, %v2712
    %v2990 = vpop.permute.xlu0 %2989
    %2991 = vset.pattern.permute.xlu0 1
    %2992 = vperm.xlu0 %2991, %v2713
    %v2993 = vpop.permute.xlu0 %2992
    %2994 = vset.pattern.permute.xlu0 1
    %2995 = vperm.xlu0 %2994, %v2714
    %v2996 = vpop.permute.xlu0 %2995
    %2997 = vset.pattern.permute.xlu0 1
    %2998 = vperm.xlu0 %2997, %v2715
    %v2999 = vpop.permute.xlu0 %2998
    %3000 = vset.pattern.permute.xlu0 1
    %3001 = vperm.xlu0 %3000, %v2716
    %v3002 = vpop.permute.xlu0 %3001
    %3003 = vset.pattern.permute.xlu0 1
    %3004 = vperm.xlu0 %3003, %v2717
    %v3005 = vpop.permute.xlu0 %3004
    %v3006 = vrot.slane %v2987, 7
    %v3007 = vsel %vm199, %v3006, %v2984
    %v3008 = vrot.slane %v2990, 6
    %v3009 = vsel %vm202, %v3008, %v3007
    %v3010 = vrot.slane %v2993, 5
    %v3011 = vsel %vm205, %v3010, %v3009
    %v3012 = vrot.slane %v2996, 4
    %v3013 = vsel %vm208, %v3012, %v3011
    %v3014 = vrot.slane %v2999, 3
    %v3015 = vsel %vm211, %v3014, %v3013
    %v3016 = vrot.slane %v3002, 2
    %v3017 = vsel %vm214, %v3016, %v3015
    %v3018 = vrot.slane %v3005, 1
    %v3019 = vsel %vm217, %v3018, %v3017
    %v3021 = vmul.f32 %v2981, %v3019
    %v3022 = vadd.f32 %v2910, %v3021
    %3023 = vmatprep.subr.mxu0 0.0
    %3024 = vmatpush1.msra.mxu0 %v142
    %3025 = vmatprep.subr.mxu0 0.0
    %3026 = vmatpush1.msra.mxu0 %v143
    %3027 = vmatprep.subr.mxu0 0.0
    %3028 = vmatpush1.msra.mxu0 %v144
    %3029 = vmatprep.subr.mxu0 0.0
    %3030 = vmatpush1.msra.mxu0 %v145
    %3031 = vmatprep.subr.mxu0 0.0
    %3032 = vmatpush1.msra.mxu0 0.0
    %3033 = vmatprep.subr.mxu0 0.0
    %3034 = vmatpush1.msra.mxu0 0.0
    %3035 = vmatprep.subr.mxu0 0.0
    %3036 = vmatpush1.msra.mxu0 0.0
    %3037 = vmatprep.subr.mxu0 0.0
    %3038 = vmatpush1.msra.mxu0 0.0
    %3039 = vmatprep.subr.mxu0 0.0
    %3040 = vmatpush1.msra.mxu0 0.0
    %3041 = vmatprep.subr.mxu0 0.0
    %3042 = vmatpush1.msra.mxu0 0.0
    %3043 = vmatprep.subr.mxu0 0.0
    %3044 = vmatpush1.msra.mxu0 0.0
    %3045 = vmatprep.subr.mxu0 0.0
    %3046 = vmatpush1.msra.mxu0 0.0
    %3047 = vmatprep.subr.mxu0 0.0
    %3048 = vmatpush1.msra.mxu0 0.0
    %3049 = vmatprep.subr.mxu0 0.0
    %3050 = vmatpush1.msra.mxu0 0.0
    %3051 = vmatprep.subr.mxu0 0.0
    %3052 = vmatpush1.msra.mxu0 0.0
    %3053 = vmatprep.subr.mxu0 0.0
    %3054 = vmatpush1.msra.mxu0 0.0
    %3055 = vmatprep.subr.mxu0 0.0
    %3056 = vmatpush1.msra.mxu0 0.0
    %3057 = vmatprep.subr.mxu0 0.0
    %3058 = vmatpush1.msra.mxu0 0.0
    %3059 = vmatprep.subr.mxu0 0.0
    %3060 = vmatpush1.msra.mxu0 0.0
    %3061 = vmatprep.subr.mxu0 0.0
    %3062 = vmatpush1.msra.mxu0 0.0
    %3063 = vmatprep.subr.mxu0 0.0
    %3064 = vmatpush1.msra.mxu0 0.0
    %3065 = vmatprep.subr.mxu0 0.0
    %3066 = vmatpush1.msra.mxu0 0.0
    %3067 = vmatprep.subr.mxu0 0.0
    %3068 = vmatpush1.msra.mxu0 0.0
    %3069 = vmatprep.subr.mxu0 0.0
    %3070 = vmatpush1.msra.mxu0 0.0
    %3071 = vmatprep.subr.mxu0 0.0
    %3072 = vmatpush1.msra.mxu0 0.0
    %3073 = vmatprep.subr.mxu0 0.0
    %3074 = vmatpush1.msra.mxu0 0.0
    %3075 = vmatprep.subr.mxu0 0.0
    %3076 = vmatpush1.msra.mxu0 0.0
    %3077 = vmatprep.subr.mxu0 0.0
    %3078 = vmatpush1.msra.mxu0 0.0
    %3079 = vmatprep.subr.mxu0 0.0
    %3080 = vmatpush1.msra.mxu0 0.0
    %3081 = vmatprep.subr.mxu0 0.0
    %3082 = vmatpush1.msra.mxu0 0.0
    %3083 = vmatprep.subr.mxu0 0.0
    %3084 = vmatpush1.msra.mxu0 0.0
    %3085 = vmatprep.subr.mxu0 0.0
    %3086 = vmatpush1.msra.mxu0 0.0
    %3087 = vmatprep.mubr.f32.mxu0 0.0
    %3088 = vmatmul.mubr.f32.gmra.mrb[0].mxu0 %v2790
    %v3089 = vpop.f32.mrb[0].mxu0
    %v3090 = vadd.f32 %v172, %v3089
    %v3091 = vpop.f32.mrb[0].mxu0
    %3092 = vdwg.mxu0
    %v3093 = vtanh.pop %v3090
    %3094 = vset.pattern.permute.xlu0 2
    %3095 = vperm.xlu0 %3094, %v2710
    %v3096 = vpop.permute.xlu0 %3095
    %3097 = vset.pattern.permute.xlu0 2
    %3098 = vperm.xlu0 %3097, %v2711
    %v3099 = vpop.permute.xlu0 %3098
    %3100 = vset.pattern.permute.xlu0 2
    %3101 = vperm.xlu0 %3100, %v2712
    %v3102 = vpop.permute.xlu0 %3101
    %3103 = vset.pattern.permute.xlu0 2
    %3104 = vperm.xlu0 %3103, %v2713
    %v3105 = vpop.permute.xlu0 %3104
    %3106 = vset.pattern.permute.xlu0 2
    %3107 = vperm.xlu0 %3106, %v2714
    %v3108 = vpop.permute.xlu0 %3107
    %3109 = vset.pattern.permute.xlu0 2
    %3110 = vperm.xlu0 %3109, %v2715
    %v3111 = vpop.permute.xlu0 %3110
    %3112 = vset.pattern.permute.xlu0 2
    %3113 = vperm.xlu0 %3112, %v2716
    %v3114 = vpop.permute.xlu0 %3113
    %3115 = vset.pattern.permute.xlu0 2
    %3116 = vperm.xlu0 %3115, %v2717
    %v3117 = vpop.permute.xlu0 %3116
    %v3118 = vrot.slane %v3099, 7
    %v3119 = vsel %vm199, %v3118, %v3096
    %v3120 = vrot.slane %v3102, 6
    %v3121 = vsel %vm202, %v3120, %v3119
    %v3122 = vrot.slane %v3105, 5
    %v3123 = vsel %vm205, %v3122, %v3121
    %v3124 = vrot.slane %v3108, 4
    %v3125 = vsel %vm208, %v3124, %v3123
    %v3126 = vrot.slane %v3111, 3
    %v3127 = vsel %vm211, %v3126, %v3125
    %v3128 = vrot.slane %v3114, 2
    %v3129 = vsel %vm214, %v3128, %v3127
    %v3130 = vrot.slane %v3117, 1
    %v3131 = vsel %vm217, %v3130, %v3129
    %v3133 = vmul.f32 %v3093, %v3131
    %v3134 = vadd.f32 %v3022, %v3133
    %3135 = vmatprep.subr.mxu0 0.0
    %3136 = vmatpush1.msra.mxu0 %v147
    %3137 = vmatprep.subr.mxu0 0.0
    %3138 = vmatpush1.msra.mxu0 %v148
    %3139 = vmatprep.subr.mxu0 0.0
    %3140 = vmatpush1.msra.mxu0 %v149
    %3141 = vmatprep.subr.mxu0 0.0
    %3142 = vmatpush1.msra.mxu0 %v150
    %3143 = vmatprep.subr.mxu0 0.0
    %3144 = vmatpush1.msra.mxu0 0.0
    %3145 = vmatprep.subr.mxu0 0.0
    %3146 = vmatpush1.msra.mxu0 0.0
    %3147 = vmatprep.subr.mxu0 0.0
    %3148 = vmatpush1.msra.mxu0 0.0
    %3149 = vmatprep.subr.mxu0 0.0
    %3150 = vmatpush1.msra.mxu0 0.0
    %3151 = vmatprep.subr.mxu0 0.0
    %3152 = vmatpush1.msra.mxu0 0.0
    %3153 = vmatprep.subr.mxu0 0.0
    %3154 = vmatpush1.msra.mxu0 0.0
    %3155 = vmatprep.subr.mxu0 0.0
    %3156 = vmatpush1.msra.mxu0 0.0
    %3157 = vmatprep.subr.mxu0 0.0
    %3158 = vmatpush1.msra.mxu0 0.0
    %3159 = vmatprep.subr.mxu0 0.0
    %3160 = vmatpush1.msra.mxu0 0.0
    %3161 = vmatprep.subr.mxu0 0.0
    %3162 = vmatpush1.msra.mxu0 0.0
    %3163 = vmatprep.subr.mxu0 0.0
    %3164 = vmatpush1.msra.mxu0 0.0
    %3165 = vmatprep.subr.mxu0 0.0
    %3166 = vmatpush1.msra.mxu0 0.0
    %3167 = vmatprep.subr.mxu0 0.0
    %3168 = vmatpush1.msra.mxu0 0.0
    %3169 = vmatprep.subr.mxu0 0.0
    %3170 = vmatpush1.msra.mxu0 0.0
    %3171 = vmatprep.subr.mxu0 0.0
    %3172 = vmatpush1.msra.mxu0 0.0
    %3173 = vmatprep.subr.mxu0 0.0
    %3174 = vmatpush1.msra.mxu0 0.0
    %3175 = vmatprep.subr.mxu0 0.0
    %3176 = vmatpush1.msra.mxu0 0.0
    %3177 = vmatprep.subr.mxu0 0.0
    %3178 = vmatpush1.msra.mxu0 0.0
    %3179 = vmatprep.subr.mxu0 0.0
    %3180 = vmatpush1.msra.mxu0 0.0
    %3181 = vmatprep.subr.mxu0 0.0
    %3182 = vmatpush1.msra.mxu0 0.0
    %3183 = vmatprep.subr.mxu0 0.0
    %3184 = vmatpush1.msra.mxu0 0.0
    %3185 = vmatprep.subr.mxu0 0.0
    %3186 = vmatpush1.msra.mxu0 0.0
    %3187 = vmatprep.subr.mxu0 0.0
    %3188 = vmatpush1.msra.mxu0 0.0
    %3189 = vmatprep.subr.mxu0 0.0
    %3190 = vmatpush1.msra.mxu0 0.0
    %3191 = vmatprep.subr.mxu0 0.0
    %3192 = vmatpush1.msra.mxu0 0.0
    %3193 = vmatprep.subr.mxu0 0.0
    %3194 = vmatpush1.msra.mxu0 0.0
    %3195 = vmatprep.subr.mxu0 0.0
    %3196 = vmatpush1.msra.mxu0 0.0
    %3197 = vmatprep.subr.mxu0 0.0
    %3198 = vmatpush1.msra.mxu0 0.0
    %3199 = vmatprep.mubr.f32.mxu0 0.0
    %3200 = vmatmul.mubr.f32.gmra.mrb[0].mxu0 %v2790
    %v3201 = vpop.f32.mrb[0].mxu0
    %v3202 = vadd.f32 %v180, %v3201
    %v3203 = vpop.f32.mrb[0].mxu0
    %3204 = vdwg.mxu0
    %v3205 = vtanh.pop %v3202
    %3206 = vset.pattern.permute.xlu0 3
    %3207 = vperm.xlu0 %3206, %v2710
    %v3208 = vpop.permute.xlu0 %3207
    %3209 = vset.pattern.permute.xlu0 3
    %3210 = vperm.xlu0 %3209, %v2711
    %v3211 = vpop.permute.xlu0 %3210
    %3212 = vset.pattern.permute.xlu0 3
    %3213 = vperm.xlu0 %3212, %v2712
    %v3214 = vpop.permute.xlu0 %3213
    %3215 = vset.pattern.permute.xlu0 3
    %3216 = vperm.xlu0 %3215, %v2713
    %v3217 = vpop.permute.xlu0 %3216
    %3218 = vset.pattern.permute.xlu0 3
    %3219 = vperm.xlu0 %3218, %v2714
    %v3220 = vpop.permute.xlu0 %3219
    %3221 = vset.pattern.permute.xlu0 3
    %3222 = vperm.xlu0 %3221, %v2715
    %v3223 = vpop.permute.xlu0 %3222
    %3224 = vset.pattern.permute.xlu0 3
    %3225 = vperm.xlu0 %3224, %v2716
    %v3226 = vpop.permute.xlu0 %3225
    %3227 = vset.pattern.permute.xlu0 3
    %3228 = vperm.xlu0 %3227, %v2717
    %v3229 = vpop.permute.xlu0 %3228
    %v3230 = vrot.slane %v3211, 7
    %v3231 = vsel %vm199, %v3230, %v3208
    %v3232 = vrot.slane %v3214, 6
    %v3233 = vsel %vm202, %v3232, %v3231
    %v3234 = vrot.slane %v3217, 5
    %v3235 = vsel %vm205, %v3234, %v3233
    %v3236 = vrot.slane %v3220, 4
    %v3237 = vsel %vm208, %v3236, %v3235
    %v3238 = vrot.slane %v3223, 3
    %v3239 = vsel %vm211, %v3238, %v3237
    %v3240 = vrot.slane %v3226, 2
    %v3241 = vsel %vm214, %v3240, %v3239
    %v3242 = vrot.slane %v3229, 1
    %v3243 = vsel %vm217, %v3242, %v3241
    %v3245 = vmul.f32 %v3205, %v3243
    %v3246 = vadd.f32 %v3134, %v3245
    %s3247 = smul.f32 %s2683, 0.5
    %v3248 = vstv %s3247
    %v3249 = vmul.f32 %v3248, %v3246
    %v3250 = vadd.f32 %v2606, %v3249
    %s3251 = sadd.f32 %s2681, %s3247
    %s3252 = ssub.f32 %s3251, %s296
    %v3253 = vstv %s3252
    %v3254 = vmul.f32 %v313, %v3253
    %v3255 = vmul.f32 %v314, %v3253
    %v3256 = vmul.f32 %v315, %v3253
    %v3257 = vmul.f32 %v316, %v3253
    %v3258 = vmul.f32 %v317, %v3253
    %v3259 = vmul.f32 %v318, %v3253
    %v3260 = vmul.f32 %v319, %v3253
    %v3261 = vmul.f32 %v320, %v3253
    %v3262 = vadd.f32 %v305, %v3254
    %v3263 = vadd.f32 %v306, %v3255
    %v3264 = vadd.f32 %v307, %v3256
    %v3265 = vadd.f32 %v308, %v3257
    %v3266 = vadd.f32 %v309, %v3258
    %v3267 = vadd.f32 %v310, %v3259
    %v3268 = vadd.f32 %v311, %v3260
    %v3269 = vadd.f32 %v312, %v3261
    %v3270 = vmul.f32 %v3262, %v3253
    %v3271 = vmul.f32 %v3263, %v3253
    %v3272 = vmul.f32 %v3264, %v3253
    %v3273 = vmul.f32 %v3265, %v3253
    %v3274 = vmul.f32 %v3266, %v3253
    %v3275 = vmul.f32 %v3267, %v3253
    %v3276 = vmul.f32 %v3268, %v3253
    %v3277 = vmul.f32 %v3269, %v3253
    %v3278 = vadd.f32 %v297, %v3270
    %v3279 = vadd.f32 %v298, %v3271
    %v3280 = vadd.f32 %v299, %v3272
    %v3281 = vadd.f32 %v300, %v3273
    %v3282 = vadd.f32 %v301, %v3274
    %v3283 = vadd.f32 %v302, %v3275
    %v3284 = vadd.f32 %v303, %v3276
    %v3285 = vadd.f32 %v304, %v3277
    %v3287 = vsel %vm358, %v3250, 0
    %3289 = vmatprep.subr.mxu0 0.0
    %3290 = vmatpush1.msra.mxu0 %v110
    %3291 = vmatprep.subr.mxu0 0.0
    %3292 = vmatpush1.msra.mxu0 %v111
    %3293 = vmatprep.subr.mxu0 0.0
    %3294 = vmatpush1.msra.mxu0 %v112
    %3295 = vmatprep.subr.mxu0 0.0
    %3296 = vmatpush1.msra.mxu0 %v113
    %3297 = vmatprep.subr.mxu0 0.0
    %3298 = vmatpush1.msra.mxu0 0.0
    %3299 = vmatprep.subr.mxu0 0.0
    %3300 = vmatpush1.msra.mxu0 0.0
    %3301 = vmatprep.subr.mxu0 0.0
    %3302 = vmatpush1.msra.mxu0 0.0
    %3303 = vmatprep.subr.mxu0 0.0
    %3304 = vmatpush1.msra.mxu0 0.0
    %3305 = vmatprep.subr.mxu0 0.0
    %3306 = vmatpush1.msra.mxu0 0.0
    %3307 = vmatprep.subr.mxu0 0.0
    %3308 = vmatpush1.msra.mxu0 0.0
    %3309 = vmatprep.subr.mxu0 0.0
    %3310 = vmatpush1.msra.mxu0 0.0
    %3311 = vmatprep.subr.mxu0 0.0
    %3312 = vmatpush1.msra.mxu0 0.0
    %3313 = vmatprep.subr.mxu0 0.0
    %3314 = vmatpush1.msra.mxu0 0.0
    %3315 = vmatprep.subr.mxu0 0.0
    %3316 = vmatpush1.msra.mxu0 0.0
    %3317 = vmatprep.subr.mxu0 0.0
    %3318 = vmatpush1.msra.mxu0 0.0
    %3319 = vmatprep.subr.mxu0 0.0
    %3320 = vmatpush1.msra.mxu0 0.0
    %3321 = vmatprep.subr.mxu0 0.0
    %3322 = vmatpush1.msra.mxu0 0.0
    %3323 = vmatprep.subr.mxu0 0.0
    %3324 = vmatpush1.msra.mxu0 0.0
    %3325 = vmatprep.subr.mxu0 0.0
    %3326 = vmatpush1.msra.mxu0 0.0
    %3327 = vmatprep.subr.mxu0 0.0
    %3328 = vmatpush1.msra.mxu0 0.0
    %3329 = vmatprep.subr.mxu0 0.0
    %3330 = vmatpush1.msra.mxu0 0.0
    %3331 = vmatprep.subr.mxu0 0.0
    %3332 = vmatpush1.msra.mxu0 0.0
    %3333 = vmatprep.subr.mxu0 0.0
    %3334 = vmatpush1.msra.mxu0 0.0
    %3335 = vmatprep.subr.mxu0 0.0
    %3336 = vmatpush1.msra.mxu0 0.0
    %3337 = vmatprep.subr.mxu0 0.0
    %3338 = vmatpush1.msra.mxu0 0.0
    %3339 = vmatprep.subr.mxu0 0.0
    %3340 = vmatpush1.msra.mxu0 0.0
    %3341 = vmatprep.subr.mxu0 0.0
    %3342 = vmatpush1.msra.mxu0 0.0
    %3343 = vmatprep.subr.mxu0 0.0
    %3344 = vmatpush1.msra.mxu0 0.0
    %3345 = vmatprep.subr.mxu0 0.0
    %3346 = vmatpush1.msra.mxu0 0.0
    %3347 = vmatprep.subr.mxu0 0.0
    %3348 = vmatpush1.msra.mxu0 0.0
    %3349 = vmatprep.subr.mxu0 0.0
    %3350 = vmatpush1.msra.mxu0 0.0
    %3351 = vmatprep.subr.mxu0 0.0
    %3352 = vmatpush1.msra.mxu0 0.0
    %3353 = vmatprep.mubr.f32.mxu0 0.0
    %3354 = vmatmul.mubr.f32.gmra.mrb[0].mxu0 %v3287
    %v3355 = vpop.f32.mrb[0].mxu0
    %v3356 = vadd.f32 %v119, %v3355
    %v3357 = vpop.f32.mrb[0].mxu0
    %3358 = vdwg.mxu0
    %v3359 = vtanh.pop %v3356
    %v3361 = vsel %vm358, %v3359, 0
    %3363 = vmatprep.subr.mxu0 0.0
    %3364 = vmatpush1.msra.mxu0 %v132
    %3365 = vmatprep.subr.mxu0 0.0
    %3366 = vmatpush1.msra.mxu0 %v133
    %3367 = vmatprep.subr.mxu0 0.0
    %3368 = vmatpush1.msra.mxu0 %v134
    %3369 = vmatprep.subr.mxu0 0.0
    %3370 = vmatpush1.msra.mxu0 %v135
    %3371 = vmatprep.subr.mxu0 0.0
    %3372 = vmatpush1.msra.mxu0 0.0
    %3373 = vmatprep.subr.mxu0 0.0
    %3374 = vmatpush1.msra.mxu0 0.0
    %3375 = vmatprep.subr.mxu0 0.0
    %3376 = vmatpush1.msra.mxu0 0.0
    %3377 = vmatprep.subr.mxu0 0.0
    %3378 = vmatpush1.msra.mxu0 0.0
    %3379 = vmatprep.subr.mxu0 0.0
    %3380 = vmatpush1.msra.mxu0 0.0
    %3381 = vmatprep.subr.mxu0 0.0
    %3382 = vmatpush1.msra.mxu0 0.0
    %3383 = vmatprep.subr.mxu0 0.0
    %3384 = vmatpush1.msra.mxu0 0.0
    %3385 = vmatprep.subr.mxu0 0.0
    %3386 = vmatpush1.msra.mxu0 0.0
    %3387 = vmatprep.subr.mxu0 0.0
    %3388 = vmatpush1.msra.mxu0 0.0
    %3389 = vmatprep.subr.mxu0 0.0
    %3390 = vmatpush1.msra.mxu0 0.0
    %3391 = vmatprep.subr.mxu0 0.0
    %3392 = vmatpush1.msra.mxu0 0.0
    %3393 = vmatprep.subr.mxu0 0.0
    %3394 = vmatpush1.msra.mxu0 0.0
    %3395 = vmatprep.subr.mxu0 0.0
    %3396 = vmatpush1.msra.mxu0 0.0
    %3397 = vmatprep.subr.mxu0 0.0
    %3398 = vmatpush1.msra.mxu0 0.0
    %3399 = vmatprep.subr.mxu0 0.0
    %3400 = vmatpush1.msra.mxu0 0.0
    %3401 = vmatprep.subr.mxu0 0.0
    %3402 = vmatpush1.msra.mxu0 0.0
    %3403 = vmatprep.subr.mxu0 0.0
    %3404 = vmatpush1.msra.mxu0 0.0
    %3405 = vmatprep.subr.mxu0 0.0
    %3406 = vmatpush1.msra.mxu0 0.0
    %3407 = vmatprep.subr.mxu0 0.0
    %3408 = vmatpush1.msra.mxu0 0.0
    %3409 = vmatprep.subr.mxu0 0.0
    %3410 = vmatpush1.msra.mxu0 0.0
    %3411 = vmatprep.subr.mxu0 0.0
    %3412 = vmatpush1.msra.mxu0 0.0
    %3413 = vmatprep.subr.mxu0 0.0
    %3414 = vmatpush1.msra.mxu0 0.0
    %3415 = vmatprep.subr.mxu0 0.0
    %3416 = vmatpush1.msra.mxu0 0.0
    %3417 = vmatprep.subr.mxu0 0.0
    %3418 = vmatpush1.msra.mxu0 0.0
    %3419 = vmatprep.subr.mxu0 0.0
    %3420 = vmatpush1.msra.mxu0 0.0
    %3421 = vmatprep.subr.mxu0 0.0
    %3422 = vmatpush1.msra.mxu0 0.0
    %3423 = vmatprep.subr.mxu0 0.0
    %3424 = vmatpush1.msra.mxu0 0.0
    %3425 = vmatprep.subr.mxu0 0.0
    %3426 = vmatpush1.msra.mxu0 0.0
    %3427 = vmatprep.mubr.f32.mxu0 0.0
    %3428 = vmatmul.mubr.f32.gmra.mrb[0].mxu0 %v3361
    %v3429 = vpop.f32.mrb[0].mxu0
    %v3430 = vadd.f32 %v156, %v3429
    %v3431 = vpop.f32.mrb[0].mxu0
    %3432 = vdwg.mxu0
    %v3433 = vtanh.pop %v3430
    %3435 = vset.pattern.permute.xlu0 0
    %3436 = vperm.xlu0 %3435, %v3278
    %v3437 = vpop.permute.xlu0 %3436
    %3439 = vset.pattern.permute.xlu0 0
    %3440 = vperm.xlu0 %3439, %v3279
    %v3441 = vpop.permute.xlu0 %3440
    %3443 = vset.pattern.permute.xlu0 0
    %3444 = vperm.xlu0 %3443, %v3280
    %v3445 = vpop.permute.xlu0 %3444
    %3447 = vset.pattern.permute.xlu0 0
    %3448 = vperm.xlu0 %3447, %v3281
    %v3449 = vpop.permute.xlu0 %3448
    %3451 = vset.pattern.permute.xlu0 0
    %3452 = vperm.xlu0 %3451, %v3282
    %v3453 = vpop.permute.xlu0 %3452
    %3455 = vset.pattern.permute.xlu0 0
    %3456 = vperm.xlu0 %3455, %v3283
    %v3457 = vpop.permute.xlu0 %3456
    %3459 = vset.pattern.permute.xlu0 0
    %3460 = vperm.xlu0 %3459, %v3284
    %v3461 = vpop.permute.xlu0 %3460
    %3463 = vset.pattern.permute.xlu0 0
    %3464 = vperm.xlu0 %3463, %v3285
    %v3465 = vpop.permute.xlu0 %3464
    %v3466 = vrot.slane %v3441, 7
    %v3467 = vsel %vm199, %v3466, %v3437
    %v3468 = vrot.slane %v3445, 6
    %v3469 = vsel %vm202, %v3468, %v3467
    %v3470 = vrot.slane %v3449, 5
    %v3471 = vsel %vm205, %v3470, %v3469
    %v3472 = vrot.slane %v3453, 4
    %v3473 = vsel %vm208, %v3472, %v3471
    %v3474 = vrot.slane %v3457, 3
    %v3475 = vsel %vm211, %v3474, %v3473
    %v3476 = vrot.slane %v3461, 2
    %v3477 = vsel %vm214, %v3476, %v3475
    %v3478 = vrot.slane %v3465, 1
    %v3479 = vsel %vm217, %v3478, %v3477
    %v3481 = vmul.f32 %v3433, %v3479
    %3482 = vmatprep.subr.mxu0 0.0
    %3483 = vmatpush1.msra.mxu0 %v137
    %3484 = vmatprep.subr.mxu0 0.0
    %3485 = vmatpush1.msra.mxu0 %v138
    %3486 = vmatprep.subr.mxu0 0.0
    %3487 = vmatpush1.msra.mxu0 %v139
    %3488 = vmatprep.subr.mxu0 0.0
    %3489 = vmatpush1.msra.mxu0 %v140
    %3490 = vmatprep.subr.mxu0 0.0
    %3491 = vmatpush1.msra.mxu0 0.0
    %3492 = vmatprep.subr.mxu0 0.0
    %3493 = vmatpush1.msra.mxu0 0.0
    %3494 = vmatprep.subr.mxu0 0.0
    %3495 = vmatpush1.msra.mxu0 0.0
    %3496 = vmatprep.subr.mxu0 0.0
    %3497 = vmatpush1.msra.mxu0 0.0
    %3498 = vmatprep.subr.mxu0 0.0
    %3499 = vmatpush1.msra.mxu0 0.0
    %3500 = vmatprep.subr.mxu0 0.0
    %3501 = vmatpush1.msra.mxu0 0.0
    %3502 = vmatprep.subr.mxu0 0.0
    %3503 = vmatpush1.msra.mxu0 0.0
    %3504 = vmatprep.subr.mxu0 0.0
    %3505 = vmatpush1.msra.mxu0 0.0
    %3506 = vmatprep.subr.mxu0 0.0
    %3507 = vmatpush1.msra.mxu0 0.0
    %3508 = vmatprep.subr.mxu0 0.0
    %3509 = vmatpush1.msra.mxu0 0.0
    %3510 = vmatprep.subr.mxu0 0.0
    %3511 = vmatpush1.msra.mxu0 0.0
    %3512 = vmatprep.subr.mxu0 0.0
    %3513 = vmatpush1.msra.mxu0 0.0
    %3514 = vmatprep.subr.mxu0 0.0
    %3515 = vmatpush1.msra.mxu0 0.0
    %3516 = vmatprep.subr.mxu0 0.0
    %3517 = vmatpush1.msra.mxu0 0.0
    %3518 = vmatprep.subr.mxu0 0.0
    %3519 = vmatpush1.msra.mxu0 0.0
    %3520 = vmatprep.subr.mxu0 0.0
    %3521 = vmatpush1.msra.mxu0 0.0
    %3522 = vmatprep.subr.mxu0 0.0
    %3523 = vmatpush1.msra.mxu0 0.0
    %3524 = vmatprep.subr.mxu0 0.0
    %3525 = vmatpush1.msra.mxu0 0.0
    %3526 = vmatprep.subr.mxu0 0.0
    %3527 = vmatpush1.msra.mxu0 0.0
    %3528 = vmatprep.subr.mxu0 0.0
    %3529 = vmatpush1.msra.mxu0 0.0
    %3530 = vmatprep.subr.mxu0 0.0
    %3531 = vmatpush1.msra.mxu0 0.0
    %3532 = vmatprep.subr.mxu0 0.0
    %3533 = vmatpush1.msra.mxu0 0.0
    %3534 = vmatprep.subr.mxu0 0.0
    %3535 = vmatpush1.msra.mxu0 0.0
    %3536 = vmatprep.subr.mxu0 0.0
    %3537 = vmatpush1.msra.mxu0 0.0
    %3538 = vmatprep.subr.mxu0 0.0
    %3539 = vmatpush1.msra.mxu0 0.0
    %3540 = vmatprep.subr.mxu0 0.0
    %3541 = vmatpush1.msra.mxu0 0.0
    %3542 = vmatprep.subr.mxu0 0.0
    %3543 = vmatpush1.msra.mxu0 0.0
    %3544 = vmatprep.subr.mxu0 0.0
    %3545 = vmatpush1.msra.mxu0 0.0
    %3546 = vmatprep.mubr.f32.mxu0 0.0
    %3547 = vmatmul.mubr.f32.gmra.mrb[0].mxu0 %v3361
    %v3548 = vpop.f32.mrb[0].mxu0
    %v3549 = vadd.f32 %v164, %v3548
    %v3550 = vpop.f32.mrb[0].mxu0
    %3551 = vdwg.mxu0
    %v3552 = vtanh.pop %v3549
    %3553 = vset.pattern.permute.xlu0 1
    %3554 = vperm.xlu0 %3553, %v3278
    %v3555 = vpop.permute.xlu0 %3554
    %3556 = vset.pattern.permute.xlu0 1
    %3557 = vperm.xlu0 %3556, %v3279
    %v3558 = vpop.permute.xlu0 %3557
    %3559 = vset.pattern.permute.xlu0 1
    %3560 = vperm.xlu0 %3559, %v3280
    %v3561 = vpop.permute.xlu0 %3560
    %3562 = vset.pattern.permute.xlu0 1
    %3563 = vperm.xlu0 %3562, %v3281
    %v3564 = vpop.permute.xlu0 %3563
    %3565 = vset.pattern.permute.xlu0 1
    %3566 = vperm.xlu0 %3565, %v3282
    %v3567 = vpop.permute.xlu0 %3566
    %3568 = vset.pattern.permute.xlu0 1
    %3569 = vperm.xlu0 %3568, %v3283
    %v3570 = vpop.permute.xlu0 %3569
    %3571 = vset.pattern.permute.xlu0 1
    %3572 = vperm.xlu0 %3571, %v3284
    %v3573 = vpop.permute.xlu0 %3572
    %3574 = vset.pattern.permute.xlu0 1
    %3575 = vperm.xlu0 %3574, %v3285
    %v3576 = vpop.permute.xlu0 %3575
    %v3577 = vrot.slane %v3558, 7
    %v3578 = vsel %vm199, %v3577, %v3555
    %v3579 = vrot.slane %v3561, 6
    %v3580 = vsel %vm202, %v3579, %v3578
    %v3581 = vrot.slane %v3564, 5
    %v3582 = vsel %vm205, %v3581, %v3580
    %v3583 = vrot.slane %v3567, 4
    %v3584 = vsel %vm208, %v3583, %v3582
    %v3585 = vrot.slane %v3570, 3
    %v3586 = vsel %vm211, %v3585, %v3584
    %v3587 = vrot.slane %v3573, 2
    %v3588 = vsel %vm214, %v3587, %v3586
    %v3589 = vrot.slane %v3576, 1
    %v3590 = vsel %vm217, %v3589, %v3588
    %v3592 = vmul.f32 %v3552, %v3590
    %v3593 = vadd.f32 %v3481, %v3592
    %3594 = vmatprep.subr.mxu0 0.0
    %3595 = vmatpush1.msra.mxu0 %v142
    %3596 = vmatprep.subr.mxu0 0.0
    %3597 = vmatpush1.msra.mxu0 %v143
    %3598 = vmatprep.subr.mxu0 0.0
    %3599 = vmatpush1.msra.mxu0 %v144
    %3600 = vmatprep.subr.mxu0 0.0
    %3601 = vmatpush1.msra.mxu0 %v145
    %3602 = vmatprep.subr.mxu0 0.0
    %3603 = vmatpush1.msra.mxu0 0.0
    %3604 = vmatprep.subr.mxu0 0.0
    %3605 = vmatpush1.msra.mxu0 0.0
    %3606 = vmatprep.subr.mxu0 0.0
    %3607 = vmatpush1.msra.mxu0 0.0
    %3608 = vmatprep.subr.mxu0 0.0
    %3609 = vmatpush1.msra.mxu0 0.0
    %3610 = vmatprep.subr.mxu0 0.0
    %3611 = vmatpush1.msra.mxu0 0.0
    %3612 = vmatprep.subr.mxu0 0.0
    %3613 = vmatpush1.msra.mxu0 0.0
    %3614 = vmatprep.subr.mxu0 0.0
    %3615 = vmatpush1.msra.mxu0 0.0
    %3616 = vmatprep.subr.mxu0 0.0
    %3617 = vmatpush1.msra.mxu0 0.0
    %3618 = vmatprep.subr.mxu0 0.0
    %3619 = vmatpush1.msra.mxu0 0.0
    %3620 = vmatprep.subr.mxu0 0.0
    %3621 = vmatpush1.msra.mxu0 0.0
    %3622 = vmatprep.subr.mxu0 0.0
    %3623 = vmatpush1.msra.mxu0 0.0
    %3624 = vmatprep.subr.mxu0 0.0
    %3625 = vmatpush1.msra.mxu0 0.0
    %3626 = vmatprep.subr.mxu0 0.0
    %3627 = vmatpush1.msra.mxu0 0.0
    %3628 = vmatprep.subr.mxu0 0.0
    %3629 = vmatpush1.msra.mxu0 0.0
    %3630 = vmatprep.subr.mxu0 0.0
    %3631 = vmatpush1.msra.mxu0 0.0
    %3632 = vmatprep.subr.mxu0 0.0
    %3633 = vmatpush1.msra.mxu0 0.0
    %3634 = vmatprep.subr.mxu0 0.0
    %3635 = vmatpush1.msra.mxu0 0.0
    %3636 = vmatprep.subr.mxu0 0.0
    %3637 = vmatpush1.msra.mxu0 0.0
    %3638 = vmatprep.subr.mxu0 0.0
    %3639 = vmatpush1.msra.mxu0 0.0
    %3640 = vmatprep.subr.mxu0 0.0
    %3641 = vmatpush1.msra.mxu0 0.0
    %3642 = vmatprep.subr.mxu0 0.0
    %3643 = vmatpush1.msra.mxu0 0.0
    %3644 = vmatprep.subr.mxu0 0.0
    %3645 = vmatpush1.msra.mxu0 0.0
    %3646 = vmatprep.subr.mxu0 0.0
    %3647 = vmatpush1.msra.mxu0 0.0
    %3648 = vmatprep.subr.mxu0 0.0
    %3649 = vmatpush1.msra.mxu0 0.0
    %3650 = vmatprep.subr.mxu0 0.0
    %3651 = vmatpush1.msra.mxu0 0.0
    %3652 = vmatprep.subr.mxu0 0.0
    %3653 = vmatpush1.msra.mxu0 0.0
    %3654 = vmatprep.subr.mxu0 0.0
    %3655 = vmatpush1.msra.mxu0 0.0
    %3656 = vmatprep.subr.mxu0 0.0
    %3657 = vmatpush1.msra.mxu0 0.0
    %3658 = vmatprep.mubr.f32.mxu0 0.0
    %3659 = vmatmul.mubr.f32.gmra.mrb[0].mxu0 %v3361
    %v3660 = vpop.f32.mrb[0].mxu0
    %v3661 = vadd.f32 %v172, %v3660
    %v3662 = vpop.f32.mrb[0].mxu0
    %3663 = vdwg.mxu0
    %v3664 = vtanh.pop %v3661
    %3665 = vset.pattern.permute.xlu0 2
    %3666 = vperm.xlu0 %3665, %v3278
    %v3667 = vpop.permute.xlu0 %3666
    %3668 = vset.pattern.permute.xlu0 2
    %3669 = vperm.xlu0 %3668, %v3279
    %v3670 = vpop.permute.xlu0 %3669
    %3671 = vset.pattern.permute.xlu0 2
    %3672 = vperm.xlu0 %3671, %v3280
    %v3673 = vpop.permute.xlu0 %3672
    %3674 = vset.pattern.permute.xlu0 2
    %3675 = vperm.xlu0 %3674, %v3281
    %v3676 = vpop.permute.xlu0 %3675
    %3677 = vset.pattern.permute.xlu0 2
    %3678 = vperm.xlu0 %3677, %v3282
    %v3679 = vpop.permute.xlu0 %3678
    %3680 = vset.pattern.permute.xlu0 2
    %3681 = vperm.xlu0 %3680, %v3283
    %v3682 = vpop.permute.xlu0 %3681
    %3683 = vset.pattern.permute.xlu0 2
    %3684 = vperm.xlu0 %3683, %v3284
    %v3685 = vpop.permute.xlu0 %3684
    %3686 = vset.pattern.permute.xlu0 2
    %3687 = vperm.xlu0 %3686, %v3285
    %v3688 = vpop.permute.xlu0 %3687
    %v3689 = vrot.slane %v3670, 7
    %v3690 = vsel %vm199, %v3689, %v3667
    %v3691 = vrot.slane %v3673, 6
    %v3692 = vsel %vm202, %v3691, %v3690
    %v3693 = vrot.slane %v3676, 5
    %v3694 = vsel %vm205, %v3693, %v3692
    %v3695 = vrot.slane %v3679, 4
    %v3696 = vsel %vm208, %v3695, %v3694
    %v3697 = vrot.slane %v3682, 3
    %v3698 = vsel %vm211, %v3697, %v3696
    %v3699 = vrot.slane %v3685, 2
    %v3700 = vsel %vm214, %v3699, %v3698
    %v3701 = vrot.slane %v3688, 1
    %v3702 = vsel %vm217, %v3701, %v3700
    %v3704 = vmul.f32 %v3664, %v3702
    %v3705 = vadd.f32 %v3593, %v3704
    %3706 = vmatprep.subr.mxu0 0.0
    %3707 = vmatpush1.msra.mxu0 %v147
    %3708 = vmatprep.subr.mxu0 0.0
    %3709 = vmatpush1.msra.mxu0 %v148
    %3710 = vmatprep.subr.mxu0 0.0
    %3711 = vmatpush1.msra.mxu0 %v149
    %3712 = vmatprep.subr.mxu0 0.0
    %3713 = vmatpush1.msra.mxu0 %v150
    %3714 = vmatprep.subr.mxu0 0.0
    %3715 = vmatpush1.msra.mxu0 0.0
    %3716 = vmatprep.subr.mxu0 0.0
    %3717 = vmatpush1.msra.mxu0 0.0
    %3718 = vmatprep.subr.mxu0 0.0
    %3719 = vmatpush1.msra.mxu0 0.0
    %3720 = vmatprep.subr.mxu0 0.0
    %3721 = vmatpush1.msra.mxu0 0.0
    %3722 = vmatprep.subr.mxu0 0.0
    %3723 = vmatpush1.msra.mxu0 0.0
    %3724 = vmatprep.subr.mxu0 0.0
    %3725 = vmatpush1.msra.mxu0 0.0
    %3726 = vmatprep.subr.mxu0 0.0
    %3727 = vmatpush1.msra.mxu0 0.0
    %3728 = vmatprep.subr.mxu0 0.0
    %3729 = vmatpush1.msra.mxu0 0.0
    %3730 = vmatprep.subr.mxu0 0.0
    %3731 = vmatpush1.msra.mxu0 0.0
    %3732 = vmatprep.subr.mxu0 0.0
    %3733 = vmatpush1.msra.mxu0 0.0
    %3734 = vmatprep.subr.mxu0 0.0
    %3735 = vmatpush1.msra.mxu0 0.0
    %3736 = vmatprep.subr.mxu0 0.0
    %3737 = vmatpush1.msra.mxu0 0.0
    %3738 = vmatprep.subr.mxu0 0.0
    %3739 = vmatpush1.msra.mxu0 0.0
    %3740 = vmatprep.subr.mxu0 0.0
    %3741 = vmatpush1.msra.mxu0 0.0
    %3742 = vmatprep.subr.mxu0 0.0
    %3743 = vmatpush1.msra.mxu0 0.0
    %3744 = vmatprep.subr.mxu0 0.0
    %3745 = vmatpush1.msra.mxu0 0.0
    %3746 = vmatprep.subr.mxu0 0.0
    %3747 = vmatpush1.msra.mxu0 0.0
    %3748 = vmatprep.subr.mxu0 0.0
    %3749 = vmatpush1.msra.mxu0 0.0
    %3750 = vmatprep.subr.mxu0 0.0
    %3751 = vmatpush1.msra.mxu0 0.0
    %3752 = vmatprep.subr.mxu0 0.0
    %3753 = vmatpush1.msra.mxu0 0.0
    %3754 = vmatprep.subr.mxu0 0.0
    %3755 = vmatpush1.msra.mxu0 0.0
    %3756 = vmatprep.subr.mxu0 0.0
    %3757 = vmatpush1.msra.mxu0 0.0
    %3758 = vmatprep.subr.mxu0 0.0
    %3759 = vmatpush1.msra.mxu0 0.0
    %3760 = vmatprep.subr.mxu0 0.0
    %3761 = vmatpush1.msra.mxu0 0.0
    %3762 = vmatprep.subr.mxu0 0.0
    %3763 = vmatpush1.msra.mxu0 0.0
    %3764 = vmatprep.subr.mxu0 0.0
    %3765 = vmatpush1.msra.mxu0 0.0
    %3766 = vmatprep.subr.mxu0 0.0
    %3767 = vmatpush1.msra.mxu0 0.0
    %3768 = vmatprep.subr.mxu0 0.0
    %3769 = vmatpush1.msra.mxu0 0.0
    %3770 = vmatprep.mubr.f32.mxu0 0.0
    %3771 = vmatmul.mubr.f32.gmra.mrb[0].mxu0 %v3361
    %v3772 = vpop.f32.mrb[0].mxu0
    %v3773 = vadd.f32 %v180, %v3772
    %v3774 = vpop.f32.mrb[0].mxu0
    %3775 = vdwg.mxu0
    %v3776 = vtanh.pop %v3773
    %3777 = vset.pattern.permute.xlu0 3
    %3778 = vperm.xlu0 %3777, %v3278
    %v3779 = vpop.permute.xlu0 %3778
    %3780 = vset.pattern.permute.xlu0 3
    %3781 = vperm.xlu0 %3780, %v3279
    %v3782 = vpop.permute.xlu0 %3781
    %3783 = vset.pattern.permute.xlu0 3
    %3784 = vperm.xlu0 %3783, %v3280
    %v3785 = vpop.permute.xlu0 %3784
    %3786 = vset.pattern.permute.xlu0 3
    %3787 = vperm.xlu0 %3786, %v3281
    %v3788 = vpop.permute.xlu0 %3787
    %3789 = vset.pattern.permute.xlu0 3
    %3790 = vperm.xlu0 %3789, %v3282
    %v3791 = vpop.permute.xlu0 %3790
    %3792 = vset.pattern.permute.xlu0 3
    %3793 = vperm.xlu0 %3792, %v3283
    %v3794 = vpop.permute.xlu0 %3793
    %3795 = vset.pattern.permute.xlu0 3
    %3796 = vperm.xlu0 %3795, %v3284
    %v3797 = vpop.permute.xlu0 %3796
    %3798 = vset.pattern.permute.xlu0 3
    %3799 = vperm.xlu0 %3798, %v3285
    %v3800 = vpop.permute.xlu0 %3799
    %v3801 = vrot.slane %v3782, 7
    %v3802 = vsel %vm199, %v3801, %v3779
    %v3803 = vrot.slane %v3785, 6
    %v3804 = vsel %vm202, %v3803, %v3802
    %v3805 = vrot.slane %v3788, 5
    %v3806 = vsel %vm205, %v3805, %v3804
    %v3807 = vrot.slane %v3791, 4
    %v3808 = vsel %vm208, %v3807, %v3806
    %v3809 = vrot.slane %v3794, 3
    %v3810 = vsel %vm211, %v3809, %v3808
    %v3811 = vrot.slane %v3797, 2
    %v3812 = vsel %vm214, %v3811, %v3810
    %v3813 = vrot.slane %v3800, 1
    %v3814 = vsel %vm217, %v3813, %v3812
    %v3816 = vmul.f32 %v3776, %v3814
    %v3817 = vadd.f32 %v3705, %v3816
    %v3818 = vstv %s2683
    %v3819 = vmul.f32 %v3818, %v3817
    %v3820 = vadd.f32 %v2606, %v3819
    %v3822 = vsel %vm358, %v3820, 0
    %3824 = vmatprep.subr.mxu0 0.0
    %3825 = vmatpush1.msra.mxu0 %v121
    %3826 = vmatprep.subr.mxu0 0.0
    %3827 = vmatpush1.msra.mxu0 %v122
    %3828 = vmatprep.subr.mxu0 0.0
    %3829 = vmatpush1.msra.mxu0 %v123
    %3830 = vmatprep.subr.mxu0 0.0
    %3831 = vmatpush1.msra.mxu0 %v124
    %3832 = vmatprep.subr.mxu0 0.0
    %3833 = vmatpush1.msra.mxu0 0.0
    %3834 = vmatprep.subr.mxu0 0.0
    %3835 = vmatpush1.msra.mxu0 0.0
    %3836 = vmatprep.subr.mxu0 0.0
    %3837 = vmatpush1.msra.mxu0 0.0
    %3838 = vmatprep.subr.mxu0 0.0
    %3839 = vmatpush1.msra.mxu0 0.0
    %3840 = vmatprep.subr.mxu0 0.0
    %3841 = vmatpush1.msra.mxu0 0.0
    %3842 = vmatprep.subr.mxu0 0.0
    %3843 = vmatpush1.msra.mxu0 0.0
    %3844 = vmatprep.subr.mxu0 0.0
    %3845 = vmatpush1.msra.mxu0 0.0
    %3846 = vmatprep.subr.mxu0 0.0
    %3847 = vmatpush1.msra.mxu0 0.0
    %3848 = vmatprep.subr.mxu0 0.0
    %3849 = vmatpush1.msra.mxu0 0.0
    %3850 = vmatprep.subr.mxu0 0.0
    %3851 = vmatpush1.msra.mxu0 0.0
    %3852 = vmatprep.subr.mxu0 0.0
    %3853 = vmatpush1.msra.mxu0 0.0
    %3854 = vmatprep.subr.mxu0 0.0
    %3855 = vmatpush1.msra.mxu0 0.0
    %3856 = vmatprep.subr.mxu0 0.0
    %3857 = vmatpush1.msra.mxu0 0.0
    %3858 = vmatprep.subr.mxu0 0.0
    %3859 = vmatpush1.msra.mxu0 0.0
    %3860 = vmatprep.subr.mxu0 0.0
    %3861 = vmatpush1.msra.mxu0 0.0
    %3862 = vmatprep.subr.mxu0 0.0
    %3863 = vmatpush1.msra.mxu0 0.0
    %3864 = vmatprep.subr.mxu0 0.0
    %3865 = vmatpush1.msra.mxu0 0.0
    %3866 = vmatprep.subr.mxu0 0.0
    %3867 = vmatpush1.msra.mxu0 0.0
    %3868 = vmatprep.subr.mxu0 0.0
    %3869 = vmatpush1.msra.mxu0 0.0
    %3870 = vmatprep.subr.mxu0 0.0
    %3871 = vmatpush1.msra.mxu0 0.0
    %3872 = vmatprep.subr.mxu0 0.0
    %3873 = vmatpush1.msra.mxu0 0.0
    %3874 = vmatprep.subr.mxu0 0.0
    %3875 = vmatpush1.msra.mxu0 0.0
    %3876 = vmatprep.subr.mxu0 0.0
    %3877 = vmatpush1.msra.mxu0 0.0
    %3878 = vmatprep.subr.mxu0 0.0
    %3879 = vmatpush1.msra.mxu0 0.0
    %3880 = vmatprep.subr.mxu0 0.0
    %3881 = vmatpush1.msra.mxu0 0.0
    %3882 = vmatprep.subr.mxu0 0.0
    %3883 = vmatpush1.msra.mxu0 0.0
    %3884 = vmatprep.subr.mxu0 0.0
    %3885 = vmatpush1.msra.mxu0 0.0
    %3886 = vmatprep.subr.mxu0 0.0
    %3887 = vmatpush1.msra.mxu0 0.0
    %3888 = vmatprep.mubr.f32.mxu0 0.0
    %3889 = vmatmul.mubr.f32.gmra.mrb[0].mxu0 %v3822
    %v3890 = vpop.f32.mrb[0].mxu0
    %v3891 = vadd.f32 %v130, %v3890
    %v3892 = vpop.f32.mrb[0].mxu0
    %3893 = vdwg.mxu0
    %3895 = vrot.lane.b32.xlu0 %v3891, 4
    %v3896 = vpop.permute.xlu0 %3895
    %vm3898 = vcmask 64544
    %3899 = vst.msk [vmem:[%s24] sm:$0xff] %vm3898, %v3896
    %s3900 = sld [smem:[#allocation4 + $0x3]]
    %s3901 = sld [smem:[#allocation4 + $0x4]]
    %s3902 = ssub.f32 %s3901, %s3900
    %s3903 = ssub.f32 %s3900, %s296
    %v3904 = vstv %s3903
    %v3905 = vmul.f32 %v313, %v3904
    %v3906 = vmul.f32 %v314, %v3904
    %v3907 = vmul.f32 %v315, %v3904
    %v3908 = vmul.f32 %v316, %v3904
    %v3909 = vmul.f32 %v317, %v3904
    %v3910 = vmul.f32 %v318, %v3904
    %v3911 = vmul.f32 %v319, %v3904
    %v3912 = vmul.f32 %v320, %v3904
    %v3913 = vadd.f32 %v305, %v3905
    %v3914 = vadd.f32 %v306, %v3906
    %v3915 = vadd.f32 %v307, %v3907
    %v3916 = vadd.f32 %v308, %v3908
    %v3917 = vadd.f32 %v309, %v3909
    %v3918 = vadd.f32 %v310, %v3910
    %v3919 = vadd.f32 %v311, %v3911
    %v3920 = vadd.f32 %v312, %v3912
    %v3921 = vmul.f32 %v3913, %v3904
    %v3922 = vmul.f32 %v3914, %v3904
    %v3923 = vmul.f32 %v3915, %v3904
    %v3924 = vmul.f32 %v3916, %v3904
    %v3925 = vmul.f32 %v3917, %v3904
    %v3926 = vmul.f32 %v3918, %v3904
    %v3927 = vmul.f32 %v3919, %v3904
    %v3928 = vmul.f32 %v3920, %v3904
    %v3929 = vadd.f32 %v297, %v3921
    %v3930 = vadd.f32 %v298, %v3922
    %v3931 = vadd.f32 %v299, %v3923
    %v3932 = vadd.f32 %v300, %v3924
    %v3933 = vadd.f32 %v301, %v3925
    %v3934 = vadd.f32 %v302, %v3926
    %v3935 = vadd.f32 %v303, %v3927
    %v3936 = vadd.f32 %v304, %v3928
    %3937 = vmatprep.subr.mxu0 0.0
    %3938 = vmatpush1.msra.mxu0 %v110
    %3939 = vmatprep.subr.mxu0 0.0
    %3940 = vmatpush1.msra.mxu0 %v111
    %3941 = vmatprep.subr.mxu0 0.0
    %3942 = vmatpush1.msra.mxu0 %v112
    %3943 = vmatprep.subr.mxu0 0.0
    %3944 = vmatpush1.msra.mxu0 %v113
    %3945 = vmatprep.subr.mxu0 0.0
    %3946 = vmatpush1.msra.mxu0 0.0
    %3947 = vmatprep.subr.mxu0 0.0
    %3948 = vmatpush1.msra.mxu0 0.0
    %3949 = vmatprep.subr.mxu0 0.0
    %3950 = vmatpush1.msra.mxu0 0.0
    %3951 = vmatprep.subr.mxu0 0.0
    %3952 = vmatpush1.msra.mxu0 0.0
    %3953 = vmatprep.subr.mxu0 0.0
    %3954 = vmatpush1.msra.mxu0 0.0
    %3955 = vmatprep.subr.mxu0 0.0
    %3956 = vmatpush1.msra.mxu0 0.0
    %3957 = vmatprep.subr.mxu0 0.0
    %3958 = vmatpush1.msra.mxu0 0.0
    %3959 = vmatprep.subr.mxu0 0.0
    %3960 = vmatpush1.msra.mxu0 0.0
    %3961 = vmatprep.subr.mxu0 0.0
    %3962 = vmatpush1.msra.mxu0 0.0
    %3963 = vmatprep.subr.mxu0 0.0
    %3964 = vmatpush1.msra.mxu0 0.0
    %3965 = vmatprep.subr.mxu0 0.0
    %3966 = vmatpush1.msra.mxu0 0.0
    %3967 = vmatprep.subr.mxu0 0.0
    %3968 = vmatpush1.msra.mxu0 0.0
    %3969 = vmatprep.subr.mxu0 0.0
    %3970 = vmatpush1.msra.mxu0 0.0
    %3971 = vmatprep.subr.mxu0 0.0
    %3972 = vmatpush1.msra.mxu0 0.0
    %3973 = vmatprep.subr.mxu0 0.0
    %3974 = vmatpush1.msra.mxu0 0.0
    %3975 = vmatprep.subr.mxu0 0.0
    %3976 = vmatpush1.msra.mxu0 0.0
    %3977 = vmatprep.subr.mxu0 0.0
    %3978 = vmatpush1.msra.mxu0 0.0
    %3979 = vmatprep.subr.mxu0 0.0
    %3980 = vmatpush1.msra.mxu0 0.0
    %3981 = vmatprep.subr.mxu0 0.0
    %3982 = vmatpush1.msra.mxu0 0.0
    %3983 = vmatprep.subr.mxu0 0.0
    %3984 = vmatpush1.msra.mxu0 0.0
    %3985 = vmatprep.subr.mxu0 0.0
    %3986 = vmatpush1.msra.mxu0 0.0
    %3987 = vmatprep.subr.mxu0 0.0
    %3988 = vmatpush1.msra.mxu0 0.0
    %3989 = vmatprep.subr.mxu0 0.0
    %3990 = vmatpush1.msra.mxu0 0.0
    %3991 = vmatprep.subr.mxu0 0.0
    %3992 = vmatpush1.msra.mxu0 0.0
    %3993 = vmatprep.subr.mxu0 0.0
    %3994 = vmatpush1.msra.mxu0 0.0
    %3995 = vmatprep.subr.mxu0 0.0
    %3996 = vmatpush1.msra.mxu0 0.0
    %3997 = vmatprep.subr.mxu0 0.0
    %3998 = vmatpush1.msra.mxu0 0.0
    %3999 = vmatprep.subr.mxu0 0.0
    %4000 = vmatpush1.msra.mxu0 0.0
    %4001 = vmatprep.mubr.f32.mxu0 0.0
    %4002 = vmatmul.mubr.f32.gmra.mrb[0].mxu0 %v3822
    %v4003 = vpop.f32.mrb[0].mxu0
    %v4004 = vadd.f32 %v119, %v4003
    %v4005 = vpop.f32.mrb[0].mxu0
    %4006 = vdwg.mxu0
    %v4007 = vtanh.pop %v4004
    %v4009 = vsel %vm358, %v4007, 0
    %4011 = vmatprep.subr.mxu0 0.0
    %4012 = vmatpush1.msra.mxu0 %v132
    %4013 = vmatprep.subr.mxu0 0.0
    %4014 = vmatpush1.msra.mxu0 %v133
    %4015 = vmatprep.subr.mxu0 0.0
    %4016 = vmatpush1.msra.mxu0 %v134
    %4017 = vmatprep.subr.mxu0 0.0
    %4018 = vmatpush1.msra.mxu0 %v135
    %4019 = vmatprep.subr.mxu0 0.0
    %4020 = vmatpush1.msra.mxu0 0.0
    %4021 = vmatprep.subr.mxu0 0.0
    %4022 = vmatpush1.msra.mxu0 0.0
    %4023 = vmatprep.subr.mxu0 0.0
    %4024 = vmatpush1.msra.mxu0 0.0
    %4025 = vmatprep.subr.mxu0 0.0
    %4026 = vmatpush1.msra.mxu0 0.0
    %4027 = vmatprep.subr.mxu0 0.0
    %4028 = vmatpush1.msra.mxu0 0.0
    %4029 = vmatprep.subr.mxu0 0.0
    %4030 = vmatpush1.msra.mxu0 0.0
    %4031 = vmatprep.subr.mxu0 0.0
    %4032 = vmatpush1.msra.mxu0 0.0
    %4033 = vmatprep.subr.mxu0 0.0
    %4034 = vmatpush1.msra.mxu0 0.0
    %4035 = vmatprep.subr.mxu0 0.0
    %4036 = vmatpush1.msra.mxu0 0.0
    %4037 = vmatprep.subr.mxu0 0.0
    %4038 = vmatpush1.msra.mxu0 0.0
    %4039 = vmatprep.subr.mxu0 0.0
    %4040 = vmatpush1.msra.mxu0 0.0
    %4041 = vmatprep.subr.mxu0 0.0
    %4042 = vmatpush1.msra.mxu0 0.0
    %4043 = vmatprep.subr.mxu0 0.0
    %4044 = vmatpush1.msra.mxu0 0.0
    %4045 = vmatprep.subr.mxu0 0.0
    %4046 = vmatpush1.msra.mxu0 0.0
    %4047 = vmatprep.subr.mxu0 0.0
    %4048 = vmatpush1.msra.mxu0 0.0
    %4049 = vmatprep.subr.mxu0 0.0
    %4050 = vmatpush1.msra.mxu0 0.0
    %4051 = vmatprep.subr.mxu0 0.0
    %4052 = vmatpush1.msra.mxu0 0.0
    %4053 = vmatprep.subr.mxu0 0.0
    %4054 = vmatpush1.msra.mxu0 0.0
    %4055 = vmatprep.subr.mxu0 0.0
    %4056 = vmatpush1.msra.mxu0 0.0
    %4057 = vmatprep.subr.mxu0 0.0
    %4058 = vmatpush1.msra.mxu0 0.0
    %4059 = vmatprep.subr.mxu0 0.0
    %4060 = vmatpush1.msra.mxu0 0.0
    %4061 = vmatprep.subr.mxu0 0.0
    %4062 = vmatpush1.msra.mxu0 0.0
    %4063 = vmatprep.subr.mxu0 0.0
    %4064 = vmatpush1.msra.mxu0 0.0
    %4065 = vmatprep.subr.mxu0 0.0
    %4066 = vmatpush1.msra.mxu0 0.0
    %4067 = vmatprep.subr.mxu0 0.0
    %4068 = vmatpush1.msra.mxu0 0.0
    %4069 = vmatprep.subr.mxu0 0.0
    %4070 = vmatpush1.msra.mxu0 0.0
    %4071 = vmatprep.subr.mxu0 0.0
    %4072 = vmatpush1.msra.mxu0 0.0
    %4073 = vmatprep.subr.mxu0 0.0
    %4074 = vmatpush1.msra.mxu0 0.0
    %4075 = vmatprep.mubr.f32.mxu0 0.0
    %4076 = vmatmul.mubr.f32.gmra.mrb[0].mxu0 %v4009
    %v4077 = vpop.f32.mrb[0].mxu0
    %v4078 = vadd.f32 %v156, %v4077
    %v4079 = vpop.f32.mrb[0].mxu0
    %4080 = vdwg.mxu0
    %v4081 = vtanh.pop %v4078
    %4083 = vset.pattern.permute.xlu0 0
    %4084 = vperm.xlu0 %4083, %v3929
    %v4085 = vpop.permute.xlu0 %4084
    %4087 = vset.pattern.permute.xlu0 0
    %4088 = vperm.xlu0 %4087, %v3930
    %v4089 = vpop.permute.xlu0 %4088
    %4091 = vset.pattern.permute.xlu0 0
    %4092 = vperm.xlu0 %4091, %v3931
    %v4093 = vpop.permute.xlu0 %4092
    %4095 = vset.pattern.permute.xlu0 0
    %4096 = vperm.xlu0 %4095, %v3932
    %v4097 = vpop.permute.xlu0 %4096
    %4099 = vset.pattern.permute.xlu0 0
    %4100 = vperm.xlu0 %4099, %v3933
    %v4101 = vpop.permute.xlu0 %4100
    %4103 = vset.pattern.permute.xlu0 0
    %4104 = vperm.xlu0 %4103, %v3934
    %v4105 = vpop.permute.xlu0 %4104
    %4107 = vset.pattern.permute.xlu0 0
    %4108 = vperm.xlu0 %4107, %v3935
    %v4109 = vpop.permute.xlu0 %4108
    %4111 = vset.pattern.permute.xlu0 0
    %4112 = vperm.xlu0 %4111, %v3936
    %v4113 = vpop.permute.xlu0 %4112
    %v4114 = vrot.slane %v4089, 7
    %v4115 = vsel %vm199, %v4114, %v4085
    %v4116 = vrot.slane %v4093, 6
    %v4117 = vsel %vm202, %v4116, %v4115
    %v4118 = vrot.slane %v4097, 5
    %v4119 = vsel %vm205, %v4118, %v4117
    %v4120 = vrot.slane %v4101, 4
    %v4121 = vsel %vm208, %v4120, %v4119
    %v4122 = vrot.slane %v4105, 3
    %v4123 = vsel %vm211, %v4122, %v4121
    %v4124 = vrot.slane %v4109, 2
    %v4125 = vsel %vm214, %v4124, %v4123
    %v4126 = vrot.slane %v4113, 1
    %v4127 = vsel %vm217, %v4126, %v4125
    %v4129 = vmul.f32 %v4081, %v4127
    %4130 = vmatprep.subr.mxu0 0.0
    %4131 = vmatpush1.msra.mxu0 %v137
    %4132 = vmatprep.subr.mxu0 0.0
    %4133 = vmatpush1.msra.mxu0 %v138
    %4134 = vmatprep.subr.mxu0 0.0
    %4135 = vmatpush1.msra.mxu0 %v139
    %4136 = vmatprep.subr.mxu0 0.0
    %4137 = vmatpush1.msra.mxu0 %v140
    %4138 = vmatprep.subr.mxu0 0.0
    %4139 = vmatpush1.msra.mxu0 0.0
    %4140 = vmatprep.subr.mxu0 0.0
    %4141 = vmatpush1.msra.mxu0 0.0
    %4142 = vmatprep.subr.mxu0 0.0
    %4143 = vmatpush1.msra.mxu0 0.0
    %4144 = vmatprep.subr.mxu0 0.0
    %4145 = vmatpush1.msra.mxu0 0.0
    %4146 = vmatprep.subr.mxu0 0.0
    %4147 = vmatpush1.msra.mxu0 0.0
    %4148 = vmatprep.subr.mxu0 0.0
    %4149 = vmatpush1.msra.mxu0 0.0
    %4150 = vmatprep.subr.mxu0 0.0
    %4151 = vmatpush1.msra.mxu0 0.0
    %4152 = vmatprep.subr.mxu0 0.0
    %4153 = vmatpush1.msra.mxu0 0.0
    %4154 = vmatprep.subr.mxu0 0.0
    %4155 = vmatpush1.msra.mxu0 0.0
    %4156 = vmatprep.subr.mxu0 0.0
    %4157 = vmatpush1.msra.mxu0 0.0
    %4158 = vmatprep.subr.mxu0 0.0
    %4159 = vmatpush1.msra.mxu0 0.0
    %4160 = vmatprep.subr.mxu0 0.0
    %4161 = vmatpush1.msra.mxu0 0.0
    %4162 = vmatprep.subr.mxu0 0.0
    %4163 = vmatpush1.msra.mxu0 0.0
    %4164 = vmatprep.subr.mxu0 0.0
    %4165 = vmatpush1.msra.mxu0 0.0
    %4166 = vmatprep.subr.mxu0 0.0
    %4167 = vmatpush1.msra.mxu0 0.0
    %4168 = vmatprep.subr.mxu0 0.0
    %4169 = vmatpush1.msra.mxu0 0.0
    %4170 = vmatprep.subr.mxu0 0.0
    %4171 = vmatpush1.msra.mxu0 0.0
    %4172 = vmatprep.subr.mxu0 0.0
    %4173 = vmatpush1.msra.mxu0 0.0
    %4174 = vmatprep.subr.mxu0 0.0
    %4175 = vmatpush1.msra.mxu0 0.0
    %4176 = vmatprep.subr.mxu0 0.0
    %4177 = vmatpush1.msra.mxu0 0.0
    %4178 = vmatprep.subr.mxu0 0.0
    %4179 = vmatpush1.msra.mxu0 0.0
    %4180 = vmatprep.subr.mxu0 0.0
    %4181 = vmatpush1.msra.mxu0 0.0
    %4182 = vmatprep.subr.mxu0 0.0
    %4183 = vmatpush1.msra.mxu0 0.0
    %4184 = vmatprep.subr.mxu0 0.0
    %4185 = vmatpush1.msra.mxu0 0.0
    %4186 = vmatprep.subr.mxu0 0.0
    %4187 = vmatpush1.msra.mxu0 0.0
    %4188 = vmatprep.subr.mxu0 0.0
    %4189 = vmatpush1.msra.mxu0 0.0
    %4190 = vmatprep.subr.mxu0 0.0
    %4191 = vmatpush1.msra.mxu0 0.0
    %4192 = vmatprep.subr.mxu0 0.0
    %4193 = vmatpush1.msra.mxu0 0.0
    %4194 = vmatprep.mubr.f32.mxu0 0.0
    %4195 = vmatmul.mubr.f32.gmra.mrb[0].mxu0 %v4009
    %v4196 = vpop.f32.mrb[0].mxu0
    %v4197 = vadd.f32 %v164, %v4196
    %v4198 = vpop.f32.mrb[0].mxu0
    %4199 = vdwg.mxu0
    %v4200 = vtanh.pop %v4197
    %4201 = vset.pattern.permute.xlu0 1
    %4202 = vperm.xlu0 %4201, %v3929
    %v4203 = vpop.permute.xlu0 %4202
    %4204 = vset.pattern.permute.xlu0 1
    %4205 = vperm.xlu0 %4204, %v3930
    %v4206 = vpop.permute.xlu0 %4205
    %4207 = vset.pattern.permute.xlu0 1
    %4208 = vperm.xlu0 %4207, %v3931
    %v4209 = vpop.permute.xlu0 %4208
    %4210 = vset.pattern.permute.xlu0 1
    %4211 = vperm.xlu0 %4210, %v3932
    %v4212 = vpop.permute.xlu0 %4211
    %4213 = vset.pattern.permute.xlu0 1
    %4214 = vperm.xlu0 %4213, %v3933
    %v4215 = vpop.permute.xlu0 %4214
    %4216 = vset.pattern.permute.xlu0 1
    %4217 = vperm.xlu0 %4216, %v3934
    %v4218 = vpop.permute.xlu0 %4217
    %4219 = vset.pattern.permute.xlu0 1
    %4220 = vperm.xlu0 %4219, %v3935
    %v4221 = vpop.permute.xlu0 %4220
    %4222 = vset.pattern.permute.xlu0 1
    %4223 = vperm.xlu0 %4222, %v3936
    %v4224 = vpop.permute.xlu0 %4223
    %v4225 = vrot.slane %v4206, 7
    %v4226 = vsel %vm199, %v4225, %v4203
    %v4227 = vrot.slane %v4209, 6
    %v4228 = vsel %vm202, %v4227, %v4226
    %v4229 = vrot.slane %v4212, 5
    %v4230 = vsel %vm205, %v4229, %v4228
    %v4231 = vrot.slane %v4215, 4
    %v4232 = vsel %vm208, %v4231, %v4230
    %v4233 = vrot.slane %v4218, 3
    %v4234 = vsel %vm211, %v4233, %v4232
    %v4235 = vrot.slane %v4221, 2
    %v4236 = vsel %vm214, %v4235, %v4234
    %v4237 = vrot.slane %v4224, 1
    %v4238 = vsel %vm217, %v4237, %v4236
    %v4240 = vmul.f32 %v4200, %v4238
    %v4241 = vadd.f32 %v4129, %v4240
    %4242 = vmatprep.subr.mxu0 0.0
    %4243 = vmatpush1.msra.mxu0 %v142
    %4244 = vmatprep.subr.mxu0 0.0
    %4245 = vmatpush1.msra.mxu0 %v143
    %4246 = vmatprep.subr.mxu0 0.0
    %4247 = vmatpush1.msra.mxu0 %v144
    %4248 = vmatprep.subr.mxu0 0.0
    %4249 = vmatpush1.msra.mxu0 %v145
    %4250 = vmatprep.subr.mxu0 0.0
    %4251 = vmatpush1.msra.mxu0 0.0
    %4252 = vmatprep.subr.mxu0 0.0
    %4253 = vmatpush1.msra.mxu0 0.0
    %4254 = vmatprep.subr.mxu0 0.0
    %4255 = vmatpush1.msra.mxu0 0.0
    %4256 = vmatprep.subr.mxu0 0.0
    %4257 = vmatpush1.msra.mxu0 0.0
    %4258 = vmatprep.subr.mxu0 0.0
    %4259 = vmatpush1.msra.mxu0 0.0
    %4260 = vmatprep.subr.mxu0 0.0
    %4261 = vmatpush1.msra.mxu0 0.0
    %4262 = vmatprep.subr.mxu0 0.0
    %4263 = vmatpush1.msra.mxu0 0.0
    %4264 = vmatprep.subr.mxu0 0.0
    %4265 = vmatpush1.msra.mxu0 0.0
    %4266 = vmatprep.subr.mxu0 0.0
    %4267 = vmatpush1.msra.mxu0 0.0
    %4268 = vmatprep.subr.mxu0 0.0
    %4269 = vmatpush1.msra.mxu0 0.0
    %4270 = vmatprep.subr.mxu0 0.0
    %4271 = vmatpush1.msra.mxu0 0.0
    %4272 = vmatprep.subr.mxu0 0.0
    %4273 = vmatpush1.msra.mxu0 0.0
    %4274 = vmatprep.subr.mxu0 0.0
    %4275 = vmatpush1.msra.mxu0 0.0
    %4276 = vmatprep.subr.mxu0 0.0
    %4277 = vmatpush1.msra.mxu0 0.0
    %4278 = vmatprep.subr.mxu0 0.0
    %4279 = vmatpush1.msra.mxu0 0.0
    %4280 = vmatprep.subr.mxu0 0.0
    %4281 = vmatpush1.msra.mxu0 0.0
    %4282 = vmatprep.subr.mxu0 0.0
    %4283 = vmatpush1.msra.mxu0 0.0
    %4284 = vmatprep.subr.mxu0 0.0
    %4285 = vmatpush1.msra.mxu0 0.0
    %4286 = vmatprep.subr.mxu0 0.0
    %4287 = vmatpush1.msra.mxu0 0.0
    %4288 = vmatprep.subr.mxu0 0.0
    %4289 = vmatpush1.msra.mxu0 0.0
    %4290 = vmatprep.subr.mxu0 0.0
    %4291 = vmatpush1.msra.mxu0 0.0
    %4292 = vmatprep.subr.mxu0 0.0
    %4293 = vmatpush1.msra.mxu0 0.0
    %4294 = vmatprep.subr.mxu0 0.0
    %4295 = vmatpush1.msra.mxu0 0.0
    %4296 = vmatprep.subr.mxu0 0.0
    %4297 = vmatpush1.msra.mxu0 0.0
    %4298 = vmatprep.subr.mxu0 0.0
    %4299 = vmatpush1.msra.mxu0 0.0
    %4300 = vmatprep.subr.mxu0 0.0
    %4301 = vmatpush1.msra.mxu0 0.0
    %4302 = vmatprep.subr.mxu0 0.0
    %4303 = vmatpush1.msra.mxu0 0.0
    %4304 = vmatprep.subr.mxu0 0.0
    %4305 = vmatpush1.msra.mxu0 0.0
    %4306 = vmatprep.mubr.f32.mxu0 0.0
    %4307 = vmatmul.mubr.f32.gmra.mrb[0].mxu0 %v4009
    %v4308 = vpop.f32.mrb[0].mxu0
    %v4309 = vadd.f32 %v172, %v4308
    %v4310 = vpop.f32.mrb[0].mxu0
    %4311 = vdwg.mxu0
    %v4312 = vtanh.pop %v4309
    %4313 = vset.pattern.permute.xlu0 2
    %4314 = vperm.xlu0 %4313, %v3929
    %v4315 = vpop.permute.xlu0 %4314
    %4316 = vset.pattern.permute.xlu0 2
    %4317 = vperm.xlu0 %4316, %v3930
    %v4318 = vpop.permute.xlu0 %4317
    %4319 = vset.pattern.permute.xlu0 2
    %4320 = vperm.xlu0 %4319, %v3931
    %v4321 = vpop.permute.xlu0 %4320
    %4322 = vset.pattern.permute.xlu0 2
    %4323 = vperm.xlu0 %4322, %v3932
    %v4324 = vpop.permute.xlu0 %4323
    %4325 = vset.pattern.permute.xlu0 2
    %4326 = vperm.xlu0 %4325, %v3933
    %v4327 = vpop.permute.xlu0 %4326
    %4328 = vset.pattern.permute.xlu0 2
    %4329 = vperm.xlu0 %4328, %v3934
    %v4330 = vpop.permute.xlu0 %4329
    %4331 = vset.pattern.permute.xlu0 2
    %4332 = vperm.xlu0 %4331, %v3935
    %v4333 = vpop.permute.xlu0 %4332
    %4334 = vset.pattern.permute.xlu0 2
    %4335 = vperm.xlu0 %4334, %v3936
    %v4336 = vpop.permute.xlu0 %4335
    %v4337 = vrot.slane %v4318, 7
    %v4338 = vsel %vm199, %v4337, %v4315
    %v4339 = vrot.slane %v4321, 6
    %v4340 = vsel %vm202, %v4339, %v4338
    %v4341 = vrot.slane %v4324, 5
    %v4342 = vsel %vm205, %v4341, %v4340
    %v4343 = vrot.slane %v4327, 4
    %v4344 = vsel %vm208, %v4343, %v4342
    %v4345 = vrot.slane %v4330, 3
    %v4346 = vsel %vm211, %v4345, %v4344
    %v4347 = vrot.slane %v4333, 2
    %v4348 = vsel %vm214, %v4347, %v4346
    %v4349 = vrot.slane %v4336, 1
    %v4350 = vsel %vm217, %v4349, %v4348
    %v4352 = vmul.f32 %v4312, %v4350
    %v4353 = vadd.f32 %v4241, %v4352
    %4354 = vmatprep.subr.mxu0 0.0
    %4355 = vmatpush1.msra.mxu0 %v147
    %4356 = vmatprep.subr.mxu0 0.0
    %4357 = vmatpush1.msra.mxu0 %v148
    %4358 = vmatprep.subr.mxu0 0.0
    %4359 = vmatpush1.msra.mxu0 %v149
    %4360 = vmatprep.subr.mxu0 0.0
    %4361 = vmatpush1.msra.mxu0 %v150
    %4362 = vmatprep.subr.mxu0 0.0
    %4363 = vmatpush1.msra.mxu0 0.0
    %4364 = vmatprep.subr.mxu0 0.0
    %4365 = vmatpush1.msra.mxu0 0.0
    %4366 = vmatprep.subr.mxu0 0.0
    %4367 = vmatpush1.msra.mxu0 0.0
    %4368 = vmatprep.subr.mxu0 0.0
    %4369 = vmatpush1.msra.mxu0 0.0
    %4370 = vmatprep.subr.mxu0 0.0
    %4371 = vmatpush1.msra.mxu0 0.0
    %4372 = vmatprep.subr.mxu0 0.0
    %4373 = vmatpush1.msra.mxu0 0.0
    %4374 = vmatprep.subr.mxu0 0.0
    %4375 = vmatpush1.msra.mxu0 0.0
    %4376 = vmatprep.subr.mxu0 0.0
    %4377 = vmatpush1.msra.mxu0 0.0
    %4378 = vmatprep.subr.mxu0 0.0
    %4379 = vmatpush1.msra.mxu0 0.0
    %4380 = vmatprep.subr.mxu0 0.0
    %4381 = vmatpush1.msra.mxu0 0.0
    %4382 = vmatprep.subr.mxu0 0.0
    %4383 = vmatpush1.msra.mxu0 0.0
    %4384 = vmatprep.subr.mxu0 0.0
    %4385 = vmatpush1.msra.mxu0 0.0
    %4386 = vmatprep.subr.mxu0 0.0
    %4387 = vmatpush1.msra.mxu0 0.0
    %4388 = vmatprep.subr.mxu0 0.0
    %4389 = vmatpush1.msra.mxu0 0.0
    %4390 = vmatprep.subr.mxu0 0.0
    %4391 = vmatpush1.msra.mxu0 0.0
    %4392 = vmatprep.subr.mxu0 0.0
    %4393 = vmatpush1.msra.mxu0 0.0
    %4394 = vmatprep.subr.mxu0 0.0
    %4395 = vmatpush1.msra.mxu0 0.0
    %4396 = vmatprep.subr.mxu0 0.0
    %4397 = vmatpush1.msra.mxu0 0.0
    %4398 = vmatprep.subr.mxu0 0.0
    %4399 = vmatpush1.msra.mxu0 0.0
    %4400 = vmatprep.subr.mxu0 0.0
    %4401 = vmatpush1.msra.mxu0 0.0
    %4402 = vmatprep.subr.mxu0 0.0
    %4403 = vmatpush1.msra.mxu0 0.0
    %4404 = vmatprep.subr.mxu0 0.0
    %4405 = vmatpush1.msra.mxu0 0.0
    %4406 = vmatprep.subr.mxu0 0.0
    %4407 = vmatpush1.msra.mxu0 0.0
    %4408 = vmatprep.subr.mxu0 0.0
    %4409 = vmatpush1.msra.mxu0 0.0
    %4410 = vmatprep.subr.mxu0 0.0
    %4411 = vmatpush1.msra.mxu0 0.0
    %4412 = vmatprep.subr.mxu0 0.0
    %4413 = vmatpush1.msra.mxu0 0.0
    %4414 = vmatprep.subr.mxu0 0.0
    %4415 = vmatpush1.msra.mxu0 0.0
    %4416 = vmatprep.subr.mxu0 0.0
    %4417 = vmatpush1.msra.mxu0 0.0
    %4418 = vmatprep.mubr.f32.mxu0 0.0
    %4419 = vmatmul.mubr.f32.gmra.mrb[0].mxu0 %v4009
    %v4420 = vpop.f32.mrb[0].mxu0
    %v4421 = vadd.f32 %v180, %v4420
    %v4422 = vpop.f32.mrb[0].mxu0
    %4423 = vdwg.mxu0
    %v4424 = vtanh.pop %v4421
    %4425 = vset.pattern.permute.xlu0 3
    %4426 = vperm.xlu0 %4425, %v3929
    %v4427 = vpop.permute.xlu0 %4426
    %4428 = vset.pattern.permute.xlu0 3
    %4429 = vperm.xlu0 %4428, %v3930
    %v4430 = vpop.permute.xlu0 %4429
    %4431 = vset.pattern.permute.xlu0 3
    %4432 = vperm.xlu0 %4431, %v3931
    %v4433 = vpop.permute.xlu0 %4432
    %4434 = vset.pattern.permute.xlu0 3
    %4435 = vperm.xlu0 %4434, %v3932
    %v4436 = vpop.permute.xlu0 %4435
    %4437 = vset.pattern.permute.xlu0 3
    %4438 = vperm.xlu0 %4437, %v3933
    %v4439 = vpop.permute.xlu0 %4438
    %4440 = vset.pattern.permute.xlu0 3
    %4441 = vperm.xlu0 %4440, %v3934
    %v4442 = vpop.permute.xlu0 %4441
    %4443 = vset.pattern.permute.xlu0 3
    %4444 = vperm.xlu0 %4443, %v3935
    %v4445 = vpop.permute.xlu0 %4444
    %4446 = vset.pattern.permute.xlu0 3
    %4447 = vperm.xlu0 %4446, %v3936
    %v4448 = vpop.permute.xlu0 %4447
    %v4449 = vrot.slane %v4430, 7
    %v4450 = vsel %vm199, %v4449, %v4427
    %v4451 = vrot.slane %v4433, 6
    %v4452 = vsel %vm202, %v4451, %v4450
    %v4453 = vrot.slane %v4436, 5
    %v4454 = vsel %vm205, %v4453, %v4452
    %v4455 = vrot.slane %v4439, 4
    %v4456 = vsel %vm208, %v4455, %v4454
    %v4457 = vrot.slane %v4442, 3
    %v4458 = vsel %vm211, %v4457, %v4456
    %v4459 = vrot.slane %v4445, 2
    %v4460 = vsel %vm214, %v4459, %v4458
    %v4461 = vrot.slane %v4448, 1
    %v4462 = vsel %vm217, %v4461, %v4460
    %v4464 = vmul.f32 %v4424, %v4462
    %v4465 = vadd.f32 %v4353, %v4464
    %s4466 = smul.f32 %s3902, 0.5
    %v4467 = vstv %s4466
    %v4468 = vmul.f32 %v4467, %v4465
    %v4469 = vadd.f32 %v3820, %v4468
    %s4470 = sadd.f32 %s3900, %s4466
    %s4471 = ssub.f32 %s4470, %s296
    %v4472 = vstv %s4471
    %v4473 = vmul.f32 %v313, %v4472
    %v4474 = vmul.f32 %v314, %v4472
    %v4475 = vmul.f32 %v315, %v4472
    %v4476 = vmul.f32 %v316, %v4472
    %v4477 = vmul.f32 %v317, %v4472
    %v4478 = vmul.f32 %v318, %v4472
    %v4479 = vmul.f32 %v319, %v4472
    %v4480 = vmul.f32 %v320, %v4472
    %v4481 = vadd.f32 %v305, %v4473
    %v4482 = vadd.f32 %v306, %v4474
    %v4483 = vadd.f32 %v307, %v4475
    %v4484 = vadd.f32 %v308, %v4476
    %v4485 = vadd.f32 %v309, %v4477
    %v4486 = vadd.f32 %v310, %v4478
    %v4487 = vadd.f32 %v311, %v4479
    %v4488 = vadd.f32 %v312, %v4480
    %v4489 = vmul.f32 %v4481, %v4472
    %v4490 = vmul.f32 %v4482, %v4472
    %v4491 = vmul.f32 %v4483, %v4472
    %v4492 = vmul.f32 %v4484, %v4472
    %v4493 = vmul.f32 %v4485, %v4472
    %v4494 = vmul.f32 %v4486, %v4472
    %v4495 = vmul.f32 %v4487, %v4472
    %v4496 = vmul.f32 %v4488, %v4472
    %v4497 = vadd.f32 %v297, %v4489
    %v4498 = vadd.f32 %v298, %v4490
    %v4499 = vadd.f32 %v299, %v4491
    %v4500 = vadd.f32 %v300, %v4492
    %v4501 = vadd.f32 %v301, %v4493
    %v4502 = vadd.f32 %v302, %v4494
    %v4503 = vadd.f32 %v303, %v4495
    %v4504 = vadd.f32 %v304, %v4496
    %v4506 = vsel %vm358, %v4469, 0
    %4508 = vmatprep.subr.mxu0 0.0
    %4509 = vmatpush1.msra.mxu0 %v110
    %4510 = vmatprep.subr.mxu0 0.0
    %4511 = vmatpush1.msra.mxu0 %v111
    %4512 = vmatprep.subr.mxu0 0.0
    %4513 = vmatpush1.msra.mxu0 %v112
    %4514 = vmatprep.subr.mxu0 0.0
    %4515 = vmatpush1.msra.mxu0 %v113
    %4516 = vmatprep.subr.mxu0 0.0
    %4517 = vmatpush1.msra.mxu0 0.0
    %4518 = vmatprep.subr.mxu0 0.0
    %4519 = vmatpush1.msra.mxu0 0.0
    %4520 = vmatprep.subr.mxu0 0.0
    %4521 = vmatpush1.msra.mxu0 0.0
    %4522 = vmatprep.subr.mxu0 0.0
    %4523 = vmatpush1.msra.mxu0 0.0
    %4524 = vmatprep.subr.mxu0 0.0
    %4525 = vmatpush1.msra.mxu0 0.0
    %4526 = vmatprep.subr.mxu0 0.0
    %4527 = vmatpush1.msra.mxu0 0.0
    %4528 = vmatprep.subr.mxu0 0.0
    %4529 = vmatpush1.msra.mxu0 0.0
    %4530 = vmatprep.subr.mxu0 0.0
    %4531 = vmatpush1.msra.mxu0 0.0
    %4532 = vmatprep.subr.mxu0 0.0
    %4533 = vmatpush1.msra.mxu0 0.0
    %4534 = vmatprep.subr.mxu0 0.0
    %4535 = vmatpush1.msra.mxu0 0.0
    %4536 = vmatprep.subr.mxu0 0.0
    %4537 = vmatpush1.msra.mxu0 0.0
    %4538 = vmatprep.subr.mxu0 0.0
    %4539 = vmatpush1.msra.mxu0 0.0
    %4540 = vmatprep.subr.mxu0 0.0
    %4541 = vmatpush1.msra.mxu0 0.0
    %4542 = vmatprep.subr.mxu0 0.0
    %4543 = vmatpush1.msra.mxu0 0.0
    %4544 = vmatprep.subr.mxu0 0.0
    %4545 = vmatpush1.msra.mxu0 0.0
    %4546 = vmatprep.subr.mxu0 0.0
    %4547 = vmatpush1.msra.mxu0 0.0
    %4548 = vmatprep.subr.mxu0 0.0
    %4549 = vmatpush1.msra.mxu0 0.0
    %4550 = vmatprep.subr.mxu0 0.0
    %4551 = vmatpush1.msra.mxu0 0.0
    %4552 = vmatprep.subr.mxu0 0.0
    %4553 = vmatpush1.msra.mxu0 0.0
    %4554 = vmatprep.subr.mxu0 0.0
    %4555 = vmatpush1.msra.mxu0 0.0
    %4556 = vmatprep.subr.mxu0 0.0
    %4557 = vmatpush1.msra.mxu0 0.0
    %4558 = vmatprep.subr.mxu0 0.0
    %4559 = vmatpush1.msra.mxu0 0.0
    %4560 = vmatprep.subr.mxu0 0.0
    %4561 = vmatpush1.msra.mxu0 0.0
    %4562 = vmatprep.subr.mxu0 0.0
    %4563 = vmatpush1.msra.mxu0 0.0
    %4564 = vmatprep.subr.mxu0 0.0
    %4565 = vmatpush1.msra.mxu0 0.0
    %4566 = vmatprep.subr.mxu0 0.0
    %4567 = vmatpush1.msra.mxu0 0.0
    %4568 = vmatprep.subr.mxu0 0.0
    %4569 = vmatpush1.msra.mxu0 0.0
    %4570 = vmatprep.subr.mxu0 0.0
    %4571 = vmatpush1.msra.mxu0 0.0
    %4572 = vmatprep.mubr.f32.mxu0 0.0
    %4573 = vmatmul.mubr.f32.gmra.mrb[0].mxu0 %v4506
    %v4574 = vpop.f32.mrb[0].mxu0
    %v4575 = vadd.f32 %v119, %v4574
    %v4576 = vpop.f32.mrb[0].mxu0
    %4577 = vdwg.mxu0
    %v4578 = vtanh.pop %v4575
    %v4580 = vsel %vm358, %v4578, 0
    %4582 = vmatprep.subr.mxu0 0.0
    %4583 = vmatpush1.msra.mxu0 %v132
    %4584 = vmatprep.subr.mxu0 0.0
    %4585 = vmatpush1.msra.mxu0 %v133
    %4586 = vmatprep.subr.mxu0 0.0
    %4587 = vmatpush1.msra.mxu0 %v134
    %4588 = vmatprep.subr.mxu0 0.0
    %4589 = vmatpush1.msra.mxu0 %v135
    %4590 = vmatprep.subr.mxu0 0.0
    %4591 = vmatpush1.msra.mxu0 0.0
    %4592 = vmatprep.subr.mxu0 0.0
    %4593 = vmatpush1.msra.mxu0 0.0
    %4594 = vmatprep.subr.mxu0 0.0
    %4595 = vmatpush1.msra.mxu0 0.0
    %4596 = vmatprep.subr.mxu0 0.0
    %4597 = vmatpush1.msra.mxu0 0.0
    %4598 = vmatprep.subr.mxu0 0.0
    %4599 = vmatpush1.msra.mxu0 0.0
    %4600 = vmatprep.subr.mxu0 0.0
    %4601 = vmatpush1.msra.mxu0 0.0
    %4602 = vmatprep.subr.mxu0 0.0
    %4603 = vmatpush1.msra.mxu0 0.0
    %4604 = vmatprep.subr.mxu0 0.0
    %4605 = vmatpush1.msra.mxu0 0.0
    %4606 = vmatprep.subr.mxu0 0.0
    %4607 = vmatpush1.msra.mxu0 0.0
    %4608 = vmatprep.subr.mxu0 0.0
    %4609 = vmatpush1.msra.mxu0 0.0
    %4610 = vmatprep.subr.mxu0 0.0
    %4611 = vmatpush1.msra.mxu0 0.0
    %4612 = vmatprep.subr.mxu0 0.0
    %4613 = vmatpush1.msra.mxu0 0.0
    %4614 = vmatprep.subr.mxu0 0.0
    %4615 = vmatpush1.msra.mxu0 0.0
    %4616 = vmatprep.subr.mxu0 0.0
    %4617 = vmatpush1.msra.mxu0 0.0
    %4618 = vmatprep.subr.mxu0 0.0
    %4619 = vmatpush1.msra.mxu0 0.0
    %4620 = vmatprep.subr.mxu0 0.0
    %4621 = vmatpush1.msra.mxu0 0.0
    %4622 = vmatprep.subr.mxu0 0.0
    %4623 = vmatpush1.msra.mxu0 0.0
    %4624 = vmatprep.subr.mxu0 0.0
    %4625 = vmatpush1.msra.mxu0 0.0
    %4626 = vmatprep.subr.mxu0 0.0
    %4627 = vmatpush1.msra.mxu0 0.0
    %4628 = vmatprep.subr.mxu0 0.0
    %4629 = vmatpush1.msra.mxu0 0.0
    %4630 = vmatprep.subr.mxu0 0.0
    %4631 = vmatpush1.msra.mxu0 0.0
    %4632 = vmatprep.subr.mxu0 0.0
    %4633 = vmatpush1.msra.mxu0 0.0
    %4634 = vmatprep.subr.mxu0 0.0
    %4635 = vmatpush1.msra.mxu0 0.0
    %4636 = vmatprep.subr.mxu0 0.0
    %4637 = vmatpush1.msra.mxu0 0.0
    %4638 = vmatprep.subr.mxu0 0.0
    %4639 = vmatpush1.msra.mxu0 0.0
    %4640 = vmatprep.subr.mxu0 0.0
    %4641 = vmatpush1.msra.mxu0 0.0
    %4642 = vmatprep.subr.mxu0 0.0
    %4643 = vmatpush1.msra.mxu0 0.0
    %4644 = vmatprep.subr.mxu0 0.0
    %4645 = vmatpush1.msra.mxu0 0.0
    %4646 = vmatprep.mubr.f32.mxu0 0.0
    %4647 = vmatmul.mubr.f32.gmra.mrb[0].mxu0 %v4580
    %v4648 = vpop.f32.mrb[0].mxu0
    %v4649 = vadd.f32 %v156, %v4648
    %v4650 = vpop.f32.mrb[0].mxu0
    %4651 = vdwg.mxu0
    %v4652 = vtanh.pop %v4649
    %4654 = vset.pattern.permute.xlu0 0
    %4655 = vperm.xlu0 %4654, %v4497
    %v4656 = vpop.permute.xlu0 %4655
    %4658 = vset.pattern.permute.xlu0 0
    %4659 = vperm.xlu0 %4658, %v4498
    %v4660 = vpop.permute.xlu0 %4659
    %4662 = vset.pattern.permute.xlu0 0
    %4663 = vperm.xlu0 %4662, %v4499
    %v4664 = vpop.permute.xlu0 %4663
    %4666 = vset.pattern.permute.xlu0 0
    %4667 = vperm.xlu0 %4666, %v4500
    %v4668 = vpop.permute.xlu0 %4667
    %4670 = vset.pattern.permute.xlu0 0
    %4671 = vperm.xlu0 %4670, %v4501
    %v4672 = vpop.permute.xlu0 %4671
    %4674 = vset.pattern.permute.xlu0 0
    %4675 = vperm.xlu0 %4674, %v4502
    %v4676 = vpop.permute.xlu0 %4675
    %4678 = vset.pattern.permute.xlu0 0
    %4679 = vperm.xlu0 %4678, %v4503
    %v4680 = vpop.permute.xlu0 %4679
    %4682 = vset.pattern.permute.xlu0 0
    %4683 = vperm.xlu0 %4682, %v4504
    %v4684 = vpop.permute.xlu0 %4683
    %v4685 = vrot.slane %v4660, 7
    %v4686 = vsel %vm199, %v4685, %v4656
    %v4687 = vrot.slane %v4664, 6
    %v4688 = vsel %vm202, %v4687, %v4686
    %v4689 = vrot.slane %v4668, 5
    %v4690 = vsel %vm205, %v4689, %v4688
    %v4691 = vrot.slane %v4672, 4
    %v4692 = vsel %vm208, %v4691, %v4690
    %v4693 = vrot.slane %v4676, 3
    %v4694 = vsel %vm211, %v4693, %v4692
    %v4695 = vrot.slane %v4680, 2
    %v4696 = vsel %vm214, %v4695, %v4694
    %v4697 = vrot.slane %v4684, 1
    %v4698 = vsel %vm217, %v4697, %v4696
    %v4700 = vmul.f32 %v4652, %v4698
    %4701 = vmatprep.subr.mxu0 0.0
    %4702 = vmatpush1.msra.mxu0 %v137
    %4703 = vmatprep.subr.mxu0 0.0
    %4704 = vmatpush1.msra.mxu0 %v138
    %4705 = vmatprep.subr.mxu0 0.0
    %4706 = vmatpush1.msra.mxu0 %v139
    %4707 = vmatprep.subr.mxu0 0.0
    %4708 = vmatpush1.msra.mxu0 %v140
    %4709 = vmatprep.subr.mxu0 0.0
    %4710 = vmatpush1.msra.mxu0 0.0
    %4711 = vmatprep.subr.mxu0 0.0
    %4712 = vmatpush1.msra.mxu0 0.0
    %4713 = vmatprep.subr.mxu0 0.0
    %4714 = vmatpush1.msra.mxu0 0.0
    %4715 = vmatprep.subr.mxu0 0.0
    %4716 = vmatpush1.msra.mxu0 0.0
    %4717 = vmatprep.subr.mxu0 0.0
    %4718 = vmatpush1.msra.mxu0 0.0
    %4719 = vmatprep.subr.mxu0 0.0
    %4720 = vmatpush1.msra.mxu0 0.0
    %4721 = vmatprep.subr.mxu0 0.0
    %4722 = vmatpush1.msra.mxu0 0.0
    %4723 = vmatprep.subr.mxu0 0.0
    %4724 = vmatpush1.msra.mxu0 0.0
    %4725 = vmatprep.subr.mxu0 0.0
    %4726 = vmatpush1.msra.mxu0 0.0
    %4727 = vmatprep.subr.mxu0 0.0
    %4728 = vmatpush1.msra.mxu0 0.0
    %4729 = vmatprep.subr.mxu0 0.0
    %4730 = vmatpush1.msra.mxu0 0.0
    %4731 = vmatprep.subr.mxu0 0.0
    %4732 = vmatpush1.msra.mxu0 0.0
    %4733 = vmatprep.subr.mxu0 0.0
    %4734 = vmatpush1.msra.mxu0 0.0
    %4735 = vmatprep.subr.mxu0 0.0
    %4736 = vmatpush1.msra.mxu0 0.0
    %4737 = vmatprep.subr.mxu0 0.0
    %4738 = vmatpush1.msra.mxu0 0.0
    %4739 = vmatprep.subr.mxu0 0.0
    %4740 = vmatpush1.msra.mxu0 0.0
    %4741 = vmatprep.subr.mxu0 0.0
    %4742 = vmatpush1.msra.mxu0 0.0
    %4743 = vmatprep.subr.mxu0 0.0
    %4744 = vmatpush1.msra.mxu0 0.0
    %4745 = vmatprep.subr.mxu0 0.0
    %4746 = vmatpush1.msra.mxu0 0.0
    %4747 = vmatprep.subr.mxu0 0.0
    %4748 = vmatpush1.msra.mxu0 0.0
    %4749 = vmatprep.subr.mxu0 0.0
    %4750 = vmatpush1.msra.mxu0 0.0
    %4751 = vmatprep.subr.mxu0 0.0
    %4752 = vmatpush1.msra.mxu0 0.0
    %4753 = vmatprep.subr.mxu0 0.0
    %4754 = vmatpush1.msra.mxu0 0.0
    %4755 = vmatprep.subr.mxu0 0.0
    %4756 = vmatpush1.msra.mxu0 0.0
    %4757 = vmatprep.subr.mxu0 0.0
    %4758 = vmatpush1.msra.mxu0 0.0
    %4759 = vmatprep.subr.mxu0 0.0
    %4760 = vmatpush1.msra.mxu0 0.0
    %4761 = vmatprep.subr.mxu0 0.0
    %4762 = vmatpush1.msra.mxu0 0.0
    %4763 = vmatprep.subr.mxu0 0.0
    %4764 = vmatpush1.msra.mxu0 0.0
    %4765 = vmatprep.mubr.f32.mxu0 0.0
    %4766 = vmatmul.mubr.f32.gmra.mrb[0].mxu0 %v4580
    %v4767 = vpop.f32.mrb[0].mxu0
    %v4768 = vadd.f32 %v164, %v4767
    %v4769 = vpop.f32.mrb[0].mxu0
    %4770 = vdwg.mxu0
    %v4771 = vtanh.pop %v4768
    %4772 = vset.pattern.permute.xlu0 1
    %4773 = vperm.xlu0 %4772, %v4497
    %v4774 = vpop.permute.xlu0 %4773
    %4775 = vset.pattern.permute.xlu0 1
    %4776 = vperm.xlu0 %4775, %v4498
    %v4777 = vpop.permute.xlu0 %4776
    %4778 = vset.pattern.permute.xlu0 1
    %4779 = vperm.xlu0 %4778, %v4499
    %v4780 = vpop.permute.xlu0 %4779
    %4781 = vset.pattern.permute.xlu0 1
    %4782 = vperm.xlu0 %4781, %v4500
    %v4783 = vpop.permute.xlu0 %4782
    %4784 = vset.pattern.permute.xlu0 1
    %4785 = vperm.xlu0 %4784, %v4501
    %v4786 = vpop.permute.xlu0 %4785
    %4787 = vset.pattern.permute.xlu0 1
    %4788 = vperm.xlu0 %4787, %v4502
    %v4789 = vpop.permute.xlu0 %4788
    %4790 = vset.pattern.permute.xlu0 1
    %4791 = vperm.xlu0 %4790, %v4503
    %v4792 = vpop.permute.xlu0 %4791
    %4793 = vset.pattern.permute.xlu0 1
    %4794 = vperm.xlu0 %4793, %v4504
    %v4795 = vpop.permute.xlu0 %4794
    %v4796 = vrot.slane %v4777, 7
    %v4797 = vsel %vm199, %v4796, %v4774
    %v4798 = vrot.slane %v4780, 6
    %v4799 = vsel %vm202, %v4798, %v4797
    %v4800 = vrot.slane %v4783, 5
    %v4801 = vsel %vm205, %v4800, %v4799
    %v4802 = vrot.slane %v4786, 4
    %v4803 = vsel %vm208, %v4802, %v4801
    %v4804 = vrot.slane %v4789, 3
    %v4805 = vsel %vm211, %v4804, %v4803
    %v4806 = vrot.slane %v4792, 2
    %v4807 = vsel %vm214, %v4806, %v4805
    %v4808 = vrot.slane %v4795, 1
    %v4809 = vsel %vm217, %v4808, %v4807
    %v4811 = vmul.f32 %v4771, %v4809
    %v4812 = vadd.f32 %v4700, %v4811
    %4813 = vmatprep.subr.mxu0 0.0
    %4814 = vmatpush1.msra.mxu0 %v142
    %4815 = vmatprep.subr.mxu0 0.0
    %4816 = vmatpush1.msra.mxu0 %v143
    %4817 = vmatprep.subr.mxu0 0.0
    %4818 = vmatpush1.msra.mxu0 %v144
    %4819 = vmatprep.subr.mxu0 0.0
    %4820 = vmatpush1.msra.mxu0 %v145
    %4821 = vmatprep.subr.mxu0 0.0
    %4822 = vmatpush1.msra.mxu0 0.0
    %4823 = vmatprep.subr.mxu0 0.0
    %4824 = vmatpush1.msra.mxu0 0.0
    %4825 = vmatprep.subr.mxu0 0.0
    %4826 = vmatpush1.msra.mxu0 0.0
    %4827 = vmatprep.subr.mxu0 0.0
    %4828 = vmatpush1.msra.mxu0 0.0
    %4829 = vmatprep.subr.mxu0 0.0
    %4830 = vmatpush1.msra.mxu0 0.0
    %4831 = vmatprep.subr.mxu0 0.0
    %4832 = vmatpush1.msra.mxu0 0.0
    %4833 = vmatprep.subr.mxu0 0.0
    %4834 = vmatpush1.msra.mxu0 0.0
    %4835 = vmatprep.subr.mxu0 0.0
    %4836 = vmatpush1.msra.mxu0 0.0
    %4837 = vmatprep.subr.mxu0 0.0
    %4838 = vmatpush1.msra.mxu0 0.0
    %4839 = vmatprep.subr.mxu0 0.0
    %4840 = vmatpush1.msra.mxu0 0.0
    %4841 = vmatprep.subr.mxu0 0.0
    %4842 = vmatpush1.msra.mxu0 0.0
    %4843 = vmatprep.subr.mxu0 0.0
    %4844 = vmatpush1.msra.mxu0 0.0
    %4845 = vmatprep.subr.mxu0 0.0
    %4846 = vmatpush1.msra.mxu0 0.0
    %4847 = vmatprep.subr.mxu0 0.0
    %4848 = vmatpush1.msra.mxu0 0.0
    %4849 = vmatprep.subr.mxu0 0.0
    %4850 = vmatpush1.msra.mxu0 0.0
    %4851 = vmatprep.subr.mxu0 0.0
    %4852 = vmatpush1.msra.mxu0 0.0
    %4853 = vmatprep.subr.mxu0 0.0
    %4854 = vmatpush1.msra.mxu0 0.0
    %4855 = vmatprep.subr.mxu0 0.0
    %4856 = vmatpush1.msra.mxu0 0.0
    %4857 = vmatprep.subr.mxu0 0.0
    %4858 = vmatpush1.msra.mxu0 0.0
    %4859 = vmatprep.subr.mxu0 0.0
    %4860 = vmatpush1.msra.mxu0 0.0
    %4861 = vmatprep.subr.mxu0 0.0
    %4862 = vmatpush1.msra.mxu0 0.0
    %4863 = vmatprep.subr.mxu0 0.0
    %4864 = vmatpush1.msra.mxu0 0.0
    %4865 = vmatprep.subr.mxu0 0.0
    %4866 = vmatpush1.msra.mxu0 0.0
    %4867 = vmatprep.subr.mxu0 0.0
    %4868 = vmatpush1.msra.mxu0 0.0
    %4869 = vmatprep.subr.mxu0 0.0
    %4870 = vmatpush1.msra.mxu0 0.0
    %4871 = vmatprep.subr.mxu0 0.0
    %4872 = vmatpush1.msra.mxu0 0.0
    %4873 = vmatprep.subr.mxu0 0.0
    %4874 = vmatpush1.msra.mxu0 0.0
    %4875 = vmatprep.subr.mxu0 0.0
    %4876 = vmatpush1.msra.mxu0 0.0
    %4877 = vmatprep.mubr.f32.mxu0 0.0
    %4878 = vmatmul.mubr.f32.gmra.mrb[0].mxu0 %v4580
    %v4879 = vpop.f32.mrb[0].mxu0
    %v4880 = vadd.f32 %v172, %v4879
    %v4881 = vpop.f32.mrb[0].mxu0
    %4882 = vdwg.mxu0
    %v4883 = vtanh.pop %v4880
    %4884 = vset.pattern.permute.xlu0 2
    %4885 = vperm.xlu0 %4884, %v4497
    %v4886 = vpop.permute.xlu0 %4885
    %4887 = vset.pattern.permute.xlu0 2
    %4888 = vperm.xlu0 %4887, %v4498
    %v4889 = vpop.permute.xlu0 %4888
    %4890 = vset.pattern.permute.xlu0 2
    %4891 = vperm.xlu0 %4890, %v4499
    %v4892 = vpop.permute.xlu0 %4891
    %4893 = vset.pattern.permute.xlu0 2
    %4894 = vperm.xlu0 %4893, %v4500
    %v4895 = vpop.permute.xlu0 %4894
    %4896 = vset.pattern.permute.xlu0 2
    %4897 = vperm.xlu0 %4896, %v4501
    %v4898 = vpop.permute.xlu0 %4897
    %4899 = vset.pattern.permute.xlu0 2
    %4900 = vperm.xlu0 %4899, %v4502
    %v4901 = vpop.permute.xlu0 %4900
    %4902 = vset.pattern.permute.xlu0 2
    %4903 = vperm.xlu0 %4902, %v4503
    %v4904 = vpop.permute.xlu0 %4903
    %4905 = vset.pattern.permute.xlu0 2
    %4906 = vperm.xlu0 %4905, %v4504
    %v4907 = vpop.permute.xlu0 %4906
    %v4908 = vrot.slane %v4889, 7
    %v4909 = vsel %vm199, %v4908, %v4886
    %v4910 = vrot.slane %v4892, 6
    %v4911 = vsel %vm202, %v4910, %v4909
    %v4912 = vrot.slane %v4895, 5
    %v4913 = vsel %vm205, %v4912, %v4911
    %v4914 = vrot.slane %v4898, 4
    %v4915 = vsel %vm208, %v4914, %v4913
    %v4916 = vrot.slane %v4901, 3
    %v4917 = vsel %vm211, %v4916, %v4915
    %v4918 = vrot.slane %v4904, 2
    %v4919 = vsel %vm214, %v4918, %v4917
    %v4920 = vrot.slane %v4907, 1
    %v4921 = vsel %vm217, %v4920, %v4919
    %v4923 = vmul.f32 %v4883, %v4921
    %v4924 = vadd.f32 %v4812, %v4923
    %4925 = vmatprep.subr.mxu0 0.0
    %4926 = vmatpush1.msra.mxu0 %v147
    %4927 = vmatprep.subr.mxu0 0.0
    %4928 = vmatpush1.msra.mxu0 %v148
    %4929 = vmatprep.subr.mxu0 0.0
    %4930 = vmatpush1.msra.mxu0 %v149
    %4931 = vmatprep.subr.mxu0 0.0
    %4932 = vmatpush1.msra.mxu0 %v150
    %4933 = vmatprep.subr.mxu0 0.0
    %4934 = vmatpush1.msra.mxu0 0.0
    %4935 = vmatprep.subr.mxu0 0.0
    %4936 = vmatpush1.msra.mxu0 0.0
    %4937 = vmatprep.subr.mxu0 0.0
    %4938 = vmatpush1.msra.mxu0 0.0
    %4939 = vmatprep.subr.mxu0 0.0
    %4940 = vmatpush1.msra.mxu0 0.0
    %4941 = vmatprep.subr.mxu0 0.0
    %4942 = vmatpush1.msra.mxu0 0.0
    %4943 = vmatprep.subr.mxu0 0.0
    %4944 = vmatpush1.msra.mxu0 0.0
    %4945 = vmatprep.subr.mxu0 0.0
    %4946 = vmatpush1.msra.mxu0 0.0
    %4947 = vmatprep.subr.mxu0 0.0
    %4948 = vmatpush1.msra.mxu0 0.0
    %4949 = vmatprep.subr.mxu0 0.0
    %4950 = vmatpush1.msra.mxu0 0.0
    %4951 = vmatprep.subr.mxu0 0.0
    %4952 = vmatpush1.msra.mxu0 0.0
    %4953 = vmatprep.subr.mxu0 0.0
    %4954 = vmatpush1.msra.mxu0 0.0
    %4955 = vmatprep.subr.mxu0 0.0
    %4956 = vmatpush1.msra.mxu0 0.0
    %4957 = vmatprep.subr.mxu0 0.0
    %4958 = vmatpush1.msra.mxu0 0.0
    %4959 = vmatprep.subr.mxu0 0.0
    %4960 = vmatpush1.msra.mxu0 0.0
    %4961 = vmatprep.subr.mxu0 0.0
    %4962 = vmatpush1.msra.mxu0 0.0
    %4963 = vmatprep.subr.mxu0 0.0
    %4964 = vmatpush1.msra.mxu0 0.0
    %4965 = vmatprep.subr.mxu0 0.0
    %4966 = vmatpush1.msra.mxu0 0.0
    %4967 = vmatprep.subr.mxu0 0.0
    %4968 = vmatpush1.msra.mxu0 0.0
    %4969 = vmatprep.subr.mxu0 0.0
    %4970 = vmatpush1.msra.mxu0 0.0
    %4971 = vmatprep.subr.mxu0 0.0
    %4972 = vmatpush1.msra.mxu0 0.0
    %4973 = vmatprep.subr.mxu0 0.0
    %4974 = vmatpush1.msra.mxu0 0.0
    %4975 = vmatprep.subr.mxu0 0.0
    %4976 = vmatpush1.msra.mxu0 0.0
    %4977 = vmatprep.subr.mxu0 0.0
    %4978 = vmatpush1.msra.mxu0 0.0
    %4979 = vmatprep.subr.mxu0 0.0
    %4980 = vmatpush1.msra.mxu0 0.0
    %4981 = vmatprep.subr.mxu0 0.0
    %4982 = vmatpush1.msra.mxu0 0.0
    %4983 = vmatprep.subr.mxu0 0.0
    %4984 = vmatpush1.msra.mxu0 0.0
    %4985 = vmatprep.subr.mxu0 0.0
    %4986 = vmatpush1.msra.mxu0 0.0
    %4987 = vmatprep.subr.mxu0 0.0
    %4988 = vmatpush1.msra.mxu0 0.0
    %4989 = vmatprep.mubr.f32.mxu0 0.0
    %4990 = vmatmul.mubr.f32.gmra.mrb[0].mxu0 %v4580
    %v4991 = vpop.f32.mrb[0].mxu0
    %v4992 = vadd.f32 %v180, %v4991
    %v4993 = vpop.f32.mrb[0].mxu0
    %4994 = vdwg.mxu0
    %v4995 = vtanh.pop %v4992
    %4996 = vset.pattern.permute.xlu0 3
    %4997 = vperm.xlu0 %4996, %v4497
    %v4998 = vpop.permute.xlu0 %4997
    %4999 = vset.pattern.permute.xlu0 3
    %5000 = vperm.xlu0 %4999, %v4498
    %v5001 = vpop.permute.xlu0 %5000
    %5002 = vset.pattern.permute.xlu0 3
    %5003 = vperm.xlu0 %5002, %v4499
    %v5004 = vpop.permute.xlu0 %5003
    %5005 = vset.pattern.permute.xlu0 3
    %5006 = vperm.xlu0 %5005, %v4500
    %v5007 = vpop.permute.xlu0 %5006
    %5008 = vset.pattern.permute.xlu0 3
    %5009 = vperm.xlu0 %5008, %v4501
    %v5010 = vpop.permute.xlu0 %5009
    %5011 = vset.pattern.permute.xlu0 3
    %5012 = vperm.xlu0 %5011, %v4502
    %v5013 = vpop.permute.xlu0 %5012
    %5014 = vset.pattern.permute.xlu0 3
    %5015 = vperm.xlu0 %5014, %v4503
    %v5016 = vpop.permute.xlu0 %5015
    %5017 = vset.pattern.permute.xlu0 3
    %5018 = vperm.xlu0 %5017, %v4504
    %v5019 = vpop.permute.xlu0 %5018
    %v5020 = vrot.slane %v5001, 7
    %v5021 = vsel %vm199, %v5020, %v4998
    %v5022 = vrot.slane %v5004, 6
    %v5023 = vsel %vm202, %v5022, %v5021
    %v5024 = vrot.slane %v5007, 5
    %v5025 = vsel %vm205, %v5024, %v5023
    %v5026 = vrot.slane %v5010, 4
    %v5027 = vsel %vm208, %v5026, %v5025
    %v5028 = vrot.slane %v5013, 3
    %v5029 = vsel %vm211, %v5028, %v5027
    %v5030 = vrot.slane %v5016, 2
    %v5031 = vsel %vm214, %v5030, %v5029
    %v5032 = vrot.slane %v5019, 1
    %v5033 = vsel %vm217, %v5032, %v5031
    %v5035 = vmul.f32 %v4995, %v5033
    %v5036 = vadd.f32 %v4924, %v5035
    %v5037 = vstv %s3902
    %v5038 = vmul.f32 %v5037, %v5036
    %v5039 = vadd.f32 %v3820, %v5038
    %v5041 = vsel %vm358, %v5039, 0
    %5043 = vmatprep.subr.mxu0 0.0
    %5044 = vmatpush1.msra.mxu0 %v121
    %5045 = vmatprep.subr.mxu0 0.0
    %5046 = vmatpush1.msra.mxu0 %v122
    %5047 = vmatprep.subr.mxu0 0.0
    %5048 = vmatpush1.msra.mxu0 %v123
    %5049 = vmatprep.subr.mxu0 0.0
    %5050 = vmatpush1.msra.mxu0 %v124
    %5051 = vmatprep.subr.mxu0 0.0
    %5052 = vmatpush1.msra.mxu0 0.0
    %5053 = vmatprep.subr.mxu0 0.0
    %5054 = vmatpush1.msra.mxu0 0.0
    %5055 = vmatprep.subr.mxu0 0.0
    %5056 = vmatpush1.msra.mxu0 0.0
    %5057 = vmatprep.subr.mxu0 0.0
    %5058 = vmatpush1.msra.mxu0 0.0
    %5059 = vmatprep.subr.mxu0 0.0
    %5060 = vmatpush1.msra.mxu0 0.0
    %5061 = vmatprep.subr.mxu0 0.0
    %5062 = vmatpush1.msra.mxu0 0.0
    %5063 = vmatprep.subr.mxu0 0.0
    %5064 = vmatpush1.msra.mxu0 0.0
    %5065 = vmatprep.subr.mxu0 0.0
    %5066 = vmatpush1.msra.mxu0 0.0
    %5067 = vmatprep.subr.mxu0 0.0
    %5068 = vmatpush1.msra.mxu0 0.0
    %5069 = vmatprep.subr.mxu0 0.0
    %5070 = vmatpush1.msra.mxu0 0.0
    %5071 = vmatprep.subr.mxu0 0.0
    %5072 = vmatpush1.msra.mxu0 0.0
    %5073 = vmatprep.subr.mxu0 0.0
    %5074 = vmatpush1.msra.mxu0 0.0
    %5075 = vmatprep.subr.mxu0 0.0
    %5076 = vmatpush1.msra.mxu0 0.0
    %5077 = vmatprep.subr.mxu0 0.0
    %5078 = vmatpush1.msra.mxu0 0.0
    %5079 = vmatprep.subr.mxu0 0.0
    %5080 = vmatpush1.msra.mxu0 0.0
    %5081 = vmatprep.subr.mxu0 0.0
    %5082 = vmatpush1.msra.mxu0 0.0
    %5083 = vmatprep.subr.mxu0 0.0
    %5084 = vmatpush1.msra.mxu0 0.0
    %5085 = vmatprep.subr.mxu0 0.0
    %5086 = vmatpush1.msra.mxu0 0.0
    %5087 = vmatprep.subr.mxu0 0.0
    %5088 = vmatpush1.msra.mxu0 0.0
    %5089 = vmatprep.subr.mxu0 0.0
    %5090 = vmatpush1.msra.mxu0 0.0
    %5091 = vmatprep.subr.mxu0 0.0
    %5092 = vmatpush1.msra.mxu0 0.0
    %5093 = vmatprep.subr.mxu0 0.0
    %5094 = vmatpush1.msra.mxu0 0.0
    %5095 = vmatprep.subr.mxu0 0.0
    %5096 = vmatpush1.msra.mxu0 0.0
    %5097 = vmatprep.subr.mxu0 0.0
    %5098 = vmatpush1.msra.mxu0 0.0
    %5099 = vmatprep.subr.mxu0 0.0
    %5100 = vmatpush1.msra.mxu0 0.0
    %5101 = vmatprep.subr.mxu0 0.0
    %5102 = vmatpush1.msra.mxu0 0.0
    %5103 = vmatprep.subr.mxu0 0.0
    %5104 = vmatpush1.msra.mxu0 0.0
    %5105 = vmatprep.subr.mxu0 0.0
    %5106 = vmatpush1.msra.mxu0 0.0
    %5107 = vmatprep.mubr.f32.mxu0 0.0
    %5108 = vmatmul.mubr.f32.gmra.mrb[0].mxu0 %v5041
    %v5109 = vpop.f32.mrb[0].mxu0
    %v5110 = vadd.f32 %v130, %v5109
    %v5111 = vpop.f32.mrb[0].mxu0
    %5112 = vdwg.mxu0
    %5114 = vrot.lane.b32.xlu0 %v5110, 8
    %v5115 = vpop.permute.xlu0 %5114
    %vm5117 = vcmask 97344
    %5118 = vst.msk [vmem:[%s24] sm:$0xff] %vm5117, %v5115
    %s5119 = sld [smem:[#allocation4 + $0x4]]
    %s5120 = sld [smem:[#allocation4 + $0x5]]
    %s5121 = ssub.f32 %s5120, %s5119
    %s5122 = ssub.f32 %s5119, %s296
    %v5123 = vstv %s5122
    %v5124 = vmul.f32 %v313, %v5123
    %v5125 = vmul.f32 %v314, %v5123
    %v5126 = vmul.f32 %v315, %v5123
    %v5127 = vmul.f32 %v316, %v5123
    %v5128 = vmul.f32 %v317, %v5123
    %v5129 = vmul.f32 %v318, %v5123
    %v5130 = vmul.f32 %v319, %v5123
    %v5131 = vmul.f32 %v320, %v5123
    %v5132 = vadd.f32 %v305, %v5124
    %v5133 = vadd.f32 %v306, %v5125
    %v5134 = vadd.f32 %v307, %v5126
    %v5135 = vadd.f32 %v308, %v5127
    %v5136 = vadd.f32 %v309, %v5128
    %v5137 = vadd.f32 %v310, %v5129
    %v5138 = vadd.f32 %v311, %v5130
    %v5139 = vadd.f32 %v312, %v5131
    %v5140 = vmul.f32 %v5132, %v5123
    %v5141 = vmul.f32 %v5133, %v5123
    %v5142 = vmul.f32 %v5134, %v5123
    %v5143 = vmul.f32 %v5135, %v5123
    %v5144 = vmul.f32 %v5136, %v5123
    %v5145 = vmul.f32 %v5137, %v5123
    %v5146 = vmul.f32 %v5138, %v5123
    %v5147 = vmul.f32 %v5139, %v5123
    %v5148 = vadd.f32 %v297, %v5140
    %v5149 = vadd.f32 %v298, %v5141
    %v5150 = vadd.f32 %v299, %v5142
    %v5151 = vadd.f32 %v300, %v5143
    %v5152 = vadd.f32 %v301, %v5144
    %v5153 = vadd.f32 %v302, %v5145
    %v5154 = vadd.f32 %v303, %v5146
    %v5155 = vadd.f32 %v304, %v5147
    %5156 = vmatprep.subr.mxu0 0.0
    %5157 = vmatpush1.msra.mxu0 %v110
    %5158 = vmatprep.subr.mxu0 0.0
    %5159 = vmatpush1.msra.mxu0 %v111
    %5160 = vmatprep.subr.mxu0 0.0
    %5161 = vmatpush1.msra.mxu0 %v112
    %5162 = vmatprep.subr.mxu0 0.0
    %5163 = vmatpush1.msra.mxu0 %v113
    %5164 = vmatprep.subr.mxu0 0.0
    %5165 = vmatpush1.msra.mxu0 0.0
    %5166 = vmatprep.subr.mxu0 0.0
    %5167 = vmatpush1.msra.mxu0 0.0
    %5168 = vmatprep.subr.mxu0 0.0
    %5169 = vmatpush1.msra.mxu0 0.0
    %5170 = vmatprep.subr.mxu0 0.0
    %5171 = vmatpush1.msra.mxu0 0.0
    %5172 = vmatprep.subr.mxu0 0.0
    %5173 = vmatpush1.msra.mxu0 0.0
    %5174 = vmatprep.subr.mxu0 0.0
    %5175 = vmatpush1.msra.mxu0 0.0
    %5176 = vmatprep.subr.mxu0 0.0
    %5177 = vmatpush1.msra.mxu0 0.0
    %5178 = vmatprep.subr.mxu0 0.0
    %5179 = vmatpush1.msra.mxu0 0.0
    %5180 = vmatprep.subr.mxu0 0.0
    %5181 = vmatpush1.msra.mxu0 0.0
    %5182 = vmatprep.subr.mxu0 0.0
    %5183 = vmatpush1.msra.mxu0 0.0
    %5184 = vmatprep.subr.mxu0 0.0
    %5185 = vmatpush1.msra.mxu0 0.0
    %5186 = vmatprep.subr.mxu0 0.0
    %5187 = vmatpush1.msra.mxu0 0.0
    %5188 = vmatprep.subr.mxu0 0.0
    %5189 = vmatpush1.msra.mxu0 0.0
    %5190 = vmatprep.subr.mxu0 0.0
    %5191 = vmatpush1.msra.mxu0 0.0
    %5192 = vmatprep.subr.mxu0 0.0
    %5193 = vmatpush1.msra.mxu0 0.0
    %5194 = vmatprep.subr.mxu0 0.0
    %5195 = vmatpush1.msra.mxu0 0.0
    %5196 = vmatprep.subr.mxu0 0.0
    %5197 = vmatpush1.msra.mxu0 0.0
    %5198 = vmatprep.subr.mxu0 0.0
    %5199 = vmatpush1.msra.mxu0 0.0
    %5200 = vmatprep.subr.mxu0 0.0
    %5201 = vmatpush1.msra.mxu0 0.0
    %5202 = vmatprep.subr.mxu0 0.0
    %5203 = vmatpush1.msra.mxu0 0.0
    %5204 = vmatprep.subr.mxu0 0.0
    %5205 = vmatpush1.msra.mxu0 0.0
    %5206 = vmatprep.subr.mxu0 0.0
    %5207 = vmatpush1.msra.mxu0 0.0
    %5208 = vmatprep.subr.mxu0 0.0
    %5209 = vmatpush1.msra.mxu0 0.0
    %5210 = vmatprep.subr.mxu0 0.0
    %5211 = vmatpush1.msra.mxu0 0.0
    %5212 = vmatprep.subr.mxu0 0.0
    %5213 = vmatpush1.msra.mxu0 0.0
    %5214 = vmatprep.subr.mxu0 0.0
    %5215 = vmatpush1.msra.mxu0 0.0
    %5216 = vmatprep.subr.mxu0 0.0
    %5217 = vmatpush1.msra.mxu0 0.0
    %5218 = vmatprep.subr.mxu0 0.0
    %5219 = vmatpush1.msra.mxu0 0.0
    %5220 = vmatprep.mubr.f32.mxu0 0.0
    %5221 = vmatmul.mubr.f32.gmra.mrb[0].mxu0 %v5041
    %v5222 = vpop.f32.mrb[0].mxu0
    %v5223 = vadd.f32 %v119, %v5222
    %v5224 = vpop.f32.mrb[0].mxu0
    %5225 = vdwg.mxu0
    %v5226 = vtanh.pop %v5223
    %v5228 = vsel %vm358, %v5226, 0
    %5230 = vmatprep.subr.mxu0 0.0
    %5231 = vmatpush1.msra.mxu0 %v132
    %5232 = vmatprep.subr.mxu0 0.0
    %5233 = vmatpush1.msra.mxu0 %v133
    %5234 = vmatprep.subr.mxu0 0.0
    %5235 = vmatpush1.msra.mxu0 %v134
    %5236 = vmatprep.subr.mxu0 0.0
    %5237 = vmatpush1.msra.mxu0 %v135
    %5238 = vmatprep.subr.mxu0 0.0
    %5239 = vmatpush1.msra.mxu0 0.0
    %5240 = vmatprep.subr.mxu0 0.0
    %5241 = vmatpush1.msra.mxu0 0.0
    %5242 = vmatprep.subr.mxu0 0.0
    %5243 = vmatpush1.msra.mxu0 0.0
    %5244 = vmatprep.subr.mxu0 0.0
    %5245 = vmatpush1.msra.mxu0 0.0
    %5246 = vmatprep.subr.mxu0 0.0
    %5247 = vmatpush1.msra.mxu0 0.0
    %5248 = vmatprep.subr.mxu0 0.0
    %5249 = vmatpush1.msra.mxu0 0.0
    %5250 = vmatprep.subr.mxu0 0.0
    %5251 = vmatpush1.msra.mxu0 0.0
    %5252 = vmatprep.subr.mxu0 0.0
    %5253 = vmatpush1.msra.mxu0 0.0
    %5254 = vmatprep.subr.mxu0 0.0
    %5255 = vmatpush1.msra.mxu0 0.0
    %5256 = vmatprep.subr.mxu0 0.0
    %5257 = vmatpush1.msra.mxu0 0.0
    %5258 = vmatprep.subr.mxu0 0.0
    %5259 = vmatpush1.msra.mxu0 0.0
    %5260 = vmatprep.subr.mxu0 0.0
    %5261 = vmatpush1.msra.mxu0 0.0
    %5262 = vmatprep.subr.mxu0 0.0
    %5263 = vmatpush1.msra.mxu0 0.0
    %5264 = vmatprep.subr.mxu0 0.0
    %5265 = vmatpush1.msra.mxu0 0.0
    %5266 = vmatprep.subr.mxu0 0.0
    %5267 = vmatpush1.msra.mxu0 0.0
    %5268 = vmatprep.subr.mxu0 0.0
    %5269 = vmatpush1.msra.mxu0 0.0
    %5270 = vmatprep.subr.mxu0 0.0
    %5271 = vmatpush1.msra.mxu0 0.0
    %5272 = vmatprep.subr.mxu0 0.0
    %5273 = vmatpush1.msra.mxu0 0.0
    %5274 = vmatprep.subr.mxu0 0.0
    %5275 = vmatpush1.msra.mxu0 0.0
    %5276 = vmatprep.subr.mxu0 0.0
    %5277 = vmatpush1.msra.mxu0 0.0
    %5278 = vmatprep.subr.mxu0 0.0
    %5279 = vmatpush1.msra.mxu0 0.0
    %5280 = vmatprep.subr.mxu0 0.0
    %5281 = vmatpush1.msra.mxu0 0.0
    %5282 = vmatprep.subr.mxu0 0.0
    %5283 = vmatpush1.msra.mxu0 0.0
    %5284 = vmatprep.subr.mxu0 0.0
    %5285 = vmatpush1.msra.mxu0 0.0
    %5286 = vmatprep.subr.mxu0 0.0
    %5287 = vmatpush1.msra.mxu0 0.0
    %5288 = vmatprep.subr.mxu0 0.0
    %5289 = vmatpush1.msra.mxu0 0.0
    %5290 = vmatprep.subr.mxu0 0.0
    %5291 = vmatpush1.msra.mxu0 0.0
    %5292 = vmatprep.subr.mxu0 0.0
    %5293 = vmatpush1.msra.mxu0 0.0
    %5294 = vmatprep.mubr.f32.mxu0 0.0
    %5295 = vmatmul.mubr.f32.gmra.mrb[0].mxu0 %v5228
    %v5296 = vpop.f32.mrb[0].mxu0
    %v5297 = vadd.f32 %v156, %v5296
    %v5298 = vpop.f32.mrb[0].mxu0
    %5299 = vdwg.mxu0
    %v5300 = vtanh.pop %v5297
    %5302 = vset.pattern.permute.xlu0 0
    %5303 = vperm.xlu0 %5302, %v5148
    %v5304 = vpop.permute.xlu0 %5303
    %5306 = vset.pattern.permute.xlu0 0
    %5307 = vperm.xlu0 %5306, %v5149
    %v5308 = vpop.permute.xlu0 %5307
    %5310 = vset.pattern.permute.xlu0 0
    %5311 = vperm.xlu0 %5310, %v5150
    %v5312 = vpop.permute.xlu0 %5311
    %5314 = vset.pattern.permute.xlu0 0
    %5315 = vperm.xlu0 %5314, %v5151
    %v5316 = vpop.permute.xlu0 %5315
    %5318 = vset.pattern.permute.xlu0 0
    %5319 = vperm.xlu0 %5318, %v5152
    %v5320 = vpop.permute.xlu0 %5319
    %5322 = vset.pattern.permute.xlu0 0
    %5323 = vperm.xlu0 %5322, %v5153
    %v5324 = vpop.permute.xlu0 %5323
    %5326 = vset.pattern.permute.xlu0 0
    %5327 = vperm.xlu0 %5326, %v5154
    %v5328 = vpop.permute.xlu0 %5327
    %5330 = vset.pattern.permute.xlu0 0
    %5331 = vperm.xlu0 %5330, %v5155
    %v5332 = vpop.permute.xlu0 %5331
    %v5333 = vrot.slane %v5308, 7
    %v5334 = vsel %vm199, %v5333, %v5304
    %v5335 = vrot.slane %v5312, 6
    %v5336 = vsel %vm202, %v5335, %v5334
    %v5337 = vrot.slane %v5316, 5
    %v5338 = vsel %vm205, %v5337, %v5336
    %v5339 = vrot.slane %v5320, 4
    %v5340 = vsel %vm208, %v5339, %v5338
    %v5341 = vrot.slane %v5324, 3
    %v5342 = vsel %vm211, %v5341, %v5340
    %v5343 = vrot.slane %v5328, 2
    %v5344 = vsel %vm214, %v5343, %v5342
    %v5345 = vrot.slane %v5332, 1
    %v5346 = vsel %vm217, %v5345, %v5344
    %v5348 = vmul.f32 %v5300, %v5346
    %5349 = vmatprep.subr.mxu0 0.0
    %5350 = vmatpush1.msra.mxu0 %v137
    %5351 = vmatprep.subr.mxu0 0.0
    %5352 = vmatpush1.msra.mxu0 %v138
    %5353 = vmatprep.subr.mxu0 0.0
    %5354 = vmatpush1.msra.mxu0 %v139
    %5355 = vmatprep.subr.mxu0 0.0
    %5356 = vmatpush1.msra.mxu0 %v140
    %5357 = vmatprep.subr.mxu0 0.0
    %5358 = vmatpush1.msra.mxu0 0.0
    %5359 = vmatprep.subr.mxu0 0.0
    %5360 = vmatpush1.msra.mxu0 0.0
    %5361 = vmatprep.subr.mxu0 0.0
    %5362 = vmatpush1.msra.mxu0 0.0
    %5363 = vmatprep.subr.mxu0 0.0
    %5364 = vmatpush1.msra.mxu0 0.0
    %5365 = vmatprep.subr.mxu0 0.0
    %5366 = vmatpush1.msra.mxu0 0.0
    %5367 = vmatprep.subr.mxu0 0.0
    %5368 = vmatpush1.msra.mxu0 0.0
    %5369 = vmatprep.subr.mxu0 0.0
    %5370 = vmatpush1.msra.mxu0 0.0
    %5371 = vmatprep.subr.mxu0 0.0
    %5372 = vmatpush1.msra.mxu0 0.0
    %5373 = vmatprep.subr.mxu0 0.0
    %5374 = vmatpush1.msra.mxu0 0.0
    %5375 = vmatprep.subr.mxu0 0.0
    %5376 = vmatpush1.msra.mxu0 0.0
    %5377 = vmatprep.subr.mxu0 0.0
    %5378 = vmatpush1.msra.mxu0 0.0
    %5379 = vmatprep.subr.mxu0 0.0
    %5380 = vmatpush1.msra.mxu0 0.0
    %5381 = vmatprep.subr.mxu0 0.0
    %5382 = vmatpush1.msra.mxu0 0.0
    %5383 = vmatprep.subr.mxu0 0.0
    %5384 = vmatpush1.msra.mxu0 0.0
    %5385 = vmatprep.subr.mxu0 0.0
    %5386 = vmatpush1.msra.mxu0 0.0
    %5387 = vmatprep.subr.mxu0 0.0
    %5388 = vmatpush1.msra.mxu0 0.0
    %5389 = vmatprep.subr.mxu0 0.0
    %5390 = vmatpush1.msra.mxu0 0.0
    %5391 = vmatprep.subr.mxu0 0.0
    %5392 = vmatpush1.msra.mxu0 0.0
    %5393 = vmatprep.subr.mxu0 0.0
    %5394 = vmatpush1.msra.mxu0 0.0
    %5395 = vmatprep.subr.mxu0 0.0
    %5396 = vmatpush1.msra.mxu0 0.0
    %5397 = vmatprep.subr.mxu0 0.0
    %5398 = vmatpush1.msra.mxu0 0.0
    %5399 = vmatprep.subr.mxu0 0.0
    %5400 = vmatpush1.msra.mxu0 0.0
    %5401 = vmatprep.subr.mxu0 0.0
    %5402 = vmatpush1.msra.mxu0 0.0
    %5403 = vmatprep.subr.mxu0 0.0
    %5404 = vmatpush1.msra.mxu0 0.0
    %5405 = vmatprep.subr.mxu0 0.0
    %5406 = vmatpush1.msra.mxu0 0.0
    %5407 = vmatprep.subr.mxu0 0.0
    %5408 = vmatpush1.msra.mxu0 0.0
    %5409 = vmatprep.subr.mxu0 0.0
    %5410 = vmatpush1.msra.mxu0 0.0
    %5411 = vmatprep.subr.mxu0 0.0
    %5412 = vmatpush1.msra.mxu0 0.0
    %5413 = vmatprep.mubr.f32.mxu0 0.0
    %5414 = vmatmul.mubr.f32.gmra.mrb[0].mxu0 %v5228
    %v5415 = vpop.f32.mrb[0].mxu0
    %v5416 = vadd.f32 %v164, %v5415
    %v5417 = vpop.f32.mrb[0].mxu0
    %5418 = vdwg.mxu0
    %v5419 = vtanh.pop %v5416
    %5420 = vset.pattern.permute.xlu0 1
    %5421 = vperm.xlu0 %5420, %v5148
    %v5422 = vpop.permute.xlu0 %5421
    %5423 = vset.pattern.permute.xlu0 1
    %5424 = vperm.xlu0 %5423, %v5149
    %v5425 = vpop.permute.xlu0 %5424
    %5426 = vset.pattern.permute.xlu0 1
    %5427 = vperm.xlu0 %5426, %v5150
    %v5428 = vpop.permute.xlu0 %5427
    %5429 = vset.pattern.permute.xlu0 1
    %5430 = vperm.xlu0 %5429, %v5151
    %v5431 = vpop.permute.xlu0 %5430
    %5432 = vset.pattern.permute.xlu0 1
    %5433 = vperm.xlu0 %5432, %v5152
    %v5434 = vpop.permute.xlu0 %5433
    %5435 = vset.pattern.permute.xlu0 1
    %5436 = vperm.xlu0 %5435, %v5153
    %v5437 = vpop.permute.xlu0 %5436
    %5438 = vset.pattern.permute.xlu0 1
    %5439 = vperm.xlu0 %5438, %v5154
    %v5440 = vpop.permute.xlu0 %5439
    %5441 = vset.pattern.permute.xlu0 1
    %5442 = vperm.xlu0 %5441, %v5155
    %v5443 = vpop.permute.xlu0 %5442
    %v5444 = vrot.slane %v5425, 7
    %v5445 = vsel %vm199, %v5444, %v5422
    %v5446 = vrot.slane %v5428, 6
    %v5447 = vsel %vm202, %v5446, %v5445
    %v5448 = vrot.slane %v5431, 5
    %v5449 = vsel %vm205, %v5448, %v5447
    %v5450 = vrot.slane %v5434, 4
    %v5451 = vsel %vm208, %v5450, %v5449
    %v5452 = vrot.slane %v5437, 3
    %v5453 = vsel %vm211, %v5452, %v5451
    %v5454 = vrot.slane %v5440, 2
    %v5455 = vsel %vm214, %v5454, %v5453
    %v5456 = vrot.slane %v5443, 1
    %v5457 = vsel %vm217, %v5456, %v5455
    %v5459 = vmul.f32 %v5419, %v5457
    %v5460 = vadd.f32 %v5348, %v5459
    %5461 = vmatprep.subr.mxu0 0.0
    %5462 = vmatpush1.msra.mxu0 %v142
    %5463 = vmatprep.subr.mxu0 0.0
    %5464 = vmatpush1.msra.mxu0 %v143
    %5465 = vmatprep.subr.mxu0 0.0
    %5466 = vmatpush1.msra.mxu0 %v144
    %5467 = vmatprep.subr.mxu0 0.0
    %5468 = vmatpush1.msra.mxu0 %v145
    %5469 = vmatprep.subr.mxu0 0.0
    %5470 = vmatpush1.msra.mxu0 0.0
    %5471 = vmatprep.subr.mxu0 0.0
    %5472 = vmatpush1.msra.mxu0 0.0
    %5473 = vmatprep.subr.mxu0 0.0
    %5474 = vmatpush1.msra.mxu0 0.0
    %5475 = vmatprep.subr.mxu0 0.0
    %5476 = vmatpush1.msra.mxu0 0.0
    %5477 = vmatprep.subr.mxu0 0.0
    %5478 = vmatpush1.msra.mxu0 0.0
    %5479 = vmatprep.subr.mxu0 0.0
    %5480 = vmatpush1.msra.mxu0 0.0
    %5481 = vmatprep.subr.mxu0 0.0
    %5482 = vmatpush1.msra.mxu0 0.0
    %5483 = vmatprep.subr.mxu0 0.0
    %5484 = vmatpush1.msra.mxu0 0.0
    %5485 = vmatprep.subr.mxu0 0.0
    %5486 = vmatpush1.msra.mxu0 0.0
    %5487 = vmatprep.subr.mxu0 0.0
    %5488 = vmatpush1.msra.mxu0 0.0
    %5489 = vmatprep.subr.mxu0 0.0
    %5490 = vmatpush1.msra.mxu0 0.0
    %5491 = vmatprep.subr.mxu0 0.0
    %5492 = vmatpush1.msra.mxu0 0.0
    %5493 = vmatprep.subr.mxu0 0.0
    %5494 = vmatpush1.msra.mxu0 0.0
    %5495 = vmatprep.subr.mxu0 0.0
    %5496 = vmatpush1.msra.mxu0 0.0
    %5497 = vmatprep.subr.mxu0 0.0
    %5498 = vmatpush1.msra.mxu0 0.0
    %5499 = vmatprep.subr.mxu0 0.0
    %5500 = vmatpush1.msra.mxu0 0.0
    %5501 = vmatprep.subr.mxu0 0.0
    %5502 = vmatpush1.msra.mxu0 0.0
    %5503 = vmatprep.subr.mxu0 0.0
    %5504 = vmatpush1.msra.mxu0 0.0
    %5505 = vmatprep.subr.mxu0 0.0
    %5506 = vmatpush1.msra.mxu0 0.0
    %5507 = vmatprep.subr.mxu0 0.0
    %5508 = vmatpush1.msra.mxu0 0.0
    %5509 = vmatprep.subr.mxu0 0.0
    %5510 = vmatpush1.msra.mxu0 0.0
    %5511 = vmatprep.subr.mxu0 0.0
    %5512 = vmatpush1.msra.mxu0 0.0
    %5513 = vmatprep.subr.mxu0 0.0
    %5514 = vmatpush1.msra.mxu0 0.0
    %5515 = vmatprep.subr.mxu0 0.0
    %5516 = vmatpush1.msra.mxu0 0.0
    %5517 = vmatprep.subr.mxu0 0.0
    %5518 = vmatpush1.msra.mxu0 0.0
    %5519 = vmatprep.subr.mxu0 0.0
    %5520 = vmatpush1.msra.mxu0 0.0
    %5521 = vmatprep.subr.mxu0 0.0
    %5522 = vmatpush1.msra.mxu0 0.0
    %5523 = vmatprep.subr.mxu0 0.0
    %5524 = vmatpush1.msra.mxu0 0.0
    %5525 = vmatprep.mubr.f32.mxu0 0.0
    %5526 = vmatmul.mubr.f32.gmra.mrb[0].mxu0 %v5228
    %v5527 = vpop.f32.mrb[0].mxu0
    %v5528 = vadd.f32 %v172, %v5527
    %v5529 = vpop.f32.mrb[0].mxu0
    %5530 = vdwg.mxu0
    %v5531 = vtanh.pop %v5528
    %5532 = vset.pattern.permute.xlu0 2
    %5533 = vperm.xlu0 %5532, %v5148
    %v5534 = vpop.permute.xlu0 %5533
    %5535 = vset.pattern.permute.xlu0 2
    %5536 = vperm.xlu0 %5535, %v5149
    %v5537 = vpop.permute.xlu0 %5536
    %5538 = vset.pattern.permute.xlu0 2
    %5539 = vperm.xlu0 %5538, %v5150
    %v5540 = vpop.permute.xlu0 %5539
    %5541 = vset.pattern.permute.xlu0 2
    %5542 = vperm.xlu0 %5541, %v5151
    %v5543 = vpop.permute.xlu0 %5542
    %5544 = vset.pattern.permute.xlu0 2
    %5545 = vperm.xlu0 %5544, %v5152
    %v5546 = vpop.permute.xlu0 %5545
    %5547 = vset.pattern.permute.xlu0 2
    %5548 = vperm.xlu0 %5547, %v5153
    %v5549 = vpop.permute.xlu0 %5548
    %5550 = vset.pattern.permute.xlu0 2
    %5551 = vperm.xlu0 %5550, %v5154
    %v5552 = vpop.permute.xlu0 %5551
    %5553 = vset.pattern.permute.xlu0 2
    %5554 = vperm.xlu0 %5553, %v5155
    %v5555 = vpop.permute.xlu0 %5554
    %v5556 = vrot.slane %v5537, 7
    %v5557 = vsel %vm199, %v5556, %v5534
    %v5558 = vrot.slane %v5540, 6
    %v5559 = vsel %vm202, %v5558, %v5557
    %v5560 = vrot.slane %v5543, 5
    %v5561 = vsel %vm205, %v5560, %v5559
    %v5562 = vrot.slane %v5546, 4
    %v5563 = vsel %vm208, %v5562, %v5561
    %v5564 = vrot.slane %v5549, 3
    %v5565 = vsel %vm211, %v5564, %v5563
    %v5566 = vrot.slane %v5552, 2
    %v5567 = vsel %vm214, %v5566, %v5565
    %v5568 = vrot.slane %v5555, 1
    %v5569 = vsel %vm217, %v5568, %v5567
    %v5571 = vmul.f32 %v5531, %v5569
    %v5572 = vadd.f32 %v5460, %v5571
    %5573 = vmatprep.subr.mxu0 0.0
    %5574 = vmatpush1.msra.mxu0 %v147
    %5575 = vmatprep.subr.mxu0 0.0
    %5576 = vmatpush1.msra.mxu0 %v148
    %5577 = vmatprep.subr.mxu0 0.0
    %5578 = vmatpush1.msra.mxu0 %v149
    %5579 = vmatprep.subr.mxu0 0.0
    %5580 = vmatpush1.msra.mxu0 %v150
    %5581 = vmatprep.subr.mxu0 0.0
    %5582 = vmatpush1.msra.mxu0 0.0
    %5583 = vmatprep.subr.mxu0 0.0
    %5584 = vmatpush1.msra.mxu0 0.0
    %5585 = vmatprep.subr.mxu0 0.0
    %5586 = vmatpush1.msra.mxu0 0.0
    %5587 = vmatprep.subr.mxu0 0.0
    %5588 = vmatpush1.msra.mxu0 0.0
    %5589 = vmatprep.subr.mxu0 0.0
    %5590 = vmatpush1.msra.mxu0 0.0
    %5591 = vmatprep.subr.mxu0 0.0
    %5592 = vmatpush1.msra.mxu0 0.0
    %5593 = vmatprep.subr.mxu0 0.0
    %5594 = vmatpush1.msra.mxu0 0.0
    %5595 = vmatprep.subr.mxu0 0.0
    %5596 = vmatpush1.msra.mxu0 0.0
    %5597 = vmatprep.subr.mxu0 0.0
    %5598 = vmatpush1.msra.mxu0 0.0
    %5599 = vmatprep.subr.mxu0 0.0
    %5600 = vmatpush1.msra.mxu0 0.0
    %5601 = vmatprep.subr.mxu0 0.0
    %5602 = vmatpush1.msra.mxu0 0.0
    %5603 = vmatprep.subr.mxu0 0.0
    %5604 = vmatpush1.msra.mxu0 0.0
    %5605 = vmatprep.subr.mxu0 0.0
    %5606 = vmatpush1.msra.mxu0 0.0
    %5607 = vmatprep.subr.mxu0 0.0
    %5608 = vmatpush1.msra.mxu0 0.0
    %5609 = vmatprep.subr.mxu0 0.0
    %5610 = vmatpush1.msra.mxu0 0.0
    %5611 = vmatprep.subr.mxu0 0.0
    %5612 = vmatpush1.msra.mxu0 0.0
    %5613 = vmatprep.subr.mxu0 0.0
    %5614 = vmatpush1.msra.mxu0 0.0
    %5615 = vmatprep.subr.mxu0 0.0
    %5616 = vmatpush1.msra.mxu0 0.0
    %5617 = vmatprep.subr.mxu0 0.0
    %5618 = vmatpush1.msra.mxu0 0.0
    %5619 = vmatprep.subr.mxu0 0.0
    %5620 = vmatpush1.msra.mxu0 0.0
    %5621 = vmatprep.subr.mxu0 0.0
    %5622 = vmatpush1.msra.mxu0 0.0
    %5623 = vmatprep.subr.mxu0 0.0
    %5624 = vmatpush1.msra.mxu0 0.0
    %5625 = vmatprep.subr.mxu0 0.0
    %5626 = vmatpush1.msra.mxu0 0.0
    %5627 = vmatprep.subr.mxu0 0.0
    %5628 = vmatpush1.msra.mxu0 0.0
    %5629 = vmatprep.subr.mxu0 0.0
    %5630 = vmatpush1.msra.mxu0 0.0
    %5631 = vmatprep.subr.mxu0 0.0
    %5632 = vmatpush1.msra.mxu0 0.0
    %5633 = vmatprep.subr.mxu0 0.0
    %5634 = vmatpush1.msra.mxu0 0.0
    %5635 = vmatprep.subr.mxu0 0.0
    %5636 = vmatpush1.msra.mxu0 0.0
    %5637 = vmatprep.mubr.f32.mxu0 0.0
    %5638 = vmatmul.mubr.f32.gmra.mrb[0].mxu0 %v5228
    %v5639 = vpop.f32.mrb[0].mxu0
    %v5640 = vadd.f32 %v180, %v5639
    %v5641 = vpop.f32.mrb[0].mxu0
    %5642 = vdwg.mxu0
    %v5643 = vtanh.pop %v5640
    %5644 = vset.pattern.permute.xlu0 3
    %5645 = vperm.xlu0 %5644, %v5148
    %v5646 = vpop.permute.xlu0 %5645
    %5647 = vset.pattern.permute.xlu0 3
    %5648 = vperm.xlu0 %5647, %v5149
    %v5649 = vpop.permute.xlu0 %5648
    %5650 = vset.pattern.permute.xlu0 3
    %5651 = vperm.xlu0 %5650, %v5150
    %v5652 = vpop.permute.xlu0 %5651
    %5653 = vset.pattern.permute.xlu0 3
    %5654 = vperm.xlu0 %5653, %v5151
    %v5655 = vpop.permute.xlu0 %5654
    %5656 = vset.pattern.permute.xlu0 3
    %5657 = vperm.xlu0 %5656, %v5152
    %v5658 = vpop.permute.xlu0 %5657
    %5659 = vset.pattern.permute.xlu0 3
    %5660 = vperm.xlu0 %5659, %v5153
    %v5661 = vpop.permute.xlu0 %5660
    %5662 = vset.pattern.permute.xlu0 3
    %5663 = vperm.xlu0 %5662, %v5154
    %v5664 = vpop.permute.xlu0 %5663
    %5665 = vset.pattern.permute.xlu0 3
    %5666 = vperm.xlu0 %5665, %v5155
    %v5667 = vpop.permute.xlu0 %5666
    %v5668 = vrot.slane %v5649, 7
    %v5669 = vsel %vm199, %v5668, %v5646
    %v5670 = vrot.slane %v5652, 6
    %v5671 = vsel %vm202, %v5670, %v5669
    %v5672 = vrot.slane %v5655, 5
    %v5673 = vsel %vm205, %v5672, %v5671
    %v5674 = vrot.slane %v5658, 4
    %v5675 = vsel %vm208, %v5674, %v5673
    %v5676 = vrot.slane %v5661, 3
    %v5677 = vsel %vm211, %v5676, %v5675
    %v5678 = vrot.slane %v5664, 2
    %v5679 = vsel %vm214, %v5678, %v5677
    %v5680 = vrot.slane %v5667, 1
    %v5681 = vsel %vm217, %v5680, %v5679
    %v5683 = vmul.f32 %v5643, %v5681
    %v5684 = vadd.f32 %v5572, %v5683
    %s5685 = smul.f32 %s5121, 0.5
    %v5686 = vstv %s5685
    %v5687 = vmul.f32 %v5686, %v5684
    %v5688 = vadd.f32 %v5039, %v5687
    %s5689 = sadd.f32 %s5119, %s5685
    %s5690 = ssub.f32 %s5689, %s296
    %v5691 = vstv %s5690
    %v5692 = vmul.f32 %v313, %v5691
    %v5693 = vmul.f32 %v314, %v5691
    %v5694 = vmul.f32 %v315, %v5691
    %v5695 = vmul.f32 %v316, %v5691
    %v5696 = vmul.f32 %v317, %v5691
    %v5697 = vmul.f32 %v318, %v5691
    %v5698 = vmul.f32 %v319, %v5691
    %v5699 = vmul.f32 %v320, %v5691
    %v5700 = vadd.f32 %v305, %v5692
    %v5701 = vadd.f32 %v306, %v5693
    %v5702 = vadd.f32 %v307, %v5694
    %v5703 = vadd.f32 %v308, %v5695
    %v5704 = vadd.f32 %v309, %v5696
    %v5705 = vadd.f32 %v310, %v5697
    %v5706 = vadd.f32 %v311, %v5698
    %v5707 = vadd.f32 %v312, %v5699
    %v5708 = vmul.f32 %v5700, %v5691
    %v5709 = vmul.f32 %v5701, %v5691
    %v5710 = vmul.f32 %v5702, %v5691
    %v5711 = vmul.f32 %v5703, %v5691
    %v5712 = vmul.f32 %v5704, %v5691
    %v5713 = vmul.f32 %v5705, %v5691
    %v5714 = vmul.f32 %v5706, %v5691
    %v5715 = vmul.f32 %v5707, %v5691
    %v5716 = vadd.f32 %v297, %v5708
    %v5717 = vadd.f32 %v298, %v5709
    %v5718 = vadd.f32 %v299, %v5710
    %v5719 = vadd.f32 %v300, %v5711
    %v5720 = vadd.f32 %v301, %v5712
    %v5721 = vadd.f32 %v302, %v5713
    %v5722 = vadd.f32 %v303, %v5714
    %v5723 = vadd.f32 %v304, %v5715
    %v5725 = vsel %vm358, %v5688, 0
    %5727 = vmatprep.subr.mxu0 0.0
    %5728 = vmatpush1.msra.mxu0 %v110
    %5729 = vmatprep.subr.mxu0 0.0
    %5730 = vmatpush1.msra.mxu0 %v111
    %5731 = vmatprep.subr.mxu0 0.0
    %5732 = vmatpush1.msra.mxu0 %v112
    %5733 = vmatprep.subr.mxu0 0.0
    %5734 = vmatpush1.msra.mxu0 %v113
    %5735 = vmatprep.subr.mxu0 0.0
    %5736 = vmatpush1.msra.mxu0 0.0
    %5737 = vmatprep.subr.mxu0 0.0
    %5738 = vmatpush1.msra.mxu0 0.0
    %5739 = vmatprep.subr.mxu0 0.0
    %5740 = vmatpush1.msra.mxu0 0.0
    %5741 = vmatprep.subr.mxu0 0.0
    %5742 = vmatpush1.msra.mxu0 0.0
    %5743 = vmatprep.subr.mxu0 0.0
    %5744 = vmatpush1.msra.mxu0 0.0
    %5745 = vmatprep.subr.mxu0 0.0
    %5746 = vmatpush1.msra.mxu0 0.0
    %5747 = vmatprep.subr.mxu0 0.0
    %5748 = vmatpush1.msra.mxu0 0.0
    %5749 = vmatprep.subr.mxu0 0.0
    %5750 = vmatpush1.msra.mxu0 0.0
    %5751 = vmatprep.subr.mxu0 0.0
    %5752 = vmatpush1.msra.mxu0 0.0
    %5753 = vmatprep.subr.mxu0 0.0
    %5754 = vmatpush1.msra.mxu0 0.0
    %5755 = vmatprep.subr.mxu0 0.0
    %5756 = vmatpush1.msra.mxu0 0.0
    %5757 = vmatprep.subr.mxu0 0.0
    %5758 = vmatpush1.msra.mxu0 0.0
    %5759 = vmatprep.subr.mxu0 0.0
    %5760 = vmatpush1.msra.mxu0 0.0
    %5761 = vmatprep.subr.mxu0 0.0
    %5762 = vmatpush1.msra.mxu0 0.0
    %5763 = vmatprep.subr.mxu0 0.0
    %5764 = vmatpush1.msra.mxu0 0.0
    %5765 = vmatprep.subr.mxu0 0.0
    %5766 = vmatpush1.msra.mxu0 0.0
    %5767 = vmatprep.subr.mxu0 0.0
    %5768 = vmatpush1.msra.mxu0 0.0
    %5769 = vmatprep.subr.mxu0 0.0
    %5770 = vmatpush1.msra.mxu0 0.0
    %5771 = vmatprep.subr.mxu0 0.0
    %5772 = vmatpush1.msra.mxu0 0.0
    %5773 = vmatprep.subr.mxu0 0.0
    %5774 = vmatpush1.msra.mxu0 0.0
    %5775 = vmatprep.subr.mxu0 0.0
    %5776 = vmatpush1.msra.mxu0 0.0
    %5777 = vmatprep.subr.mxu0 0.0
    %5778 = vmatpush1.msra.mxu0 0.0
    %5779 = vmatprep.subr.mxu0 0.0
    %5780 = vmatpush1.msra.mxu0 0.0
    %5781 = vmatprep.subr.mxu0 0.0
    %5782 = vmatpush1.msra.mxu0 0.0
    %5783 = vmatprep.subr.mxu0 0.0
    %5784 = vmatpush1.msra.mxu0 0.0
    %5785 = vmatprep.subr.mxu0 0.0
    %5786 = vmatpush1.msra.mxu0 0.0
    %5787 = vmatprep.subr.mxu0 0.0
    %5788 = vmatpush1.msra.mxu0 0.0
    %5789 = vmatprep.subr.mxu0 0.0
    %5790 = vmatpush1.msra.mxu0 0.0
    %5791 = vmatprep.mubr.f32.mxu0 0.0
    %5792 = vmatmul.mubr.f32.gmra.mrb[0].mxu0 %v5725
    %v5793 = vpop.f32.mrb[0].mxu0
    %v5794 = vadd.f32 %v119, %v5793
    %v5795 = vpop.f32.mrb[0].mxu0
    %5796 = vdwg.mxu0
    %v5797 = vtanh.pop %v5794
    %v5799 = vsel %vm358, %v5797, 0
    %5801 = vmatprep.subr.mxu0 0.0
    %5802 = vmatpush1.msra.mxu0 %v132
    %5803 = vmatprep.subr.mxu0 0.0
    %5804 = vmatpush1.msra.mxu0 %v133
    %5805 = vmatprep.subr.mxu0 0.0
    %5806 = vmatpush1.msra.mxu0 %v134
    %5807 = vmatprep.subr.mxu0 0.0
    %5808 = vmatpush1.msra.mxu0 %v135
    %5809 = vmatprep.subr.mxu0 0.0
    %5810 = vmatpush1.msra.mxu0 0.0
    %5811 = vmatprep.subr.mxu0 0.0
    %5812 = vmatpush1.msra.mxu0 0.0
    %5813 = vmatprep.subr.mxu0 0.0
    %5814 = vmatpush1.msra.mxu0 0.0
    %5815 = vmatprep.subr.mxu0 0.0
    %5816 = vmatpush1.msra.mxu0 0.0
    %5817 = vmatprep.subr.mxu0 0.0
    %5818 = vmatpush1.msra.mxu0 0.0
    %5819 = vmatprep.subr.mxu0 0.0
    %5820 = vmatpush1.msra.mxu0 0.0
    %5821 = vmatprep.subr.mxu0 0.0
    %5822 = vmatpush1.msra.mxu0 0.0
    %5823 = vmatprep.subr.mxu0 0.0
    %5824 = vmatpush1.msra.mxu0 0.0
    %5825 = vmatprep.subr.mxu0 0.0
    %5826 = vmatpush1.msra.mxu0 0.0
    %5827 = vmatprep.subr.mxu0 0.0
    %5828 = vmatpush1.msra.mxu0 0.0
    %5829 = vmatprep.subr.mxu0 0.0
    %5830 = vmatpush1.msra.mxu0 0.0
    %5831 = vmatprep.subr.mxu0 0.0
    %5832 = vmatpush1.msra.mxu0 0.0
    %5833 = vmatprep.subr.mxu0 0.0
    %5834 = vmatpush1.msra.mxu0 0.0
    %5835 = vmatprep.subr.mxu0 0.0
    %5836 = vmatpush1.msra.mxu0 0.0
    %5837 = vmatprep.subr.mxu0 0.0
    %5838 = vmatpush1.msra.mxu0 0.0
    %5839 = vmatprep.subr.mxu0 0.0
    %5840 = vmatpush1.msra.mxu0 0.0
    %5841 = vmatprep.subr.mxu0 0.0
    %5842 = vmatpush1.msra.mxu0 0.0
    %5843 = vmatprep.subr.mxu0 0.0
    %5844 = vmatpush1.msra.mxu0 0.0
    %5845 = vmatprep.subr.mxu0 0.0
    %5846 = vmatpush1.msra.mxu0 0.0
    %5847 = vmatprep.subr.mxu0 0.0
    %5848 = vmatpush1.msra.mxu0 0.0
    %5849 = vmatprep.subr.mxu0 0.0
    %5850 = vmatpush1.msra.mxu0 0.0
    %5851 = vmatprep.subr.mxu0 0.0
    %5852 = vmatpush1.msra.mxu0 0.0
    %5853 = vmatprep.subr.mxu0 0.0
    %5854 = vmatpush1.msra.mxu0 0.0
    %5855 = vmatprep.subr.mxu0 0.0
    %5856 = vmatpush1.msra.mxu0 0.0
    %5857 = vmatprep.subr.mxu0 0.0
    %5858 = vmatpush1.msra.mxu0 0.0
    %5859 = vmatprep.subr.mxu0 0.0
    %5860 = vmatpush1.msra.mxu0 0.0
    %5861 = vmatprep.subr.mxu0 0.0
    %5862 = vmatpush1.msra.mxu0 0.0
    %5863 = vmatprep.subr.mxu0 0.0
    %5864 = vmatpush1.msra.mxu0 0.0
    %5865 = vmatprep.mubr.f32.mxu0 0.0
    %5866 = vmatmul.mubr.f32.gmra.mrb[0].mxu0 %v5799
    %v5867 = vpop.f32.mrb[0].mxu0
    %v5868 = vadd.f32 %v156, %v5867
    %v5869 = vpop.f32.mrb[0].mxu0
    %5870 = vdwg.mxu0
    %v5871 = vtanh.pop %v5868
    %5873 = vset.pattern.permute.xlu0 0
    %5874 = vperm.xlu0 %5873, %v5716
    %v5875 = vpop.permute.xlu0 %5874
    %5877 = vset.pattern.permute.xlu0 0
    %5878 = vperm.xlu0 %5877, %v5717
    %v5879 = vpop.permute.xlu0 %5878
    %5881 = vset.pattern.permute.xlu0 0
    %5882 = vperm.xlu0 %5881, %v5718
    %v5883 = vpop.permute.xlu0 %5882
    %5885 = vset.pattern.permute.xlu0 0
    %5886 = vperm.xlu0 %5885, %v5719
    %v5887 = vpop.permute.xlu0 %5886
    %5889 = vset.pattern.permute.xlu0 0
    %5890 = vperm.xlu0 %5889, %v5720
    %v5891 = vpop.permute.xlu0 %5890
    %5893 = vset.pattern.permute.xlu0 0
    %5894 = vperm.xlu0 %5893, %v5721
    %v5895 = vpop.permute.xlu0 %5894
    %5897 = vset.pattern.permute.xlu0 0
    %5898 = vperm.xlu0 %5897, %v5722
    %v5899 = vpop.permute.xlu0 %5898
    %5901 = vset.pattern.permute.xlu0 0
    %5902 = vperm.xlu0 %5901, %v5723
    %v5903 = vpop.permute.xlu0 %5902
    %v5904 = vrot.slane %v5879, 7
    %v5905 = vsel %vm199, %v5904, %v5875
    %v5906 = vrot.slane %v5883, 6
    %v5907 = vsel %vm202, %v5906, %v5905
    %v5908 = vrot.slane %v5887, 5
    %v5909 = vsel %vm205, %v5908, %v5907
    %v5910 = vrot.slane %v5891, 4
    %v5911 = vsel %vm208, %v5910, %v5909
    %v5912 = vrot.slane %v5895, 3
    %v5913 = vsel %vm211, %v5912, %v5911
    %v5914 = vrot.slane %v5899, 2
    %v5915 = vsel %vm214, %v5914, %v5913
    %v5916 = vrot.slane %v5903, 1
    %v5917 = vsel %vm217, %v5916, %v5915
    %v5919 = vmul.f32 %v5871, %v5917
    %5920 = vmatprep.subr.mxu0 0.0
    %5921 = vmatpush1.msra.mxu0 %v137
    %5922 = vmatprep.subr.mxu0 0.0
    %5923 = vmatpush1.msra.mxu0 %v138
    %5924 = vmatprep.subr.mxu0 0.0
    %5925 = vmatpush1.msra.mxu0 %v139
    %5926 = vmatprep.subr.mxu0 0.0
    %5927 = vmatpush1.msra.mxu0 %v140
    %5928 = vmatprep.subr.mxu0 0.0
    %5929 = vmatpush1.msra.mxu0 0.0
    %5930 = vmatprep.subr.mxu0 0.0
    %5931 = vmatpush1.msra.mxu0 0.0
    %5932 = vmatprep.subr.mxu0 0.0
    %5933 = vmatpush1.msra.mxu0 0.0
    %5934 = vmatprep.subr.mxu0 0.0
    %5935 = vmatpush1.msra.mxu0 0.0
    %5936 = vmatprep.subr.mxu0 0.0
    %5937 = vmatpush1.msra.mxu0 0.0
    %5938 = vmatprep.subr.mxu0 0.0
    %5939 = vmatpush1.msra.mxu0 0.0
    %5940 = vmatprep.subr.mxu0 0.0
    %5941 = vmatpush1.msra.mxu0 0.0
    %5942 = vmatprep.subr.mxu0 0.0
    %5943 = vmatpush1.msra.mxu0 0.0
    %5944 = vmatprep.subr.mxu0 0.0
    %5945 = vmatpush1.msra.mxu0 0.0
    %5946 = vmatprep.subr.mxu0 0.0
    %5947 = vmatpush1.msra.mxu0 0.0
    %5948 = vmatprep.subr.mxu0 0.0
    %5949 = vmatpush1.msra.mxu0 0.0
    %5950 = vmatprep.subr.mxu0 0.0
    %5951 = vmatpush1.msra.mxu0 0.0
    %5952 = vmatprep.subr.mxu0 0.0
    %5953 = vmatpush1.msra.mxu0 0.0
    %5954 = vmatprep.subr.mxu0 0.0
    %5955 = vmatpush1.msra.mxu0 0.0
    %5956 = vmatprep.subr.mxu0 0.0
    %5957 = vmatpush1.msra.mxu0 0.0
    %5958 = vmatprep.subr.mxu0 0.0
    %5959 = vmatpush1.msra.mxu0 0.0
    %5960 = vmatprep.subr.mxu0 0.0
    %5961 = vmatpush1.msra.mxu0 0.0
    %5962 = vmatprep.subr.mxu0 0.0
    %5963 = vmatpush1.msra.mxu0 0.0
    %5964 = vmatprep.subr.mxu0 0.0
    %5965 = vmatpush1.msra.mxu0 0.0
    %5966 = vmatprep.subr.mxu0 0.0
    %5967 = vmatpush1.msra.mxu0 0.0
    %5968 = vmatprep.subr.mxu0 0.0
    %5969 = vmatpush1.msra.mxu0 0.0
    %5970 = vmatprep.subr.mxu0 0.0
    %5971 = vmatpush1.msra.mxu0 0.0
    %5972 = vmatprep.subr.mxu0 0.0
    %5973 = vmatpush1.msra.mxu0 0.0
    %5974 = vmatprep.subr.mxu0 0.0
    %5975 = vmatpush1.msra.mxu0 0.0
    %5976 = vmatprep.subr.mxu0 0.0
    %5977 = vmatpush1.msra.mxu0 0.0
    %5978 = vmatprep.subr.mxu0 0.0
    %5979 = vmatpush1.msra.mxu0 0.0
    %5980 = vmatprep.subr.mxu0 0.0
    %5981 = vmatpush1.msra.mxu0 0.0
    %5982 = vmatprep.subr.mxu0 0.0
    %5983 = vmatpush1.msra.mxu0 0.0
    %5984 = vmatprep.mubr.f32.mxu0 0.0
    %5985 = vmatmul.mubr.f32.gmra.mrb[0].mxu0 %v5799
    %v5986 = vpop.f32.mrb[0].mxu0
    %v5987 = vadd.f32 %v164, %v5986
    %v5988 = vpop.f32.mrb[0].mxu0
    %5989 = vdwg.mxu0
    %v5990 = vtanh.pop %v5987
    %5991 = vset.pattern.permute.xlu0 1
    %5992 = vperm.xlu0 %5991, %v5716
    %v5993 = vpop.permute.xlu0 %5992
    %5994 = vset.pattern.permute.xlu0 1
    %5995 = vperm.xlu0 %5994, %v5717
    %v5996 = vpop.permute.xlu0 %5995
    %5997 = vset.pattern.permute.xlu0 1
    %5998 = vperm.xlu0 %5997, %v5718
    %v5999 = vpop.permute.xlu0 %5998
    %6000 = vset.pattern.permute.xlu0 1
    %6001 = vperm.xlu0 %6000, %v5719
    %v6002 = vpop.permute.xlu0 %6001
    %6003 = vset.pattern.permute.xlu0 1
    %6004 = vperm.xlu0 %6003, %v5720
    %v6005 = vpop.permute.xlu0 %6004
    %6006 = vset.pattern.permute.xlu0 1
    %6007 = vperm.xlu0 %6006, %v5721
    %v6008 = vpop.permute.xlu0 %6007
    %6009 = vset.pattern.permute.xlu0 1
    %6010 = vperm.xlu0 %6009, %v5722
    %v6011 = vpop.permute.xlu0 %6010
    %6012 = vset.pattern.permute.xlu0 1
    %6013 = vperm.xlu0 %6012, %v5723
    %v6014 = vpop.permute.xlu0 %6013
    %v6015 = vrot.slane %v5996, 7
    %v6016 = vsel %vm199, %v6015, %v5993
    %v6017 = vrot.slane %v5999, 6
    %v6018 = vsel %vm202, %v6017, %v6016
    %v6019 = vrot.slane %v6002, 5
    %v6020 = vsel %vm205, %v6019, %v6018
    %v6021 = vrot.slane %v6005, 4
    %v6022 = vsel %vm208, %v6021, %v6020
    %v6023 = vrot.slane %v6008, 3
    %v6024 = vsel %vm211, %v6023, %v6022
    %v6025 = vrot.slane %v6011, 2
    %v6026 = vsel %vm214, %v6025, %v6024
    %v6027 = vrot.slane %v6014, 1
    %v6028 = vsel %vm217, %v6027, %v6026
    %v6030 = vmul.f32 %v5990, %v6028
    %v6031 = vadd.f32 %v5919, %v6030
    %6032 = vmatprep.subr.mxu0 0.0
    %6033 = vmatpush1.msra.mxu0 %v142
    %6034 = vmatprep.subr.mxu0 0.0
    %6035 = vmatpush1.msra.mxu0 %v143
    %6036 = vmatprep.subr.mxu0 0.0
    %6037 = vmatpush1.msra.mxu0 %v144
    %6038 = vmatprep.subr.mxu0 0.0
    %6039 = vmatpush1.msra.mxu0 %v145
    %6040 = vmatprep.subr.mxu0 0.0
    %6041 = vmatpush1.msra.mxu0 0.0
    %6042 = vmatprep.subr.mxu0 0.0
    %6043 = vmatpush1.msra.mxu0 0.0
    %6044 = vmatprep.subr.mxu0 0.0
    %6045 = vmatpush1.msra.mxu0 0.0
    %6046 = vmatprep.subr.mxu0 0.0
    %6047 = vmatpush1.msra.mxu0 0.0
    %6048 = vmatprep.subr.mxu0 0.0
    %6049 = vmatpush1.msra.mxu0 0.0
    %6050 = vmatprep.subr.mxu0 0.0
    %6051 = vmatpush1.msra.mxu0 0.0
    %6052 = vmatprep.subr.mxu0 0.0
    %6053 = vmatpush1.msra.mxu0 0.0
    %6054 = vmatprep.subr.mxu0 0.0
    %6055 = vmatpush1.msra.mxu0 0.0
    %6056 = vmatprep.subr.mxu0 0.0
    %6057 = vmatpush1.msra.mxu0 0.0
    %6058 = vmatprep.subr.mxu0 0.0
    %6059 = vmatpush1.msra.mxu0 0.0
    %6060 = vmatprep.subr.mxu0 0.0
    %6061 = vmatpush1.msra.mxu0 0.0
    %6062 = vmatprep.subr.mxu0 0.0
    %6063 = vmatpush1.msra.mxu0 0.0
    %6064 = vmatprep.subr.mxu0 0.0
    %6065 = vmatpush1.msra.mxu0 0.0
    %6066 = vmatprep.subr.mxu0 0.0
    %6067 = vmatpush1.msra.mxu0 0.0
    %6068 = vmatprep.subr.mxu0 0.0
    %6069 = vmatpush1.msra.mxu0 0.0
    %6070 = vmatprep.subr.mxu0 0.0
    %6071 = vmatpush1.msra.mxu0 0.0
    %6072 = vmatprep.subr.mxu0 0.0
    %6073 = vmatpush1.msra.mxu0 0.0
    %6074 = vmatprep.subr.mxu0 0.0
    %6075 = vmatpush1.msra.mxu0 0.0
    %6076 = vmatprep.subr.mxu0 0.0
    %6077 = vmatpush1.msra.mxu0 0.0
    %6078 = vmatprep.subr.mxu0 0.0
    %6079 = vmatpush1.msra.mxu0 0.0
    %6080 = vmatprep.subr.mxu0 0.0
    %6081 = vmatpush1.msra.mxu0 0.0
    %6082 = vmatprep.subr.mxu0 0.0
    %6083 = vmatpush1.msra.mxu0 0.0
    %6084 = vmatprep.subr.mxu0 0.0
    %6085 = vmatpush1.msra.mxu0 0.0
    %6086 = vmatprep.subr.mxu0 0.0
    %6087 = vmatpush1.msra.mxu0 0.0
    %6088 = vmatprep.subr.mxu0 0.0
    %6089 = vmatpush1.msra.mxu0 0.0
    %6090 = vmatprep.subr.mxu0 0.0
    %6091 = vmatpush1.msra.mxu0 0.0
    %6092 = vmatprep.subr.mxu0 0.0
    %6093 = vmatpush1.msra.mxu0 0.0
    %6094 = vmatprep.subr.mxu0 0.0
    %6095 = vmatpush1.msra.mxu0 0.0
    %6096 = vmatprep.mubr.f32.mxu0 0.0
    %6097 = vmatmul.mubr.f32.gmra.mrb[0].mxu0 %v5799
    %v6098 = vpop.f32.mrb[0].mxu0
    %v6099 = vadd.f32 %v172, %v6098
    %v6100 = vpop.f32.mrb[0].mxu0
    %6101 = vdwg.mxu0
    %v6102 = vtanh.pop %v6099
    %6103 = vset.pattern.permute.xlu0 2
    %6104 = vperm.xlu0 %6103, %v5716
    %v6105 = vpop.permute.xlu0 %6104
    %6106 = vset.pattern.permute.xlu0 2
    %6107 = vperm.xlu0 %6106, %v5717
    %v6108 = vpop.permute.xlu0 %6107
    %6109 = vset.pattern.permute.xlu0 2
    %6110 = vperm.xlu0 %6109, %v5718
    %v6111 = vpop.permute.xlu0 %6110
    %6112 = vset.pattern.permute.xlu0 2
    %6113 = vperm.xlu0 %6112, %v5719
    %v6114 = vpop.permute.xlu0 %6113
    %6115 = vset.pattern.permute.xlu0 2
    %6116 = vperm.xlu0 %6115, %v5720
    %v6117 = vpop.permute.xlu0 %6116
    %6118 = vset.pattern.permute.xlu0 2
    %6119 = vperm.xlu0 %6118, %v5721
    %v6120 = vpop.permute.xlu0 %6119
    %6121 = vset.pattern.permute.xlu0 2
    %6122 = vperm.xlu0 %6121, %v5722
    %v6123 = vpop.permute.xlu0 %6122
    %6124 = vset.pattern.permute.xlu0 2
    %6125 = vperm.xlu0 %6124, %v5723
    %v6126 = vpop.permute.xlu0 %6125
    %v6127 = vrot.slane %v6108, 7
    %v6128 = vsel %vm199, %v6127, %v6105
    %v6129 = vrot.slane %v6111, 6
    %v6130 = vsel %vm202, %v6129, %v6128
    %v6131 = vrot.slane %v6114, 5
    %v6132 = vsel %vm205, %v6131, %v6130
    %v6133 = vrot.slane %v6117, 4
    %v6134 = vsel %vm208, %v6133, %v6132
    %v6135 = vrot.slane %v6120, 3
    %v6136 = vsel %vm211, %v6135, %v6134
    %v6137 = vrot.slane %v6123, 2
    %v6138 = vsel %vm214, %v6137, %v6136
    %v6139 = vrot.slane %v6126, 1
    %v6140 = vsel %vm217, %v6139, %v6138
    %v6142 = vmul.f32 %v6102, %v6140
    %v6143 = vadd.f32 %v6031, %v6142
    %6144 = vmatprep.subr.mxu0 0.0
    %6145 = vmatpush1.msra.mxu0 %v147
    %6146 = vmatprep.subr.mxu0 0.0
    %6147 = vmatpush1.msra.mxu0 %v148
    %6148 = vmatprep.subr.mxu0 0.0
    %6149 = vmatpush1.msra.mxu0 %v149
    %6150 = vmatprep.subr.mxu0 0.0
    %6151 = vmatpush1.msra.mxu0 %v150
    %6152 = vmatprep.subr.mxu0 0.0
    %6153 = vmatpush1.msra.mxu0 0.0
    %6154 = vmatprep.subr.mxu0 0.0
    %6155 = vmatpush1.msra.mxu0 0.0
    %6156 = vmatprep.subr.mxu0 0.0
    %6157 = vmatpush1.msra.mxu0 0.0
    %6158 = vmatprep.subr.mxu0 0.0
    %6159 = vmatpush1.msra.mxu0 0.0
    %6160 = vmatprep.subr.mxu0 0.0
    %6161 = vmatpush1.msra.mxu0 0.0
    %6162 = vmatprep.subr.mxu0 0.0
    %6163 = vmatpush1.msra.mxu0 0.0
    %6164 = vmatprep.subr.mxu0 0.0
    %6165 = vmatpush1.msra.mxu0 0.0
    %6166 = vmatprep.subr.mxu0 0.0
    %6167 = vmatpush1.msra.mxu0 0.0
    %6168 = vmatprep.subr.mxu0 0.0
    %6169 = vmatpush1.msra.mxu0 0.0
    %6170 = vmatprep.subr.mxu0 0.0
    %6171 = vmatpush1.msra.mxu0 0.0
    %6172 = vmatprep.subr.mxu0 0.0
    %6173 = vmatpush1.msra.mxu0 0.0
    %6174 = vmatprep.subr.mxu0 0.0
    %6175 = vmatpush1.msra.mxu0 0.0
    %6176 = vmatprep.subr.mxu0 0.0
    %6177 = vmatpush1.msra.mxu0 0.0
    %6178 = vmatprep.subr.mxu0 0.0
    %6179 = vmatpush1.msra.mxu0 0.0
    %6180 = vmatprep.subr.mxu0 0.0
    %6181 = vmatpush1.msra.mxu0 0.0
    %6182 = vmatprep.subr.mxu0 0.0
    %6183 = vmatpush1.msra.mxu0 0.0
    %6184 = vmatprep.subr.mxu0 0.0
    %6185 = vmatpush1.msra.mxu0 0.0
    %6186 = vmatprep.subr.mxu0 0.0
    %6187 = vmatpush1.msra.mxu0 0.0
    %6188 = vmatprep.subr.mxu0 0.0
    %6189 = vmatpush1.msra.mxu0 0.0
    %6190 = vmatprep.subr.mxu0 0.0
    %6191 = vmatpush1.msra.mxu0 0.0
    %6192 = vmatprep.subr.mxu0 0.0
    %6193 = vmatpush1.msra.mxu0 0.0
    %6194 = vmatprep.subr.mxu0 0.0
    %6195 = vmatpush1.msra.mxu0 0.0
    %6196 = vmatprep.subr.mxu0 0.0
    %6197 = vmatpush1.msra.mxu0 0.0
    %6198 = vmatprep.subr.mxu0 0.0
    %6199 = vmatpush1.msra.mxu0 0.0
    %6200 = vmatprep.subr.mxu0 0.0
    %6201 = vmatpush1.msra.mxu0 0.0
    %6202 = vmatprep.subr.mxu0 0.0
    %6203 = vmatpush1.msra.mxu0 0.0
    %6204 = vmatprep.subr.mxu0 0.0
    %6205 = vmatpush1.msra.mxu0 0.0
    %6206 = vmatprep.subr.mxu0 0.0
    %6207 = vmatpush1.msra.mxu0 0.0
    %6208 = vmatprep.mubr.f32.mxu0 0.0
    %6209 = vmatmul.mubr.f32.gmra.mrb[0].mxu0 %v5799
    %v6210 = vpop.f32.mrb[0].mxu0
    %v6211 = vadd.f32 %v180, %v6210
    %v6212 = vpop.f32.mrb[0].mxu0
    %6213 = vdwg.mxu0
    %v6214 = vtanh.pop %v6211
    %6215 = vset.pattern.permute.xlu0 3
    %6216 = vperm.xlu0 %6215, %v5716
    %v6217 = vpop.permute.xlu0 %6216
    %6218 = vset.pattern.permute.xlu0 3
    %6219 = vperm.xlu0 %6218, %v5717
    %v6220 = vpop.permute.xlu0 %6219
    %6221 = vset.pattern.permute.xlu0 3
    %6222 = vperm.xlu0 %6221, %v5718
    %v6223 = vpop.permute.xlu0 %6222
    %6224 = vset.pattern.permute.xlu0 3
    %6225 = vperm.xlu0 %6224, %v5719
    %v6226 = vpop.permute.xlu0 %6225
    %6227 = vset.pattern.permute.xlu0 3
    %6228 = vperm.xlu0 %6227, %v5720
    %v6229 = vpop.permute.xlu0 %6228
    %6230 = vset.pattern.permute.xlu0 3
    %6231 = vperm.xlu0 %6230, %v5721
    %v6232 = vpop.permute.xlu0 %6231
    %6233 = vset.pattern.permute.xlu0 3
    %6234 = vperm.xlu0 %6233, %v5722
    %v6235 = vpop.permute.xlu0 %6234
    %6236 = vset.pattern.permute.xlu0 3
    %6237 = vperm.xlu0 %6236, %v5723
    %v6238 = vpop.permute.xlu0 %6237
    %v6239 = vrot.slane %v6220, 7
    %v6240 = vsel %vm199, %v6239, %v6217
    %v6241 = vrot.slane %v6223, 6
    %v6242 = vsel %vm202, %v6241, %v6240
    %v6243 = vrot.slane %v6226, 5
    %v6244 = vsel %vm205, %v6243, %v6242
    %v6245 = vrot.slane %v6229, 4
    %v6246 = vsel %vm208, %v6245, %v6244
    %v6247 = vrot.slane %v6232, 3
    %v6248 = vsel %vm211, %v6247, %v6246
    %v6249 = vrot.slane %v6235, 2
    %v6250 = vsel %vm214, %v6249, %v6248
    %v6251 = vrot.slane %v6238, 1
    %v6252 = vsel %vm217, %v6251, %v6250
    %v6254 = vmul.f32 %v6214, %v6252
    %v6255 = vadd.f32 %v6143, %v6254
    %v6256 = vstv %s5121
    %v6257 = vmul.f32 %v6256, %v6255
    %v6258 = vadd.f32 %v5039, %v6257
    %v6260 = vsel %vm358, %v6258, 0
    %6262 = vmatprep.subr.mxu0 0.0
    %6263 = vmatpush1.msra.mxu0 %v121
    %6264 = vmatprep.subr.mxu0 0.0
    %6265 = vmatpush1.msra.mxu0 %v122
    %6266 = vmatprep.subr.mxu0 0.0
    %6267 = vmatpush1.msra.mxu0 %v123
    %6268 = vmatprep.subr.mxu0 0.0
    %6269 = vmatpush1.msra.mxu0 %v124
    %6270 = vmatprep.subr.mxu0 0.0
    %6271 = vmatpush1.msra.mxu0 0.0
    %6272 = vmatprep.subr.mxu0 0.0
    %6273 = vmatpush1.msra.mxu0 0.0
    %6274 = vmatprep.subr.mxu0 0.0
    %6275 = vmatpush1.msra.mxu0 0.0
    %6276 = vmatprep.subr.mxu0 0.0
    %6277 = vmatpush1.msra.mxu0 0.0
    %6278 = vmatprep.subr.mxu0 0.0
    %6279 = vmatpush1.msra.mxu0 0.0
    %6280 = vmatprep.subr.mxu0 0.0
    %6281 = vmatpush1.msra.mxu0 0.0
    %6282 = vmatprep.subr.mxu0 0.0
    %6283 = vmatpush1.msra.mxu0 0.0
    %6284 = vmatprep.subr.mxu0 0.0
    %6285 = vmatpush1.msra.mxu0 0.0
    %6286 = vmatprep.subr.mxu0 0.0
    %6287 = vmatpush1.msra.mxu0 0.0
    %6288 = vmatprep.subr.mxu0 0.0
    %6289 = vmatpush1.msra.mxu0 0.0
    %6290 = vmatprep.subr.mxu0 0.0
    %6291 = vmatpush1.msra.mxu0 0.0
    %6292 = vmatprep.subr.mxu0 0.0
    %6293 = vmatpush1.msra.mxu0 0.0
    %6294 = vmatprep.subr.mxu0 0.0
    %6295 = vmatpush1.msra.mxu0 0.0
    %6296 = vmatprep.subr.mxu0 0.0
    %6297 = vmatpush1.msra.mxu0 0.0
    %6298 = vmatprep.subr.mxu0 0.0
    %6299 = vmatpush1.msra.mxu0 0.0
    %6300 = vmatprep.subr.mxu0 0.0
    %6301 = vmatpush1.msra.mxu0 0.0
    %6302 = vmatprep.subr.mxu0 0.0
    %6303 = vmatpush1.msra.mxu0 0.0
    %6304 = vmatprep.subr.mxu0 0.0
    %6305 = vmatpush1.msra.mxu0 0.0
    %6306 = vmatprep.subr.mxu0 0.0
    %6307 = vmatpush1.msra.mxu0 0.0
    %6308 = vmatprep.subr.mxu0 0.0
    %6309 = vmatpush1.msra.mxu0 0.0
    %6310 = vmatprep.subr.mxu0 0.0
    %6311 = vmatpush1.msra.mxu0 0.0
    %6312 = vmatprep.subr.mxu0 0.0
    %6313 = vmatpush1.msra.mxu0 0.0
    %6314 = vmatprep.subr.mxu0 0.0
    %6315 = vmatpush1.msra.mxu0 0.0
    %6316 = vmatprep.subr.mxu0 0.0
    %6317 = vmatpush1.msra.mxu0 0.0
    %6318 = vmatprep.subr.mxu0 0.0
    %6319 = vmatpush1.msra.mxu0 0.0
    %6320 = vmatprep.subr.mxu0 0.0
    %6321 = vmatpush1.msra.mxu0 0.0
    %6322 = vmatprep.subr.mxu0 0.0
    %6323 = vmatpush1.msra.mxu0 0.0
    %6324 = vmatprep.subr.mxu0 0.0
    %6325 = vmatpush1.msra.mxu0 0.0
    %6326 = vmatprep.mubr.f32.mxu0 0.0
    %6327 = vmatmul.mubr.f32.gmra.mrb[0].mxu0 %v6260
    %v6328 = vpop.f32.mrb[0].mxu0
    %v6329 = vadd.f32 %v130, %v6328
    %v6330 = vpop.f32.mrb[0].mxu0
    %6331 = vdwg.mxu0
    %6333 = vrot.lane.b32.xlu0 %v6329, 12
    %v6334 = vpop.permute.xlu0 %6333
    %vm6336 = vcmask 130144
    %6337 = vst.msk [vmem:[%s24] sm:$0xff] %vm6336, %v6334
    // Predicated region
    $region106: #{neural_cde_idea4_forecasting.1} parent=1 // pred_check
      _
    $region107: #{neural_cde_idea4_forecasting.1} parent=1 // pred_check_branch
      %6339 = sbr.rel (0) target = $region109
    $region108: #{neural_cde_idea4_forecasting.1} parent=1 // pred_region
      _
    $region109: #{neural_cde_idea4_forecasting.1} parent=1 // pred_fallthru
      _
    // Predicated region
    $region110: #{neural_cde_idea4_forecasting.1} parent=1 // pred_check
      _
    $region111: #{neural_cde_idea4_forecasting.1} parent=1 // pred_check_branch
      %6341 = sbr.rel (0) target = $region113
    $region112: #{neural_cde_idea4_forecasting.1} parent=1 // pred_region
      _
    $region113: #{neural_cde_idea4_forecasting.1} parent=1 // pred_fallthru
      _
    %6342 = vsyncpa [#allocation3], 1
    %6343 = vsyncpa [#allocation5], 1

</llo_original>
